<compile_context>
chip_gen: v6e
topology: v6e:2x2x1
jax: 0.10.0
libtpu: 0.0.40
codegen_flags: <defaults>
</compile_context>

<pallas_src>
import functools
import math

import jax
import jax.numpy as jnp
from jax.experimental import pallas as pl
from jax.experimental.pallas import tpu as pltpu

# The reference Block implementation is not shown; GPT-2 style models use the tanh
# GELU (maps to the TPU EUP).  If the PyTorch Block uses nn.GELU()'s default (erf),
# flip this to False.
GELU_APPROXIMATE = True


def _vmem_limit_bytes():
    try:
        cap = pltpu.get_tpu_info().vmem_capacity_bytes
    except Exception:
        cap = 64 * 1024 * 1024
    return min((cap * 3) // 4, 100 * 1024 * 1024)


VMEM_LIMIT_BYTES = _vmem_limit_bytes()


# ----------------------------- kernels ------------------------------------- #

def _layernorm(v, w, b, eps=1e-5):
    mu = jnp.mean(v, axis=-1, keepdims=True)
    var = jnp.mean((v - mu) ** 2, axis=-1, keepdims=True)
    return (v - mu) * jax.lax.rsqrt(var + eps) * w + b


def block_kernel(x_ref, mask_ref, ln1w_ref, ln1b_ref, wqkv_ref, bqkv_ref,
                 wo_ref, bo_ref, ln2w_ref, ln2b_ref, wfc_ref, bfc_ref,
                 wproj_ref, bproj_ref, o_ref, y_scratch,
                 *, num_heads, head_dim):
    """One full transformer block for one batch element, entirely VMEM-resident.

    x1  = x + Wo @ attn(ln1(x))
    out = x1 + mlp(ln2(x1))
    """
    x = x_ref[0]                                               # (T, D) f32
    D = num_heads * head_dim
    scale = 1.0 / math.sqrt(head_dim)
    mask = mask_ref[...]                                       # (T, T) additive f32

    # ---- LN1 + fused QKV projection (bf16 MXU, f32 accumulate) ----
    h1 = _layernorm(x, ln1w_ref[0], ln1b_ref[0])               # f32 on VPU
    qkv = jnp.dot(h1.astype(jnp.bfloat16), wqkv_ref[...],
                  preferred_element_type=jnp.float32) + bqkv_ref[0]   # (T, 3D) f32

    # ---- causal attention, heads unrolled (H is small); outputs staged in VMEM ----
    for h in range(num_heads):
        lo = h * head_dim
        # fold 1/sqrt(hd) into q (T*hd mul instead of T*T), then cast to bf16
        q = (qkv[:, lo:lo + head_dim] * scale).astype(jnp.bfloat16)
        k = qkv[:, D + lo:D + lo + head_dim].astype(jnp.bfloat16)
        v = qkv[:, 2 * D + lo:2 * D + lo + head_dim].astype(jnp.bfloat16)

        # q @ k^T without materializing a transpose (contract last dims on the MXU)
        s = jax.lax.dot_general(q, k, (((1,), (1,)), ((), ())),
                                preferred_element_type=jnp.float32)
        s = s + mask                                           # causal mask (0 / -1e30)

        # softmax in f32: max-subtract, exp (EUP), approx reciprocal (EUP)
        s = s - jnp.max(s, axis=-1, keepdims=True)
        p = jnp.exp(s)
        p = p * pl.reciprocal(jnp.sum(p, axis=-1, keepdims=True), approx=True)

        out_h = jnp.dot(p.astype(jnp.bfloat16), v,
                        preferred_element_type=jnp.float32)
        y_scratch[:, lo:lo + head_dim] = out_h.astype(jnp.bfloat16)

    # ---- output projection + residual ----
    attn = jnp.dot(y_scratch[...], wo_ref[...],
                   preferred_element_type=jnp.float32) + bo_ref[0]
    x1 = x + attn

    # ---- LN2 + MLP + residual ----
    h2 = _layernorm(x1, ln2w_ref[0], ln2b_ref[0])
    f = jnp.dot(h2.astype(jnp.bfloat16), wfc_ref[...],
                preferred_element_type=jnp.float32) + bfc_ref[0]
    f = jax.nn.gelu(f, approximate=GELU_APPROXIMATE)
    mlp = jnp.dot(f.astype(jnp.bfloat16), wproj_ref[...],
                  preferred_element_type=jnp.float32) + bproj_ref[0]
    o_ref[0] = x1 + mlp


def head_kernel(x_ref, lnfw_ref, lnfb_ref, wte_ref, blm_ref, o_ref, h_scratch):
    """logits tile = ln_f(x) @ wte[tile, :].T + b[tile].

    ln_f(x) is computed once per batch element (j == 0) and kept in a bf16
    VMEM scratch across the vocab-tile axis.
    """
    @pl.when(pl.program_id(1) == 0)
    def _():
        h = _layernorm(x_ref[0], lnfw_ref[0], lnfb_ref[0])
        h_scratch[...] = h.astype(jnp.bfloat16)

    # (T, D) @ (tile_v, D)^T — contract last dims; wte stays untransposed (V, D).
    logits = jax.lax.dot_general(h_scratch[...], wte_ref[...],
                                 (((1,), (1,)), ((), ())),
                                 preferred_element_type=jnp.float32)
    o_ref[0] = logits + blm_ref[0]


# ----------------------------- wrappers ------------------------------------ #

def _weight_spec(shape):
    """Full-array, constant-index block: DMA'd once, single-buffered."""
    nd = len(shape)
    return pl.BlockSpec(shape, lambda *_args: (0,) * nd,
                        pipeline_mode=pl.Buffered(1))


def run_block(x, mask, blk, num_heads, head_dim):
    B, T, D = x.shape
    weights = [blk["ln1_w"], blk["ln1_b"], blk["w_qkv"], blk["b_qkv"],
               blk["w_o"], blk["b_o"], blk["ln2_w"], blk["ln2_b"],
               blk["w_fc"], blk["b_fc"], blk["w_proj"], blk["b_proj"]]
    return pl.pallas_call(
        functools.partial(block_kernel, num_heads=num_heads, head_dim=head_dim),
        out_shape=jax.ShapeDtypeStruct((B, T, D), jnp.float32),
        grid=(B,),
        in_specs=[pl.BlockSpec((1, T, D), lambda b: (b, 0, 0)),
                  _weight_spec(mask.shape)]
                 + [_weight_spec(w.shape) for w in weights],
        out_specs=pl.BlockSpec((1, T, D), lambda b: (b, 0, 0)),
        scratch_shapes=[pltpu.VMEM((T, D), jnp.bfloat16)],
        compiler_params=pltpu.CompilerParams(
            dimension_semantics=("parallel",),
            vmem_limit_bytes=VMEM_LIMIT_BYTES),
    )(x, mask, *weights)


def run_head(x, lnf_w, lnf_b, wte, b_lm, tile_v=512):
    B, T, D = x.shape
    V = wte.shape[0]
    tile_v = min(tile_v, V)
    assert V % tile_v == 0
    return pl.pallas_call(
        head_kernel,
        out_shape=jax.ShapeDtypeStruct((B, T, V), jnp.float32),
        grid=(B, V // tile_v),
        in_specs=[pl.BlockSpec((1, T, D), lambda b, j: (b, 0, 0)),
                  _weight_spec(lnf_w.shape),
                  _weight_spec(lnf_b.shape),
                  pl.BlockSpec((tile_v, D), lambda b, j: (j, 0)),
                  pl.BlockSpec((1, tile_v), lambda b, j: (0, j))],
        out_specs=pl.BlockSpec((1, T, tile_v), lambda b, j: (b, 0, j)),
        scratch_shapes=[pltpu.VMEM((T, D), jnp.bfloat16)],
        compiler_params=pltpu.CompilerParams(
            dimension_semantics=("parallel", "arbitrary"),
            vmem_limit_bytes=VMEM_LIMIT_BYTES),
    )(x, lnf_w, lnf_b, wte, b_lm)


def gpt_forward(idx, params, num_heads):
    """idx: (B, T) int32 token ids -> logits (B, T, vocab)."""
    B, T = idx.shape
    wte = params["wte"]                        # (V, D) bf16 (tied with lm_head)
    wpe = params["wpe"]                        # (max_len, D) f32

    # plain-JAX embedding gather (glue)
    tok_embed = jnp.take(wte, idx, axis=0).astype(jnp.float32)
    pos_embed = wpe[:T][None, :, :]
    x = tok_embed + pos_embed                  # (B, T, D) f32

    D = x.shape[-1]
    hd = D // num_heads

    # additive causal mask, built once per forward (constant-folds under jit)
    row = jnp.arange(T)[:, None]
    col = jnp.arange(T)[None, :]
    mask = jnp.where(col <= row, 0.0, -1e30).astype(jnp.float32)   # (T, T)

    for blk in params["blocks"]:
        x = run_block(x, mask, blk, num_heads, hd)

    # lm_head with weight tying: logits = ln_f(x) @ wte^T + b_lm (no transpose copy)
    logits = run_head(x, params["lnf_w"], params["lnf_b"], wte, params["b_lm"])
    return logits


# ------------------------------ params ------------------------------------- #

def init_params(key, vocab_size, embed_size, max_len, num_layers):
    D = embed_size
    ks = jax.random.split(key, 4 + num_layers)

    def normal(k, shape, dtype, scale=0.02):
        return (scale * jax.random.normal(k, shape)).astype(dtype)

    params = {
        "wte": normal(ks[0], (vocab_size, D), jnp.bfloat16),   # tied lm_head weight
        "wpe": normal(ks[1], (max_len, D), jnp.float32),
        "lnf_w": jnp.ones((1, D), jnp.float32),
        "lnf_b": jnp.zeros((1, D), jnp.float32),
        "b_lm": jnp.zeros((1, vocab_size), jnp.float32),
        "blocks": [],
    }
    for li in range(num_layers):
        bk = jax.random.split(ks[4 + li], 4)
        params["blocks"].append({
            "ln1_w": jnp.ones((1, D), jnp.float32),
            "ln1_b": jnp.zeros((1, D), jnp.float32),
            "w_qkv": normal(bk[0], (D, 3 * D), jnp.bfloat16),
            "b_qkv": jnp.zeros((1, 3 * D), jnp.float32),
            "w_o": normal(bk[1], (D, D), jnp.bfloat16),
            "b_o": jnp.zeros((1, D), jnp.float32),
            "ln2_w": jnp.ones((1, D), jnp.float32),
            "ln2_b": jnp.zeros((1, D), jnp.float32),
            "w_fc": normal(bk[2], (D, 4 * D), jnp.bfloat16),
            "b_fc": jnp.zeros((1, 4 * D), jnp.float32),
            "w_proj": normal(bk[3], (4 * D, D), jnp.bfloat16),
            "b_proj": jnp.zeros((1, D), jnp.float32),
        })
    return params


# ------------------------------- main --------------------------------------- #

if __name__ == "__main__":
    # small, TPU-aligned config (head_dim = 256/2 = 128, vocab tiled by 512)
    vocab_size = 512
    embed_size = 256
    max_len = 128
    block_size = 128
    num_layers = 2
    num_heads = 2
    B, T = 2, 128
    assert T <= block_size

    key = jax.random.PRNGKey(0)
    kp, ki = jax.random.split(key)
    params = init_params(kp, vocab_size, embed_size, max_len, num_layers)
    idx = jax.random.randint(ki, (B, T), 0, vocab_size, dtype=jnp.int32)

    fwd = jax.jit(functools.partial(gpt_forward, num_heads=num_heads))
    logits = fwd(idx, params)
    logits = jax.block_until_ready(logits)

    assert logits.shape == (B, T, vocab_size)
    assert bool(jnp.all(jnp.isfinite(logits)))
    print("KERNEL_OK")
</pallas_src>

<mosaic_0001>
module attributes {stable_mosaic.version = 11 : i64} {
  func.func @head_kernel(%arg0: i32, %arg1: i32, %arg2: memref<1x128x256xf32, #tpu.memory_space<vmem>>, %arg3: memref<1x256xf32, #tpu.memory_space<vmem>>, %arg4: memref<1x256xf32, #tpu.memory_space<vmem>>, %arg5: memref<512x256xbf16, #tpu.memory_space<vmem>>, %arg6: memref<1x512xf32, #tpu.memory_space<vmem>>, %arg7: memref<1x128x512xf32, #tpu.memory_space<vmem>>, %arg8: memref<128x256xbf16, #tpu.memory_space<vmem>>) attributes {dimension_semantics = [#tpu.dimension_semantics<parallel>, #tpu.dimension_semantics<arbitrary>], iteration_bounds = array<i64: 2, 1>, scalar_prefetch = 0 : i64, scratch_operands = 1 : i64, tpu.core_type = #tpu.core_type<tc>, window_params = [{transform_indices = @transform_0, window_bounds = array<i64: 1, 128, 256>}, {pipeline_mode = #tpu.pipeline_mode<synchronous>, transform_indices = @transform_1, window_bounds = array<i64: 1, 256>}, {pipeline_mode = #tpu.pipeline_mode<synchronous>, transform_indices = @transform_2, window_bounds = array<i64: 1, 256>}, {transform_indices = @transform_3, window_bounds = array<i64: 512, 256>}, {transform_indices = @transform_4, window_bounds = array<i64: 1, 512>}, {transform_indices = @transform_5, window_bounds = array<i64: 1, 128, 512>}]} {
    %c0_i32 = arith.constant 0 : i32
    %0 = arith.cmpi eq, %arg1, %c0_i32 : i32
    %1 = arith.extui %0 : i1 to i32
    %c0_i32_0 = arith.constant 0 : i32
    %2 = arith.cmpi ne, %1, %c0_i32_0 : i32
    scf.if %2 {
      %c0_9 = arith.constant 0 : index
      %c0_10 = arith.constant 0 : index
      %c0_11 = arith.constant 0 : index
      %14 = vector.load %arg2[%c0_9, %c0_10, %c0_11] : memref<1x128x256xf32, #tpu.memory_space<vmem>>, vector<1x128x256xf32>
      %15 = vector.shape_cast %14 : vector<1x128x256xf32> to vector<128x256xf32>
      %c0_12 = arith.constant 0 : index
      %c0_13 = arith.constant 0 : index
      %16 = vector.load %arg3[%c0_12, %c0_13] : memref<1x256xf32, #tpu.memory_space<vmem>>, vector<1x256xf32>
      %17 = vector.shape_cast %16 : vector<1x256xf32> to vector<256xf32>
      %c0_14 = arith.constant 0 : index
      %c0_15 = arith.constant 0 : index
      %18 = vector.load %arg4[%c0_14, %c0_15] : memref<1x256xf32, #tpu.memory_space<vmem>>, vector<1x256xf32>
      %19 = vector.shape_cast %18 : vector<1x256xf32> to vector<256xf32>
      %cst_16 = arith.constant dense<0.000000e+00> : vector<128xf32>
      %20 = vector.multi_reduction <add>, %15, %cst_16 [1] : vector<128x256xf32> to vector<128xf32>
      %21 = vector.shape_cast %20 : vector<128xf32> to vector<128x1xf32>
      %cst_17 = arith.constant 2.560000e+02 : f32
      %22 = vector.broadcast %cst_17 : f32 to vector<128x1xf32>
      %23 = arith.divf %21, %22 : vector<128x1xf32>
      %24 = vector.broadcast %23 : vector<128x1xf32> to vector<128x256xf32>
      %25 = arith.subf %15, %24 : vector<128x256xf32>
      %26 = arith.mulf %25, %25 : vector<128x256xf32>
      %cst_18 = arith.constant dense<0.000000e+00> : vector<128xf32>
      %27 = vector.multi_reduction <add>, %26, %cst_18 [1] : vector<128x256xf32> to vector<128xf32>
      %28 = vector.shape_cast %27 : vector<128xf32> to vector<128x1xf32>
      %cst_19 = arith.constant 2.560000e+02 : f32
      %29 = vector.broadcast %cst_19 : f32 to vector<128x1xf32>
      %30 = arith.divf %28, %29 : vector<128x1xf32>
      %31 = vector.broadcast %23 : vector<128x1xf32> to vector<128x256xf32>
      %32 = arith.subf %15, %31 : vector<128x256xf32>
      %cst_20 = arith.constant 9.99999974E-6 : f32
      %33 = vector.broadcast %cst_20 : f32 to vector<128x1xf32>
      %34 = arith.addf %30, %33 : vector<128x1xf32>
      %35 = math.rsqrt %34 : vector<128x1xf32>
      %36 = vector.broadcast %35 : vector<128x1xf32> to vector<128x256xf32>
      %37 = arith.mulf %32, %36 : vector<128x256xf32>
      %38 = vector.shape_cast %17 : vector<256xf32> to vector<1x256xf32>
      %39 = vector.broadcast %38 : vector<1x256xf32> to vector<128x256xf32>
      %40 = arith.mulf %37, %39 : vector<128x256xf32>
      %41 = vector.shape_cast %19 : vector<256xf32> to vector<1x256xf32>
      %42 = vector.broadcast %41 : vector<1x256xf32> to vector<128x256xf32>
      %43 = arith.addf %40, %42 : vector<128x256xf32>
      %44 = arith.truncf %43 : vector<128x256xf32> to vector<128x256xbf16>
      %c0_21 = arith.constant 0 : index
      %c0_22 = arith.constant 0 : index
      %45 = vector.load %arg8[%c0_21, %c0_22] : memref<128x256xbf16, #tpu.memory_space<vmem>>, vector<128x256xbf16>
      tpu.vector_store %arg8[%c0_21, %c0_22], %44 {strides = array<i32>} : memref<128x256xbf16, #tpu.memory_space<vmem>>, vector<128x256xbf16>,
    } else {
    }
    %c0 = arith.constant 0 : index
    %c0_1 = arith.constant 0 : index
    %3 = vector.load %arg8[%c0, %c0_1] : memref<128x256xbf16, #tpu.memory_space<vmem>>, vector<128x256xbf16>
    %c0_2 = arith.constant 0 : index
    %c0_3 = arith.constant 0 : index
    %4 = vector.load %arg5[%c0_2, %c0_3] : memref<512x256xbf16, #tpu.memory_space<vmem>>, vector<512x256xbf16>
    %cst = arith.constant dense<0.000000e+00> : vector<128x512xf32>
    %5 = tpu.matmul %3, %4, %cst {dimension_numbers = #tpu.dot_dimension_numbers<[1], [1], [0], [0], [0, 0, 1, 0], [], []>} : vector<128x256xbf16>, vector<512x256xbf16>, vector<128x512xf32> -> vector<128x512xf32>
    %c0_4 = arith.constant 0 : index
    %c0_5 = arith.constant 0 : index
    %6 = vector.load %arg6[%c0_4, %c0_5] : memref<1x512xf32, #tpu.memory_space<vmem>>, vector<1x512xf32>
    %7 = vector.shape_cast %6 : vector<1x512xf32> to vector<512xf32>
    %8 = vector.shape_cast %7 : vector<512xf32> to vector<1x512xf32>
    %9 = vector.broadcast %8 : vector<1x512xf32> to vector<128x512xf32>
    %10 = arith.addf %5, %9 : vector<128x512xf32>
    %c0_6 = arith.constant 0 : index
    %c0_7 = arith.constant 0 : index
    %c0_8 = arith.constant 0 : index
    %11 = vector.load %arg7[%c0_6, %c0_7, %c0_8] : memref<1x128x512xf32, #tpu.memory_space<vmem>>, vector<1x128x512xf32>
    %12 = vector.shape_cast %11 : vector<1x128x512xf32> to vector<128x512xf32>
    %13 = vector.shape_cast %10 : vector<128x512xf32> to vector<1x128x512xf32>
    tpu.vector_store %arg7[%c0_6, %c0_7, %c0_8], %13 {strides = array<i32>} : memref<1x128x512xf32, #tpu.memory_space<vmem>>, vector<1x128x512xf32>,
    return
  }
  func.func @transform_0(%arg0: i32, %arg1: i32) -> (i32, i32, i32) {
    %c0_i32 = arith.constant 0 : i32
    %c0_i32_0 = arith.constant 0 : i32
    %c0_i32_1 = arith.constant 0 : i32
    return %arg0, %c0_i32, %c0_i32_0 : i32, i32, i32
  }
  func.func @transform_1(%arg0: i32, %arg1: i32) -> (i32, i32) {
    %c0_i32 = arith.constant 0 : i32
    %c0_i32_0 = arith.constant 0 : i32
    %c0_i32_1 = arith.constant 0 : i32
    return %c0_i32, %c0_i32_0 : i32, i32
  }
  func.func @transform_2(%arg0: i32, %arg1: i32) -> (i32, i32) {
    %c0_i32 = arith.constant 0 : i32
    %c0_i32_0 = arith.constant 0 : i32
    %c0_i32_1 = arith.constant 0 : i32
    return %c0_i32, %c0_i32_0 : i32, i32
  }
  func.func @transform_3(%arg0: i32, %arg1: i32) -> (i32, i32) {
    %c0_i32 = arith.constant 0 : i32
    %c0_i32_0 = arith.constant 0 : i32
    return %arg1, %c0_i32 : i32, i32
  }
  func.func @transform_4(%arg0: i32, %arg1: i32) -> (i32, i32) {
    %c0_i32 = arith.constant 0 : i32
    %c0_i32_0 = arith.constant 0 : i32
    return %c0_i32, %arg1 : i32, i32
  }
  func.func @transform_5(%arg0: i32, %arg1: i32) -> (i32, i32, i32) {
    %c0_i32 = arith.constant 0 : i32
    %c0_i32_0 = arith.constant 0 : i32
    return %arg0, %c0_i32, %arg1 : i32, i32, i32
  }
}

module attributes {stable_mosaic.version = 11 : i64} {
  func.func @block_kernel(%arg0: i32, %arg1: memref<1x128x256xf32, #tpu.memory_space<vmem>>, %arg2: memref<128x128xf32, #tpu.memory_space<vmem>>, %arg3: memref<1x256xf32, #tpu.memory_space<vmem>>, %arg4: memref<1x256xf32, #tpu.memory_space<vmem>>, %arg5: memref<256x768xbf16, #tpu.memory_space<vmem>>, %arg6: memref<1x768xf32, #tpu.memory_space<vmem>>, %arg7: memref<256x256xbf16, #tpu.memory_space<vmem>>, %arg8: memref<1x256xf32, #tpu.memory_space<vmem>>, %arg9: memref<1x256xf32, #tpu.memory_space<vmem>>, %arg10: memref<1x256xf32, #tpu.memory_space<vmem>>, %arg11: memref<256x1024xbf16, #tpu.memory_space<vmem>>, %arg12: memref<1x1024xf32, #tpu.memory_space<vmem>>, %arg13: memref<1024x256xbf16, #tpu.memory_space<vmem>>, %arg14: memref<1x256xf32, #tpu.memory_space<vmem>>, %arg15: memref<1x128x256xf32, #tpu.memory_space<vmem>>, %arg16: memref<128x256xbf16, #tpu.memory_space<vmem>>) attributes {dimension_semantics = [#tpu.dimension_semantics<parallel>], iteration_bounds = array<i64: 2>, scalar_prefetch = 0 : i64, scratch_operands = 1 : i64, tpu.core_type = #tpu.core_type<tc>, window_params = [{transform_indices = @transform_0, window_bounds = array<i64: 1, 128, 256>}, {pipeline_mode = #tpu.pipeline_mode<synchronous>, transform_indices = @transform_1, window_bounds = array<i64: 128, 128>}, {pipeline_mode = #tpu.pipeline_mode<synchronous>, transform_indices = @transform_2, window_bounds = array<i64: 1, 256>}, {pipeline_mode = #tpu.pipeline_mode<synchronous>, transform_indices = @transform_3, window_bounds = array<i64: 1, 256>}, {pipeline_mode = #tpu.pipeline_mode<synchronous>, transform_indices = @transform_4, window_bounds = array<i64: 256, 768>}, {pipeline_mode = #tpu.pipeline_mode<synchronous>, transform_indices = @transform_5, window_bounds = array<i64: 1, 768>}, {pipeline_mode = #tpu.pipeline_mode<synchronous>, transform_indices = @transform_6, window_bounds = array<i64: 256, 256>}, {pipeline_mode = #tpu.pipeline_mode<synchronous>, transform_indices = @transform_7, window_bounds = array<i64: 1, 256>}, {pipeline_mode = #tpu.pipeline_mode<synchronous>, transform_indices = @transform_8, window_bounds = array<i64: 1, 256>}, {pipeline_mode = #tpu.pipeline_mode<synchronous>, transform_indices = @transform_9, window_bounds = array<i64: 1, 256>}, {pipeline_mode = #tpu.pipeline_mode<synchronous>, transform_indices = @transform_10, window_bounds = array<i64: 256, 1024>}, {pipeline_mode = #tpu.pipeline_mode<synchronous>, transform_indices = @transform_11, window_bounds = array<i64: 1, 1024>}, {pipeline_mode = #tpu.pipeline_mode<synchronous>, transform_indices = @transform_12, window_bounds = array<i64: 1024, 256>}, {pipeline_mode = #tpu.pipeline_mode<synchronous>, transform_indices = @transform_13, window_bounds = array<i64: 1, 256>}, {transform_indices = @transform_14, window_bounds = array<i64: 1, 128, 256>}]} {
    %c0 = arith.constant 0 : index
    %c0_0 = arith.constant 0 : index
    %c0_1 = arith.constant 0 : index
    %0 = vector.load %arg1[%c0, %c0_0, %c0_1] : memref<1x128x256xf32, #tpu.memory_space<vmem>>, vector<1x128x256xf32>
    %1 = vector.shape_cast %0 : vector<1x128x256xf32> to vector<128x256xf32>
    %c0_2 = arith.constant 0 : index
    %c0_3 = arith.constant 0 : index
    %2 = vector.load %arg2[%c0_2, %c0_3] : memref<128x128xf32, #tpu.memory_space<vmem>>, vector<128x128xf32>
    %c0_4 = arith.constant 0 : index
    %c0_5 = arith.constant 0 : index
    %3 = vector.load %arg3[%c0_4, %c0_5] : memref<1x256xf32, #tpu.memory_space<vmem>>, vector<1x256xf32>
    %4 = vector.shape_cast %3 : vector<1x256xf32> to vector<256xf32>
    %c0_6 = arith.constant 0 : index
    %c0_7 = arith.constant 0 : index
    %5 = vector.load %arg4[%c0_6, %c0_7] : memref<1x256xf32, #tpu.memory_space<vmem>>, vector<1x256xf32>
    %6 = vector.shape_cast %5 : vector<1x256xf32> to vector<256xf32>
    %cst = arith.constant dense<0.000000e+00> : vector<128xf32>
    %7 = vector.multi_reduction <add>, %1, %cst [1] : vector<128x256xf32> to vector<128xf32>
    %8 = vector.shape_cast %7 : vector<128xf32> to vector<128x1xf32>
    %cst_8 = arith.constant 2.560000e+02 : f32
    %9 = vector.broadcast %cst_8 : f32 to vector<128x1xf32>
    %10 = arith.divf %8, %9 : vector<128x1xf32>
    %11 = vector.broadcast %10 : vector<128x1xf32> to vector<128x256xf32>
    %12 = arith.subf %1, %11 : vector<128x256xf32>
    %13 = arith.mulf %12, %12 : vector<128x256xf32>
    %cst_9 = arith.constant dense<0.000000e+00> : vector<128xf32>
    %14 = vector.multi_reduction <add>, %13, %cst_9 [1] : vector<128x256xf32> to vector<128xf32>
    %15 = vector.shape_cast %14 : vector<128xf32> to vector<128x1xf32>
    %cst_10 = arith.constant 2.560000e+02 : f32
    %16 = vector.broadcast %cst_10 : f32 to vector<128x1xf32>
    %17 = arith.divf %15, %16 : vector<128x1xf32>
    %18 = vector.broadcast %10 : vector<128x1xf32> to vector<128x256xf32>
    %19 = arith.subf %1, %18 : vector<128x256xf32>
    %cst_11 = arith.constant 9.99999974E-6 : f32
    %20 = vector.broadcast %cst_11 : f32 to vector<128x1xf32>
    %21 = arith.addf %17, %20 : vector<128x1xf32>
    %22 = math.rsqrt %21 : vector<128x1xf32>
    %23 = vector.broadcast %22 : vector<128x1xf32> to vector<128x256xf32>
    %24 = arith.mulf %19, %23 : vector<128x256xf32>
    %25 = vector.shape_cast %4 : vector<256xf32> to vector<1x256xf32>
    %26 = vector.broadcast %25 : vector<1x256xf32> to vector<128x256xf32>
    %27 = arith.mulf %24, %26 : vector<128x256xf32>
    %28 = vector.shape_cast %6 : vector<256xf32> to vector<1x256xf32>
    %29 = vector.broadcast %28 : vector<1x256xf32> to vector<128x256xf32>
    %30 = arith.addf %27, %29 : vector<128x256xf32>
    %31 = arith.truncf %30 : vector<128x256xf32> to vector<128x256xbf16>
    %c0_12 = arith.constant 0 : index
    %c0_13 = arith.constant 0 : index
    %32 = vector.load %arg5[%c0_12, %c0_13] : memref<256x768xbf16, #tpu.memory_space<vmem>>, vector<256x768xbf16>
    %cst_14 = arith.constant dense<0.000000e+00> : vector<128x768xf32>
    %33 = tpu.matmul %31, %32, %cst_14 {dimension_numbers = #tpu.dot_dimension_numbers<[1], [0], [0], [1], [0, 0, 1, 1], [], []>} : vector<128x256xbf16>, vector<256x768xbf16>, vector<128x768xf32> -> vector<128x768xf32>
    %c0_15 = arith.constant 0 : index
    %c0_16 = arith.constant 0 : index
    %34 = vector.load %arg6[%c0_15, %c0_16] : memref<1x768xf32, #tpu.memory_space<vmem>>, vector<1x768xf32>
    %35 = vector.shape_cast %34 : vector<1x768xf32> to vector<768xf32>
    %36 = vector.shape_cast %35 : vector<768xf32> to vector<1x768xf32>
    %37 = vector.broadcast %36 : vector<1x768xf32> to vector<128x768xf32>
    %38 = arith.addf %33, %37 : vector<128x768xf32>
    %39 = vector.extract_strided_slice %38 {offsets = [0, 0], sizes = [128, 128], strides = [1, 1]} : vector<128x768xf32> to vector<128x128xf32>
    %cst_17 = arith.constant 0.0883883461 : f32
    %40 = vector.broadcast %cst_17 : f32 to vector<128x128xf32>
    %41 = arith.mulf %39, %40 : vector<128x128xf32>
    %42 = arith.truncf %41 : vector<128x128xf32> to vector<128x128xbf16>
    %43 = vector.extract_strided_slice %38 {offsets = [0, 256], sizes = [128, 128], strides = [1, 1]} : vector<128x768xf32> to vector<128x128xf32>
    %44 = arith.truncf %43 : vector<128x128xf32> to vector<128x128xbf16>
    %45 = vector.extract_strided_slice %38 {offsets = [0, 512], sizes = [128, 128], strides = [1, 1]} : vector<128x768xf32> to vector<128x128xf32>
    %46 = arith.truncf %45 : vector<128x128xf32> to vector<128x128xbf16>
    %cst_18 = arith.constant dense<0.000000e+00> : vector<128x128xf32>
    %47 = tpu.matmul %42, %44, %cst_18 {dimension_numbers = #tpu.dot_dimension_numbers<[1], [1], [0], [0], [0, 0, 1, 0], [], []>} : vector<128x128xbf16>, vector<128x128xbf16>, vector<128x128xf32> -> vector<128x128xf32>
    %48 = arith.addf %47, %2 : vector<128x128xf32>
    %cst_19 = arith.constant dense<0xFF800000> : vector<128xf32>
    %49 = vector.multi_reduction <maximumf>, %48, %cst_19 [1] : vector<128x128xf32> to vector<128xf32>
    %50 = vector.shape_cast %49 : vector<128xf32> to vector<128x1xf32>
    %51 = vector.broadcast %50 : vector<128x1xf32> to vector<128x128xf32>
    %52 = arith.subf %48, %51 : vector<128x128xf32>
    %53 = math.exp %52 : vector<128x128xf32>
    %cst_20 = arith.constant dense<0.000000e+00> : vector<128xf32>
    %54 = vector.multi_reduction <add>, %53, %cst_20 [1] : vector<128x128xf32> to vector<128xf32>
    %55 = vector.shape_cast %54 : vector<128xf32> to vector<128x1xf32>
    %56 = tpu.reciprocal %55 {approx = true} : vector<128x1xf32> -> vector<128x1xf32>
    %57 = vector.broadcast %56 : vector<128x1xf32> to vector<128x128xf32>
    %58 = arith.mulf %53, %57 : vector<128x128xf32>
    %59 = arith.truncf %58 : vector<128x128xf32> to vector<128x128xbf16>
    %cst_21 = arith.constant dense<0.000000e+00> : vector<128x128xf32>
    %60 = tpu.matmul %59, %46, %cst_21 {dimension_numbers = #tpu.dot_dimension_numbers<[1], [0], [0], [1], [0, 0, 1, 1], [], []>} : vector<128x128xbf16>, vector<128x128xbf16>, vector<128x128xf32> -> vector<128x128xf32>
    %61 = arith.truncf %60 : vector<128x128xf32> to vector<128x128xbf16>
    %c0_22 = arith.constant 0 : index
    %c0_23 = arith.constant 0 : index
    %62 = vector.load %arg16[%c0_22, %c0_23] : memref<128x256xbf16, #tpu.memory_space<vmem>>, vector<128x128xbf16>
    tpu.vector_store %arg16[%c0_22, %c0_23], %61 {strides = array<i32>} : memref<128x256xbf16, #tpu.memory_space<vmem>>, vector<128x128xbf16>,
    %63 = vector.extract_strided_slice %38 {offsets = [0, 128], sizes = [128, 128], strides = [1, 1]} : vector<128x768xf32> to vector<128x128xf32>
    %cst_24 = arith.constant 0.0883883461 : f32
    %64 = vector.broadcast %cst_24 : f32 to vector<128x128xf32>
    %65 = arith.mulf %63, %64 : vector<128x128xf32>
    %66 = arith.truncf %65 : vector<128x128xf32> to vector<128x128xbf16>
    %67 = vector.extract_strided_slice %38 {offsets = [0, 384], sizes = [128, 128], strides = [1, 1]} : vector<128x768xf32> to vector<128x128xf32>
    %68 = arith.truncf %67 : vector<128x128xf32> to vector<128x128xbf16>
    %69 = vector.extract_strided_slice %38 {offsets = [0, 640], sizes = [128, 128], strides = [1, 1]} : vector<128x768xf32> to vector<128x128xf32>
    %70 = arith.truncf %69 : vector<128x128xf32> to vector<128x128xbf16>
    %cst_25 = arith.constant dense<0.000000e+00> : vector<128x128xf32>
    %71 = tpu.matmul %66, %68, %cst_25 {dimension_numbers = #tpu.dot_dimension_numbers<[1], [1], [0], [0], [0, 0, 1, 0], [], []>} : vector<128x128xbf16>, vector<128x128xbf16>, vector<128x128xf32> -> vector<128x128xf32>
    %72 = arith.addf %71, %2 : vector<128x128xf32>
    %cst_26 = arith.constant dense<0xFF800000> : vector<128xf32>
    %73 = vector.multi_reduction <maximumf>, %72, %cst_26 [1] : vector<128x128xf32> to vector<128xf32>
    %74 = vector.shape_cast %73 : vector<128xf32> to vector<128x1xf32>
    %75 = vector.broadcast %74 : vector<128x1xf32> to vector<128x128xf32>
    %76 = arith.subf %72, %75 : vector<128x128xf32>
    %77 = math.exp %76 : vector<128x128xf32>
    %cst_27 = arith.constant dense<0.000000e+00> : vector<128xf32>
    %78 = vector.multi_reduction <add>, %77, %cst_27 [1] : vector<128x128xf32> to vector<128xf32>
    %79 = vector.shape_cast %78 : vector<128xf32> to vector<128x1xf32>
    %80 = tpu.reciprocal %79 {approx = true} : vector<128x1xf32> -> vector<128x1xf32>
    %81 = vector.broadcast %80 : vector<128x1xf32> to vector<128x128xf32>
    %82 = arith.mulf %77, %81 : vector<128x128xf32>
    %83 = arith.truncf %82 : vector<128x128xf32> to vector<128x128xbf16>
    %cst_28 = arith.constant dense<0.000000e+00> : vector<128x128xf32>
    %84 = tpu.matmul %83, %70, %cst_28 {dimension_numbers = #tpu.dot_dimension_numbers<[1], [0], [0], [1], [0, 0, 1, 1], [], []>} : vector<128x128xbf16>, vector<128x128xbf16>, vector<128x128xf32> -> vector<128x128xf32>
    %85 = arith.truncf %84 : vector<128x128xf32> to vector<128x128xbf16>
    %c0_29 = arith.constant 0 : index
    %c128 = arith.constant 128 : index
    %86 = vector.load %arg16[%c0_29, %c128] : memref<128x256xbf16, #tpu.memory_space<vmem>>, vector<128x128xbf16>
    tpu.vector_store %arg16[%c0_29, %c128], %85 {strides = array<i32>} : memref<128x256xbf16, #tpu.memory_space<vmem>>, vector<128x128xbf16>,
    %c0_30 = arith.constant 0 : index
    %c0_31 = arith.constant 0 : index
    %87 = vector.load %arg16[%c0_30, %c0_31] : memref<128x256xbf16, #tpu.memory_space<vmem>>, vector<128x256xbf16>
    %c0_32 = arith.constant 0 : index
    %c0_33 = arith.constant 0 : index
    %88 = vector.load %arg7[%c0_32, %c0_33] : memref<256x256xbf16, #tpu.memory_space<vmem>>, vector<256x256xbf16>
    %cst_34 = arith.constant dense<0.000000e+00> : vector<128x256xf32>
    %89 = tpu.matmul %87, %88, %cst_34 {dimension_numbers = #tpu.dot_dimension_numbers<[1], [0], [0], [1], [0, 0, 1, 1], [], []>} : vector<128x256xbf16>, vector<256x256xbf16>, vector<128x256xf32> -> vector<128x256xf32>
    %c0_35 = arith.constant 0 : index
    %c0_36 = arith.constant 0 : index
    %90 = vector.load %arg8[%c0_35, %c0_36] : memref<1x256xf32, #tpu.memory_space<vmem>>, vector<1x256xf32>
    %91 = vector.shape_cast %90 : vector<1x256xf32> to vector<256xf32>
    %92 = vector.shape_cast %91 : vector<256xf32> to vector<1x256xf32>
    %93 = vector.broadcast %92 : vector<1x256xf32> to vector<128x256xf32>
    %94 = arith.addf %89, %93 : vector<128x256xf32>
    %95 = arith.addf %1, %94 : vector<128x256xf32>
    %c0_37 = arith.constant 0 : index
    %c0_38 = arith.constant 0 : index
    %96 = vector.load %arg9[%c0_37, %c0_38] : memref<1x256xf32, #tpu.memory_space<vmem>>, vector<1x256xf32>
    %97 = vector.shape_cast %96 : vector<1x256xf32> to vector<256xf32>
    %c0_39 = arith.constant 0 : index
    %c0_40 = arith.constant 0 : index
    %98 = vector.load %arg10[%c0_39, %c0_40] : memref<1x256xf32, #tpu.memory_space<vmem>>, vector<1x256xf32>
    %99 = vector.shape_cast %98 : vector<1x256xf32> to vector<256xf32>
    %cst_41 = arith.constant dense<0.000000e+00> : vector<128xf32>
    %100 = vector.multi_reduction <add>, %95, %cst_41 [1] : vector<128x256xf32> to vector<128xf32>
    %101 = vector.shape_cast %100 : vector<128xf32> to vector<128x1xf32>
    %cst_42 = arith.constant 2.560000e+02 : f32
    %102 = vector.broadcast %cst_42 : f32 to vector<128x1xf32>
    %103 = arith.divf %101, %102 : vector<128x1xf32>
    %104 = vector.broadcast %103 : vector<128x1xf32> to vector<128x256xf32>
    %105 = arith.subf %95, %104 : vector<128x256xf32>
    %106 = arith.mulf %105, %105 : vector<128x256xf32>
    %cst_43 = arith.constant dense<0.000000e+00> : vector<128xf32>
    %107 = vector.multi_reduction <add>, %106, %cst_43 [1] : vector<128x256xf32> to vector<128xf32>
    %108 = vector.shape_cast %107 : vector<128xf32> to vector<128x1xf32>
    %cst_44 = arith.constant 2.560000e+02 : f32
    %109 = vector.broadcast %cst_44 : f32 to vector<128x1xf32>
    %110 = arith.divf %108, %109 : vector<128x1xf32>
    %111 = vector.broadcast %103 : vector<128x1xf32> to vector<128x256xf32>
    %112 = arith.subf %95, %111 : vector<128x256xf32>
    %cst_45 = arith.constant 9.99999974E-6 : f32
    %113 = vector.broadcast %cst_45 : f32 to vector<128x1xf32>
    %114 = arith.addf %110, %113 : vector<128x1xf32>
    %115 = math.rsqrt %114 : vector<128x1xf32>
    %116 = vector.broadcast %115 : vector<128x1xf32> to vector<128x256xf32>
    %117 = arith.mulf %112, %116 : vector<128x256xf32>
    %118 = vector.shape_cast %97 : vector<256xf32> to vector<1x256xf32>
    %119 = vector.broadcast %118 : vector<1x256xf32> to vector<128x256xf32>
    %120 = arith.mulf %117, %119 : vector<128x256xf32>
    %121 = vector.shape_cast %99 : vector<256xf32> to vector<1x256xf32>
    %122 = vector.broadcast %121 : vector<1x256xf32> to vector<128x256xf32>
    %123 = arith.addf %120, %122 : vector<128x256xf32>
    %124 = arith.truncf %123 : vector<128x256xf32> to vector<128x256xbf16>
    %c0_46 = arith.constant 0 : index
    %c0_47 = arith.constant 0 : index
    %125 = vector.load %arg11[%c0_46, %c0_47] : memref<256x1024xbf16, #tpu.memory_space<vmem>>, vector<256x1024xbf16>
    %cst_48 = arith.constant dense<0.000000e+00> : vector<128x1024xf32>
    %126 = tpu.matmul %124, %125, %cst_48 {dimension_numbers = #tpu.dot_dimension_numbers<[1], [0], [0], [1], [0, 0, 1, 1], [], []>} : vector<128x256xbf16>, vector<256x1024xbf16>, vector<128x1024xf32> -> vector<128x1024xf32>
    %c0_49 = arith.constant 0 : index
    %c0_50 = arith.constant 0 : index
    %127 = vector.load %arg12[%c0_49, %c0_50] : memref<1x1024xf32, #tpu.memory_space<vmem>>, vector<1x1024xf32>
    %128 = vector.shape_cast %127 : vector<1x1024xf32> to vector<1024xf32>
    %129 = vector.shape_cast %128 : vector<1024xf32> to vector<1x1024xf32>
    %130 = vector.broadcast %129 : vector<1x1024xf32> to vector<128x1024xf32>
    %131 = arith.addf %126, %130 : vector<128x1024xf32>
    %132 = arith.mulf %131, %131 : vector<128x1024xf32>
    %133 = arith.mulf %131, %132 : vector<128x1024xf32>
    %cst_51 = arith.constant 4.471500e-02 : f32
    %134 = vector.broadcast %cst_51 : f32 to vector<128x1024xf32>
    %135 = arith.mulf %134, %133 : vector<128x1024xf32>
    %136 = arith.addf %131, %135 : vector<128x1024xf32>
    %cst_52 = arith.constant 0.797884583 : f32
    %137 = vector.broadcast %cst_52 : f32 to vector<128x1024xf32>
    %138 = arith.mulf %137, %136 : vector<128x1024xf32>
    %139 = math.tanh %138 : vector<128x1024xf32>
    %cst_53 = arith.constant 1.000000e+00 : f32
    %140 = vector.broadcast %cst_53 : f32 to vector<128x1024xf32>
    %141 = arith.addf %140, %139 : vector<128x1024xf32>
    %cst_54 = arith.constant 5.000000e-01 : f32
    %142 = vector.broadcast %cst_54 : f32 to vector<128x1024xf32>
    %143 = arith.mulf %142, %141 : vector<128x1024xf32>
    %144 = arith.mulf %131, %143 : vector<128x1024xf32>
    %145 = arith.truncf %144 : vector<128x1024xf32> to vector<128x1024xbf16>
    %c0_55 = arith.constant 0 : index
    %c0_56 = arith.constant 0 : index
    %146 = vector.load %arg13[%c0_55, %c0_56] : memref<1024x256xbf16, #tpu.memory_space<vmem>>, vector<1024x256xbf16>
    %cst_57 = arith.constant dense<0.000000e+00> : vector<128x256xf32>
    %147 = tpu.matmul %145, %146, %cst_57 {dimension_numbers = #tpu.dot_dimension_numbers<[1], [0], [0], [1], [0, 0, 1, 1], [], []>} : vector<128x1024xbf16>, vector<1024x256xbf16>, vector<128x256xf32> -> vector<128x256xf32>
    %c0_58 = arith.constant 0 : index
    %c0_59 = arith.constant 0 : index
    %148 = vector.load %arg14[%c0_58, %c0_59] : memref<1x256xf32, #tpu.memory_space<vmem>>, vector<1x256xf32>
    %149 = vector.shape_cast %148 : vector<1x256xf32> to vector<256xf32>
    %150 = vector.shape_cast %149 : vector<256xf32> to vector<1x256xf32>
    %151 = vector.broadcast %150 : vector<1x256xf32> to vector<128x256xf32>
    %152 = arith.addf %147, %151 : vector<128x256xf32>
    %153 = arith.addf %95, %152 : vector<128x256xf32>
    %c0_60 = arith.constant 0 : index
    %c0_61 = arith.constant 0 : index
    %c0_62 = arith.constant 0 : index
    %154 = vector.load %arg15[%c0_60, %c0_61, %c0_62] : memref<1x128x256xf32, #tpu.memory_space<vmem>>, vector<1x128x256xf32>
    %155 = vector.shape_cast %154 : vector<1x128x256xf32> to vector<128x256xf32>
    %156 = vector.shape_cast %153 : vector<128x256xf32> to vector<1x128x256xf32>
    tpu.vector_store %arg15[%c0_60, %c0_61, %c0_62], %156 {strides = array<i32>} : memref<1x128x256xf32, #tpu.memory_space<vmem>>, vector<1x128x256xf32>,
    return
  }
  func.func @transform_0(%arg0: i32) -> (i32, i32, i32) {
    %c0_i32 = arith.constant 0 : i32
    %c0_i32_0 = arith.constant 0 : i32
    %c0_i32_1 = arith.constant 0 : i32
    return %arg0, %c0_i32, %c0_i32_0 : i32, i32, i32
  }
  func.func @transform_1(%arg0: i32) -> (i32, i32) {
    %c0_i32 = arith.constant 0 : i32
    %c0_i32_0 = arith.constant 0 : i32
    %c0_i32_1 = arith.constant 0 : i32
    return %c0_i32, %c0_i32_0 : i32, i32
  }
  func.func @transform_2(%arg0: i32) -> (i32, i32) {
    %c0_i32 = arith.constant 0 : i32
    %c0_i32_0 = arith.constant 0 : i32
    %c0_i32_1 = arith.constant 0 : i32
    return %c0_i32, %c0_i32_0 : i32, i32
  }
  func.func @transform_3(%arg0: i32) -> (i32, i32) {
    %c0_i32 = arith.constant 0 : i32
    %c0_i32_0 = arith.constant 0 : i32
    %c0_i32_1 = arith.constant 0 : i32
    return %c0_i32, %c0_i32_0 : i32, i32
  }
  func.func @transform_4(%arg0: i32) -> (i32, i32) {
    %c0_i32 = arith.constant 0 : i32
    %c0_i32_0 = arith.constant 0 : i32
    %c0_i32_1 = arith.constant 0 : i32
    return %c0_i32, %c0_i32_0 : i32, i32
  }
  func.func @transform_5(%arg0: i32) -> (i32, i32) {
    %c0_i32 = arith.constant 0 : i32
    %c0_i32_0 = arith.constant 0 : i32
    %c0_i32_1 = arith.constant 0 : i32
    return %c0_i32, %c0_i32_0 : i32, i32
  }
  func.func @transform_6(%arg0: i32) -> (i32, i32) {
    %c0_i32 = arith.constant 0 : i32
    %c0_i32_0 = arith.constant 0 : i32
    %c0_i32_1 = arith.constant 0 : i32
    return %c0_i32, %c0_i32_0 : i32, i32
  }
  func.func @transform_7(%arg0: i32) -> (i32, i32) {
    %c0_i32 = arith.constant 0 : i32
    %c0_i32_0 = arith.constant 0 : i32
    %c0_i32_1 = arith.constant 0 : i32
    return %c0_i32, %c0_i32_0 : i32, i32
  }
  func.func @transform_8(%arg0: i32) -> (i32, i32) {
    %c0_i32 = arith.constant 0 : i32
    %c0_i32_0 = arith.constant 0 : i32
    %c0_i32_1 = arith.constant 0 : i32
    return %c0_i32, %c0_i32_0 : i32, i32
  }
  func.func @transform_9(%arg0: i32) -> (i32, i32) {
    %c0_i32 = arith.constant 0 : i32
    %c0_i32_0 = arith.constant 0 : i32
    %c0_i32_1 = arith.constant 0 : i32
    return %c0_i32, %c0_i32_0 : i32, i32
  }
  func.func @transform_10(%arg0: i32) -> (i32, i32) {
    %c0_i32 = arith.constant 0 : i32
    %c0_i32_0 = arith.constant 0 : i32
    %c0_i32_1 = arith.constant 0 : i32
    return %c0_i32, %c0_i32_0 : i32, i32
  }
  func.func @transform_11(%arg0: i32) -> (i32, i32) {
    %c0_i32 = arith.constant 0 : i32
    %c0_i32_0 = arith.constant 0 : i32
    %c0_i32_1 = arith.constant 0 : i32
    return %c0_i32, %c0_i32_0 : i32, i32
  }
  func.func @transform_12(%arg0: i32) -> (i32, i32) {
    %c0_i32 = arith.constant 0 : i32
    %c0_i32_0 = arith.constant 0 : i32
    %c0_i32_1 = arith.constant 0 : i32
    return %c0_i32, %c0_i32_0 : i32, i32
  }
  func.func @transform_13(%arg0: i32) -> (i32, i32) {
    %c0_i32 = arith.constant 0 : i32
    %c0_i32_0 = arith.constant 0 : i32
    %c0_i32_1 = arith.constant 0 : i32
    return %c0_i32, %c0_i32_0 : i32, i32
  }
  func.func @transform_14(%arg0: i32) -> (i32, i32, i32) {
    %c0_i32 = arith.constant 0 : i32
    %c0_i32_0 = arith.constant 0 : i32
    %c0_i32_1 = arith.constant 0 : i32
    return %arg0, %c0_i32, %c0_i32_0 : i32, i32, i32
  }
}

</mosaic_0001>

<llo_original>
// kernel: gpt_forward.5
$region0: #{gpt_forward.5}
  #allocation0 [shape = 'u32[]', space=smem, size = 0x4, offset = 0x4, fixed_abs, tag = 'smem constant byte address 0x4 - core index']
  #allocation1 [shape = 'u32[144,128]{1,0:T(1,128)}', space=vmem, size = 0x12000, scoped, tag = 'internal scratch']
  #allocation2 [shape = 'bf16[128,256]{1,0:T(8,128)(2,1)}', space=vmem, size = 0x10000, scoped, tag = 'scratch operand']
  %s0 = inlined_call_operand.vmem [shape: f32[2,128,256], index: 0, kind: input, shape index: {}]
  %s1 = inlined_call_operand.vmem [shape: f32[1,256], index: 1, kind: input, shape index: {}]
  %s2 = inlined_call_operand.vmem [shape: f32[1,256], index: 2, kind: input, shape index: {}]
  %s3 = inlined_call_operand.vmem [shape: bf16[512,256], index: 3, kind: input, shape index: {}]
  %s4 = inlined_call_operand.vmem [shape: f32[1,512], index: 4, kind: input, shape index: {}]
  %s5 = inlined_call_operand.hbm [shape: f32[2,128,512], index: 5, kind: output, shape index: {}]
  %s6 = sld [smem:[#allocation0]]
  $region57: #{gpt_forward.5} parent=0
    _
  %s8 = ssub.s32 1, %s6
  %s9 = scalar_select 0, %s8, %s6
  $region1: #{gpt_forward.5} parent=0
    #allocation3 [shape = 'u8[524288]{0}', space=vmem, size = 0x80000, scoped, tag = 'output window, operand 0']
    #allocation4 [shape = 's32[2]{0}', space=sflag, size = 0x8, scoped, tag = 'scoped memory for gpt_forward.5']
    %10 = vsyncpa [#allocation4], 0
    %s11 = scalar_lea.sflag [#allocation4], 1
    %12 = vsyncpa %s11, 0
    loop: start=0, step=1, limit=4
    $region2: #{gpt_forward.5} parent=1 // loop_pre_header
      _
    $region3: #{gpt_forward.5} parent=1 // loop_header
      %s14 = sphi 0, %s18
      %p15 = scmp.ge.s32.totalorder %s14, 4
      %s21 = sphi 0, %s33
      %s22 = sphi 0, %s29
      %s23 = sphi 0, %s21
      %s24 = sphi 0, %s22
      %s25 = sphi 0, %s23
      %s26 = sphi 0, %s24
      %s36 = sphi 0, %s38
      %s39 = sphi 0, %s36
      %s40 = sphi 0, %s39
      %s56 = sphi 0, %s40
      %s60 = sphi 0, %s60
      %s62 = sphi 0, %s60
      %s63 = sphi 0, %s62
      %s77 = sphi 0, %s63
      %s81 = sphi 0, %s81
      %s83 = sphi 0, %s81
      %s84 = sphi 0, %s83
      %s98 = sphi 0, %s84
      %s104 = sphi 0, %s106
      %s107 = sphi 0, %s104
      %s108 = sphi 0, %s107
      %s124 = sphi 0, %s108
      %s130 = sphi 0, %s132
      %s133 = sphi 0, %s130
      %s134 = sphi 0, %s133
      %s150 = sphi 0, %s134
      %s158 = sphi 0, %s160
      %s161 = sphi 0, %s158
      %s162 = sphi 0, %s161
      %s178 = sphi 0, %s162
    $region4: #{gpt_forward.5} parent=1 // loop_header_branch
      %17 = sbr.rel (%p15) target = $region8
    $region5: #{gpt_forward.5} parent=1 // loop_body
      %s19 = ssub.s32 %s14, 1
      %s20 = ssub.s32 %s14, 2
      %s27 = sadd.s32 1, %s22
      %p28 = scmp.ge.s32.totalorder %s27, 1
      %s29 = scalar_select %p28, 0, %s27
      %s30 = sadd.s32 1, %s21
      %s31 = scalar_select %p28, %s30, %s21
      %p32 = scmp.ge.s32.totalorder %s31, 2
      %s33 = scalar_select %p32, 0, %s31
      %s34 = ssub.s32 %s21, %s33
      %p35 = scmp.eq.s32.totalorder %s34, 0
      %s37 = sadd.s32 %s36, 1
      %s38 = scalar_select %p35, %s36, %s37
      %p41 = pneg %p35
      %p42 = scmp.eq.s32.totalorder %s14, 1
      %p43 = por %p41, %p42
      %p44 = scmp.ne.s32.totalorder %s36, %s39
      %p45 = scmp.eq.s32.totalorder %s14, 0
      %p46 = por %p44, %p45
      %p47 = scmp.ne.s32.totalorder %s36, %s39
      %p48 = scmp.eq.s32.totalorder %s19, 1
      %p49 = por %p47, %p48
      %p50 = scmp.ne.s32.totalorder %s39, %s40
      %p51 = scmp.eq.s32.totalorder %s19, 0
      %p52 = por %p50, %p51
      %p53 = scmp.ne.s32.totalorder %s39, %s40
      %p54 = scmp.eq.s32.totalorder %s20, 1
      %p55 = por %p53, %p54
      %p57 = scmp.ne.s32.totalorder %s40, %s56
      %p58 = scmp.eq.s32.totalorder %s20, 0
      %p59 = por %p57, %p58
      %s61 = sadd.s32 %s60, 1
      %p64 = scmp.eq.s32.totalorder %s14, 1
      %p65 = scmp.ne.s32.totalorder %s60, %s62
      %p66 = scmp.eq.s32.totalorder %s14, 0
      %p67 = por %p65, %p66
      %p68 = scmp.ne.s32.totalorder %s60, %s62
      %p69 = scmp.eq.s32.totalorder %s19, 1
      %p70 = por %p68, %p69
      %p71 = scmp.ne.s32.totalorder %s62, %s63
      %p72 = scmp.eq.s32.totalorder %s19, 0
      %p73 = por %p71, %p72
      %p74 = scmp.ne.s32.totalorder %s62, %s63
      %p75 = scmp.eq.s32.totalorder %s20, 1
      %p76 = por %p74, %p75
      %p78 = scmp.ne.s32.totalorder %s63, %s77
      %p79 = scmp.eq.s32.totalorder %s20, 0
      %p80 = por %p78, %p79
      %s82 = sadd.s32 %s81, 1
      %p85 = scmp.eq.s32.totalorder %s14, 1
      %p86 = scmp.ne.s32.totalorder %s81, %s83
      %p87 = scmp.eq.s32.totalorder %s14, 0
      %p88 = por %p86, %p87
      %p89 = scmp.ne.s32.totalorder %s81, %s83
      %p90 = scmp.eq.s32.totalorder %s19, 1
      %p91 = por %p89, %p90
      %p92 = scmp.ne.s32.totalorder %s83, %s84
      %p93 = scmp.eq.s32.totalorder %s19, 0
      %p94 = por %p92, %p93
      %p95 = scmp.ne.s32.totalorder %s83, %s84
      %p96 = scmp.eq.s32.totalorder %s20, 1
      %p97 = por %p95, %p96
      %p99 = scmp.ne.s32.totalorder %s84, %s98
      %p100 = scmp.eq.s32.totalorder %s20, 0
      %p101 = por %p99, %p100
      %s102 = ssub.s32 %s22, %s29
      %p103 = scmp.eq.s32.totalorder %s102, 0
      %s105 = sadd.s32 %s104, 1
      %s106 = scalar_select %p103, %s104, %s105
      %p109 = pneg %p103
      %p110 = scmp.eq.s32.totalorder %s14, 1
      %p111 = por %p109, %p110
      %p112 = scmp.ne.s32.totalorder %s104, %s107
      %p113 = scmp.eq.s32.totalorder %s14, 0
      %p114 = por %p112, %p113
      %p115 = scmp.ne.s32.totalorder %s104, %s107
      %p116 = scmp.eq.s32.totalorder %s19, 1
      %p117 = por %p115, %p116
      %p118 = scmp.ne.s32.totalorder %s107, %s108
      %p119 = scmp.eq.s32.totalorder %s19, 0
      %p120 = por %p118, %p119
      %p121 = scmp.ne.s32.totalorder %s107, %s108
      %p122 = scmp.eq.s32.totalorder %s20, 1
      %p123 = por %p121, %p122
      %p125 = scmp.ne.s32.totalorder %s108, %s124
      %p126 = scmp.eq.s32.totalorder %s20, 0
      %p127 = por %p125, %p126
      %s128 = ssub.s32 %s22, %s29
      %p129 = scmp.eq.s32.totalorder %s128, 0
      %s131 = sadd.s32 %s130, 1
      %s132 = scalar_select %p129, %s130, %s131
      %p135 = pneg %p129
      %p136 = scmp.eq.s32.totalorder %s14, 1
      %p137 = por %p135, %p136
      %p138 = scmp.ne.s32.totalorder %s130, %s133
      %p139 = scmp.eq.s32.totalorder %s14, 0
      %p140 = por %p138, %p139
      %p141 = scmp.ne.s32.totalorder %s130, %s133
      %p142 = scmp.eq.s32.totalorder %s19, 1
      %p143 = por %p141, %p142
      %p144 = scmp.ne.s32.totalorder %s133, %s134
      %p145 = scmp.eq.s32.totalorder %s19, 0
      %p146 = por %p144, %p145
      %p147 = scmp.ne.s32.totalorder %s133, %s134
      %p148 = scmp.eq.s32.totalorder %s20, 1
      %p149 = por %p147, %p148
      %p151 = scmp.ne.s32.totalorder %s134, %s150
      %p152 = scmp.eq.s32.totalorder %s20, 0
      %p153 = por %p151, %p152
      %s154 = ssub.s32 %s21, %s33
      %s155 = ssub.s32 %s22, %s29
      %s156 = sor.u32 %s154, %s155
      %p157 = scmp.eq.s32.totalorder %s156, 0
      %s159 = sadd.s32 %s158, 1
      %s160 = scalar_select %p157, %s158, %s159
      %p163 = pneg %p157
      %p164 = scmp.eq.s32.totalorder %s14, 1
      %p165 = por %p163, %p164
      %p166 = scmp.ne.s32.totalorder %s158, %s161
      %p167 = scmp.eq.s32.totalorder %s14, 0
      %p168 = por %p166, %p167
      %p169 = scmp.ne.s32.totalorder %s158, %s161
      %p170 = scmp.eq.s32.totalorder %s19, 1
      %p171 = por %p169, %p170
      %p172 = scmp.ne.s32.totalorder %s161, %s162
      %p173 = scmp.eq.s32.totalorder %s19, 0
      %p174 = por %p172, %p173
      %p175 = scmp.ne.s32.totalorder %s161, %s162
      %p176 = scmp.eq.s32.totalorder %s20, 1
      %p177 = por %p175, %p176
      %p179 = scmp.ne.s32.totalorder %s162, %s178
      %p180 = scmp.eq.s32.totalorder %s20, 0
      %p181 = por %p179, %p180
      %p182 = scmp.le.s32.totalorder 1, %s14
      %p183 = scmp.lt.s32.totalorder %s14, 3
      %p184 = pnand %p182, %p183
      %p185 = pneg %p184
      // Predicated region
      $region9: #{gpt_forward.5} parent=5 // pred_check
        _
      $region10: #{gpt_forward.5} parent=5 // pred_check_branch
        %187 = sbr.rel (%p184) target = $region12
      $region11: #{gpt_forward.5} parent=5 // pred_region
        %s188 = ssub.s32 %s14, 1
        // Predicated region
        $region13: #{gpt_forward.5} parent=11 // pred_check
          %p189 = pneg %p73
        $region14: #{gpt_forward.5} parent=11 // pred_check_branch
          %191 = sbr.rel (%p189) target = $region16
        $region15: #{gpt_forward.5} parent=11 // pred_region
          _
        $region16: #{gpt_forward.5} parent=11 // pred_fallthru
          _
        // Predicated region
        $region17: #{gpt_forward.5} parent=11 // pred_check
          %p192 = pneg %p94
        $region18: #{gpt_forward.5} parent=11 // pred_check_branch
          %194 = sbr.rel (%p192) target = $region20
        $region19: #{gpt_forward.5} parent=11 // pred_region
          _
        $region20: #{gpt_forward.5} parent=11 // pred_fallthru
          _
        // Predicated region
        $region21: #{gpt_forward.5} parent=11 // pred_check
          %p195 = pneg %p120
        $region22: #{gpt_forward.5} parent=11 // pred_check_branch
          %197 = sbr.rel (%p195) target = $region24
        $region23: #{gpt_forward.5} parent=11 // pred_region
          %s198 = smul.u32 64, %s24
          %p199 = scmp.lt.s32.totalorder %s198, 63
          %s200 = scalar_select %p199, %s198, 63
          %s201 = smul.addr %s200, 2
          %s202 = smul.addr %s201, 4
          %s203 = scalar_lea.vmem %s3, %s202
          %s204 = smul.u32 64, %s24
        $region24: #{gpt_forward.5} parent=11 // pred_fallthru
          _
        // Predicated region
        $region25: #{gpt_forward.5} parent=11 // pred_check
          %p205 = pneg %p146
        $region26: #{gpt_forward.5} parent=11 // pred_check_branch
          %207 = sbr.rel (%p205) target = $region28
        $region27: #{gpt_forward.5} parent=11 // pred_region
          %s208 = smul.u32 4, %s24
          %p209 = scmp.lt.s32.totalorder %s208, 3
          %s210 = scalar_select %p209, %s208, 3
          %s211 = scalar_lea.vmem %s4, %s210
          %s212 = smul.u32 4, %s24
        $region28: #{gpt_forward.5} parent=11 // pred_fallthru
          _
      $region12: #{gpt_forward.5} parent=5 // pred_fallthru
        _
      %p213 = scmp.lt.s32.totalorder %s14, 2
      // Predicated region
      $region29: #{gpt_forward.5} parent=5 // pred_check
        %p214 = pneg %p213
      $region30: #{gpt_forward.5} parent=5 // pred_check_branch
        %216 = sbr.rel (%p214) target = $region32
      $region31: #{gpt_forward.5} parent=5 // pred_region
        // Predicated region
        $region33: #{gpt_forward.5} parent=31 // pred_check
          %p217 = pneg %p46
        $region34: #{gpt_forward.5} parent=31 // pred_check_branch
          %219 = sbr.rel (%p217) target = $region36
        $region35: #{gpt_forward.5} parent=31 // pred_region
          %p220 = scmp.lt.s32.totalorder %s21, 1
          %s221 = scalar_select %p220, %s21, 1
          %s222 = smul.addr %s221, 32
          %s223 = smul.addr %s222, 8
          %s224 = scalar_lea.vmem %s0, %s223
        $region36: #{gpt_forward.5} parent=31 // pred_fallthru
          _
      $region32: #{gpt_forward.5} parent=5 // pred_fallthru
        _
      %p225 = scmp.le.s32.totalorder 1, %s14
      %p226 = scmp.lt.s32.totalorder %s14, 3
      %p227 = pnand %p225, %p226
      %p228 = pneg %p227
      // Predicated region
      $region37: #{gpt_forward.5} parent=5 // pred_check
        _
      $region38: #{gpt_forward.5} parent=5 // pred_check_branch
        %230 = sbr.rel (%p227) target = $region40
      $region39: #{gpt_forward.5} parent=5 // pred_region
        %s231 = ssub.s32 %s14, 1
        %p232 = scmp.lt.s32.totalorder %s23, 1
        %s233 = scalar_select %p232, %s23, 1
        %s234 = smul.addr %s233, 32
        %s235 = smul.addr %s234, 8
        %s236 = scalar_lea.vmem %s0, %s235
        %p237 = pneg %p52
        %p238 = pneg %p49
        %p239 = pneg %p73
        %p240 = pneg %p70
        %p241 = pneg %p94
        %p242 = pneg %p91
        %s243 = smul.u32 64, %s24
        %p244 = scmp.lt.s32.totalorder %s243, 63
        %s245 = scalar_select %p244, %s243, 63
        %s246 = smul.addr %s245, 2
        %s247 = smul.addr %s246, 4
        %s248 = scalar_lea.vmem %s3, %s247
        %p249 = pneg %p120
        %p250 = pneg %p117
        %s251 = smul.u32 4, %s24
        %p252 = scmp.lt.s32.totalorder %s251, 3
        %s253 = scalar_select %p252, %s251, 3
        %s254 = scalar_lea.vmem %s4, %s253
        %p255 = pneg %p146
        %p256 = pneg %p143
        %p257 = pneg %p174
        %p258 = pneg %p171
        %s259 = sand.u32 %s161, 1
        %s260 = scalar_lea.sflag [#allocation4], %s259
        %s261 = sand.u32 %s161, 1
        %s262 = smul.addr %s261, 512
        %s263 = scalar_lea.vmem [#allocation3], %s262
        %p264 = scmp.lt.s32.totalorder %s23, 1
        %s265 = scalar_select %p264, %s23, 1
        %s266 = smul.addr %s265, 32
        %s267 = smul.addr %s266, 8
        %s268 = scalar_lea.vmem %s0, %s267
        %s269 = smul.u32 64, %s24
        %p270 = scmp.lt.s32.totalorder %s269, 63
        %s271 = scalar_select %p270, %s269, 63
        %s272 = smul.addr %s271, 2
        %s273 = smul.addr %s272, 4
        %s274 = scalar_lea.vmem %s3, %s273
        %s275 = smul.u32 64, %s24
        %s276 = smul.u32 4, %s24
        %p277 = scmp.lt.s32.totalorder %s276, 3
        %s278 = scalar_select %p277, %s276, 3
        %s279 = scalar_lea.vmem %s4, %s278
        %s280 = smul.u32 4, %s24
        %s281 = smul.u32 4, %s24
        %p282 = scmp.eq.s32.totalorder %s24, 0
        // Predicated region
        $region41: #{gpt_forward.5} parent=39 // pred_check
          %p283 = pneg %p282
        $region42: #{gpt_forward.5} parent=39 // pred_check_branch
          %285 = sbr.rel (%p283) target = $region44
        $region43: #{gpt_forward.5} parent=39 // pred_region
          %v286 = vld [vmem:[%s268] sm:$0xff]
          %v287 = vld [vmem:[%s268 + $0x8] sm:$0xff]
          %v288 = vld [vmem:[%s268 + $0x10] sm:$0xff]
          %v289 = vld [vmem:[%s268 + $0x18] sm:$0xff]
          %v290 = vld [vmem:[%s268 + $0x20] sm:$0xff]
          %v291 = vld [vmem:[%s268 + $0x28] sm:$0xff]
          %v292 = vld [vmem:[%s268 + $0x30] sm:$0xff]
          %v293 = vld [vmem:[%s268 + $0x38] sm:$0xff]
          %v294 = vld [vmem:[%s268 + $0x40] sm:$0xff]
          %v295 = vld [vmem:[%s268 + $0x48] sm:$0xff]
          %v296 = vld [vmem:[%s268 + $0x50] sm:$0xff]
          %v297 = vld [vmem:[%s268 + $0x58] sm:$0xff]
          %v298 = vld [vmem:[%s268 + $0x60] sm:$0xff]
          %v299 = vld [vmem:[%s268 + $0x68] sm:$0xff]
          %v300 = vld [vmem:[%s268 + $0x70] sm:$0xff]
          %v301 = vld [vmem:[%s268 + $0x78] sm:$0xff]
          %v302 = vld [vmem:[%s268 + $0x80] sm:$0xff]
          %v303 = vld [vmem:[%s268 + $0x88] sm:$0xff]
          %v304 = vld [vmem:[%s268 + $0x90] sm:$0xff]
          %v305 = vld [vmem:[%s268 + $0x98] sm:$0xff]
          %v306 = vld [vmem:[%s268 + $0xa0] sm:$0xff]
          %v307 = vld [vmem:[%s268 + $0xa8] sm:$0xff]
          %v308 = vld [vmem:[%s268 + $0xb0] sm:$0xff]
          %v309 = vld [vmem:[%s268 + $0xb8] sm:$0xff]
          %v310 = vld [vmem:[%s268 + $0xc0] sm:$0xff]
          %v311 = vld [vmem:[%s268 + $0xc8] sm:$0xff]
          %v312 = vld [vmem:[%s268 + $0xd0] sm:$0xff]
          %v313 = vld [vmem:[%s268 + $0xd8] sm:$0xff]
          %v314 = vld [vmem:[%s268 + $0xe0] sm:$0xff]
          %v315 = vld [vmem:[%s268 + $0xe8] sm:$0xff]
          %v316 = vld [vmem:[%s268 + $0xf0] sm:$0xff]
          %v317 = vld [vmem:[%s268 + $0xf8] sm:$0xff]
          %v318 = vld [vmem:[%s1] sm:$0x3]
          %v319 = vld [vmem:[%s2] sm:$0x3]
          %v320 = vadd.f32 %v286, %v287
          %321 = vadd.xlane.f32.xlu0 %v320
          %v322 = vpop.xlane.xlu0 %321
          %v323 = vadd.f32 %v288, %v289
          %324 = vadd.xlane.f32.xlu0 %v323
          %v325 = vpop.xlane.xlu0 %324
          %v326 = vadd.f32 %v290, %v291
          %327 = vadd.xlane.f32.xlu0 %v326
          %v328 = vpop.xlane.xlu0 %327
          %v329 = vadd.f32 %v292, %v293
          %330 = vadd.xlane.f32.xlu0 %v329
          %v331 = vpop.xlane.xlu0 %330
          %v332 = vadd.f32 %v294, %v295
          %333 = vadd.xlane.f32.xlu0 %v332
          %v334 = vpop.xlane.xlu0 %333
          %v335 = vadd.f32 %v296, %v297
          %336 = vadd.xlane.f32.xlu0 %v335
          %v337 = vpop.xlane.xlu0 %336
          %v338 = vadd.f32 %v298, %v299
          %339 = vadd.xlane.f32.xlu0 %v338
          %v340 = vpop.xlane.xlu0 %339
          %v341 = vadd.f32 %v300, %v301
          %342 = vadd.xlane.f32.xlu0 %v341
          %v343 = vpop.xlane.xlu0 %342
          %v344 = vadd.f32 %v302, %v303
          %345 = vadd.xlane.f32.xlu0 %v344
          %v346 = vpop.xlane.xlu0 %345
          %v347 = vadd.f32 %v304, %v305
          %348 = vadd.xlane.f32.xlu0 %v347
          %v349 = vpop.xlane.xlu0 %348
          %v350 = vadd.f32 %v306, %v307
          %351 = vadd.xlane.f32.xlu0 %v350
          %v352 = vpop.xlane.xlu0 %351
          %v353 = vadd.f32 %v308, %v309
          %354 = vadd.xlane.f32.xlu0 %v353
          %v355 = vpop.xlane.xlu0 %354
          %v356 = vadd.f32 %v310, %v311
          %357 = vadd.xlane.f32.xlu0 %v356
          %v358 = vpop.xlane.xlu0 %357
          %v359 = vadd.f32 %v312, %v313
          %360 = vadd.xlane.f32.xlu0 %v359
          %v361 = vpop.xlane.xlu0 %360
          %v362 = vadd.f32 %v314, %v315
          %363 = vadd.xlane.f32.xlu0 %v362
          %v364 = vpop.xlane.xlu0 %363
          %v365 = vadd.f32 %v316, %v317
          %366 = vadd.xlane.f32.xlu0 %v365
          %v367 = vpop.xlane.xlu0 %366
          %v368 = vrcp.pop 256.0
          %v369 = vmul.f32 %v322, %v368
          %v370 = vmul.f32 %v325, %v368
          %v371 = vmul.f32 %v328, %v368
          %v372 = vmul.f32 %v331, %v368
          %v373 = vmul.f32 %v334, %v368
          %v374 = vmul.f32 %v337, %v368
          %v375 = vmul.f32 %v340, %v368
          %v376 = vmul.f32 %v343, %v368
          %v377 = vmul.f32 %v346, %v368
          %v378 = vmul.f32 %v349, %v368
          %v379 = vmul.f32 %v352, %v368
          %v380 = vmul.f32 %v355, %v368
          %v381 = vmul.f32 %v358, %v368
          %v382 = vmul.f32 %v361, %v368
          %v383 = vmul.f32 %v364, %v368
          %v384 = vmul.f32 %v367, %v368
          %v385 = vsub.f32 %v286, %v369
          %v386 = vsub.f32 %v287, %v369
          %v387 = vsub.f32 %v288, %v370
          %v388 = vsub.f32 %v289, %v370
          %v389 = vsub.f32 %v290, %v371
          %v390 = vsub.f32 %v291, %v371
          %v391 = vsub.f32 %v292, %v372
          %v392 = vsub.f32 %v293, %v372
          %v393 = vsub.f32 %v294, %v373
          %v394 = vsub.f32 %v295, %v373
          %v395 = vsub.f32 %v296, %v374
          %v396 = vsub.f32 %v297, %v374
          %v397 = vsub.f32 %v298, %v375
          %v398 = vsub.f32 %v299, %v375
          %v399 = vsub.f32 %v300, %v376
          %v400 = vsub.f32 %v301, %v376
          %v401 = vsub.f32 %v302, %v377
          %v402 = vsub.f32 %v303, %v377
          %v403 = vsub.f32 %v304, %v378
          %v404 = vsub.f32 %v305, %v378
          %v405 = vsub.f32 %v306, %v379
          %v406 = vsub.f32 %v307, %v379
          %v407 = vsub.f32 %v308, %v380
          %v408 = vsub.f32 %v309, %v380
          %v409 = vsub.f32 %v310, %v381
          %v410 = vsub.f32 %v311, %v381
          %v411 = vsub.f32 %v312, %v382
          %v412 = vsub.f32 %v313, %v382
          %v413 = vsub.f32 %v314, %v383
          %v414 = vsub.f32 %v315, %v383
          %v415 = vsub.f32 %v316, %v384
          %v416 = vsub.f32 %v317, %v384
          %v417 = vmul.f32 %v385, %v385
          %v418 = vmul.f32 %v386, %v386
          %v419 = vmul.f32 %v387, %v387
          %v420 = vmul.f32 %v388, %v388
          %v421 = vmul.f32 %v389, %v389
          %v422 = vmul.f32 %v390, %v390
          %v423 = vmul.f32 %v391, %v391
          %v424 = vmul.f32 %v392, %v392
          %v425 = vmul.f32 %v393, %v393
          %v426 = vmul.f32 %v394, %v394
          %v427 = vmul.f32 %v395, %v395
          %v428 = vmul.f32 %v396, %v396
          %v429 = vmul.f32 %v397, %v397
          %v430 = vmul.f32 %v398, %v398
          %v431 = vmul.f32 %v399, %v399
          %v432 = vmul.f32 %v400, %v400
          %v433 = vmul.f32 %v401, %v401
          %v434 = vmul.f32 %v402, %v402
          %v435 = vmul.f32 %v403, %v403
          %v436 = vmul.f32 %v404, %v404
          %v437 = vmul.f32 %v405, %v405
          %v438 = vmul.f32 %v406, %v406
          %v439 = vmul.f32 %v407, %v407
          %v440 = vmul.f32 %v408, %v408
          %v441 = vmul.f32 %v409, %v409
          %v442 = vmul.f32 %v410, %v410
          %v443 = vmul.f32 %v411, %v411
          %v444 = vmul.f32 %v412, %v412
          %v445 = vmul.f32 %v413, %v413
          %v446 = vmul.f32 %v414, %v414
          %v447 = vmul.f32 %v415, %v415
          %v448 = vmul.f32 %v416, %v416
          %v449 = vadd.f32 %v417, %v418
          %450 = vadd.xlane.f32.xlu0 %v449
          %v451 = vpop.xlane.xlu0 %450
          %v452 = vadd.f32 %v419, %v420
          %453 = vadd.xlane.f32.xlu0 %v452
          %v454 = vpop.xlane.xlu0 %453
          %v455 = vadd.f32 %v421, %v422
          %456 = vadd.xlane.f32.xlu0 %v455
          %v457 = vpop.xlane.xlu0 %456
          %v458 = vadd.f32 %v423, %v424
          %459 = vadd.xlane.f32.xlu0 %v458
          %v460 = vpop.xlane.xlu0 %459
          %v461 = vadd.f32 %v425, %v426
          %462 = vadd.xlane.f32.xlu0 %v461
          %v463 = vpop.xlane.xlu0 %462
          %v464 = vadd.f32 %v427, %v428
          %465 = vadd.xlane.f32.xlu0 %v464
          %v466 = vpop.xlane.xlu0 %465
          %v467 = vadd.f32 %v429, %v430
          %468 = vadd.xlane.f32.xlu0 %v467
          %v469 = vpop.xlane.xlu0 %468
          %v470 = vadd.f32 %v431, %v432
          %471 = vadd.xlane.f32.xlu0 %v470
          %v472 = vpop.xlane.xlu0 %471
          %v473 = vadd.f32 %v433, %v434
          %474 = vadd.xlane.f32.xlu0 %v473
          %v475 = vpop.xlane.xlu0 %474
          %v476 = vadd.f32 %v435, %v436
          %477 = vadd.xlane.f32.xlu0 %v476
          %v478 = vpop.xlane.xlu0 %477
          %v479 = vadd.f32 %v437, %v438
          %480 = vadd.xlane.f32.xlu0 %v479
          %v481 = vpop.xlane.xlu0 %480
          %v482 = vadd.f32 %v439, %v440
          %483 = vadd.xlane.f32.xlu0 %v482
          %v484 = vpop.xlane.xlu0 %483
          %v485 = vadd.f32 %v441, %v442
          %486 = vadd.xlane.f32.xlu0 %v485
          %v487 = vpop.xlane.xlu0 %486
          %v488 = vadd.f32 %v443, %v444
          %489 = vadd.xlane.f32.xlu0 %v488
          %v490 = vpop.xlane.xlu0 %489
          %v491 = vadd.f32 %v445, %v446
          %492 = vadd.xlane.f32.xlu0 %v491
          %v493 = vpop.xlane.xlu0 %492
          %v494 = vadd.f32 %v447, %v448
          %495 = vadd.xlane.f32.xlu0 %v494
          %v496 = vpop.xlane.xlu0 %495
          %v497 = vmul.f32 %v451, %v368
          %v498 = vmul.f32 %v454, %v368
          %v499 = vmul.f32 %v457, %v368
          %v500 = vmul.f32 %v460, %v368
          %v501 = vmul.f32 %v463, %v368
          %v502 = vmul.f32 %v466, %v368
          %v503 = vmul.f32 %v469, %v368
          %v504 = vmul.f32 %v472, %v368
          %v505 = vmul.f32 %v475, %v368
          %v506 = vmul.f32 %v478, %v368
          %v507 = vmul.f32 %v481, %v368
          %v508 = vmul.f32 %v484, %v368
          %v509 = vmul.f32 %v487, %v368
          %v510 = vmul.f32 %v490, %v368
          %v511 = vmul.f32 %v493, %v368
          %v512 = vmul.f32 %v496, %v368
          %v513 = vadd.f32 %v497, 1e-05
          %v514 = vadd.f32 %v498, 1e-05
          %v515 = vadd.f32 %v499, 1e-05
          %v516 = vadd.f32 %v500, 1e-05
          %v517 = vadd.f32 %v501, 1e-05
          %v518 = vadd.f32 %v502, 1e-05
          %v519 = vadd.f32 %v503, 1e-05
          %v520 = vadd.f32 %v504, 1e-05
          %v521 = vadd.f32 %v505, 1e-05
          %v522 = vadd.f32 %v506, 1e-05
          %v523 = vadd.f32 %v507, 1e-05
          %v524 = vadd.f32 %v508, 1e-05
          %v525 = vadd.f32 %v509, 1e-05
          %v526 = vadd.f32 %v510, 1e-05
          %v527 = vadd.f32 %v511, 1e-05
          %v528 = vadd.f32 %v512, 1e-05
          %v529 = vrsqrt.pop %v513
          %v530 = vrsqrt.pop %v514
          %v531 = vrsqrt.pop %v515
          %v532 = vrsqrt.pop %v516
          %v533 = vrsqrt.pop %v517
          %v534 = vrsqrt.pop %v518
          %v535 = vrsqrt.pop %v519
          %v536 = vrsqrt.pop %v520
          %v537 = vrsqrt.pop %v521
          %v538 = vrsqrt.pop %v522
          %v539 = vrsqrt.pop %v523
          %v540 = vrsqrt.pop %v524
          %v541 = vrsqrt.pop %v525
          %v542 = vrsqrt.pop %v526
          %v543 = vrsqrt.pop %v527
          %v544 = vrsqrt.pop %v528
          %v545 = vmul.f32 %v385, %v529
          %v546 = vmul.f32 %v386, %v529
          %v547 = vmul.f32 %v387, %v530
          %v548 = vmul.f32 %v388, %v530
          %v549 = vmul.f32 %v389, %v531
          %v550 = vmul.f32 %v390, %v531
          %v551 = vmul.f32 %v391, %v532
          %v552 = vmul.f32 %v392, %v532
          %v553 = vmul.f32 %v393, %v533
          %v554 = vmul.f32 %v394, %v533
          %v555 = vmul.f32 %v395, %v534
          %v556 = vmul.f32 %v396, %v534
          %v557 = vmul.f32 %v397, %v535
          %v558 = vmul.f32 %v398, %v535
          %v559 = vmul.f32 %v399, %v536
          %v560 = vmul.f32 %v400, %v536
          %v561 = vmul.f32 %v401, %v537
          %v562 = vmul.f32 %v402, %v537
          %v563 = vmul.f32 %v403, %v538
          %v564 = vmul.f32 %v404, %v538
          %v565 = vmul.f32 %v405, %v539
          %v566 = vmul.f32 %v406, %v539
          %v567 = vmul.f32 %v407, %v540
          %v568 = vmul.f32 %v408, %v540
          %v569 = vmul.f32 %v409, %v541
          %v570 = vmul.f32 %v410, %v541
          %v571 = vmul.f32 %v411, %v542
          %v572 = vmul.f32 %v412, %v542
          %v573 = vmul.f32 %v413, %v543
          %v574 = vmul.f32 %v414, %v543
          %v575 = vmul.f32 %v415, %v544
          %v576 = vmul.f32 %v416, %v544
          %v578 = vlaneseq
          %v579 = vshrl.u32 %v578, 7
          %v580 = vsub.s32 0, %v579
          %v581 = vrot.slane %v318, %v580
          %v582 = vlaneseq
          %v583 = vshrl.u32 %v582, 7
          %v584 = vsub.s32 1, %v583
          %v585 = vrot.slane %v318, %v584
          %v588 = vmul.f32 %v545, %v581
          %v589 = vmul.f32 %v546, %v585
          %v590 = vmul.f32 %v547, %v581
          %v591 = vmul.f32 %v548, %v585
          %v592 = vmul.f32 %v549, %v581
          %v593 = vmul.f32 %v550, %v585
          %v594 = vmul.f32 %v551, %v581
          %v595 = vmul.f32 %v552, %v585
          %v596 = vmul.f32 %v553, %v581
          %v597 = vmul.f32 %v554, %v585
          %v598 = vmul.f32 %v555, %v581
          %v599 = vmul.f32 %v556, %v585
          %v600 = vmul.f32 %v557, %v581
          %v601 = vmul.f32 %v558, %v585
          %v602 = vmul.f32 %v559, %v581
          %v603 = vmul.f32 %v560, %v585
          %v604 = vmul.f32 %v561, %v581
          %v605 = vmul.f32 %v562, %v585
          %v606 = vmul.f32 %v563, %v581
          %v607 = vmul.f32 %v564, %v585
          %v608 = vmul.f32 %v565, %v581
          %v609 = vmul.f32 %v566, %v585
          %v610 = vmul.f32 %v567, %v581
          %v611 = vmul.f32 %v568, %v585
          %v612 = vmul.f32 %v569, %v581
          %v613 = vmul.f32 %v570, %v585
          %v614 = vmul.f32 %v571, %v581
          %v615 = vmul.f32 %v572, %v585
          %v616 = vmul.f32 %v573, %v581
          %v617 = vmul.f32 %v574, %v585
          %v618 = vmul.f32 %v575, %v581
          %v619 = vmul.f32 %v576, %v585
          %v621 = vlaneseq
          %v622 = vshrl.u32 %v621, 7
          %v623 = vsub.s32 0, %v622
          %v624 = vrot.slane %v319, %v623
          %v625 = vlaneseq
          %v626 = vshrl.u32 %v625, 7
          %v627 = vsub.s32 1, %v626
          %v628 = vrot.slane %v319, %v627
          %v631 = vadd.f32 %v588, %v624
          %v632 = vadd.f32 %v589, %v628
          %v633 = vadd.f32 %v590, %v624
          %v634 = vadd.f32 %v591, %v628
          %v635 = vadd.f32 %v592, %v624
          %v636 = vadd.f32 %v593, %v628
          %v637 = vadd.f32 %v594, %v624
          %v638 = vadd.f32 %v595, %v628
          %v639 = vadd.f32 %v596, %v624
          %v640 = vadd.f32 %v597, %v628
          %v641 = vadd.f32 %v598, %v624
          %v642 = vadd.f32 %v599, %v628
          %v643 = vadd.f32 %v600, %v624
          %v644 = vadd.f32 %v601, %v628
          %v645 = vadd.f32 %v602, %v624
          %v646 = vadd.f32 %v603, %v628
          %v647 = vadd.f32 %v604, %v624
          %v648 = vadd.f32 %v605, %v628
          %v649 = vadd.f32 %v606, %v624
          %v650 = vadd.f32 %v607, %v628
          %v651 = vadd.f32 %v608, %v624
          %v652 = vadd.f32 %v609, %v628
          %v653 = vadd.f32 %v610, %v624
          %v654 = vadd.f32 %v611, %v628
          %v655 = vadd.f32 %v612, %v624
          %v656 = vadd.f32 %v613, %v628
          %v657 = vadd.f32 %v614, %v624
          %v658 = vadd.f32 %v615, %v628
          %v659 = vadd.f32 %v616, %v624
          %v660 = vadd.f32 %v617, %v628
          %v661 = vadd.f32 %v618, %v624
          %v662 = vadd.f32 %v619, %v628
          %v663 = vpack.c.bf16 %v633, %v631
          %v664 = vpack.c.bf16 %v634, %v632
          %v665 = vpack.c.bf16 %v637, %v635
          %v666 = vpack.c.bf16 %v638, %v636
          %v667 = vpack.c.bf16 %v641, %v639
          %v668 = vpack.c.bf16 %v642, %v640
          %v669 = vpack.c.bf16 %v645, %v643
          %v670 = vpack.c.bf16 %v646, %v644
          %v671 = vpack.c.bf16 %v649, %v647
          %v672 = vpack.c.bf16 %v650, %v648
          %v673 = vpack.c.bf16 %v653, %v651
          %v674 = vpack.c.bf16 %v654, %v652
          %v675 = vpack.c.bf16 %v657, %v655
          %v676 = vpack.c.bf16 %v658, %v656
          %v677 = vpack.c.bf16 %v661, %v659
          %v678 = vpack.c.bf16 %v662, %v660
          %v695 = vunpack.c.l.b16 %v663
          %v696 = vunpack.c.l.b16 %v664
          %v697 = vunpack.c.h.b16 %v663
          %v698 = vunpack.c.h.b16 %v664
          %v699 = vunpack.c.l.b16 %v665
          %v700 = vunpack.c.l.b16 %v666
          %v701 = vunpack.c.h.b16 %v665
          %v702 = vunpack.c.h.b16 %v666
          %v703 = vunpack.c.l.b16 %v667
          %v704 = vunpack.c.l.b16 %v668
          %v705 = vunpack.c.h.b16 %v667
          %v706 = vunpack.c.h.b16 %v668
          %v707 = vunpack.c.l.b16 %v669
          %v708 = vunpack.c.l.b16 %v670
          %v709 = vunpack.c.h.b16 %v669
          %v710 = vunpack.c.h.b16 %v670
          %v711 = vunpack.c.l.b16 %v671
          %v712 = vunpack.c.l.b16 %v672
          %v713 = vunpack.c.h.b16 %v671
          %v714 = vunpack.c.h.b16 %v672
          %v715 = vunpack.c.l.b16 %v673
          %v716 = vunpack.c.l.b16 %v674
          %v717 = vunpack.c.h.b16 %v673
          %v718 = vunpack.c.h.b16 %v674
          %v719 = vunpack.c.l.b16 %v675
          %v720 = vunpack.c.l.b16 %v676
          %v721 = vunpack.c.h.b16 %v675
          %v722 = vunpack.c.h.b16 %v676
          %v723 = vunpack.c.l.b16 %v677
          %v724 = vunpack.c.l.b16 %v678
          %v725 = vunpack.c.h.b16 %v677
          %v726 = vunpack.c.h.b16 %v678
          %v727 = vpack.c.b16 %v696, %v695
          %v728 = vpack.c.b16 %v698, %v697
          %v729 = vpack.c.b16 %v700, %v699
          %v730 = vpack.c.b16 %v702, %v701
          %v731 = vpack.c.b16 %v704, %v703
          %v732 = vpack.c.b16 %v706, %v705
          %v733 = vpack.c.b16 %v708, %v707
          %v734 = vpack.c.b16 %v710, %v709
          %v735 = vpack.c.b16 %v712, %v711
          %v736 = vpack.c.b16 %v714, %v713
          %v737 = vpack.c.b16 %v716, %v715
          %v738 = vpack.c.b16 %v718, %v717
          %v739 = vpack.c.b16 %v720, %v719
          %v740 = vpack.c.b16 %v722, %v721
          %v741 = vpack.c.b16 %v724, %v723
          %v742 = vpack.c.b16 %v726, %v725
          %759 = vst [vmem:[#allocation2] sm:$0xff] %v727
          %760 = vst [vmem:[#allocation2 + $0x8] sm:$0xff] %v728
          %761 = vst [vmem:[#allocation2 + $0x10] sm:$0xff] %v729
          %762 = vst [vmem:[#allocation2 + $0x18] sm:$0xff] %v730
          %763 = vst [vmem:[#allocation2 + $0x20] sm:$0xff] %v731
          %764 = vst [vmem:[#allocation2 + $0x28] sm:$0xff] %v732
          %765 = vst [vmem:[#allocation2 + $0x30] sm:$0xff] %v733
          %766 = vst [vmem:[#allocation2 + $0x38] sm:$0xff] %v734
          %767 = vst [vmem:[#allocation2 + $0x40] sm:$0xff] %v735
          %768 = vst [vmem:[#allocation2 + $0x48] sm:$0xff] %v736
          %769 = vst [vmem:[#allocation2 + $0x50] sm:$0xff] %v737
          %770 = vst [vmem:[#allocation2 + $0x58] sm:$0xff] %v738
          %771 = vst [vmem:[#allocation2 + $0x60] sm:$0xff] %v739
          %772 = vst [vmem:[#allocation2 + $0x68] sm:$0xff] %v740
          %773 = vst [vmem:[#allocation2 + $0x70] sm:$0xff] %v741
          %774 = vst [vmem:[#allocation2 + $0x78] sm:$0xff] %v742
        $region44: #{gpt_forward.5} parent=39 // pred_fallthru
          _
        %v775 = vld [vmem:[#allocation2] sm:$0xff]
        %v776 = vld [vmem:[#allocation2 + $0x8] sm:$0xff]
        %v777 = vld [vmem:[#allocation2 + $0x10] sm:$0xff]
        %v778 = vld [vmem:[#allocation2 + $0x18] sm:$0xff]
        %v779 = vld [vmem:[#allocation2 + $0x20] sm:$0xff]
        %v780 = vld [vmem:[#allocation2 + $0x28] sm:$0xff]
        %v781 = vld [vmem:[#allocation2 + $0x30] sm:$0xff]
        %v782 = vld [vmem:[#allocation2 + $0x38] sm:$0xff]
        %v783 = vld [vmem:[#allocation2 + $0x40] sm:$0xff]
        %v784 = vld [vmem:[#allocation2 + $0x48] sm:$0xff]
        %v785 = vld [vmem:[#allocation2 + $0x50] sm:$0xff]
        %v786 = vld [vmem:[#allocation2 + $0x58] sm:$0xff]
        %v787 = vld [vmem:[#allocation2 + $0x60] sm:$0xff]
        %v788 = vld [vmem:[#allocation2 + $0x68] sm:$0xff]
        %v789 = vld [vmem:[#allocation2 + $0x70] sm:$0xff]
        %v790 = vld [vmem:[#allocation2 + $0x78] sm:$0xff]
        %v791 = vld [vmem:[%s274] sm:$0xff]
        %v792 = vld [vmem:[%s274 + $0x8] sm:$0xff]
        %v793 = vld [vmem:[%s274 + $0x10] sm:$0xff]
        %v794 = vld [vmem:[%s274 + $0x18] sm:$0xff]
        %v795 = vld [vmem:[%s274 + $0x20] sm:$0xff]
        %v796 = vld [vmem:[%s274 + $0x28] sm:$0xff]
        %v797 = vld [vmem:[%s274 + $0x30] sm:$0xff]
        %v798 = vld [vmem:[%s274 + $0x38] sm:$0xff]
        %v799 = vld [vmem:[%s274 + $0x40] sm:$0xff]
        %v800 = vld [vmem:[%s274 + $0x48] sm:$0xff]
        %v801 = vld [vmem:[%s274 + $0x50] sm:$0xff]
        %v802 = vld [vmem:[%s274 + $0x58] sm:$0xff]
        %v803 = vld [vmem:[%s274 + $0x60] sm:$0xff]
        %v804 = vld [vmem:[%s274 + $0x68] sm:$0xff]
        %v805 = vld [vmem:[%s274 + $0x70] sm:$0xff]
        %v806 = vld [vmem:[%s274 + $0x78] sm:$0xff]
        %v807 = vld [vmem:[%s274 + $0x80] sm:$0xff]
        %v808 = vld [vmem:[%s274 + $0x88] sm:$0xff]
        %v809 = vld [vmem:[%s274 + $0x90] sm:$0xff]
        %v810 = vld [vmem:[%s274 + $0x98] sm:$0xff]
        %v811 = vld [vmem:[%s274 + $0xa0] sm:$0xff]
        %v812 = vld [vmem:[%s274 + $0xa8] sm:$0xff]
        %v813 = vld [vmem:[%s274 + $0xb0] sm:$0xff]
        %v814 = vld [vmem:[%s274 + $0xb8] sm:$0xff]
        %v815 = vld [vmem:[%s274 + $0xc0] sm:$0xff]
        %v816 = vld [vmem:[%s274 + $0xc8] sm:$0xff]
        %v817 = vld [vmem:[%s274 + $0xd0] sm:$0xff]
        %v818 = vld [vmem:[%s274 + $0xd8] sm:$0xff]
        %v819 = vld [vmem:[%s274 + $0xe0] sm:$0xff]
        %v820 = vld [vmem:[%s274 + $0xe8] sm:$0xff]
        %v821 = vld [vmem:[%s274 + $0xf0] sm:$0xff]
        %v822 = vld [vmem:[%s274 + $0xf8] sm:$0xff]
        %v823 = vld [vmem:[%s274 + $0x100] sm:$0xff]
        %v824 = vld [vmem:[%s274 + $0x108] sm:$0xff]
        %v825 = vld [vmem:[%s274 + $0x110] sm:$0xff]
        %v826 = vld [vmem:[%s274 + $0x118] sm:$0xff]
        %v827 = vld [vmem:[%s274 + $0x120] sm:$0xff]
        %v828 = vld [vmem:[%s274 + $0x128] sm:$0xff]
        %v829 = vld [vmem:[%s274 + $0x130] sm:$0xff]
        %v830 = vld [vmem:[%s274 + $0x138] sm:$0xff]
        %v831 = vld [vmem:[%s274 + $0x140] sm:$0xff]
        %v832 = vld [vmem:[%s274 + $0x148] sm:$0xff]
        %v833 = vld [vmem:[%s274 + $0x150] sm:$0xff]
        %v834 = vld [vmem:[%s274 + $0x158] sm:$0xff]
        %v835 = vld [vmem:[%s274 + $0x160] sm:$0xff]
        %v836 = vld [vmem:[%s274 + $0x168] sm:$0xff]
        %v837 = vld [vmem:[%s274 + $0x170] sm:$0xff]
        %v838 = vld [vmem:[%s274 + $0x178] sm:$0xff]
        %v839 = vld [vmem:[%s274 + $0x180] sm:$0xff]
        %v840 = vld [vmem:[%s274 + $0x188] sm:$0xff]
        %v841 = vld [vmem:[%s274 + $0x190] sm:$0xff]
        %v842 = vld [vmem:[%s274 + $0x198] sm:$0xff]
        %v843 = vld [vmem:[%s274 + $0x1a0] sm:$0xff]
        %v844 = vld [vmem:[%s274 + $0x1a8] sm:$0xff]
        %v845 = vld [vmem:[%s274 + $0x1b0] sm:$0xff]
        %v846 = vld [vmem:[%s274 + $0x1b8] sm:$0xff]
        %v847 = vld [vmem:[%s274 + $0x1c0] sm:$0xff]
        %v848 = vld [vmem:[%s274 + $0x1c8] sm:$0xff]
        %v849 = vld [vmem:[%s274 + $0x1d0] sm:$0xff]
        %v850 = vld [vmem:[%s274 + $0x1d8] sm:$0xff]
        %v851 = vld [vmem:[%s274 + $0x1e0] sm:$0xff]
        %v852 = vld [vmem:[%s274 + $0x1e8] sm:$0xff]
        %v853 = vld [vmem:[%s274 + $0x1f0] sm:$0xff]
        %v854 = vld [vmem:[%s274 + $0x1f8] sm:$0xff]
        %v855 = vld [vmem:[%s279] sm:$0xf]
        %v857 = vlaneseq
        %v858 = vshrl.u32 %v857, 7
        %v859 = vsub.s32 0, %v858
        %v860 = vrot.slane %v855, %v859
        %v861 = vlaneseq
        %v862 = vshrl.u32 %v861, 7
        %v863 = vsub.s32 1, %v862
        %v864 = vrot.slane %v855, %v863
        %v865 = vlaneseq
        %v866 = vshrl.u32 %v865, 7
        %v867 = vsub.s32 2, %v866
        %v868 = vrot.slane %v855, %v867
        %v869 = vlaneseq
        %v870 = vshrl.u32 %v869, 7
        %v871 = vsub.s32 3, %v870
        %v872 = vrot.slane %v855, %v871
        %v893 = vunpack.c.l.b16 %v775
        %v894 = vunpack.c.h.b16 %v775
        %v895 = vunpack.c.l.b16 %v776
        %v896 = vunpack.c.h.b16 %v776
        %v897 = vunpack.c.l.b16 %v777
        %v898 = vunpack.c.h.b16 %v777
        %v899 = vunpack.c.l.b16 %v778
        %v900 = vunpack.c.h.b16 %v778
        %v901 = vunpack.c.l.b16 %v779
        %v902 = vunpack.c.h.b16 %v779
        %v903 = vunpack.c.l.b16 %v780
        %v904 = vunpack.c.h.b16 %v780
        %v905 = vunpack.c.l.b16 %v781
        %v906 = vunpack.c.h.b16 %v781
        %v907 = vunpack.c.l.b16 %v782
        %v908 = vunpack.c.h.b16 %v782
        %v909 = vunpack.c.l.b16 %v783
        %v910 = vunpack.c.h.b16 %v783
        %v911 = vunpack.c.l.b16 %v784
        %v912 = vunpack.c.h.b16 %v784
        %v913 = vunpack.c.l.b16 %v785
        %v914 = vunpack.c.h.b16 %v785
        %v915 = vunpack.c.l.b16 %v786
        %v916 = vunpack.c.h.b16 %v786
        %v917 = vunpack.c.l.b16 %v787
        %v918 = vunpack.c.h.b16 %v787
        %v919 = vunpack.c.l.b16 %v788
        %v920 = vunpack.c.h.b16 %v788
        %v921 = vunpack.c.l.b16 %v789
        %v922 = vunpack.c.h.b16 %v789
        %v923 = vunpack.c.l.b16 %v790
        %v924 = vunpack.c.h.b16 %v790
        %v925 = vpack.c.b16 %v895, %v893
        %v926 = vpack.c.b16 %v896, %v894
        %v927 = vpack.c.b16 %v899, %v897
        %v928 = vpack.c.b16 %v900, %v898
        %v929 = vpack.c.b16 %v903, %v901
        %v930 = vpack.c.b16 %v904, %v902
        %v931 = vpack.c.b16 %v907, %v905
        %v932 = vpack.c.b16 %v908, %v906
        %v933 = vpack.c.b16 %v911, %v909
        %v934 = vpack.c.b16 %v912, %v910
        %v935 = vpack.c.b16 %v915, %v913
        %v936 = vpack.c.b16 %v916, %v914
        %v937 = vpack.c.b16 %v919, %v917
        %v938 = vpack.c.b16 %v920, %v918
        %v939 = vpack.c.b16 %v923, %v921
        %v940 = vpack.c.b16 %v924, %v922
        %v1021 = vunpack.c.l.b16 %v791
        %v1022 = vunpack.c.h.b16 %v791
        %v1023 = vunpack.c.l.b16 %v792
        %v1024 = vunpack.c.h.b16 %v792
        %v1025 = vunpack.c.l.b16 %v793
        %v1026 = vunpack.c.h.b16 %v793
        %v1027 = vunpack.c.l.b16 %v794
        %v1028 = vunpack.c.h.b16 %v794
        %v1029 = vunpack.c.l.b16 %v795
        %v1030 = vunpack.c.h.b16 %v795
        %v1031 = vunpack.c.l.b16 %v796
        %v1032 = vunpack.c.h.b16 %v796
        %v1033 = vunpack.c.l.b16 %v797
        %v1034 = vunpack.c.h.b16 %v797
        %v1035 = vunpack.c.l.b16 %v798
        %v1036 = vunpack.c.h.b16 %v798
        %v1037 = vunpack.c.l.b16 %v799
        %v1038 = vunpack.c.h.b16 %v799
        %v1039 = vunpack.c.l.b16 %v800
        %v1040 = vunpack.c.h.b16 %v800
        %v1041 = vunpack.c.l.b16 %v801
        %v1042 = vunpack.c.h.b16 %v801
        %v1043 = vunpack.c.l.b16 %v802
        %v1044 = vunpack.c.h.b16 %v802
        %v1045 = vunpack.c.l.b16 %v803
        %v1046 = vunpack.c.h.b16 %v803
        %v1047 = vunpack.c.l.b16 %v804
        %v1048 = vunpack.c.h.b16 %v804
        %v1049 = vunpack.c.l.b16 %v805
        %v1050 = vunpack.c.h.b16 %v805
        %v1051 = vunpack.c.l.b16 %v806
        %v1052 = vunpack.c.h.b16 %v806
        %v1053 = vunpack.c.l.b16 %v807
        %v1054 = vunpack.c.h.b16 %v807
        %v1055 = vunpack.c.l.b16 %v808
        %v1056 = vunpack.c.h.b16 %v808
        %v1057 = vunpack.c.l.b16 %v809
        %v1058 = vunpack.c.h.b16 %v809
        %v1059 = vunpack.c.l.b16 %v810
        %v1060 = vunpack.c.h.b16 %v810
        %v1061 = vunpack.c.l.b16 %v811
        %v1062 = vunpack.c.h.b16 %v811
        %v1063 = vunpack.c.l.b16 %v812
        %v1064 = vunpack.c.h.b16 %v812
        %v1065 = vunpack.c.l.b16 %v813
        %v1066 = vunpack.c.h.b16 %v813
        %v1067 = vunpack.c.l.b16 %v814
        %v1068 = vunpack.c.h.b16 %v814
        %v1069 = vunpack.c.l.b16 %v815
        %v1070 = vunpack.c.h.b16 %v815
        %v1071 = vunpack.c.l.b16 %v816
        %v1072 = vunpack.c.h.b16 %v816
        %v1073 = vunpack.c.l.b16 %v817
        %v1074 = vunpack.c.h.b16 %v817
        %v1075 = vunpack.c.l.b16 %v818
        %v1076 = vunpack.c.h.b16 %v818
        %v1077 = vunpack.c.l.b16 %v819
        %v1078 = vunpack.c.h.b16 %v819
        %v1079 = vunpack.c.l.b16 %v820
        %v1080 = vunpack.c.h.b16 %v820
        %v1081 = vunpack.c.l.b16 %v821
        %v1082 = vunpack.c.h.b16 %v821
        %v1083 = vunpack.c.l.b16 %v822
        %v1084 = vunpack.c.h.b16 %v822
        %v1085 = vunpack.c.l.b16 %v823
        %v1086 = vunpack.c.h.b16 %v823
        %v1087 = vunpack.c.l.b16 %v824
        %v1088 = vunpack.c.h.b16 %v824
        %v1089 = vunpack.c.l.b16 %v825
        %v1090 = vunpack.c.h.b16 %v825
        %v1091 = vunpack.c.l.b16 %v826
        %v1092 = vunpack.c.h.b16 %v826
        %v1093 = vunpack.c.l.b16 %v827
        %v1094 = vunpack.c.h.b16 %v827
        %v1095 = vunpack.c.l.b16 %v828
        %v1096 = vunpack.c.h.b16 %v828
        %v1097 = vunpack.c.l.b16 %v829
        %v1098 = vunpack.c.h.b16 %v829
        %v1099 = vunpack.c.l.b16 %v830
        %v1100 = vunpack.c.h.b16 %v830
        %v1101 = vunpack.c.l.b16 %v831
        %v1102 = vunpack.c.h.b16 %v831
        %v1103 = vunpack.c.l.b16 %v832
        %v1104 = vunpack.c.h.b16 %v832
        %v1105 = vunpack.c.l.b16 %v833
        %v1106 = vunpack.c.h.b16 %v833
        %v1107 = vunpack.c.l.b16 %v834
        %v1108 = vunpack.c.h.b16 %v834
        %v1109 = vunpack.c.l.b16 %v835
        %v1110 = vunpack.c.h.b16 %v835
        %v1111 = vunpack.c.l.b16 %v836
        %v1112 = vunpack.c.h.b16 %v836
        %v1113 = vunpack.c.l.b16 %v837
        %v1114 = vunpack.c.h.b16 %v837
        %v1115 = vunpack.c.l.b16 %v838
        %v1116 = vunpack.c.h.b16 %v838
        %v1117 = vunpack.c.l.b16 %v839
        %v1118 = vunpack.c.h.b16 %v839
        %v1119 = vunpack.c.l.b16 %v840
        %v1120 = vunpack.c.h.b16 %v840
        %v1121 = vunpack.c.l.b16 %v841
        %v1122 = vunpack.c.h.b16 %v841
        %v1123 = vunpack.c.l.b16 %v842
        %v1124 = vunpack.c.h.b16 %v842
        %v1125 = vunpack.c.l.b16 %v843
        %v1126 = vunpack.c.h.b16 %v843
        %v1127 = vunpack.c.l.b16 %v844
        %v1128 = vunpack.c.h.b16 %v844
        %v1129 = vunpack.c.l.b16 %v845
        %v1130 = vunpack.c.h.b16 %v845
        %v1131 = vunpack.c.l.b16 %v846
        %v1132 = vunpack.c.h.b16 %v846
        %v1133 = vunpack.c.l.b16 %v847
        %v1134 = vunpack.c.h.b16 %v847
        %v1135 = vunpack.c.l.b16 %v848
        %v1136 = vunpack.c.h.b16 %v848
        %v1137 = vunpack.c.l.b16 %v849
        %v1138 = vunpack.c.h.b16 %v849
        %v1139 = vunpack.c.l.b16 %v850
        %v1140 = vunpack.c.h.b16 %v850
        %v1141 = vunpack.c.l.b16 %v851
        %v1142 = vunpack.c.h.b16 %v851
        %v1143 = vunpack.c.l.b16 %v852
        %v1144 = vunpack.c.h.b16 %v852
        %v1145 = vunpack.c.l.b16 %v853
        %v1146 = vunpack.c.h.b16 %v853
        %v1147 = vunpack.c.l.b16 %v854
        %v1148 = vunpack.c.h.b16 %v854
        %v1149 = vpack.c.b16 %v1023, %v1021
        %v1150 = vpack.c.b16 %v1024, %v1022
        %v1151 = vpack.c.b16 %v1027, %v1025
        %v1152 = vpack.c.b16 %v1028, %v1026
        %v1153 = vpack.c.b16 %v1031, %v1029
        %v1154 = vpack.c.b16 %v1032, %v1030
        %v1155 = vpack.c.b16 %v1035, %v1033
        %v1156 = vpack.c.b16 %v1036, %v1034
        %v1157 = vpack.c.b16 %v1039, %v1037
        %v1158 = vpack.c.b16 %v1040, %v1038
        %v1159 = vpack.c.b16 %v1043, %v1041
        %v1160 = vpack.c.b16 %v1044, %v1042
        %v1161 = vpack.c.b16 %v1047, %v1045
        %v1162 = vpack.c.b16 %v1048, %v1046
        %v1163 = vpack.c.b16 %v1051, %v1049
        %v1164 = vpack.c.b16 %v1052, %v1050
        %v1165 = vpack.c.b16 %v1055, %v1053
        %v1166 = vpack.c.b16 %v1056, %v1054
        %v1167 = vpack.c.b16 %v1059, %v1057
        %v1168 = vpack.c.b16 %v1060, %v1058
        %v1169 = vpack.c.b16 %v1063, %v1061
        %v1170 = vpack.c.b16 %v1064, %v1062
        %v1171 = vpack.c.b16 %v1067, %v1065
        %v1172 = vpack.c.b16 %v1068, %v1066
        %v1173 = vpack.c.b16 %v1071, %v1069
        %v1174 = vpack.c.b16 %v1072, %v1070
        %v1175 = vpack.c.b16 %v1075, %v1073
        %v1176 = vpack.c.b16 %v1076, %v1074
        %v1177 = vpack.c.b16 %v1079, %v1077
        %v1178 = vpack.c.b16 %v1080, %v1078
        %v1179 = vpack.c.b16 %v1083, %v1081
        %v1180 = vpack.c.b16 %v1084, %v1082
        %v1181 = vpack.c.b16 %v1087, %v1085
        %v1182 = vpack.c.b16 %v1088, %v1086
        %v1183 = vpack.c.b16 %v1091, %v1089
        %v1184 = vpack.c.b16 %v1092, %v1090
        %v1185 = vpack.c.b16 %v1095, %v1093
        %v1186 = vpack.c.b16 %v1096, %v1094
        %v1187 = vpack.c.b16 %v1099, %v1097
        %v1188 = vpack.c.b16 %v1100, %v1098
        %v1189 = vpack.c.b16 %v1103, %v1101
        %v1190 = vpack.c.b16 %v1104, %v1102
        %v1191 = vpack.c.b16 %v1107, %v1105
        %v1192 = vpack.c.b16 %v1108, %v1106
        %v1193 = vpack.c.b16 %v1111, %v1109
        %v1194 = vpack.c.b16 %v1112, %v1110
        %v1195 = vpack.c.b16 %v1115, %v1113
        %v1196 = vpack.c.b16 %v1116, %v1114
        %v1197 = vpack.c.b16 %v1119, %v1117
        %v1198 = vpack.c.b16 %v1120, %v1118
        %v1199 = vpack.c.b16 %v1123, %v1121
        %v1200 = vpack.c.b16 %v1124, %v1122
        %v1201 = vpack.c.b16 %v1127, %v1125
        %v1202 = vpack.c.b16 %v1128, %v1126
        %v1203 = vpack.c.b16 %v1131, %v1129
        %v1204 = vpack.c.b16 %v1132, %v1130
        %v1205 = vpack.c.b16 %v1135, %v1133
        %v1206 = vpack.c.b16 %v1136, %v1134
        %v1207 = vpack.c.b16 %v1139, %v1137
        %v1208 = vpack.c.b16 %v1140, %v1138
        %v1209 = vpack.c.b16 %v1143, %v1141
        %v1210 = vpack.c.b16 %v1144, %v1142
        %v1211 = vpack.c.b16 %v1147, %v1145
        %v1212 = vpack.c.b16 %v1148, %v1146
        %1277 = vmatprep.subr.bf16.mxu0 %v1164
        %1278 = vmatpush1.bf16.xpose.msra.mxu0 %v1163
        %1279 = vmatprep.subr.bf16.mxu0 %v1162
        %1280 = vmatpush1.bf16.xpose.msra.mxu0 %v1161
        %1281 = vmatprep.subr.bf16.mxu0 %v1160
        %1282 = vmatpush1.bf16.xpose.msra.mxu0 %v1159
        %1283 = vmatprep.subr.bf16.mxu0 %v1158
        %1284 = vmatpush1.bf16.xpose.msra.mxu0 %v1157
        %1285 = vmatprep.subr.bf16.mxu0 %v1156
        %1286 = vmatpush1.bf16.xpose.msra.mxu0 %v1155
        %1287 = vmatprep.subr.bf16.mxu0 %v1154
        %1288 = vmatpush1.bf16.xpose.msra.mxu0 %v1153
        %1289 = vmatprep.subr.bf16.mxu0 %v1152
        %1290 = vmatpush1.bf16.xpose.msra.mxu0 %v1151
        %1291 = vmatprep.subr.bf16.mxu0 %v1150
        %1292 = vmatpush1.bf16.xpose.msra.mxu0 %v1149
        %1293 = vmatprep.subr.bf16.mxu0 %v1180
        %1294 = vmatpush2.bf16.xpose.msra.mxu0 %v1179
        %1295 = vmatprep.subr.bf16.mxu0 %v1178
        %1296 = vmatpush2.bf16.xpose.msra.mxu0 %v1177
        %1297 = vmatprep.subr.bf16.mxu0 %v1176
        %1298 = vmatpush2.bf16.xpose.msra.mxu0 %v1175
        %1299 = vmatprep.subr.bf16.mxu0 %v1174
        %1300 = vmatpush2.bf16.xpose.msra.mxu0 %v1173
        %1301 = vmatprep.subr.bf16.mxu0 %v1172
        %1302 = vmatpush2.bf16.xpose.msra.mxu0 %v1171
        %1303 = vmatprep.subr.bf16.mxu0 %v1170
        %1304 = vmatpush2.bf16.xpose.msra.mxu0 %v1169
        %1305 = vmatprep.subr.bf16.mxu0 %v1168
        %1306 = vmatpush2.bf16.xpose.msra.mxu0 %v1167
        %1307 = vmatprep.subr.bf16.mxu0 %v1166
        %1308 = vmatpush2.bf16.xpose.msra.mxu0 %v1165
        %1309 = vmatprep.mubr.bf16.mxu0 %v926
        %1310 = vmatmul.mubr.bf16.gmra.mxu0 %v925
        %v1311 = vpop.f32.mrf.mxu0
        %v1312 = vadd.f32 %v860, %v1311
        %v1313 = vpop.f32.mrf.mxu0
        %v1314 = vadd.f32 %v864, %v1313
        %v1315 = vpop.f32.mrf.mxu0
        %v1316 = vadd.f32 %v860, %v1315
        %v1317 = vpop.f32.mrf.mxu0
        %v1318 = vadd.f32 %v864, %v1317
        %1319 = vmatprep.mubr.bf16.mxu0 %v928
        %1320 = vmatmul.mubr.bf16.gmra.mxu0 %v927
        %v1321 = vpop.f32.mrf.mxu0
        %v1322 = vadd.f32 %v860, %v1321
        %v1323 = vpop.f32.mrf.mxu0
        %v1324 = vadd.f32 %v864, %v1323
        %v1325 = vpop.f32.mrf.mxu0
        %v1326 = vadd.f32 %v860, %v1325
        %v1327 = vpop.f32.mrf.mxu0
        %v1328 = vadd.f32 %v864, %v1327
        %1329 = vmatprep.mubr.bf16.mxu0 %v930
        %1330 = vmatmul.mubr.bf16.gmra.mxu0 %v929
        %v1331 = vpop.f32.mrf.mxu0
        %v1332 = vadd.f32 %v860, %v1331
        %v1333 = vpop.f32.mrf.mxu0
        %v1334 = vadd.f32 %v864, %v1333
        %v1335 = vpop.f32.mrf.mxu0
        %v1336 = vadd.f32 %v860, %v1335
        %v1337 = vpop.f32.mrf.mxu0
        %v1338 = vadd.f32 %v864, %v1337
        %1339 = vmatprep.mubr.bf16.mxu0 %v932
        %1340 = vmatmul.mubr.bf16.gmra.mxu0 %v931
        %v1341 = vpop.f32.mrf.mxu0
        %v1342 = vadd.f32 %v860, %v1341
        %v1343 = vpop.f32.mrf.mxu0
        %v1344 = vadd.f32 %v864, %v1343
        %v1345 = vpop.f32.mrf.mxu0
        %v1346 = vadd.f32 %v860, %v1345
        %v1347 = vpop.f32.mrf.mxu0
        %v1348 = vadd.f32 %v864, %v1347
        %1349 = vmatprep.mubr.bf16.mxu0 %v934
        %1350 = vmatmul.mubr.bf16.gmra.mxu0 %v933
        %v1351 = vpop.f32.mrf.mxu0
        %v1352 = vadd.f32 %v860, %v1351
        %v1353 = vpop.f32.mrf.mxu0
        %v1354 = vadd.f32 %v864, %v1353
        %v1355 = vpop.f32.mrf.mxu0
        %v1356 = vadd.f32 %v860, %v1355
        %v1357 = vpop.f32.mrf.mxu0
        %v1358 = vadd.f32 %v864, %v1357
        %1359 = vmatprep.mubr.bf16.mxu0 %v936
        %1360 = vmatmul.mubr.bf16.gmra.mxu0 %v935
        %v1361 = vpop.f32.mrf.mxu0
        %v1362 = vadd.f32 %v860, %v1361
        %v1363 = vpop.f32.mrf.mxu0
        %v1364 = vadd.f32 %v864, %v1363
        %v1365 = vpop.f32.mrf.mxu0
        %v1366 = vadd.f32 %v860, %v1365
        %v1367 = vpop.f32.mrf.mxu0
        %v1368 = vadd.f32 %v864, %v1367
        %1369 = vmatprep.mubr.bf16.mxu0 %v938
        %1370 = vmatmul.mubr.bf16.gmra.mxu0 %v937
        %v1371 = vpop.f32.mrf.mxu0
        %v1372 = vadd.f32 %v860, %v1371
        %v1373 = vpop.f32.mrf.mxu0
        %v1374 = vadd.f32 %v864, %v1373
        %v1375 = vpop.f32.mrf.mxu0
        %v1376 = vadd.f32 %v860, %v1375
        %v1377 = vpop.f32.mrf.mxu0
        %v1378 = vadd.f32 %v864, %v1377
        %1379 = vmatprep.mubr.bf16.mxu0 %v940
        %1380 = vmatmul.mubr.bf16.gmra.mxu0 %v939
        %v1381 = vpop.f32.mrf.mxu0
        %v1382 = vadd.f32 %v860, %v1381
        %v1383 = vpop.f32.mrf.mxu0
        %v1384 = vadd.f32 %v864, %v1383
        %v1385 = vpop.f32.mrf.mxu0
        %v1386 = vadd.f32 %v860, %v1385
        %v1387 = vpop.f32.mrf.mxu0
        %v1388 = vadd.f32 %v864, %v1387
        %1389 = vdwg.mxu0
        %1390 = vmatprep.subr.bf16.mxu0 %v1196
        %1391 = vmatpush1.bf16.xpose.msra.mxu0 %v1195
        %1392 = vmatprep.subr.bf16.mxu0 %v1194
        %1393 = vmatpush1.bf16.xpose.msra.mxu0 %v1193
        %1394 = vmatprep.subr.bf16.mxu0 %v1192
        %1395 = vmatpush1.bf16.xpose.msra.mxu0 %v1191
        %1396 = vmatprep.subr.bf16.mxu0 %v1190
        %1397 = vmatpush1.bf16.xpose.msra.mxu0 %v1189
        %1398 = vmatprep.subr.bf16.mxu0 %v1188
        %1399 = vmatpush1.bf16.xpose.msra.mxu0 %v1187
        %1400 = vmatprep.subr.bf16.mxu0 %v1186
        %1401 = vmatpush1.bf16.xpose.msra.mxu0 %v1185
        %1402 = vmatprep.subr.bf16.mxu0 %v1184
        %1403 = vmatpush1.bf16.xpose.msra.mxu0 %v1183
        %1404 = vmatprep.subr.bf16.mxu0 %v1182
        %1405 = vmatpush1.bf16.xpose.msra.mxu0 %v1181
        %1406 = vmatprep.subr.bf16.mxu0 %v1212
        %1407 = vmatpush2.bf16.xpose.msra.mxu0 %v1211
        %1408 = vmatprep.subr.bf16.mxu0 %v1210
        %1409 = vmatpush2.bf16.xpose.msra.mxu0 %v1209
        %1410 = vmatprep.subr.bf16.mxu0 %v1208
        %1411 = vmatpush2.bf16.xpose.msra.mxu0 %v1207
        %1412 = vmatprep.subr.bf16.mxu0 %v1206
        %1413 = vmatpush2.bf16.xpose.msra.mxu0 %v1205
        %1414 = vmatprep.subr.bf16.mxu0 %v1204
        %1415 = vmatpush2.bf16.xpose.msra.mxu0 %v1203
        %1416 = vmatprep.subr.bf16.mxu0 %v1202
        %1417 = vmatpush2.bf16.xpose.msra.mxu0 %v1201
        %1418 = vmatprep.subr.bf16.mxu0 %v1200
        %1419 = vmatpush2.bf16.xpose.msra.mxu0 %v1199
        %1420 = vmatprep.subr.bf16.mxu0 %v1198
        %1421 = vmatpush2.bf16.xpose.msra.mxu0 %v1197
        %1422 = vmatprep.mubr.bf16.mxu0 %v926
        %1423 = vmatmul.mubr.bf16.gmra.mxu0 %v925
        %v1424 = vpop.f32.mrf.mxu0
        %v1425 = vadd.f32 %v868, %v1424
        %v1426 = vpop.f32.mrf.mxu0
        %v1427 = vadd.f32 %v872, %v1426
        %v1428 = vpop.f32.mrf.mxu0
        %v1429 = vadd.f32 %v868, %v1428
        %v1430 = vpop.f32.mrf.mxu0
        %v1431 = vadd.f32 %v872, %v1430
        %1432 = vmatprep.mubr.bf16.mxu0 %v928
        %1433 = vmatmul.mubr.bf16.gmra.mxu0 %v927
        %v1434 = vpop.f32.mrf.mxu0
        %v1435 = vadd.f32 %v868, %v1434
        %v1436 = vpop.f32.mrf.mxu0
        %v1437 = vadd.f32 %v872, %v1436
        %v1438 = vpop.f32.mrf.mxu0
        %v1439 = vadd.f32 %v868, %v1438
        %v1440 = vpop.f32.mrf.mxu0
        %v1441 = vadd.f32 %v872, %v1440
        %1442 = vmatprep.mubr.bf16.mxu0 %v930
        %1443 = vmatmul.mubr.bf16.gmra.mxu0 %v929
        %v1444 = vpop.f32.mrf.mxu0
        %v1445 = vadd.f32 %v868, %v1444
        %v1446 = vpop.f32.mrf.mxu0
        %v1447 = vadd.f32 %v872, %v1446
        %v1448 = vpop.f32.mrf.mxu0
        %v1449 = vadd.f32 %v868, %v1448
        %v1450 = vpop.f32.mrf.mxu0
        %v1451 = vadd.f32 %v872, %v1450
        %1452 = vmatprep.mubr.bf16.mxu0 %v932
        %1453 = vmatmul.mubr.bf16.gmra.mxu0 %v931
        %v1454 = vpop.f32.mrf.mxu0
        %v1455 = vadd.f32 %v868, %v1454
        %v1456 = vpop.f32.mrf.mxu0
        %v1457 = vadd.f32 %v872, %v1456
        %v1458 = vpop.f32.mrf.mxu0
        %v1459 = vadd.f32 %v868, %v1458
        %v1460 = vpop.f32.mrf.mxu0
        %v1461 = vadd.f32 %v872, %v1460
        %1462 = vmatprep.mubr.bf16.mxu0 %v934
        %1463 = vmatmul.mubr.bf16.gmra.mxu0 %v933
        %v1464 = vpop.f32.mrf.mxu0
        %v1465 = vadd.f32 %v868, %v1464
        %v1466 = vpop.f32.mrf.mxu0
        %v1467 = vadd.f32 %v872, %v1466
        %v1468 = vpop.f32.mrf.mxu0
        %v1469 = vadd.f32 %v868, %v1468
        %v1470 = vpop.f32.mrf.mxu0
        %v1471 = vadd.f32 %v872, %v1470
        %1472 = vmatprep.mubr.bf16.mxu0 %v936
        %1473 = vmatmul.mubr.bf16.gmra.mxu0 %v935
        %v1474 = vpop.f32.mrf.mxu0
        %v1475 = vadd.f32 %v868, %v1474
        %v1476 = vpop.f32.mrf.mxu0
        %v1477 = vadd.f32 %v872, %v1476
        %v1478 = vpop.f32.mrf.mxu0
        %v1479 = vadd.f32 %v868, %v1478
        %v1480 = vpop.f32.mrf.mxu0
        %v1481 = vadd.f32 %v872, %v1480
        %1482 = vmatprep.mubr.bf16.mxu0 %v938
        %1483 = vmatmul.mubr.bf16.gmra.mxu0 %v937
        %v1484 = vpop.f32.mrf.mxu0
        %v1485 = vadd.f32 %v868, %v1484
        %v1486 = vpop.f32.mrf.mxu0
        %v1487 = vadd.f32 %v872, %v1486
        %v1488 = vpop.f32.mrf.mxu0
        %v1489 = vadd.f32 %v868, %v1488
        %v1490 = vpop.f32.mrf.mxu0
        %v1491 = vadd.f32 %v872, %v1490
        %1492 = vmatprep.mubr.bf16.mxu0 %v940
        %1493 = vmatmul.mubr.bf16.gmra.mxu0 %v939
        %v1494 = vpop.f32.mrf.mxu0
        %v1495 = vadd.f32 %v868, %v1494
        %v1496 = vpop.f32.mrf.mxu0
        %v1497 = vadd.f32 %v872, %v1496
        %v1498 = vpop.f32.mrf.mxu0
        %v1499 = vadd.f32 %v868, %v1498
        %v1500 = vpop.f32.mrf.mxu0
        %v1501 = vadd.f32 %v872, %v1500
        %1502 = vdwg.mxu0
        %1503 = vst [vmem:[%s263] sm:$0xff] %v1312
        %1504 = vst [vmem:[%s263 + $0x8] sm:$0xff] %v1314
        %1505 = vst [vmem:[%s263 + $0x10] sm:$0xff] %v1425
        %1506 = vst [vmem:[%s263 + $0x18] sm:$0xff] %v1427
        %1507 = vst [vmem:[%s263 + $0x20] sm:$0xff] %v1316
        %1508 = vst [vmem:[%s263 + $0x28] sm:$0xff] %v1318
        %1509 = vst [vmem:[%s263 + $0x30] sm:$0xff] %v1429
        %1510 = vst [vmem:[%s263 + $0x38] sm:$0xff] %v1431
        %1511 = vst [vmem:[%s263 + $0x40] sm:$0xff] %v1322
        %1512 = vst [vmem:[%s263 + $0x48] sm:$0xff] %v1324
        %1513 = vst [vmem:[%s263 + $0x50] sm:$0xff] %v1435
        %1514 = vst [vmem:[%s263 + $0x58] sm:$0xff] %v1437
        %1515 = vst [vmem:[%s263 + $0x60] sm:$0xff] %v1326
        %1516 = vst [vmem:[%s263 + $0x68] sm:$0xff] %v1328
        %1517 = vst [vmem:[%s263 + $0x70] sm:$0xff] %v1439
        %1518 = vst [vmem:[%s263 + $0x78] sm:$0xff] %v1441
        %1519 = vst [vmem:[%s263 + $0x80] sm:$0xff] %v1332
        %1520 = vst [vmem:[%s263 + $0x88] sm:$0xff] %v1334
        %1521 = vst [vmem:[%s263 + $0x90] sm:$0xff] %v1445
        %1522 = vst [vmem:[%s263 + $0x98] sm:$0xff] %v1447
        %1523 = vst [vmem:[%s263 + $0xa0] sm:$0xff] %v1336
        %1524 = vst [vmem:[%s263 + $0xa8] sm:$0xff] %v1338
        %1525 = vst [vmem:[%s263 + $0xb0] sm:$0xff] %v1449
        %1526 = vst [vmem:[%s263 + $0xb8] sm:$0xff] %v1451
        %1527 = vst [vmem:[%s263 + $0xc0] sm:$0xff] %v1342
        %1528 = vst [vmem:[%s263 + $0xc8] sm:$0xff] %v1344
        %1529 = vst [vmem:[%s263 + $0xd0] sm:$0xff] %v1455
        %1530 = vst [vmem:[%s263 + $0xd8] sm:$0xff] %v1457
        %1531 = vst [vmem:[%s263 + $0xe0] sm:$0xff] %v1346
        %1532 = vst [vmem:[%s263 + $0xe8] sm:$0xff] %v1348
        %1533 = vst [vmem:[%s263 + $0xf0] sm:$0xff] %v1459
        %1534 = vst [vmem:[%s263 + $0xf8] sm:$0xff] %v1461
        %1535 = vst [vmem:[%s263 + $0x100] sm:$0xff] %v1352
        %1536 = vst [vmem:[%s263 + $0x108] sm:$0xff] %v1354
        %1537 = vst [vmem:[%s263 + $0x110] sm:$0xff] %v1465
        %1538 = vst [vmem:[%s263 + $0x118] sm:$0xff] %v1467
        %1539 = vst [vmem:[%s263 + $0x120] sm:$0xff] %v1356
        %1540 = vst [vmem:[%s263 + $0x128] sm:$0xff] %v1358
        %1541 = vst [vmem:[%s263 + $0x130] sm:$0xff] %v1469
        %1542 = vst [vmem:[%s263 + $0x138] sm:$0xff] %v1471
        %1543 = vst [vmem:[%s263 + $0x140] sm:$0xff] %v1362
        %1544 = vst [vmem:[%s263 + $0x148] sm:$0xff] %v1364
        %1545 = vst [vmem:[%s263 + $0x150] sm:$0xff] %v1475
        %1546 = vst [vmem:[%s263 + $0x158] sm:$0xff] %v1477
        %1547 = vst [vmem:[%s263 + $0x160] sm:$0xff] %v1366
        %1548 = vst [vmem:[%s263 + $0x168] sm:$0xff] %v1368
        %1549 = vst [vmem:[%s263 + $0x170] sm:$0xff] %v1479
        %1550 = vst [vmem:[%s263 + $0x178] sm:$0xff] %v1481
        %1551 = vst [vmem:[%s263 + $0x180] sm:$0xff] %v1372
        %1552 = vst [vmem:[%s263 + $0x188] sm:$0xff] %v1374
        %1553 = vst [vmem:[%s263 + $0x190] sm:$0xff] %v1485
        %1554 = vst [vmem:[%s263 + $0x198] sm:$0xff] %v1487
        %1555 = vst [vmem:[%s263 + $0x1a0] sm:$0xff] %v1376
        %1556 = vst [vmem:[%s263 + $0x1a8] sm:$0xff] %v1378
        %1557 = vst [vmem:[%s263 + $0x1b0] sm:$0xff] %v1489
        %1558 = vst [vmem:[%s263 + $0x1b8] sm:$0xff] %v1491
        %1559 = vst [vmem:[%s263 + $0x1c0] sm:$0xff] %v1382
        %1560 = vst [vmem:[%s263 + $0x1c8] sm:$0xff] %v1384
        %1561 = vst [vmem:[%s263 + $0x1d0] sm:$0xff] %v1495
        %1562 = vst [vmem:[%s263 + $0x1d8] sm:$0xff] %v1497
        %1563 = vst [vmem:[%s263 + $0x1e0] sm:$0xff] %v1386
        %1564 = vst [vmem:[%s263 + $0x1e8] sm:$0xff] %v1388
        %1565 = vst [vmem:[%s263 + $0x1f0] sm:$0xff] %v1499
        %1566 = vst [vmem:[%s263 + $0x1f8] sm:$0xff] %v1501
        %s1567 = sand.u32 %s161, 1
        %s1568 = scalar_lea.sflag [#allocation4], %s1567
        %s1569 = sand.u32 %s161, 1
        %s1570 = smul.addr %s1569, 512
        %s1571 = scalar_lea.vmem [#allocation3], %s1570
        // Predicated region
        $region45: #{gpt_forward.5} parent=39 // pred_check
          %p1572 = pneg %p171
        $region46: #{gpt_forward.5} parent=39 // pred_check_branch
          %1574 = sbr.rel (%p1572) target = $region48
        $region47: #{gpt_forward.5} parent=39 // pred_region
          %s1575 = smul.u32 4, %s24
          %s1577 = ssub.s32 8192, 8192
          %1578 = vsyncadd %s1568, %s1577
          %s1579 = smul.addr %s23, 64
          %s1580 = sadd.s32 %s1575, %s1579
          %s1581 = smul.addr %s1580, 128
          %s1582 = scalar_lea.hbm %s5, %s1581
          %s1583 = sshll.u32 %s1571, 4
          %s1584 = int_to_ptr.vmem [resolvable:$true] %s1583
          %1589 = dma.vmem_to_hbm [thread:$0]  %s1584, 8192, %s1582, %s1568, 512, 512, 32
        $region48: #{gpt_forward.5} parent=39 // pred_fallthru
          _
      $region40: #{gpt_forward.5} parent=5 // pred_fallthru
        _
      %p1590 = scmp.le.s32.totalorder 2, %s14
      // Predicated region
      $region49: #{gpt_forward.5} parent=5 // pred_check
        %p1591 = pneg %p1590
      $region50: #{gpt_forward.5} parent=5 // pred_check_branch
        %1593 = sbr.rel (%p1591) target = $region52
      $region51: #{gpt_forward.5} parent=5 // pred_region
        %s1594 = ssub.s32 %s14, 2
        // Predicated region
        $region53: #{gpt_forward.5} parent=51 // pred_check
          %p1595 = pneg %p177
        $region54: #{gpt_forward.5} parent=51 // pred_check_branch
          %1597 = sbr.rel (%p1595) target = $region56
        $region55: #{gpt_forward.5} parent=51 // pred_region
          %s1598 = sand.u32 %s162, 1
          %s1599 = scalar_lea.sflag [#allocation4], %s1598
          %s1600 = sand.u32 %s162, 1
          %s1601 = smul.addr %s1600, 512
          %s1602 = scalar_lea.vmem [#allocation3], %s1601
          %1603 = dma.done %s1599, 8192
        $region56: #{gpt_forward.5} parent=51 // pred_fallthru
          _
      $region52: #{gpt_forward.5} parent=5 // pred_fallthru
        _
    $region6: #{gpt_forward.5} parent=1 // loop_footer
      %s18 = sadd.s32 1, %s14
    $region7: #{gpt_forward.5} parent=1 // loop_footer_branch
      %13 = sbr.rel target = $region3
    $region8: #{gpt_forward.5} parent=1 // loop_exit
      _
    %1604 = vsyncpa [#allocation4], 1
    %s1605 = scalar_lea.sflag [#allocation4], 1
    %1606 = vsyncpa %s1605, 1

// kernel: gpt_forward.3
$region0: #{gpt_forward.3}
  #allocation0 [shape = 'u32[]', space=smem, size = 0x4, offset = 0x4, fixed_abs, tag = 'smem constant byte address 0x4 - core index']
  #allocation1 [shape = 'u32[144,128]{1,0:T(1,128)}', space=vmem, size = 0x12000, scoped, tag = 'internal scratch']
  #allocation2 [shape = 'bf16[128,256]{1,0:T(8,128)(2,1)}', space=vmem, size = 0x10000, scoped, tag = 'scratch operand']
  %s0 = inlined_call_operand.vmem [shape: f32[2,128,256], index: 0, kind: input, shape index: {}]
  %s1 = inlined_call_operand.vmem [shape: f32[128,128], index: 1, kind: input, shape index: {}]
  %s2 = inlined_call_operand.vmem [shape: f32[1,256], index: 2, kind: input, shape index: {}]
  %s3 = inlined_call_operand.vmem [shape: f32[1,256], index: 3, kind: input, shape index: {}]
  %s4 = inlined_call_operand.vmem [shape: bf16[256,768], index: 4, kind: input, shape index: {}]
  %s5 = inlined_call_operand.vmem [shape: f32[1,768], index: 5, kind: input, shape index: {}]
  %s6 = inlined_call_operand.vmem [shape: bf16[256,256], index: 6, kind: input, shape index: {}]
  %s7 = inlined_call_operand.vmem [shape: f32[1,256], index: 7, kind: input, shape index: {}]
  %s8 = inlined_call_operand.vmem [shape: f32[1,256], index: 8, kind: input, shape index: {}]
  %s9 = inlined_call_operand.vmem [shape: f32[1,256], index: 9, kind: input, shape index: {}]
  %s10 = inlined_call_operand.vmem [shape: bf16[256,1024], index: 10, kind: input, shape index: {}]
  %s11 = inlined_call_operand.vmem [shape: f32[1,1024], index: 11, kind: input, shape index: {}]
  %s12 = inlined_call_operand.vmem [shape: bf16[1024,256], index: 12, kind: input, shape index: {}]
  %s13 = inlined_call_operand.vmem [shape: f32[1,256], index: 13, kind: input, shape index: {}]
  %s14 = inlined_call_operand.vmem [shape: f32[2,128,256], index: 14, kind: output, shape index: {}]
  %s15 = sld [smem:[#allocation0]]
  $region89: #{gpt_forward.3} parent=0
    _
  %s17 = ssub.s32 1, %s15
  %s18 = scalar_select 0, %s17, %s15
  loop: start=0, step=1, limit=4
  $region2: #{gpt_forward.3} parent=0 // loop_pre_header
    _
  $region3: #{gpt_forward.3} parent=0 // loop_header
    %s20 = sphi 0, %s24
    %p21 = scmp.ge.s32.totalorder %s20, 4
    %s30 = sphi 0, %s32
    %s33 = sphi 0, %s30
    %s34 = sphi 0, %s33
    %s50 = sphi 0, %s34
    %s54 = sphi 0, %s54
    %s56 = sphi 0, %s54
    %s57 = sphi 0, %s56
    %s71 = sphi 0, %s57
    %s75 = sphi 0, %s75
    %s77 = sphi 0, %s75
    %s78 = sphi 0, %s77
    %s92 = sphi 0, %s78
    %s96 = sphi 0, %s96
    %s98 = sphi 0, %s96
    %s99 = sphi 0, %s98
    %s113 = sphi 0, %s99
    %s117 = sphi 0, %s117
    %s119 = sphi 0, %s117
    %s120 = sphi 0, %s119
    %s134 = sphi 0, %s120
    %s138 = sphi 0, %s138
    %s140 = sphi 0, %s138
    %s141 = sphi 0, %s140
    %s155 = sphi 0, %s141
    %s159 = sphi 0, %s159
    %s161 = sphi 0, %s159
    %s162 = sphi 0, %s161
    %s176 = sphi 0, %s162
    %s180 = sphi 0, %s180
    %s182 = sphi 0, %s180
    %s183 = sphi 0, %s182
    %s197 = sphi 0, %s183
    %s201 = sphi 0, %s201
    %s203 = sphi 0, %s201
    %s204 = sphi 0, %s203
    %s218 = sphi 0, %s204
    %s222 = sphi 0, %s222
    %s224 = sphi 0, %s222
    %s225 = sphi 0, %s224
    %s239 = sphi 0, %s225
    %s243 = sphi 0, %s243
    %s245 = sphi 0, %s243
    %s246 = sphi 0, %s245
    %s260 = sphi 0, %s246
    %s264 = sphi 0, %s264
    %s266 = sphi 0, %s264
    %s267 = sphi 0, %s266
    %s281 = sphi 0, %s267
    %s285 = sphi 0, %s285
    %s287 = sphi 0, %s285
    %s288 = sphi 0, %s287
    %s302 = sphi 0, %s288
    %s306 = sphi 0, %s306
    %s308 = sphi 0, %s306
    %s309 = sphi 0, %s308
    %s323 = sphi 0, %s309
    %s329 = sphi 0, %s331
    %s332 = sphi 0, %s329
    %s333 = sphi 0, %s332
    %s349 = sphi 0, %s333
  $region4: #{gpt_forward.3} parent=0 // loop_header_branch
    %23 = sbr.rel (%p21) target = $region8
  $region5: #{gpt_forward.3} parent=0 // loop_body
    %s25 = ssub.s32 %s20, 1
    %s26 = ssub.s32 %s20, 2
    %s27 = sadd.s32 %s20, 1
    %s28 = ssub.s32 %s20, %s27
    %p29 = scmp.eq.s32.totalorder %s28, 0
    %s31 = sadd.s32 %s30, 1
    %s32 = scalar_select %p29, %s30, %s31
    %p35 = pneg %p29
    %p36 = scmp.eq.s32.totalorder %s20, 1
    %p37 = por %p35, %p36
    %p38 = scmp.ne.s32.totalorder %s30, %s33
    %p39 = scmp.eq.s32.totalorder %s20, 0
    %p40 = por %p38, %p39
    %p41 = scmp.ne.s32.totalorder %s30, %s33
    %p42 = scmp.eq.s32.totalorder %s25, 1
    %p43 = por %p41, %p42
    %p44 = scmp.ne.s32.totalorder %s33, %s34
    %p45 = scmp.eq.s32.totalorder %s25, 0
    %p46 = por %p44, %p45
    %p47 = scmp.ne.s32.totalorder %s33, %s34
    %p48 = scmp.eq.s32.totalorder %s26, 1
    %p49 = por %p47, %p48
    %p51 = scmp.ne.s32.totalorder %s34, %s50
    %p52 = scmp.eq.s32.totalorder %s26, 0
    %p53 = por %p51, %p52
    %s55 = sadd.s32 %s54, 1
    %p58 = scmp.eq.s32.totalorder %s20, 1
    %p59 = scmp.ne.s32.totalorder %s54, %s56
    %p60 = scmp.eq.s32.totalorder %s20, 0
    %p61 = por %p59, %p60
    %p62 = scmp.ne.s32.totalorder %s54, %s56
    %p63 = scmp.eq.s32.totalorder %s25, 1
    %p64 = por %p62, %p63
    %p65 = scmp.ne.s32.totalorder %s56, %s57
    %p66 = scmp.eq.s32.totalorder %s25, 0
    %p67 = por %p65, %p66
    %p68 = scmp.ne.s32.totalorder %s56, %s57
    %p69 = scmp.eq.s32.totalorder %s26, 1
    %p70 = por %p68, %p69
    %p72 = scmp.ne.s32.totalorder %s57, %s71
    %p73 = scmp.eq.s32.totalorder %s26, 0
    %p74 = por %p72, %p73
    %s76 = sadd.s32 %s75, 1
    %p79 = scmp.eq.s32.totalorder %s20, 1
    %p80 = scmp.ne.s32.totalorder %s75, %s77
    %p81 = scmp.eq.s32.totalorder %s20, 0
    %p82 = por %p80, %p81
    %p83 = scmp.ne.s32.totalorder %s75, %s77
    %p84 = scmp.eq.s32.totalorder %s25, 1
    %p85 = por %p83, %p84
    %p86 = scmp.ne.s32.totalorder %s77, %s78
    %p87 = scmp.eq.s32.totalorder %s25, 0
    %p88 = por %p86, %p87
    %p89 = scmp.ne.s32.totalorder %s77, %s78
    %p90 = scmp.eq.s32.totalorder %s26, 1
    %p91 = por %p89, %p90
    %p93 = scmp.ne.s32.totalorder %s78, %s92
    %p94 = scmp.eq.s32.totalorder %s26, 0
    %p95 = por %p93, %p94
    %s97 = sadd.s32 %s96, 1
    %p100 = scmp.eq.s32.totalorder %s20, 1
    %p101 = scmp.ne.s32.totalorder %s96, %s98
    %p102 = scmp.eq.s32.totalorder %s20, 0
    %p103 = por %p101, %p102
    %p104 = scmp.ne.s32.totalorder %s96, %s98
    %p105 = scmp.eq.s32.totalorder %s25, 1
    %p106 = por %p104, %p105
    %p107 = scmp.ne.s32.totalorder %s98, %s99
    %p108 = scmp.eq.s32.totalorder %s25, 0
    %p109 = por %p107, %p108
    %p110 = scmp.ne.s32.totalorder %s98, %s99
    %p111 = scmp.eq.s32.totalorder %s26, 1
    %p112 = por %p110, %p111
    %p114 = scmp.ne.s32.totalorder %s99, %s113
    %p115 = scmp.eq.s32.totalorder %s26, 0
    %p116 = por %p114, %p115
    %s118 = sadd.s32 %s117, 1
    %p121 = scmp.eq.s32.totalorder %s20, 1
    %p122 = scmp.ne.s32.totalorder %s117, %s119
    %p123 = scmp.eq.s32.totalorder %s20, 0
    %p124 = por %p122, %p123
    %p125 = scmp.ne.s32.totalorder %s117, %s119
    %p126 = scmp.eq.s32.totalorder %s25, 1
    %p127 = por %p125, %p126
    %p128 = scmp.ne.s32.totalorder %s119, %s120
    %p129 = scmp.eq.s32.totalorder %s25, 0
    %p130 = por %p128, %p129
    %p131 = scmp.ne.s32.totalorder %s119, %s120
    %p132 = scmp.eq.s32.totalorder %s26, 1
    %p133 = por %p131, %p132
    %p135 = scmp.ne.s32.totalorder %s120, %s134
    %p136 = scmp.eq.s32.totalorder %s26, 0
    %p137 = por %p135, %p136
    %s139 = sadd.s32 %s138, 1
    %p142 = scmp.eq.s32.totalorder %s20, 1
    %p143 = scmp.ne.s32.totalorder %s138, %s140
    %p144 = scmp.eq.s32.totalorder %s20, 0
    %p145 = por %p143, %p144
    %p146 = scmp.ne.s32.totalorder %s138, %s140
    %p147 = scmp.eq.s32.totalorder %s25, 1
    %p148 = por %p146, %p147
    %p149 = scmp.ne.s32.totalorder %s140, %s141
    %p150 = scmp.eq.s32.totalorder %s25, 0
    %p151 = por %p149, %p150
    %p152 = scmp.ne.s32.totalorder %s140, %s141
    %p153 = scmp.eq.s32.totalorder %s26, 1
    %p154 = por %p152, %p153
    %p156 = scmp.ne.s32.totalorder %s141, %s155
    %p157 = scmp.eq.s32.totalorder %s26, 0
    %p158 = por %p156, %p157
    %s160 = sadd.s32 %s159, 1
    %p163 = scmp.eq.s32.totalorder %s20, 1
    %p164 = scmp.ne.s32.totalorder %s159, %s161
    %p165 = scmp.eq.s32.totalorder %s20, 0
    %p166 = por %p164, %p165
    %p167 = scmp.ne.s32.totalorder %s159, %s161
    %p168 = scmp.eq.s32.totalorder %s25, 1
    %p169 = por %p167, %p168
    %p170 = scmp.ne.s32.totalorder %s161, %s162
    %p171 = scmp.eq.s32.totalorder %s25, 0
    %p172 = por %p170, %p171
    %p173 = scmp.ne.s32.totalorder %s161, %s162
    %p174 = scmp.eq.s32.totalorder %s26, 1
    %p175 = por %p173, %p174
    %p177 = scmp.ne.s32.totalorder %s162, %s176
    %p178 = scmp.eq.s32.totalorder %s26, 0
    %p179 = por %p177, %p178
    %s181 = sadd.s32 %s180, 1
    %p184 = scmp.eq.s32.totalorder %s20, 1
    %p185 = scmp.ne.s32.totalorder %s180, %s182
    %p186 = scmp.eq.s32.totalorder %s20, 0
    %p187 = por %p185, %p186
    %p188 = scmp.ne.s32.totalorder %s180, %s182
    %p189 = scmp.eq.s32.totalorder %s25, 1
    %p190 = por %p188, %p189
    %p191 = scmp.ne.s32.totalorder %s182, %s183
    %p192 = scmp.eq.s32.totalorder %s25, 0
    %p193 = por %p191, %p192
    %p194 = scmp.ne.s32.totalorder %s182, %s183
    %p195 = scmp.eq.s32.totalorder %s26, 1
    %p196 = por %p194, %p195
    %p198 = scmp.ne.s32.totalorder %s183, %s197
    %p199 = scmp.eq.s32.totalorder %s26, 0
    %p200 = por %p198, %p199
    %s202 = sadd.s32 %s201, 1
    %p205 = scmp.eq.s32.totalorder %s20, 1
    %p206 = scmp.ne.s32.totalorder %s201, %s203
    %p207 = scmp.eq.s32.totalorder %s20, 0
    %p208 = por %p206, %p207
    %p209 = scmp.ne.s32.totalorder %s201, %s203
    %p210 = scmp.eq.s32.totalorder %s25, 1
    %p211 = por %p209, %p210
    %p212 = scmp.ne.s32.totalorder %s203, %s204
    %p213 = scmp.eq.s32.totalorder %s25, 0
    %p214 = por %p212, %p213
    %p215 = scmp.ne.s32.totalorder %s203, %s204
    %p216 = scmp.eq.s32.totalorder %s26, 1
    %p217 = por %p215, %p216
    %p219 = scmp.ne.s32.totalorder %s204, %s218
    %p220 = scmp.eq.s32.totalorder %s26, 0
    %p221 = por %p219, %p220
    %s223 = sadd.s32 %s222, 1
    %p226 = scmp.eq.s32.totalorder %s20, 1
    %p227 = scmp.ne.s32.totalorder %s222, %s224
    %p228 = scmp.eq.s32.totalorder %s20, 0
    %p229 = por %p227, %p228
    %p230 = scmp.ne.s32.totalorder %s222, %s224
    %p231 = scmp.eq.s32.totalorder %s25, 1
    %p232 = por %p230, %p231
    %p233 = scmp.ne.s32.totalorder %s224, %s225
    %p234 = scmp.eq.s32.totalorder %s25, 0
    %p235 = por %p233, %p234
    %p236 = scmp.ne.s32.totalorder %s224, %s225
    %p237 = scmp.eq.s32.totalorder %s26, 1
    %p238 = por %p236, %p237
    %p240 = scmp.ne.s32.totalorder %s225, %s239
    %p241 = scmp.eq.s32.totalorder %s26, 0
    %p242 = por %p240, %p241
    %s244 = sadd.s32 %s243, 1
    %p247 = scmp.eq.s32.totalorder %s20, 1
    %p248 = scmp.ne.s32.totalorder %s243, %s245
    %p249 = scmp.eq.s32.totalorder %s20, 0
    %p250 = por %p248, %p249
    %p251 = scmp.ne.s32.totalorder %s243, %s245
    %p252 = scmp.eq.s32.totalorder %s25, 1
    %p253 = por %p251, %p252
    %p254 = scmp.ne.s32.totalorder %s245, %s246
    %p255 = scmp.eq.s32.totalorder %s25, 0
    %p256 = por %p254, %p255
    %p257 = scmp.ne.s32.totalorder %s245, %s246
    %p258 = scmp.eq.s32.totalorder %s26, 1
    %p259 = por %p257, %p258
    %p261 = scmp.ne.s32.totalorder %s246, %s260
    %p262 = scmp.eq.s32.totalorder %s26, 0
    %p263 = por %p261, %p262
    %s265 = sadd.s32 %s264, 1
    %p268 = scmp.eq.s32.totalorder %s20, 1
    %p269 = scmp.ne.s32.totalorder %s264, %s266
    %p270 = scmp.eq.s32.totalorder %s20, 0
    %p271 = por %p269, %p270
    %p272 = scmp.ne.s32.totalorder %s264, %s266
    %p273 = scmp.eq.s32.totalorder %s25, 1
    %p274 = por %p272, %p273
    %p275 = scmp.ne.s32.totalorder %s266, %s267
    %p276 = scmp.eq.s32.totalorder %s25, 0
    %p277 = por %p275, %p276
    %p278 = scmp.ne.s32.totalorder %s266, %s267
    %p279 = scmp.eq.s32.totalorder %s26, 1
    %p280 = por %p278, %p279
    %p282 = scmp.ne.s32.totalorder %s267, %s281
    %p283 = scmp.eq.s32.totalorder %s26, 0
    %p284 = por %p282, %p283
    %s286 = sadd.s32 %s285, 1
    %p289 = scmp.eq.s32.totalorder %s20, 1
    %p290 = scmp.ne.s32.totalorder %s285, %s287
    %p291 = scmp.eq.s32.totalorder %s20, 0
    %p292 = por %p290, %p291
    %p293 = scmp.ne.s32.totalorder %s285, %s287
    %p294 = scmp.eq.s32.totalorder %s25, 1
    %p295 = por %p293, %p294
    %p296 = scmp.ne.s32.totalorder %s287, %s288
    %p297 = scmp.eq.s32.totalorder %s25, 0
    %p298 = por %p296, %p297
    %p299 = scmp.ne.s32.totalorder %s287, %s288
    %p300 = scmp.eq.s32.totalorder %s26, 1
    %p301 = por %p299, %p300
    %p303 = scmp.ne.s32.totalorder %s288, %s302
    %p304 = scmp.eq.s32.totalorder %s26, 0
    %p305 = por %p303, %p304
    %s307 = sadd.s32 %s306, 1
    %p310 = scmp.eq.s32.totalorder %s20, 1
    %p311 = scmp.ne.s32.totalorder %s306, %s308
    %p312 = scmp.eq.s32.totalorder %s20, 0
    %p313 = por %p311, %p312
    %p314 = scmp.ne.s32.totalorder %s306, %s308
    %p315 = scmp.eq.s32.totalorder %s25, 1
    %p316 = por %p314, %p315
    %p317 = scmp.ne.s32.totalorder %s308, %s309
    %p318 = scmp.eq.s32.totalorder %s25, 0
    %p319 = por %p317, %p318
    %p320 = scmp.ne.s32.totalorder %s308, %s309
    %p321 = scmp.eq.s32.totalorder %s26, 1
    %p322 = por %p320, %p321
    %p324 = scmp.ne.s32.totalorder %s309, %s323
    %p325 = scmp.eq.s32.totalorder %s26, 0
    %p326 = por %p324, %p325
    %s327 = ssub.s32 %s20, %s27
    %p328 = scmp.eq.s32.totalorder %s327, 0
    %s330 = sadd.s32 %s329, 1
    %s331 = scalar_select %p328, %s329, %s330
    %p334 = pneg %p328
    %p335 = scmp.eq.s32.totalorder %s20, 1
    %p336 = por %p334, %p335
    %p337 = scmp.ne.s32.totalorder %s329, %s332
    %p338 = scmp.eq.s32.totalorder %s20, 0
    %p339 = por %p337, %p338
    %p340 = scmp.ne.s32.totalorder %s329, %s332
    %p341 = scmp.eq.s32.totalorder %s25, 1
    %p342 = por %p340, %p341
    %p343 = scmp.ne.s32.totalorder %s332, %s333
    %p344 = scmp.eq.s32.totalorder %s25, 0
    %p345 = por %p343, %p344
    %p346 = scmp.ne.s32.totalorder %s332, %s333
    %p347 = scmp.eq.s32.totalorder %s26, 1
    %p348 = por %p346, %p347
    %p350 = scmp.ne.s32.totalorder %s333, %s349
    %p351 = scmp.eq.s32.totalorder %s26, 0
    %p352 = por %p350, %p351
    %p353 = scmp.le.s32.totalorder 1, %s20
    %p354 = scmp.lt.s32.totalorder %s20, 3
    %p355 = pnand %p353, %p354
    %p356 = pneg %p355
    // Predicated region
    $region9: #{gpt_forward.3} parent=5 // pred_check
      _
    $region10: #{gpt_forward.3} parent=5 // pred_check_branch
      %358 = sbr.rel (%p355) target = $region12
    $region11: #{gpt_forward.3} parent=5 // pred_region
      %s359 = ssub.s32 %s20, 1
      // Predicated region
      $region13: #{gpt_forward.3} parent=11 // pred_check
        %p360 = pneg %p67
      $region14: #{gpt_forward.3} parent=11 // pred_check_branch
        %362 = sbr.rel (%p360) target = $region16
      $region15: #{gpt_forward.3} parent=11 // pred_region
        _
      $region16: #{gpt_forward.3} parent=11 // pred_fallthru
        _
      // Predicated region
      $region17: #{gpt_forward.3} parent=11 // pred_check
        %p363 = pneg %p88
      $region18: #{gpt_forward.3} parent=11 // pred_check_branch
        %365 = sbr.rel (%p363) target = $region20
      $region19: #{gpt_forward.3} parent=11 // pred_region
        _
      $region20: #{gpt_forward.3} parent=11 // pred_fallthru
        _
      // Predicated region
      $region21: #{gpt_forward.3} parent=11 // pred_check
        %p366 = pneg %p109
      $region22: #{gpt_forward.3} parent=11 // pred_check_branch
        %368 = sbr.rel (%p366) target = $region24
      $region23: #{gpt_forward.3} parent=11 // pred_region
        _
      $region24: #{gpt_forward.3} parent=11 // pred_fallthru
        _
      // Predicated region
      $region25: #{gpt_forward.3} parent=11 // pred_check
        %p369 = pneg %p130
      $region26: #{gpt_forward.3} parent=11 // pred_check_branch
        %371 = sbr.rel (%p369) target = $region28
      $region27: #{gpt_forward.3} parent=11 // pred_region
        _
      $region28: #{gpt_forward.3} parent=11 // pred_fallthru
        _
      // Predicated region
      $region29: #{gpt_forward.3} parent=11 // pred_check
        %p372 = pneg %p151
      $region30: #{gpt_forward.3} parent=11 // pred_check_branch
        %374 = sbr.rel (%p372) target = $region32
      $region31: #{gpt_forward.3} parent=11 // pred_region
        _
      $region32: #{gpt_forward.3} parent=11 // pred_fallthru
        _
      // Predicated region
      $region33: #{gpt_forward.3} parent=11 // pred_check
        %p375 = pneg %p172
      $region34: #{gpt_forward.3} parent=11 // pred_check_branch
        %377 = sbr.rel (%p375) target = $region36
      $region35: #{gpt_forward.3} parent=11 // pred_region
        _
      $region36: #{gpt_forward.3} parent=11 // pred_fallthru
        _
      // Predicated region
      $region37: #{gpt_forward.3} parent=11 // pred_check
        %p378 = pneg %p193
      $region38: #{gpt_forward.3} parent=11 // pred_check_branch
        %380 = sbr.rel (%p378) target = $region40
      $region39: #{gpt_forward.3} parent=11 // pred_region
        _
      $region40: #{gpt_forward.3} parent=11 // pred_fallthru
        _
      // Predicated region
      $region41: #{gpt_forward.3} parent=11 // pred_check
        %p381 = pneg %p214
      $region42: #{gpt_forward.3} parent=11 // pred_check_branch
        %383 = sbr.rel (%p381) target = $region44
      $region43: #{gpt_forward.3} parent=11 // pred_region
        _
      $region44: #{gpt_forward.3} parent=11 // pred_fallthru
        _
      // Predicated region
      $region45: #{gpt_forward.3} parent=11 // pred_check
        %p384 = pneg %p235
      $region46: #{gpt_forward.3} parent=11 // pred_check_branch
        %386 = sbr.rel (%p384) target = $region48
      $region47: #{gpt_forward.3} parent=11 // pred_region
        _
      $region48: #{gpt_forward.3} parent=11 // pred_fallthru
        _
      // Predicated region
      $region49: #{gpt_forward.3} parent=11 // pred_check
        %p387 = pneg %p256
      $region50: #{gpt_forward.3} parent=11 // pred_check_branch
        %389 = sbr.rel (%p387) target = $region52
      $region51: #{gpt_forward.3} parent=11 // pred_region
        _
      $region52: #{gpt_forward.3} parent=11 // pred_fallthru
        _
      // Predicated region
      $region53: #{gpt_forward.3} parent=11 // pred_check
        %p390 = pneg %p277
      $region54: #{gpt_forward.3} parent=11 // pred_check_branch
        %392 = sbr.rel (%p390) target = $region56
      $region55: #{gpt_forward.3} parent=11 // pred_region
        _
      $region56: #{gpt_forward.3} parent=11 // pred_fallthru
        _
      // Predicated region
      $region57: #{gpt_forward.3} parent=11 // pred_check
        %p393 = pneg %p298
      $region58: #{gpt_forward.3} parent=11 // pred_check_branch
        %395 = sbr.rel (%p393) target = $region60
      $region59: #{gpt_forward.3} parent=11 // pred_region
        _
      $region60: #{gpt_forward.3} parent=11 // pred_fallthru
        _
      // Predicated region
      $region61: #{gpt_forward.3} parent=11 // pred_check
        %p396 = pneg %p319
      $region62: #{gpt_forward.3} parent=11 // pred_check_branch
        %398 = sbr.rel (%p396) target = $region64
      $region63: #{gpt_forward.3} parent=11 // pred_region
        _
      $region64: #{gpt_forward.3} parent=11 // pred_fallthru
        _
    $region12: #{gpt_forward.3} parent=5 // pred_fallthru
      _
    %p399 = scmp.lt.s32.totalorder %s20, 2
    // Predicated region
    $region65: #{gpt_forward.3} parent=5 // pred_check
      %p400 = pneg %p399
    $region66: #{gpt_forward.3} parent=5 // pred_check_branch
      %402 = sbr.rel (%p400) target = $region68
    $region67: #{gpt_forward.3} parent=5 // pred_region
      // Predicated region
      $region69: #{gpt_forward.3} parent=67 // pred_check
        %p403 = pneg %p40
      $region70: #{gpt_forward.3} parent=67 // pred_check_branch
        %405 = sbr.rel (%p403) target = $region72
      $region71: #{gpt_forward.3} parent=67 // pred_region
        %p406 = scmp.lt.s32.totalorder %s20, 1
        %s407 = scalar_select %p406, %s20, 1
        %s408 = smul.addr %s407, 32
        %s409 = smul.addr %s408, 8
        %s410 = scalar_lea.vmem %s0, %s409
      $region72: #{gpt_forward.3} parent=67 // pred_fallthru
        _
    $region68: #{gpt_forward.3} parent=5 // pred_fallthru
      _
    %p411 = scmp.le.s32.totalorder 1, %s20
    %p412 = scmp.lt.s32.totalorder %s20, 3
    %p413 = pnand %p411, %p412
    %p414 = pneg %p413
    // Predicated region
    $region73: #{gpt_forward.3} parent=5 // pred_check
      _
    $region74: #{gpt_forward.3} parent=5 // pred_check_branch
      %416 = sbr.rel (%p413) target = $region76
    $region75: #{gpt_forward.3} parent=5 // pred_region
      %s417 = ssub.s32 %s20, 1
      %p418 = scmp.lt.s32.totalorder %s25, 1
      %s419 = scalar_select %p418, %s25, 1
      %s420 = smul.addr %s419, 32
      %s421 = smul.addr %s420, 8
      %s422 = scalar_lea.vmem %s0, %s421
      %p423 = pneg %p46
      %p424 = pneg %p43
      %p425 = pneg %p67
      %p426 = pneg %p64
      %p427 = pneg %p88
      %p428 = pneg %p85
      %p429 = pneg %p109
      %p430 = pneg %p106
      %p431 = pneg %p130
      %p432 = pneg %p127
      %p433 = pneg %p151
      %p434 = pneg %p148
      %p435 = pneg %p172
      %p436 = pneg %p169
      %p437 = pneg %p193
      %p438 = pneg %p190
      %p439 = pneg %p214
      %p440 = pneg %p211
      %p441 = pneg %p235
      %p442 = pneg %p232
      %p443 = pneg %p256
      %p444 = pneg %p253
      %p445 = pneg %p277
      %p446 = pneg %p274
      %p447 = pneg %p298
      %p448 = pneg %p295
      %p449 = pneg %p319
      %p450 = pneg %p316
      %p451 = pneg %p345
      %p452 = pneg %p342
      %p453 = scmp.lt.s32.totalorder %s25, 1
      %s454 = scalar_select %p453, %s25, 1
      %s455 = smul.addr %s454, 32
      %s456 = smul.addr %s455, 8
      %s457 = scalar_lea.vmem %s14, %s456
      %p458 = scmp.lt.s32.totalorder %s25, 1
      %s459 = scalar_select %p458, %s25, 1
      %s460 = smul.addr %s459, 32
      %s461 = smul.addr %s460, 8
      %s462 = scalar_lea.vmem %s0, %s461
      %p463 = scmp.lt.s32.totalorder %s25, 1
      %s464 = scalar_select %p463, %s25, 1
      %s465 = smul.addr %s464, 32
      %s466 = smul.addr %s465, 8
      %s467 = scalar_lea.vmem %s14, %s466
      %v469 = vld [vmem:[%s462] sm:$0xff]
      %v470 = vld [vmem:[%s462 + $0x8] sm:$0xff]
      %v471 = vld [vmem:[%s462 + $0x10] sm:$0xff]
      %v472 = vld [vmem:[%s462 + $0x18] sm:$0xff]
      %v473 = vld [vmem:[%s462 + $0x20] sm:$0xff]
      %v474 = vld [vmem:[%s462 + $0x28] sm:$0xff]
      %v475 = vld [vmem:[%s462 + $0x30] sm:$0xff]
      %v476 = vld [vmem:[%s462 + $0x38] sm:$0xff]
      %v477 = vld [vmem:[%s462 + $0x40] sm:$0xff]
      %v478 = vld [vmem:[%s462 + $0x48] sm:$0xff]
      %v479 = vld [vmem:[%s462 + $0x50] sm:$0xff]
      %v480 = vld [vmem:[%s462 + $0x58] sm:$0xff]
      %v481 = vld [vmem:[%s462 + $0x60] sm:$0xff]
      %v482 = vld [vmem:[%s462 + $0x68] sm:$0xff]
      %v483 = vld [vmem:[%s462 + $0x70] sm:$0xff]
      %v484 = vld [vmem:[%s462 + $0x78] sm:$0xff]
      %v485 = vld [vmem:[%s462 + $0x80] sm:$0xff]
      %v486 = vld [vmem:[%s462 + $0x88] sm:$0xff]
      %v487 = vld [vmem:[%s462 + $0x90] sm:$0xff]
      %v488 = vld [vmem:[%s462 + $0x98] sm:$0xff]
      %v489 = vld [vmem:[%s462 + $0xa0] sm:$0xff]
      %v490 = vld [vmem:[%s462 + $0xa8] sm:$0xff]
      %v491 = vld [vmem:[%s462 + $0xb0] sm:$0xff]
      %v492 = vld [vmem:[%s462 + $0xb8] sm:$0xff]
      %v493 = vld [vmem:[%s462 + $0xc0] sm:$0xff]
      %v494 = vld [vmem:[%s462 + $0xc8] sm:$0xff]
      %v495 = vld [vmem:[%s462 + $0xd0] sm:$0xff]
      %v496 = vld [vmem:[%s462 + $0xd8] sm:$0xff]
      %v497 = vld [vmem:[%s462 + $0xe0] sm:$0xff]
      %v498 = vld [vmem:[%s462 + $0xe8] sm:$0xff]
      %v499 = vld [vmem:[%s462 + $0xf0] sm:$0xff]
      %v500 = vld [vmem:[%s462 + $0xf8] sm:$0xff]
      %v501 = vld [vmem:[%s1] sm:$0xff]
      %v502 = vld [vmem:[%s1 + $0x8] sm:$0xff]
      %v503 = vld [vmem:[%s1 + $0x10] sm:$0xff]
      %v504 = vld [vmem:[%s1 + $0x18] sm:$0xff]
      %v505 = vld [vmem:[%s1 + $0x20] sm:$0xff]
      %v506 = vld [vmem:[%s1 + $0x28] sm:$0xff]
      %v507 = vld [vmem:[%s1 + $0x30] sm:$0xff]
      %v508 = vld [vmem:[%s1 + $0x38] sm:$0xff]
      %v509 = vld [vmem:[%s1 + $0x40] sm:$0xff]
      %v510 = vld [vmem:[%s1 + $0x48] sm:$0xff]
      %v511 = vld [vmem:[%s1 + $0x50] sm:$0xff]
      %v512 = vld [vmem:[%s1 + $0x58] sm:$0xff]
      %v513 = vld [vmem:[%s1 + $0x60] sm:$0xff]
      %v514 = vld [vmem:[%s1 + $0x68] sm:$0xff]
      %v515 = vld [vmem:[%s1 + $0x70] sm:$0xff]
      %v516 = vld [vmem:[%s1 + $0x78] sm:$0xff]
      %v517 = vld [vmem:[%s2] sm:$0x3]
      %v518 = vld [vmem:[%s3] sm:$0x3]
      %v519 = vadd.f32 %v469, %v470
      %520 = vadd.xlane.f32.xlu0 %v519
      %v521 = vpop.xlane.xlu0 %520
      %v522 = vadd.f32 %v471, %v472
      %523 = vadd.xlane.f32.xlu0 %v522
      %v524 = vpop.xlane.xlu0 %523
      %v525 = vadd.f32 %v473, %v474
      %526 = vadd.xlane.f32.xlu0 %v525
      %v527 = vpop.xlane.xlu0 %526
      %v528 = vadd.f32 %v475, %v476
      %529 = vadd.xlane.f32.xlu0 %v528
      %v530 = vpop.xlane.xlu0 %529
      %v531 = vadd.f32 %v477, %v478
      %532 = vadd.xlane.f32.xlu0 %v531
      %v533 = vpop.xlane.xlu0 %532
      %v534 = vadd.f32 %v479, %v480
      %535 = vadd.xlane.f32.xlu0 %v534
      %v536 = vpop.xlane.xlu0 %535
      %v537 = vadd.f32 %v481, %v482
      %538 = vadd.xlane.f32.xlu0 %v537
      %v539 = vpop.xlane.xlu0 %538
      %v540 = vadd.f32 %v483, %v484
      %541 = vadd.xlane.f32.xlu0 %v540
      %v542 = vpop.xlane.xlu0 %541
      %v543 = vadd.f32 %v485, %v486
      %544 = vadd.xlane.f32.xlu0 %v543
      %v545 = vpop.xlane.xlu0 %544
      %v546 = vadd.f32 %v487, %v488
      %547 = vadd.xlane.f32.xlu0 %v546
      %v548 = vpop.xlane.xlu0 %547
      %v549 = vadd.f32 %v489, %v490
      %550 = vadd.xlane.f32.xlu0 %v549
      %v551 = vpop.xlane.xlu0 %550
      %v552 = vadd.f32 %v491, %v492
      %553 = vadd.xlane.f32.xlu0 %v552
      %v554 = vpop.xlane.xlu0 %553
      %v555 = vadd.f32 %v493, %v494
      %556 = vadd.xlane.f32.xlu0 %v555
      %v557 = vpop.xlane.xlu0 %556
      %v558 = vadd.f32 %v495, %v496
      %559 = vadd.xlane.f32.xlu0 %v558
      %v560 = vpop.xlane.xlu0 %559
      %v561 = vadd.f32 %v497, %v498
      %562 = vadd.xlane.f32.xlu0 %v561
      %v563 = vpop.xlane.xlu0 %562
      %v564 = vadd.f32 %v499, %v500
      %565 = vadd.xlane.f32.xlu0 %v564
      %v566 = vpop.xlane.xlu0 %565
      %v567 = vrcp.pop 256.0
      %v568 = vmul.f32 %v521, %v567
      %v569 = vmul.f32 %v524, %v567
      %v570 = vmul.f32 %v527, %v567
      %v571 = vmul.f32 %v530, %v567
      %v572 = vmul.f32 %v533, %v567
      %v573 = vmul.f32 %v536, %v567
      %v574 = vmul.f32 %v539, %v567
      %v575 = vmul.f32 %v542, %v567
      %v576 = vmul.f32 %v545, %v567
      %v577 = vmul.f32 %v548, %v567
      %v578 = vmul.f32 %v551, %v567
      %v579 = vmul.f32 %v554, %v567
      %v580 = vmul.f32 %v557, %v567
      %v581 = vmul.f32 %v560, %v567
      %v582 = vmul.f32 %v563, %v567
      %v583 = vmul.f32 %v566, %v567
      %v584 = vsub.f32 %v469, %v568
      %v585 = vsub.f32 %v470, %v568
      %v586 = vsub.f32 %v471, %v569
      %v587 = vsub.f32 %v472, %v569
      %v588 = vsub.f32 %v473, %v570
      %v589 = vsub.f32 %v474, %v570
      %v590 = vsub.f32 %v475, %v571
      %v591 = vsub.f32 %v476, %v571
      %v592 = vsub.f32 %v477, %v572
      %v593 = vsub.f32 %v478, %v572
      %v594 = vsub.f32 %v479, %v573
      %v595 = vsub.f32 %v480, %v573
      %v596 = vsub.f32 %v481, %v574
      %v597 = vsub.f32 %v482, %v574
      %v598 = vsub.f32 %v483, %v575
      %v599 = vsub.f32 %v484, %v575
      %v600 = vsub.f32 %v485, %v576
      %v601 = vsub.f32 %v486, %v576
      %v602 = vsub.f32 %v487, %v577
      %v603 = vsub.f32 %v488, %v577
      %v604 = vsub.f32 %v489, %v578
      %v605 = vsub.f32 %v490, %v578
      %v606 = vsub.f32 %v491, %v579
      %v607 = vsub.f32 %v492, %v579
      %v608 = vsub.f32 %v493, %v580
      %v609 = vsub.f32 %v494, %v580
      %v610 = vsub.f32 %v495, %v581
      %v611 = vsub.f32 %v496, %v581
      %v612 = vsub.f32 %v497, %v582
      %v613 = vsub.f32 %v498, %v582
      %v614 = vsub.f32 %v499, %v583
      %v615 = vsub.f32 %v500, %v583
      %v616 = vmul.f32 %v584, %v584
      %v617 = vmul.f32 %v585, %v585
      %v618 = vmul.f32 %v586, %v586
      %v619 = vmul.f32 %v587, %v587
      %v620 = vmul.f32 %v588, %v588
      %v621 = vmul.f32 %v589, %v589
      %v622 = vmul.f32 %v590, %v590
      %v623 = vmul.f32 %v591, %v591
      %v624 = vmul.f32 %v592, %v592
      %v625 = vmul.f32 %v593, %v593
      %v626 = vmul.f32 %v594, %v594
      %v627 = vmul.f32 %v595, %v595
      %v628 = vmul.f32 %v596, %v596
      %v629 = vmul.f32 %v597, %v597
      %v630 = vmul.f32 %v598, %v598
      %v631 = vmul.f32 %v599, %v599
      %v632 = vmul.f32 %v600, %v600
      %v633 = vmul.f32 %v601, %v601
      %v634 = vmul.f32 %v602, %v602
      %v635 = vmul.f32 %v603, %v603
      %v636 = vmul.f32 %v604, %v604
      %v637 = vmul.f32 %v605, %v605
      %v638 = vmul.f32 %v606, %v606
      %v639 = vmul.f32 %v607, %v607
      %v640 = vmul.f32 %v608, %v608
      %v641 = vmul.f32 %v609, %v609
      %v642 = vmul.f32 %v610, %v610
      %v643 = vmul.f32 %v611, %v611
      %v644 = vmul.f32 %v612, %v612
      %v645 = vmul.f32 %v613, %v613
      %v646 = vmul.f32 %v614, %v614
      %v647 = vmul.f32 %v615, %v615
      %v648 = vadd.f32 %v616, %v617
      %649 = vadd.xlane.f32.xlu0 %v648
      %v650 = vpop.xlane.xlu0 %649
      %v651 = vadd.f32 %v618, %v619
      %652 = vadd.xlane.f32.xlu0 %v651
      %v653 = vpop.xlane.xlu0 %652
      %v654 = vadd.f32 %v620, %v621
      %655 = vadd.xlane.f32.xlu0 %v654
      %v656 = vpop.xlane.xlu0 %655
      %v657 = vadd.f32 %v622, %v623
      %658 = vadd.xlane.f32.xlu0 %v657
      %v659 = vpop.xlane.xlu0 %658
      %v660 = vadd.f32 %v624, %v625
      %661 = vadd.xlane.f32.xlu0 %v660
      %v662 = vpop.xlane.xlu0 %661
      %v663 = vadd.f32 %v626, %v627
      %664 = vadd.xlane.f32.xlu0 %v663
      %v665 = vpop.xlane.xlu0 %664
      %v666 = vadd.f32 %v628, %v629
      %667 = vadd.xlane.f32.xlu0 %v666
      %v668 = vpop.xlane.xlu0 %667
      %v669 = vadd.f32 %v630, %v631
      %670 = vadd.xlane.f32.xlu0 %v669
      %v671 = vpop.xlane.xlu0 %670
      %v672 = vadd.f32 %v632, %v633
      %673 = vadd.xlane.f32.xlu0 %v672
      %v674 = vpop.xlane.xlu0 %673
      %v675 = vadd.f32 %v634, %v635
      %676 = vadd.xlane.f32.xlu0 %v675
      %v677 = vpop.xlane.xlu0 %676
      %v678 = vadd.f32 %v636, %v637
      %679 = vadd.xlane.f32.xlu0 %v678
      %v680 = vpop.xlane.xlu0 %679
      %v681 = vadd.f32 %v638, %v639
      %682 = vadd.xlane.f32.xlu0 %v681
      %v683 = vpop.xlane.xlu0 %682
      %v684 = vadd.f32 %v640, %v641
      %685 = vadd.xlane.f32.xlu0 %v684
      %v686 = vpop.xlane.xlu0 %685
      %v687 = vadd.f32 %v642, %v643
      %688 = vadd.xlane.f32.xlu0 %v687
      %v689 = vpop.xlane.xlu0 %688
      %v690 = vadd.f32 %v644, %v645
      %691 = vadd.xlane.f32.xlu0 %v690
      %v692 = vpop.xlane.xlu0 %691
      %v693 = vadd.f32 %v646, %v647
      %694 = vadd.xlane.f32.xlu0 %v693
      %v695 = vpop.xlane.xlu0 %694
      %v696 = vmul.f32 %v650, %v567
      %v697 = vmul.f32 %v653, %v567
      %v698 = vmul.f32 %v656, %v567
      %v699 = vmul.f32 %v659, %v567
      %v700 = vmul.f32 %v662, %v567
      %v701 = vmul.f32 %v665, %v567
      %v702 = vmul.f32 %v668, %v567
      %v703 = vmul.f32 %v671, %v567
      %v704 = vmul.f32 %v674, %v567
      %v705 = vmul.f32 %v677, %v567
      %v706 = vmul.f32 %v680, %v567
      %v707 = vmul.f32 %v683, %v567
      %v708 = vmul.f32 %v686, %v567
      %v709 = vmul.f32 %v689, %v567
      %v710 = vmul.f32 %v692, %v567
      %v711 = vmul.f32 %v695, %v567
      %v712 = vadd.f32 %v696, 1e-05
      %v713 = vadd.f32 %v697, 1e-05
      %v714 = vadd.f32 %v698, 1e-05
      %v715 = vadd.f32 %v699, 1e-05
      %v716 = vadd.f32 %v700, 1e-05
      %v717 = vadd.f32 %v701, 1e-05
      %v718 = vadd.f32 %v702, 1e-05
      %v719 = vadd.f32 %v703, 1e-05
      %v720 = vadd.f32 %v704, 1e-05
      %v721 = vadd.f32 %v705, 1e-05
      %v722 = vadd.f32 %v706, 1e-05
      %v723 = vadd.f32 %v707, 1e-05
      %v724 = vadd.f32 %v708, 1e-05
      %v725 = vadd.f32 %v709, 1e-05
      %v726 = vadd.f32 %v710, 1e-05
      %v727 = vadd.f32 %v711, 1e-05
      %v728 = vrsqrt.pop %v712
      %v729 = vrsqrt.pop %v713
      %v730 = vrsqrt.pop %v714
      %v731 = vrsqrt.pop %v715
      %v732 = vrsqrt.pop %v716
      %v733 = vrsqrt.pop %v717
      %v734 = vrsqrt.pop %v718
      %v735 = vrsqrt.pop %v719
      %v736 = vrsqrt.pop %v720
      %v737 = vrsqrt.pop %v721
      %v738 = vrsqrt.pop %v722
      %v739 = vrsqrt.pop %v723
      %v740 = vrsqrt.pop %v724
      %v741 = vrsqrt.pop %v725
      %v742 = vrsqrt.pop %v726
      %v743 = vrsqrt.pop %v727
      %v744 = vmul.f32 %v584, %v728
      %v745 = vmul.f32 %v585, %v728
      %v746 = vmul.f32 %v586, %v729
      %v747 = vmul.f32 %v587, %v729
      %v748 = vmul.f32 %v588, %v730
      %v749 = vmul.f32 %v589, %v730
      %v750 = vmul.f32 %v590, %v731
      %v751 = vmul.f32 %v591, %v731
      %v752 = vmul.f32 %v592, %v732
      %v753 = vmul.f32 %v593, %v732
      %v754 = vmul.f32 %v594, %v733
      %v755 = vmul.f32 %v595, %v733
      %v756 = vmul.f32 %v596, %v734
      %v757 = vmul.f32 %v597, %v734
      %v758 = vmul.f32 %v598, %v735
      %v759 = vmul.f32 %v599, %v735
      %v760 = vmul.f32 %v600, %v736
      %v761 = vmul.f32 %v601, %v736
      %v762 = vmul.f32 %v602, %v737
      %v763 = vmul.f32 %v603, %v737
      %v764 = vmul.f32 %v604, %v738
      %v765 = vmul.f32 %v605, %v738
      %v766 = vmul.f32 %v606, %v739
      %v767 = vmul.f32 %v607, %v739
      %v768 = vmul.f32 %v608, %v740
      %v769 = vmul.f32 %v609, %v740
      %v770 = vmul.f32 %v610, %v741
      %v771 = vmul.f32 %v611, %v741
      %v772 = vmul.f32 %v612, %v742
      %v773 = vmul.f32 %v613, %v742
      %v774 = vmul.f32 %v614, %v743
      %v775 = vmul.f32 %v615, %v743
      %v777 = vlaneseq
      %v778 = vshrl.u32 %v777, 7
      %v779 = vsub.s32 0, %v778
      %v780 = vrot.slane %v517, %v779
      %v781 = vlaneseq
      %v782 = vshrl.u32 %v781, 7
      %v783 = vsub.s32 1, %v782
      %v784 = vrot.slane %v517, %v783
      %v787 = vmul.f32 %v744, %v780
      %v788 = vmul.f32 %v745, %v784
      %v789 = vmul.f32 %v746, %v780
      %v790 = vmul.f32 %v747, %v784
      %v791 = vmul.f32 %v748, %v780
      %v792 = vmul.f32 %v749, %v784
      %v793 = vmul.f32 %v750, %v780
      %v794 = vmul.f32 %v751, %v784
      %v795 = vmul.f32 %v752, %v780
      %v796 = vmul.f32 %v753, %v784
      %v797 = vmul.f32 %v754, %v780
      %v798 = vmul.f32 %v755, %v784
      %v799 = vmul.f32 %v756, %v780
      %v800 = vmul.f32 %v757, %v784
      %v801 = vmul.f32 %v758, %v780
      %v802 = vmul.f32 %v759, %v784
      %v803 = vmul.f32 %v760, %v780
      %v804 = vmul.f32 %v761, %v784
      %v805 = vmul.f32 %v762, %v780
      %v806 = vmul.f32 %v763, %v784
      %v807 = vmul.f32 %v764, %v780
      %v808 = vmul.f32 %v765, %v784
      %v809 = vmul.f32 %v766, %v780
      %v810 = vmul.f32 %v767, %v784
      %v811 = vmul.f32 %v768, %v780
      %v812 = vmul.f32 %v769, %v784
      %v813 = vmul.f32 %v770, %v780
      %v814 = vmul.f32 %v771, %v784
      %v815 = vmul.f32 %v772, %v780
      %v816 = vmul.f32 %v773, %v784
      %v817 = vmul.f32 %v774, %v780
      %v818 = vmul.f32 %v775, %v784
      %v820 = vlaneseq
      %v821 = vshrl.u32 %v820, 7
      %v822 = vsub.s32 0, %v821
      %v823 = vrot.slane %v518, %v822
      %v824 = vlaneseq
      %v825 = vshrl.u32 %v824, 7
      %v826 = vsub.s32 1, %v825
      %v827 = vrot.slane %v518, %v826
      %v830 = vadd.f32 %v787, %v823
      %v831 = vadd.f32 %v788, %v827
      %v832 = vadd.f32 %v789, %v823
      %v833 = vadd.f32 %v790, %v827
      %v834 = vadd.f32 %v791, %v823
      %v835 = vadd.f32 %v792, %v827
      %v836 = vadd.f32 %v793, %v823
      %v837 = vadd.f32 %v794, %v827
      %v838 = vadd.f32 %v795, %v823
      %v839 = vadd.f32 %v796, %v827
      %v840 = vadd.f32 %v797, %v823
      %v841 = vadd.f32 %v798, %v827
      %v842 = vadd.f32 %v799, %v823
      %v843 = vadd.f32 %v800, %v827
      %v844 = vadd.f32 %v801, %v823
      %v845 = vadd.f32 %v802, %v827
      %v846 = vadd.f32 %v803, %v823
      %v847 = vadd.f32 %v804, %v827
      %v848 = vadd.f32 %v805, %v823
      %v849 = vadd.f32 %v806, %v827
      %v850 = vadd.f32 %v807, %v823
      %v851 = vadd.f32 %v808, %v827
      %v852 = vadd.f32 %v809, %v823
      %v853 = vadd.f32 %v810, %v827
      %v854 = vadd.f32 %v811, %v823
      %v855 = vadd.f32 %v812, %v827
      %v856 = vadd.f32 %v813, %v823
      %v857 = vadd.f32 %v814, %v827
      %v858 = vadd.f32 %v815, %v823
      %v859 = vadd.f32 %v816, %v827
      %v860 = vadd.f32 %v817, %v823
      %v861 = vadd.f32 %v818, %v827
      %v862 = vpack.c.bf16 %v832, %v830
      %v863 = vpack.c.bf16 %v833, %v831
      %v864 = vpack.c.bf16 %v836, %v834
      %v865 = vpack.c.bf16 %v837, %v835
      %v866 = vpack.c.bf16 %v840, %v838
      %v867 = vpack.c.bf16 %v841, %v839
      %v868 = vpack.c.bf16 %v844, %v842
      %v869 = vpack.c.bf16 %v845, %v843
      %v870 = vpack.c.bf16 %v848, %v846
      %v871 = vpack.c.bf16 %v849, %v847
      %v872 = vpack.c.bf16 %v852, %v850
      %v873 = vpack.c.bf16 %v853, %v851
      %v874 = vpack.c.bf16 %v856, %v854
      %v875 = vpack.c.bf16 %v857, %v855
      %v876 = vpack.c.bf16 %v860, %v858
      %v877 = vpack.c.bf16 %v861, %v859
      %v878 = vld [vmem:[%s4] sm:$0xff]
      %v879 = vld [vmem:[%s4 + $0x8] sm:$0xff]
      %v880 = vld [vmem:[%s4 + $0x10] sm:$0xff]
      %v881 = vld [vmem:[%s4 + $0x18] sm:$0xff]
      %v882 = vld [vmem:[%s4 + $0x20] sm:$0xff]
      %v883 = vld [vmem:[%s4 + $0x28] sm:$0xff]
      %v884 = vld [vmem:[%s4 + $0x30] sm:$0xff]
      %v885 = vld [vmem:[%s4 + $0x38] sm:$0xff]
      %v886 = vld [vmem:[%s4 + $0x40] sm:$0xff]
      %v887 = vld [vmem:[%s4 + $0x48] sm:$0xff]
      %v888 = vld [vmem:[%s4 + $0x50] sm:$0xff]
      %v889 = vld [vmem:[%s4 + $0x58] sm:$0xff]
      %v890 = vld [vmem:[%s4 + $0x60] sm:$0xff]
      %v891 = vld [vmem:[%s4 + $0x68] sm:$0xff]
      %v892 = vld [vmem:[%s4 + $0x70] sm:$0xff]
      %v893 = vld [vmem:[%s4 + $0x78] sm:$0xff]
      %v894 = vld [vmem:[%s4 + $0x80] sm:$0xff]
      %v895 = vld [vmem:[%s4 + $0x88] sm:$0xff]
      %v896 = vld [vmem:[%s4 + $0x90] sm:$0xff]
      %v897 = vld [vmem:[%s4 + $0x98] sm:$0xff]
      %v898 = vld [vmem:[%s4 + $0xa0] sm:$0xff]
      %v899 = vld [vmem:[%s4 + $0xa8] sm:$0xff]
      %v900 = vld [vmem:[%s4 + $0xb0] sm:$0xff]
      %v901 = vld [vmem:[%s4 + $0xb8] sm:$0xff]
      %v902 = vld [vmem:[%s4 + $0xc0] sm:$0xff]
      %v903 = vld [vmem:[%s4 + $0xc8] sm:$0xff]
      %v904 = vld [vmem:[%s4 + $0xd0] sm:$0xff]
      %v905 = vld [vmem:[%s4 + $0xd8] sm:$0xff]
      %v906 = vld [vmem:[%s4 + $0xe0] sm:$0xff]
      %v907 = vld [vmem:[%s4 + $0xe8] sm:$0xff]
      %v908 = vld [vmem:[%s4 + $0xf0] sm:$0xff]
      %v909 = vld [vmem:[%s4 + $0xf8] sm:$0xff]
      %v910 = vld [vmem:[%s4 + $0x100] sm:$0xff]
      %v911 = vld [vmem:[%s4 + $0x108] sm:$0xff]
      %v912 = vld [vmem:[%s4 + $0x110] sm:$0xff]
      %v913 = vld [vmem:[%s4 + $0x118] sm:$0xff]
      %v914 = vld [vmem:[%s4 + $0x120] sm:$0xff]
      %v915 = vld [vmem:[%s4 + $0x128] sm:$0xff]
      %v916 = vld [vmem:[%s4 + $0x130] sm:$0xff]
      %v917 = vld [vmem:[%s4 + $0x138] sm:$0xff]
      %v918 = vld [vmem:[%s4 + $0x140] sm:$0xff]
      %v919 = vld [vmem:[%s4 + $0x148] sm:$0xff]
      %v920 = vld [vmem:[%s4 + $0x150] sm:$0xff]
      %v921 = vld [vmem:[%s4 + $0x158] sm:$0xff]
      %v922 = vld [vmem:[%s4 + $0x160] sm:$0xff]
      %v923 = vld [vmem:[%s4 + $0x168] sm:$0xff]
      %v924 = vld [vmem:[%s4 + $0x170] sm:$0xff]
      %v925 = vld [vmem:[%s4 + $0x178] sm:$0xff]
      %v926 = vld [vmem:[%s4 + $0x180] sm:$0xff]
      %v927 = vld [vmem:[%s4 + $0x188] sm:$0xff]
      %v928 = vld [vmem:[%s4 + $0x190] sm:$0xff]
      %v929 = vld [vmem:[%s4 + $0x198] sm:$0xff]
      %v930 = vld [vmem:[%s4 + $0x1a0] sm:$0xff]
      %v931 = vld [vmem:[%s4 + $0x1a8] sm:$0xff]
      %v932 = vld [vmem:[%s4 + $0x1b0] sm:$0xff]
      %v933 = vld [vmem:[%s4 + $0x1b8] sm:$0xff]
      %v934 = vld [vmem:[%s4 + $0x1c0] sm:$0xff]
      %v935 = vld [vmem:[%s4 + $0x1c8] sm:$0xff]
      %v936 = vld [vmem:[%s4 + $0x1d0] sm:$0xff]
      %v937 = vld [vmem:[%s4 + $0x1d8] sm:$0xff]
      %v938 = vld [vmem:[%s4 + $0x1e0] sm:$0xff]
      %v939 = vld [vmem:[%s4 + $0x1e8] sm:$0xff]
      %v940 = vld [vmem:[%s4 + $0x1f0] sm:$0xff]
      %v941 = vld [vmem:[%s4 + $0x1f8] sm:$0xff]
      %v942 = vld [vmem:[%s4 + $0x200] sm:$0xff]
      %v943 = vld [vmem:[%s4 + $0x208] sm:$0xff]
      %v944 = vld [vmem:[%s4 + $0x210] sm:$0xff]
      %v945 = vld [vmem:[%s4 + $0x218] sm:$0xff]
      %v946 = vld [vmem:[%s4 + $0x220] sm:$0xff]
      %v947 = vld [vmem:[%s4 + $0x228] sm:$0xff]
      %v948 = vld [vmem:[%s4 + $0x230] sm:$0xff]
      %v949 = vld [vmem:[%s4 + $0x238] sm:$0xff]
      %v950 = vld [vmem:[%s4 + $0x240] sm:$0xff]
      %v951 = vld [vmem:[%s4 + $0x248] sm:$0xff]
      %v952 = vld [vmem:[%s4 + $0x250] sm:$0xff]
      %v953 = vld [vmem:[%s4 + $0x258] sm:$0xff]
      %v954 = vld [vmem:[%s4 + $0x260] sm:$0xff]
      %v955 = vld [vmem:[%s4 + $0x268] sm:$0xff]
      %v956 = vld [vmem:[%s4 + $0x270] sm:$0xff]
      %v957 = vld [vmem:[%s4 + $0x278] sm:$0xff]
      %v958 = vld [vmem:[%s4 + $0x280] sm:$0xff]
      %v959 = vld [vmem:[%s4 + $0x288] sm:$0xff]
      %v960 = vld [vmem:[%s4 + $0x290] sm:$0xff]
      %v961 = vld [vmem:[%s4 + $0x298] sm:$0xff]
      %v962 = vld [vmem:[%s4 + $0x2a0] sm:$0xff]
      %v963 = vld [vmem:[%s4 + $0x2a8] sm:$0xff]
      %v964 = vld [vmem:[%s4 + $0x2b0] sm:$0xff]
      %v965 = vld [vmem:[%s4 + $0x2b8] sm:$0xff]
      %v966 = vld [vmem:[%s4 + $0x2c0] sm:$0xff]
      %v967 = vld [vmem:[%s4 + $0x2c8] sm:$0xff]
      %v968 = vld [vmem:[%s4 + $0x2d0] sm:$0xff]
      %v969 = vld [vmem:[%s4 + $0x2d8] sm:$0xff]
      %v970 = vld [vmem:[%s4 + $0x2e0] sm:$0xff]
      %v971 = vld [vmem:[%s4 + $0x2e8] sm:$0xff]
      %v972 = vld [vmem:[%s4 + $0x2f0] sm:$0xff]
      %v973 = vld [vmem:[%s4 + $0x2f8] sm:$0xff]
      %v974 = vld [vmem:[%s5] sm:$0x3f]
      %v976 = vlaneseq
      %v977 = vshrl.u32 %v976, 7
      %v978 = vsub.s32 0, %v977
      %v979 = vrot.slane %v974, %v978
      %v980 = vlaneseq
      %v981 = vshrl.u32 %v980, 7
      %v982 = vsub.s32 1, %v981
      %v983 = vrot.slane %v974, %v982
      %v984 = vlaneseq
      %v985 = vshrl.u32 %v984, 7
      %v986 = vsub.s32 2, %v985
      %v987 = vrot.slane %v974, %v986
      %v988 = vlaneseq
      %v989 = vshrl.u32 %v988, 7
      %v990 = vsub.s32 3, %v989
      %v991 = vrot.slane %v974, %v990
      %v992 = vlaneseq
      %v993 = vshrl.u32 %v992, 7
      %v994 = vsub.s32 4, %v993
      %v995 = vrot.slane %v974, %v994
      %v996 = vlaneseq
      %v997 = vshrl.u32 %v996, 7
      %v998 = vsub.s32 5, %v997
      %v999 = vrot.slane %v974, %v998
      %v1102 = vunpack.c.l.b16 %v878
      %v1103 = vunpack.c.h.b16 %v878
      %v1104 = vunpack.c.l.b16 %v879
      %v1105 = vunpack.c.h.b16 %v879
      %v1106 = vunpack.c.l.b16 %v880
      %v1107 = vunpack.c.h.b16 %v880
      %v1108 = vunpack.c.l.b16 %v881
      %v1109 = vunpack.c.h.b16 %v881
      %v1110 = vunpack.c.l.b16 %v882
      %v1111 = vunpack.c.h.b16 %v882
      %v1112 = vunpack.c.l.b16 %v883
      %v1113 = vunpack.c.h.b16 %v883
      %v1114 = vunpack.c.l.b16 %v884
      %v1115 = vunpack.c.h.b16 %v884
      %v1116 = vunpack.c.l.b16 %v885
      %v1117 = vunpack.c.h.b16 %v885
      %v1118 = vunpack.c.l.b16 %v886
      %v1119 = vunpack.c.h.b16 %v886
      %v1120 = vunpack.c.l.b16 %v887
      %v1121 = vunpack.c.h.b16 %v887
      %v1122 = vunpack.c.l.b16 %v888
      %v1123 = vunpack.c.h.b16 %v888
      %v1124 = vunpack.c.l.b16 %v889
      %v1125 = vunpack.c.h.b16 %v889
      %v1126 = vunpack.c.l.b16 %v890
      %v1127 = vunpack.c.h.b16 %v890
      %v1128 = vunpack.c.l.b16 %v891
      %v1129 = vunpack.c.h.b16 %v891
      %v1130 = vunpack.c.l.b16 %v892
      %v1131 = vunpack.c.h.b16 %v892
      %v1132 = vunpack.c.l.b16 %v893
      %v1133 = vunpack.c.h.b16 %v893
      %v1134 = vunpack.c.l.b16 %v894
      %v1135 = vunpack.c.h.b16 %v894
      %v1136 = vunpack.c.l.b16 %v895
      %v1137 = vunpack.c.h.b16 %v895
      %v1138 = vunpack.c.l.b16 %v896
      %v1139 = vunpack.c.h.b16 %v896
      %v1140 = vunpack.c.l.b16 %v897
      %v1141 = vunpack.c.h.b16 %v897
      %v1142 = vunpack.c.l.b16 %v898
      %v1143 = vunpack.c.h.b16 %v898
      %v1144 = vunpack.c.l.b16 %v899
      %v1145 = vunpack.c.h.b16 %v899
      %v1146 = vunpack.c.l.b16 %v900
      %v1147 = vunpack.c.h.b16 %v900
      %v1148 = vunpack.c.l.b16 %v901
      %v1149 = vunpack.c.h.b16 %v901
      %v1150 = vunpack.c.l.b16 %v902
      %v1151 = vunpack.c.h.b16 %v902
      %v1152 = vunpack.c.l.b16 %v903
      %v1153 = vunpack.c.h.b16 %v903
      %v1154 = vunpack.c.l.b16 %v904
      %v1155 = vunpack.c.h.b16 %v904
      %v1156 = vunpack.c.l.b16 %v905
      %v1157 = vunpack.c.h.b16 %v905
      %v1158 = vunpack.c.l.b16 %v906
      %v1159 = vunpack.c.h.b16 %v906
      %v1160 = vunpack.c.l.b16 %v907
      %v1161 = vunpack.c.h.b16 %v907
      %v1162 = vunpack.c.l.b16 %v908
      %v1163 = vunpack.c.h.b16 %v908
      %v1164 = vunpack.c.l.b16 %v909
      %v1165 = vunpack.c.h.b16 %v909
      %v1166 = vunpack.c.l.b16 %v910
      %v1167 = vunpack.c.h.b16 %v910
      %v1168 = vunpack.c.l.b16 %v911
      %v1169 = vunpack.c.h.b16 %v911
      %v1170 = vunpack.c.l.b16 %v912
      %v1171 = vunpack.c.h.b16 %v912
      %v1172 = vunpack.c.l.b16 %v913
      %v1173 = vunpack.c.h.b16 %v913
      %v1174 = vunpack.c.l.b16 %v914
      %v1175 = vunpack.c.h.b16 %v914
      %v1176 = vunpack.c.l.b16 %v915
      %v1177 = vunpack.c.h.b16 %v915
      %v1178 = vunpack.c.l.b16 %v916
      %v1179 = vunpack.c.h.b16 %v916
      %v1180 = vunpack.c.l.b16 %v917
      %v1181 = vunpack.c.h.b16 %v917
      %v1182 = vunpack.c.l.b16 %v918
      %v1183 = vunpack.c.h.b16 %v918
      %v1184 = vunpack.c.l.b16 %v919
      %v1185 = vunpack.c.h.b16 %v919
      %v1186 = vunpack.c.l.b16 %v920
      %v1187 = vunpack.c.h.b16 %v920
      %v1188 = vunpack.c.l.b16 %v921
      %v1189 = vunpack.c.h.b16 %v921
      %v1190 = vunpack.c.l.b16 %v922
      %v1191 = vunpack.c.h.b16 %v922
      %v1192 = vunpack.c.l.b16 %v923
      %v1193 = vunpack.c.h.b16 %v923
      %v1194 = vunpack.c.l.b16 %v924
      %v1195 = vunpack.c.h.b16 %v924
      %v1196 = vunpack.c.l.b16 %v925
      %v1197 = vunpack.c.h.b16 %v925
      %v1198 = vunpack.c.l.b16 %v926
      %v1199 = vunpack.c.h.b16 %v926
      %v1200 = vunpack.c.l.b16 %v927
      %v1201 = vunpack.c.h.b16 %v927
      %v1202 = vunpack.c.l.b16 %v928
      %v1203 = vunpack.c.h.b16 %v928
      %v1204 = vunpack.c.l.b16 %v929
      %v1205 = vunpack.c.h.b16 %v929
      %v1206 = vunpack.c.l.b16 %v930
      %v1207 = vunpack.c.h.b16 %v930
      %v1208 = vunpack.c.l.b16 %v931
      %v1209 = vunpack.c.h.b16 %v931
      %v1210 = vunpack.c.l.b16 %v932
      %v1211 = vunpack.c.h.b16 %v932
      %v1212 = vunpack.c.l.b16 %v933
      %v1213 = vunpack.c.h.b16 %v933
      %v1214 = vunpack.c.l.b16 %v934
      %v1215 = vunpack.c.h.b16 %v934
      %v1216 = vunpack.c.l.b16 %v935
      %v1217 = vunpack.c.h.b16 %v935
      %v1218 = vunpack.c.l.b16 %v936
      %v1219 = vunpack.c.h.b16 %v936
      %v1220 = vunpack.c.l.b16 %v937
      %v1221 = vunpack.c.h.b16 %v937
      %v1222 = vunpack.c.l.b16 %v938
      %v1223 = vunpack.c.h.b16 %v938
      %v1224 = vunpack.c.l.b16 %v939
      %v1225 = vunpack.c.h.b16 %v939
      %v1226 = vunpack.c.l.b16 %v940
      %v1227 = vunpack.c.h.b16 %v940
      %v1228 = vunpack.c.l.b16 %v941
      %v1229 = vunpack.c.h.b16 %v941
      %v1230 = vunpack.c.l.b16 %v942
      %v1231 = vunpack.c.h.b16 %v942
      %v1232 = vunpack.c.l.b16 %v943
      %v1233 = vunpack.c.h.b16 %v943
      %v1234 = vunpack.c.l.b16 %v944
      %v1235 = vunpack.c.h.b16 %v944
      %v1236 = vunpack.c.l.b16 %v945
      %v1237 = vunpack.c.h.b16 %v945
      %v1238 = vunpack.c.l.b16 %v946
      %v1239 = vunpack.c.h.b16 %v946
      %v1240 = vunpack.c.l.b16 %v947
      %v1241 = vunpack.c.h.b16 %v947
      %v1242 = vunpack.c.l.b16 %v948
      %v1243 = vunpack.c.h.b16 %v948
      %v1244 = vunpack.c.l.b16 %v949
      %v1245 = vunpack.c.h.b16 %v949
      %v1246 = vunpack.c.l.b16 %v950
      %v1247 = vunpack.c.h.b16 %v950
      %v1248 = vunpack.c.l.b16 %v951
      %v1249 = vunpack.c.h.b16 %v951
      %v1250 = vunpack.c.l.b16 %v952
      %v1251 = vunpack.c.h.b16 %v952
      %v1252 = vunpack.c.l.b16 %v953
      %v1253 = vunpack.c.h.b16 %v953
      %v1254 = vunpack.c.l.b16 %v954
      %v1255 = vunpack.c.h.b16 %v954
      %v1256 = vunpack.c.l.b16 %v955
      %v1257 = vunpack.c.h.b16 %v955
      %v1258 = vunpack.c.l.b16 %v956
      %v1259 = vunpack.c.h.b16 %v956
      %v1260 = vunpack.c.l.b16 %v957
      %v1261 = vunpack.c.h.b16 %v957
      %v1262 = vunpack.c.l.b16 %v958
      %v1263 = vunpack.c.h.b16 %v958
      %v1264 = vunpack.c.l.b16 %v959
      %v1265 = vunpack.c.h.b16 %v959
      %v1266 = vunpack.c.l.b16 %v960
      %v1267 = vunpack.c.h.b16 %v960
      %v1268 = vunpack.c.l.b16 %v961
      %v1269 = vunpack.c.h.b16 %v961
      %v1270 = vunpack.c.l.b16 %v962
      %v1271 = vunpack.c.h.b16 %v962
      %v1272 = vunpack.c.l.b16 %v963
      %v1273 = vunpack.c.h.b16 %v963
      %v1274 = vunpack.c.l.b16 %v964
      %v1275 = vunpack.c.h.b16 %v964
      %v1276 = vunpack.c.l.b16 %v965
      %v1277 = vunpack.c.h.b16 %v965
      %v1278 = vunpack.c.l.b16 %v966
      %v1279 = vunpack.c.h.b16 %v966
      %v1280 = vunpack.c.l.b16 %v967
      %v1281 = vunpack.c.h.b16 %v967
      %v1282 = vunpack.c.l.b16 %v968
      %v1283 = vunpack.c.h.b16 %v968
      %v1284 = vunpack.c.l.b16 %v969
      %v1285 = vunpack.c.h.b16 %v969
      %v1286 = vunpack.c.l.b16 %v970
      %v1287 = vunpack.c.h.b16 %v970
      %v1288 = vunpack.c.l.b16 %v971
      %v1289 = vunpack.c.h.b16 %v971
      %v1290 = vunpack.c.l.b16 %v972
      %v1291 = vunpack.c.h.b16 %v972
      %v1292 = vunpack.c.l.b16 %v973
      %v1293 = vunpack.c.h.b16 %v973
      %v1294 = vpack.c.b16 %v1108, %v1102
      %v1295 = vpack.c.b16 %v1109, %v1103
      %v1296 = vpack.c.b16 %v1110, %v1104
      %v1297 = vpack.c.b16 %v1111, %v1105
      %v1298 = vpack.c.b16 %v1112, %v1106
      %v1299 = vpack.c.b16 %v1113, %v1107
      %v1300 = vpack.c.b16 %v1120, %v1114
      %v1301 = vpack.c.b16 %v1121, %v1115
      %v1302 = vpack.c.b16 %v1122, %v1116
      %v1303 = vpack.c.b16 %v1123, %v1117
      %v1304 = vpack.c.b16 %v1124, %v1118
      %v1305 = vpack.c.b16 %v1125, %v1119
      %v1306 = vpack.c.b16 %v1132, %v1126
      %v1307 = vpack.c.b16 %v1133, %v1127
      %v1308 = vpack.c.b16 %v1134, %v1128
      %v1309 = vpack.c.b16 %v1135, %v1129
      %v1310 = vpack.c.b16 %v1136, %v1130
      %v1311 = vpack.c.b16 %v1137, %v1131
      %v1312 = vpack.c.b16 %v1144, %v1138
      %v1313 = vpack.c.b16 %v1145, %v1139
      %v1314 = vpack.c.b16 %v1146, %v1140
      %v1315 = vpack.c.b16 %v1147, %v1141
      %v1316 = vpack.c.b16 %v1148, %v1142
      %v1317 = vpack.c.b16 %v1149, %v1143
      %v1318 = vpack.c.b16 %v1156, %v1150
      %v1319 = vpack.c.b16 %v1157, %v1151
      %v1320 = vpack.c.b16 %v1158, %v1152
      %v1321 = vpack.c.b16 %v1159, %v1153
      %v1322 = vpack.c.b16 %v1160, %v1154
      %v1323 = vpack.c.b16 %v1161, %v1155
      %v1324 = vpack.c.b16 %v1168, %v1162
      %v1325 = vpack.c.b16 %v1169, %v1163
      %v1326 = vpack.c.b16 %v1170, %v1164
      %v1327 = vpack.c.b16 %v1171, %v1165
      %v1328 = vpack.c.b16 %v1172, %v1166
      %v1329 = vpack.c.b16 %v1173, %v1167
      %v1330 = vpack.c.b16 %v1180, %v1174
      %v1331 = vpack.c.b16 %v1181, %v1175
      %v1332 = vpack.c.b16 %v1182, %v1176
      %v1333 = vpack.c.b16 %v1183, %v1177
      %v1334 = vpack.c.b16 %v1184, %v1178
      %v1335 = vpack.c.b16 %v1185, %v1179
      %v1336 = vpack.c.b16 %v1192, %v1186
      %v1337 = vpack.c.b16 %v1193, %v1187
      %v1338 = vpack.c.b16 %v1194, %v1188
      %v1339 = vpack.c.b16 %v1195, %v1189
      %v1340 = vpack.c.b16 %v1196, %v1190
      %v1341 = vpack.c.b16 %v1197, %v1191
      %v1342 = vpack.c.b16 %v1204, %v1198
      %v1343 = vpack.c.b16 %v1205, %v1199
      %v1344 = vpack.c.b16 %v1206, %v1200
      %v1345 = vpack.c.b16 %v1207, %v1201
      %v1346 = vpack.c.b16 %v1208, %v1202
      %v1347 = vpack.c.b16 %v1209, %v1203
      %v1348 = vpack.c.b16 %v1216, %v1210
      %v1349 = vpack.c.b16 %v1217, %v1211
      %v1350 = vpack.c.b16 %v1218, %v1212
      %v1351 = vpack.c.b16 %v1219, %v1213
      %v1352 = vpack.c.b16 %v1220, %v1214
      %v1353 = vpack.c.b16 %v1221, %v1215
      %v1354 = vpack.c.b16 %v1228, %v1222
      %v1355 = vpack.c.b16 %v1229, %v1223
      %v1356 = vpack.c.b16 %v1230, %v1224
      %v1357 = vpack.c.b16 %v1231, %v1225
      %v1358 = vpack.c.b16 %v1232, %v1226
      %v1359 = vpack.c.b16 %v1233, %v1227
      %v1360 = vpack.c.b16 %v1240, %v1234
      %v1361 = vpack.c.b16 %v1241, %v1235
      %v1362 = vpack.c.b16 %v1242, %v1236
      %v1363 = vpack.c.b16 %v1243, %v1237
      %v1364 = vpack.c.b16 %v1244, %v1238
      %v1365 = vpack.c.b16 %v1245, %v1239
      %v1366 = vpack.c.b16 %v1252, %v1246
      %v1367 = vpack.c.b16 %v1253, %v1247
      %v1368 = vpack.c.b16 %v1254, %v1248
      %v1369 = vpack.c.b16 %v1255, %v1249
      %v1370 = vpack.c.b16 %v1256, %v1250
      %v1371 = vpack.c.b16 %v1257, %v1251
      %v1372 = vpack.c.b16 %v1264, %v1258
      %v1373 = vpack.c.b16 %v1265, %v1259
      %v1374 = vpack.c.b16 %v1266, %v1260
      %v1375 = vpack.c.b16 %v1267, %v1261
      %v1376 = vpack.c.b16 %v1268, %v1262
      %v1377 = vpack.c.b16 %v1269, %v1263
      %v1378 = vpack.c.b16 %v1276, %v1270
      %v1379 = vpack.c.b16 %v1277, %v1271
      %v1380 = vpack.c.b16 %v1278, %v1272
      %v1381 = vpack.c.b16 %v1279, %v1273
      %v1382 = vpack.c.b16 %v1280, %v1274
      %v1383 = vpack.c.b16 %v1281, %v1275
      %v1384 = vpack.c.b16 %v1288, %v1282
      %v1385 = vpack.c.b16 %v1289, %v1283
      %v1386 = vpack.c.b16 %v1290, %v1284
      %v1387 = vpack.c.b16 %v1291, %v1285
      %v1388 = vpack.c.b16 %v1292, %v1286
      %v1389 = vpack.c.b16 %v1293, %v1287
      %1486 = vmatprep.subr.bf16.mxu0 %v1337
      %1487 = vmatpush1.bf16.msra.mxu0 %v1336
      %1488 = vmatprep.subr.bf16.mxu0 %v1331
      %1489 = vmatpush1.bf16.msra.mxu0 %v1330
      %1490 = vmatprep.subr.bf16.mxu0 %v1325
      %1491 = vmatpush1.bf16.msra.mxu0 %v1324
      %1492 = vmatprep.subr.bf16.mxu0 %v1319
      %1493 = vmatpush1.bf16.msra.mxu0 %v1318
      %1494 = vmatprep.subr.bf16.mxu0 %v1313
      %1495 = vmatpush1.bf16.msra.mxu0 %v1312
      %1496 = vmatprep.subr.bf16.mxu0 %v1307
      %1497 = vmatpush1.bf16.msra.mxu0 %v1306
      %1498 = vmatprep.subr.bf16.mxu0 %v1301
      %1499 = vmatpush1.bf16.msra.mxu0 %v1300
      %1500 = vmatprep.subr.bf16.mxu0 %v1295
      %1501 = vmatpush1.bf16.msra.mxu0 %v1294
      %1502 = vmatprep.subr.bf16.mxu0 %v1385
      %1503 = vmatpush2.bf16.msra.mxu0 %v1384
      %1504 = vmatprep.subr.bf16.mxu0 %v1379
      %1505 = vmatpush2.bf16.msra.mxu0 %v1378
      %1506 = vmatprep.subr.bf16.mxu0 %v1373
      %1507 = vmatpush2.bf16.msra.mxu0 %v1372
      %1508 = vmatprep.subr.bf16.mxu0 %v1367
      %1509 = vmatpush2.bf16.msra.mxu0 %v1366
      %1510 = vmatprep.subr.bf16.mxu0 %v1361
      %1511 = vmatpush2.bf16.msra.mxu0 %v1360
      %1512 = vmatprep.subr.bf16.mxu0 %v1355
      %1513 = vmatpush2.bf16.msra.mxu0 %v1354
      %1514 = vmatprep.subr.bf16.mxu0 %v1349
      %1515 = vmatpush2.bf16.msra.mxu0 %v1348
      %1516 = vmatprep.subr.bf16.mxu0 %v1343
      %1517 = vmatpush2.bf16.msra.mxu0 %v1342
      %1518 = vmatprep.mubr.bf16.mxu0 %v863
      %1519 = vmatmul.mubr.bf16.gmra.mxu0 %v862
      %v1520 = vpop.f32.mrf.mxu0
      %v1521 = vadd.f32 %v979, %v1520
      %v1522 = vpop.f32.mrf.mxu0
      %v1523 = vadd.f32 %v983, %v1522
      %v1524 = vpop.f32.mrf.mxu0
      %v1525 = vadd.f32 %v979, %v1524
      %v1526 = vpop.f32.mrf.mxu0
      %v1527 = vadd.f32 %v983, %v1526
      %1528 = vmatprep.mubr.bf16.mxu0 %v865
      %1529 = vmatmul.mubr.bf16.gmra.mxu0 %v864
      %v1530 = vpop.f32.mrf.mxu0
      %v1531 = vadd.f32 %v979, %v1530
      %v1532 = vpop.f32.mrf.mxu0
      %v1533 = vadd.f32 %v983, %v1532
      %v1534 = vpop.f32.mrf.mxu0
      %v1535 = vadd.f32 %v979, %v1534
      %v1536 = vpop.f32.mrf.mxu0
      %v1537 = vadd.f32 %v983, %v1536
      %1538 = vmatprep.mubr.bf16.mxu0 %v867
      %1539 = vmatmul.mubr.bf16.gmra.mxu0 %v866
      %v1540 = vpop.f32.mrf.mxu0
      %v1541 = vadd.f32 %v979, %v1540
      %v1542 = vpop.f32.mrf.mxu0
      %v1543 = vadd.f32 %v983, %v1542
      %v1544 = vpop.f32.mrf.mxu0
      %v1545 = vadd.f32 %v979, %v1544
      %v1546 = vpop.f32.mrf.mxu0
      %v1547 = vadd.f32 %v983, %v1546
      %1548 = vmatprep.mubr.bf16.mxu0 %v869
      %1549 = vmatmul.mubr.bf16.gmra.mxu0 %v868
      %v1550 = vpop.f32.mrf.mxu0
      %v1551 = vadd.f32 %v979, %v1550
      %v1552 = vpop.f32.mrf.mxu0
      %v1553 = vadd.f32 %v983, %v1552
      %v1554 = vpop.f32.mrf.mxu0
      %v1555 = vadd.f32 %v979, %v1554
      %v1556 = vpop.f32.mrf.mxu0
      %v1557 = vadd.f32 %v983, %v1556
      %1558 = vmatprep.mubr.bf16.mxu0 %v871
      %1559 = vmatmul.mubr.bf16.gmra.mxu0 %v870
      %v1560 = vpop.f32.mrf.mxu0
      %v1561 = vadd.f32 %v979, %v1560
      %v1562 = vpop.f32.mrf.mxu0
      %v1563 = vadd.f32 %v983, %v1562
      %v1564 = vpop.f32.mrf.mxu0
      %v1565 = vadd.f32 %v979, %v1564
      %v1566 = vpop.f32.mrf.mxu0
      %v1567 = vadd.f32 %v983, %v1566
      %1568 = vmatprep.mubr.bf16.mxu0 %v873
      %1569 = vmatmul.mubr.bf16.gmra.mxu0 %v872
      %v1570 = vpop.f32.mrf.mxu0
      %v1571 = vadd.f32 %v979, %v1570
      %v1572 = vpop.f32.mrf.mxu0
      %v1573 = vadd.f32 %v983, %v1572
      %v1574 = vpop.f32.mrf.mxu0
      %v1575 = vadd.f32 %v979, %v1574
      %v1576 = vpop.f32.mrf.mxu0
      %v1577 = vadd.f32 %v983, %v1576
      %1578 = vmatprep.mubr.bf16.mxu0 %v875
      %1579 = vmatmul.mubr.bf16.gmra.mxu0 %v874
      %v1580 = vpop.f32.mrf.mxu0
      %v1581 = vadd.f32 %v979, %v1580
      %v1582 = vpop.f32.mrf.mxu0
      %v1583 = vadd.f32 %v983, %v1582
      %v1584 = vpop.f32.mrf.mxu0
      %v1585 = vadd.f32 %v979, %v1584
      %v1586 = vpop.f32.mrf.mxu0
      %v1587 = vadd.f32 %v983, %v1586
      %1588 = vmatprep.mubr.bf16.mxu0 %v877
      %1589 = vmatmul.mubr.bf16.gmra.mxu0 %v876
      %v1590 = vpop.f32.mrf.mxu0
      %v1591 = vadd.f32 %v979, %v1590
      %v1592 = vpop.f32.mrf.mxu0
      %v1593 = vadd.f32 %v983, %v1592
      %v1594 = vpop.f32.mrf.mxu0
      %v1595 = vadd.f32 %v979, %v1594
      %v1596 = vpop.f32.mrf.mxu0
      %v1597 = vadd.f32 %v983, %v1596
      %1598 = vdwg.mxu0
      %1599 = vmatprep.subr.bf16.mxu0 %v1339
      %1600 = vmatpush1.bf16.msra.mxu0 %v1338
      %1601 = vmatprep.subr.bf16.mxu0 %v1333
      %1602 = vmatpush1.bf16.msra.mxu0 %v1332
      %1603 = vmatprep.subr.bf16.mxu0 %v1327
      %1604 = vmatpush1.bf16.msra.mxu0 %v1326
      %1605 = vmatprep.subr.bf16.mxu0 %v1321
      %1606 = vmatpush1.bf16.msra.mxu0 %v1320
      %1607 = vmatprep.subr.bf16.mxu0 %v1315
      %1608 = vmatpush1.bf16.msra.mxu0 %v1314
      %1609 = vmatprep.subr.bf16.mxu0 %v1309
      %1610 = vmatpush1.bf16.msra.mxu0 %v1308
      %1611 = vmatprep.subr.bf16.mxu0 %v1303
      %1612 = vmatpush1.bf16.msra.mxu0 %v1302
      %1613 = vmatprep.subr.bf16.mxu0 %v1297
      %1614 = vmatpush1.bf16.msra.mxu0 %v1296
      %1615 = vmatprep.subr.bf16.mxu0 %v1387
      %1616 = vmatpush2.bf16.msra.mxu0 %v1386
      %1617 = vmatprep.subr.bf16.mxu0 %v1381
      %1618 = vmatpush2.bf16.msra.mxu0 %v1380
      %1619 = vmatprep.subr.bf16.mxu0 %v1375
      %1620 = vmatpush2.bf16.msra.mxu0 %v1374
      %1621 = vmatprep.subr.bf16.mxu0 %v1369
      %1622 = vmatpush2.bf16.msra.mxu0 %v1368
      %1623 = vmatprep.subr.bf16.mxu0 %v1363
      %1624 = vmatpush2.bf16.msra.mxu0 %v1362
      %1625 = vmatprep.subr.bf16.mxu0 %v1357
      %1626 = vmatpush2.bf16.msra.mxu0 %v1356
      %1627 = vmatprep.subr.bf16.mxu0 %v1351
      %1628 = vmatpush2.bf16.msra.mxu0 %v1350
      %1629 = vmatprep.subr.bf16.mxu0 %v1345
      %1630 = vmatpush2.bf16.msra.mxu0 %v1344
      %1631 = vmatprep.mubr.bf16.mxu0 %v863
      %1632 = vmatmul.mubr.bf16.gmra.mxu0 %v862
      %v1633 = vpop.f32.mrf.mxu0
      %v1634 = vadd.f32 %v987, %v1633
      %v1635 = vpop.f32.mrf.mxu0
      %v1636 = vadd.f32 %v991, %v1635
      %v1637 = vpop.f32.mrf.mxu0
      %v1638 = vadd.f32 %v987, %v1637
      %v1639 = vpop.f32.mrf.mxu0
      %v1640 = vadd.f32 %v991, %v1639
      %1641 = vmatprep.mubr.bf16.mxu0 %v865
      %1642 = vmatmul.mubr.bf16.gmra.mxu0 %v864
      %v1643 = vpop.f32.mrf.mxu0
      %v1644 = vadd.f32 %v987, %v1643
      %v1645 = vpop.f32.mrf.mxu0
      %v1646 = vadd.f32 %v991, %v1645
      %v1647 = vpop.f32.mrf.mxu0
      %v1648 = vadd.f32 %v987, %v1647
      %v1649 = vpop.f32.mrf.mxu0
      %v1650 = vadd.f32 %v991, %v1649
      %1651 = vmatprep.mubr.bf16.mxu0 %v867
      %1652 = vmatmul.mubr.bf16.gmra.mxu0 %v866
      %v1653 = vpop.f32.mrf.mxu0
      %v1654 = vadd.f32 %v987, %v1653
      %v1655 = vpop.f32.mrf.mxu0
      %v1656 = vadd.f32 %v991, %v1655
      %v1657 = vpop.f32.mrf.mxu0
      %v1658 = vadd.f32 %v987, %v1657
      %v1659 = vpop.f32.mrf.mxu0
      %v1660 = vadd.f32 %v991, %v1659
      %1661 = vmatprep.mubr.bf16.mxu0 %v869
      %1662 = vmatmul.mubr.bf16.gmra.mxu0 %v868
      %v1663 = vpop.f32.mrf.mxu0
      %v1664 = vadd.f32 %v987, %v1663
      %v1665 = vpop.f32.mrf.mxu0
      %v1666 = vadd.f32 %v991, %v1665
      %v1667 = vpop.f32.mrf.mxu0
      %v1668 = vadd.f32 %v987, %v1667
      %v1669 = vpop.f32.mrf.mxu0
      %v1670 = vadd.f32 %v991, %v1669
      %1671 = vmatprep.mubr.bf16.mxu0 %v871
      %1672 = vmatmul.mubr.bf16.gmra.mxu0 %v870
      %v1673 = vpop.f32.mrf.mxu0
      %v1674 = vadd.f32 %v987, %v1673
      %v1675 = vpop.f32.mrf.mxu0
      %v1676 = vadd.f32 %v991, %v1675
      %v1677 = vpop.f32.mrf.mxu0
      %v1678 = vadd.f32 %v987, %v1677
      %v1679 = vpop.f32.mrf.mxu0
      %v1680 = vadd.f32 %v991, %v1679
      %1681 = vmatprep.mubr.bf16.mxu0 %v873
      %1682 = vmatmul.mubr.bf16.gmra.mxu0 %v872
      %v1683 = vpop.f32.mrf.mxu0
      %v1684 = vadd.f32 %v987, %v1683
      %v1685 = vpop.f32.mrf.mxu0
      %v1686 = vadd.f32 %v991, %v1685
      %v1687 = vpop.f32.mrf.mxu0
      %v1688 = vadd.f32 %v987, %v1687
      %v1689 = vpop.f32.mrf.mxu0
      %v1690 = vadd.f32 %v991, %v1689
      %1691 = vmatprep.mubr.bf16.mxu0 %v875
      %1692 = vmatmul.mubr.bf16.gmra.mxu0 %v874
      %v1693 = vpop.f32.mrf.mxu0
      %v1694 = vadd.f32 %v987, %v1693
      %v1695 = vpop.f32.mrf.mxu0
      %v1696 = vadd.f32 %v991, %v1695
      %v1697 = vpop.f32.mrf.mxu0
      %v1698 = vadd.f32 %v987, %v1697
      %v1699 = vpop.f32.mrf.mxu0
      %v1700 = vadd.f32 %v991, %v1699
      %1701 = vmatprep.mubr.bf16.mxu0 %v877
      %1702 = vmatmul.mubr.bf16.gmra.mxu0 %v876
      %v1703 = vpop.f32.mrf.mxu0
      %v1704 = vadd.f32 %v987, %v1703
      %v1705 = vpop.f32.mrf.mxu0
      %v1706 = vadd.f32 %v991, %v1705
      %v1707 = vpop.f32.mrf.mxu0
      %v1708 = vadd.f32 %v987, %v1707
      %v1709 = vpop.f32.mrf.mxu0
      %v1710 = vadd.f32 %v991, %v1709
      %1711 = vdwg.mxu0
      %1712 = vmatprep.subr.bf16.mxu0 %v1341
      %1713 = vmatpush1.bf16.msra.mxu0 %v1340
      %1714 = vmatprep.subr.bf16.mxu0 %v1335
      %1715 = vmatpush1.bf16.msra.mxu0 %v1334
      %1716 = vmatprep.subr.bf16.mxu0 %v1329
      %1717 = vmatpush1.bf16.msra.mxu0 %v1328
      %1718 = vmatprep.subr.bf16.mxu0 %v1323
      %1719 = vmatpush1.bf16.msra.mxu0 %v1322
      %1720 = vmatprep.subr.bf16.mxu0 %v1317
      %1721 = vmatpush1.bf16.msra.mxu0 %v1316
      %1722 = vmatprep.subr.bf16.mxu0 %v1311
      %1723 = vmatpush1.bf16.msra.mxu0 %v1310
      %1724 = vmatprep.subr.bf16.mxu0 %v1305
      %1725 = vmatpush1.bf16.msra.mxu0 %v1304
      %1726 = vmatprep.subr.bf16.mxu0 %v1299
      %1727 = vmatpush1.bf16.msra.mxu0 %v1298
      %1728 = vmatprep.subr.bf16.mxu0 %v1389
      %1729 = vmatpush2.bf16.msra.mxu0 %v1388
      %1730 = vmatprep.subr.bf16.mxu0 %v1383
      %1731 = vmatpush2.bf16.msra.mxu0 %v1382
      %1732 = vmatprep.subr.bf16.mxu0 %v1377
      %1733 = vmatpush2.bf16.msra.mxu0 %v1376
      %1734 = vmatprep.subr.bf16.mxu0 %v1371
      %1735 = vmatpush2.bf16.msra.mxu0 %v1370
      %1736 = vmatprep.subr.bf16.mxu0 %v1365
      %1737 = vmatpush2.bf16.msra.mxu0 %v1364
      %1738 = vmatprep.subr.bf16.mxu0 %v1359
      %1739 = vmatpush2.bf16.msra.mxu0 %v1358
      %1740 = vmatprep.subr.bf16.mxu0 %v1353
      %1741 = vmatpush2.bf16.msra.mxu0 %v1352
      %1742 = vmatprep.subr.bf16.mxu0 %v1347
      %1743 = vmatpush2.bf16.msra.mxu0 %v1346
      %1744 = vmatprep.mubr.bf16.mxu0 %v863
      %1745 = vmatmul.mubr.bf16.gmra.mxu0 %v862
      %v1746 = vpop.f32.mrf.mxu0
      %v1747 = vadd.f32 %v995, %v1746
      %v1748 = vpop.f32.mrf.mxu0
      %v1749 = vadd.f32 %v999, %v1748
      %v1750 = vpop.f32.mrf.mxu0
      %v1751 = vadd.f32 %v995, %v1750
      %v1752 = vpop.f32.mrf.mxu0
      %v1753 = vadd.f32 %v999, %v1752
      %1754 = vmatprep.mubr.bf16.mxu0 %v865
      %1755 = vmatmul.mubr.bf16.gmra.mxu0 %v864
      %v1756 = vpop.f32.mrf.mxu0
      %v1757 = vadd.f32 %v995, %v1756
      %v1758 = vpop.f32.mrf.mxu0
      %v1759 = vadd.f32 %v999, %v1758
      %v1760 = vpop.f32.mrf.mxu0
      %v1761 = vadd.f32 %v995, %v1760
      %v1762 = vpop.f32.mrf.mxu0
      %v1763 = vadd.f32 %v999, %v1762
      %1764 = vmatprep.mubr.bf16.mxu0 %v867
      %1765 = vmatmul.mubr.bf16.gmra.mxu0 %v866
      %v1766 = vpop.f32.mrf.mxu0
      %v1767 = vadd.f32 %v995, %v1766
      %v1768 = vpop.f32.mrf.mxu0
      %v1769 = vadd.f32 %v999, %v1768
      %v1770 = vpop.f32.mrf.mxu0
      %v1771 = vadd.f32 %v995, %v1770
      %v1772 = vpop.f32.mrf.mxu0
      %v1773 = vadd.f32 %v999, %v1772
      %1774 = vmatprep.mubr.bf16.mxu0 %v869
      %1775 = vmatmul.mubr.bf16.gmra.mxu0 %v868
      %v1776 = vpop.f32.mrf.mxu0
      %v1777 = vadd.f32 %v995, %v1776
      %v1778 = vpop.f32.mrf.mxu0
      %v1779 = vadd.f32 %v999, %v1778
      %v1780 = vpop.f32.mrf.mxu0
      %v1781 = vadd.f32 %v995, %v1780
      %v1782 = vpop.f32.mrf.mxu0
      %v1783 = vadd.f32 %v999, %v1782
      %1784 = vmatprep.mubr.bf16.mxu0 %v871
      %1785 = vmatmul.mubr.bf16.gmra.mxu0 %v870
      %v1786 = vpop.f32.mrf.mxu0
      %v1787 = vadd.f32 %v995, %v1786
      %v1788 = vpop.f32.mrf.mxu0
      %v1789 = vadd.f32 %v999, %v1788
      %v1790 = vpop.f32.mrf.mxu0
      %v1791 = vadd.f32 %v995, %v1790
      %v1792 = vpop.f32.mrf.mxu0
      %v1793 = vadd.f32 %v999, %v1792
      %1794 = vmatprep.mubr.bf16.mxu0 %v873
      %1795 = vmatmul.mubr.bf16.gmra.mxu0 %v872
      %v1796 = vpop.f32.mrf.mxu0
      %v1797 = vadd.f32 %v995, %v1796
      %v1798 = vpop.f32.mrf.mxu0
      %v1799 = vadd.f32 %v999, %v1798
      %v1800 = vpop.f32.mrf.mxu0
      %v1801 = vadd.f32 %v995, %v1800
      %v1802 = vpop.f32.mrf.mxu0
      %v1803 = vadd.f32 %v999, %v1802
      %1804 = vmatprep.mubr.bf16.mxu0 %v875
      %1805 = vmatmul.mubr.bf16.gmra.mxu0 %v874
      %v1806 = vpop.f32.mrf.mxu0
      %v1807 = vadd.f32 %v995, %v1806
      %v1808 = vpop.f32.mrf.mxu0
      %v1809 = vadd.f32 %v999, %v1808
      %v1810 = vpop.f32.mrf.mxu0
      %v1811 = vadd.f32 %v995, %v1810
      %v1812 = vpop.f32.mrf.mxu0
      %v1813 = vadd.f32 %v999, %v1812
      %1814 = vmatprep.mubr.bf16.mxu0 %v877
      %1815 = vmatmul.mubr.bf16.gmra.mxu0 %v876
      %v1816 = vpop.f32.mrf.mxu0
      %v1817 = vadd.f32 %v995, %v1816
      %v1818 = vpop.f32.mrf.mxu0
      %v1819 = vadd.f32 %v999, %v1818
      %v1820 = vpop.f32.mrf.mxu0
      %v1821 = vadd.f32 %v995, %v1820
      %v1822 = vpop.f32.mrf.mxu0
      %v1823 = vadd.f32 %v999, %v1822
      %1824 = vdwg.mxu0
      %v1825 = vmul.f32 %v1521, 0.088388346
      %v1826 = vmul.f32 %v1525, 0.088388346
      %v1827 = vmul.f32 %v1531, 0.088388346
      %v1828 = vmul.f32 %v1535, 0.088388346
      %v1829 = vmul.f32 %v1541, 0.088388346
      %v1830 = vmul.f32 %v1545, 0.088388346
      %v1831 = vmul.f32 %v1551, 0.088388346
      %v1832 = vmul.f32 %v1555, 0.088388346
      %v1833 = vmul.f32 %v1561, 0.088388346
      %v1834 = vmul.f32 %v1565, 0.088388346
      %v1835 = vmul.f32 %v1571, 0.088388346
      %v1836 = vmul.f32 %v1575, 0.088388346
      %v1837 = vmul.f32 %v1581, 0.088388346
      %v1838 = vmul.f32 %v1585, 0.088388346
      %v1839 = vmul.f32 %v1591, 0.088388346
      %v1840 = vmul.f32 %v1595, 0.088388346
      %v1841 = vpack.c.bf16 %v1826, %v1825
      %v1842 = vpack.c.bf16 %v1828, %v1827
      %v1843 = vpack.c.bf16 %v1830, %v1829
      %v1844 = vpack.c.bf16 %v1832, %v1831
      %v1845 = vpack.c.bf16 %v1834, %v1833
      %v1846 = vpack.c.bf16 %v1836, %v1835
      %v1847 = vpack.c.bf16 %v1838, %v1837
      %v1848 = vpack.c.bf16 %v1840, %v1839
      %v1849 = vpack.c.bf16 %v1638, %v1634
      %v1850 = vpack.c.bf16 %v1648, %v1644
      %v1851 = vpack.c.bf16 %v1658, %v1654
      %v1852 = vpack.c.bf16 %v1668, %v1664
      %v1853 = vpack.c.bf16 %v1678, %v1674
      %v1854 = vpack.c.bf16 %v1688, %v1684
      %v1855 = vpack.c.bf16 %v1698, %v1694
      %v1856 = vpack.c.bf16 %v1708, %v1704
      %v1857 = vpack.c.bf16 %v1751, %v1747
      %v1858 = vpack.c.bf16 %v1761, %v1757
      %v1859 = vpack.c.bf16 %v1771, %v1767
      %v1860 = vpack.c.bf16 %v1781, %v1777
      %v1861 = vpack.c.bf16 %v1791, %v1787
      %v1862 = vpack.c.bf16 %v1801, %v1797
      %v1863 = vpack.c.bf16 %v1811, %v1807
      %v1864 = vpack.c.bf16 %v1821, %v1817
      %1865 = vmatprep.subr.bf16.mxu0 0
      %1866 = vmatpush1.bf16.xpose.msra.mxu0 %v1856
      %1867 = vmatprep.subr.bf16.mxu0 0
      %1868 = vmatpush1.bf16.xpose.msra.mxu0 %v1855
      %1869 = vmatprep.subr.bf16.mxu0 0
      %1870 = vmatpush1.bf16.xpose.msra.mxu0 %v1854
      %1871 = vmatprep.subr.bf16.mxu0 0
      %1872 = vmatpush1.bf16.xpose.msra.mxu0 %v1853
      %1873 = vmatprep.subr.bf16.mxu0 0
      %1874 = vmatpush1.bf16.xpose.msra.mxu0 %v1852
      %1875 = vmatprep.subr.bf16.mxu0 0
      %1876 = vmatpush1.bf16.xpose.msra.mxu0 %v1851
      %1877 = vmatprep.subr.bf16.mxu0 0
      %1878 = vmatpush1.bf16.xpose.msra.mxu0 %v1850
      %1879 = vmatprep.subr.bf16.mxu0 0
      %1880 = vmatpush1.bf16.xpose.msra.mxu0 %v1849
      %1881 = vmatprep.subr.bf16.mxu0 0
      %1882 = vmatpush2.bf16.xpose.msra.mxu0 0
      %1883 = vmatprep.subr.bf16.mxu0 0
      %1884 = vmatpush2.bf16.xpose.msra.mxu0 0
      %1885 = vmatprep.subr.bf16.mxu0 0
      %1886 = vmatpush2.bf16.xpose.msra.mxu0 0
      %1887 = vmatprep.subr.bf16.mxu0 0
      %1888 = vmatpush2.bf16.xpose.msra.mxu0 0
      %1889 = vmatprep.subr.bf16.mxu0 0
      %1890 = vmatpush2.bf16.xpose.msra.mxu0 0
      %1891 = vmatprep.subr.bf16.mxu0 0
      %1892 = vmatpush2.bf16.xpose.msra.mxu0 0
      %1893 = vmatprep.subr.bf16.mxu0 0
      %1894 = vmatpush2.bf16.xpose.msra.mxu0 0
      %1895 = vmatprep.subr.bf16.mxu0 0
      %1896 = vmatpush2.bf16.xpose.msra.mxu0 0
      %1897 = vmatprep.mubr.bf16.mxu0 0
      %1898 = vmatmul.mubr.bf16.gmra.mxu0 %v1841
      %v1899 = vpop.f32.mrf.mxu0
      %v1900 = vadd.f32 %v501, %v1899
      %v1901 = vpop.f32.mrf.mxu0
      %v1902 = vpop.f32.mrf.mxu0
      %v1903 = vadd.f32 %v502, %v1902
      %v1904 = vpop.f32.mrf.mxu0
      %1905 = vmatprep.mubr.bf16.mxu0 0
      %1906 = vmatmul.mubr.bf16.gmra.mxu0 %v1842
      %v1907 = vpop.f32.mrf.mxu0
      %v1908 = vadd.f32 %v503, %v1907
      %v1909 = vpop.f32.mrf.mxu0
      %v1910 = vpop.f32.mrf.mxu0
      %v1911 = vadd.f32 %v504, %v1910
      %v1912 = vpop.f32.mrf.mxu0
      %1913 = vmatprep.mubr.bf16.mxu0 0
      %1914 = vmatmul.mubr.bf16.gmra.mxu0 %v1843
      %v1915 = vpop.f32.mrf.mxu0
      %v1916 = vadd.f32 %v505, %v1915
      %v1917 = vpop.f32.mrf.mxu0
      %v1918 = vpop.f32.mrf.mxu0
      %v1919 = vadd.f32 %v506, %v1918
      %v1920 = vpop.f32.mrf.mxu0
      %1921 = vmatprep.mubr.bf16.mxu0 0
      %1922 = vmatmul.mubr.bf16.gmra.mxu0 %v1844
      %v1923 = vpop.f32.mrf.mxu0
      %v1924 = vadd.f32 %v507, %v1923
      %v1925 = vpop.f32.mrf.mxu0
      %v1926 = vpop.f32.mrf.mxu0
      %v1927 = vadd.f32 %v508, %v1926
      %v1928 = vpop.f32.mrf.mxu0
      %1929 = vmatprep.mubr.bf16.mxu0 0
      %1930 = vmatmul.mubr.bf16.gmra.mxu0 %v1845
      %v1931 = vpop.f32.mrf.mxu0
      %v1932 = vadd.f32 %v509, %v1931
      %v1933 = vpop.f32.mrf.mxu0
      %v1934 = vpop.f32.mrf.mxu0
      %v1935 = vadd.f32 %v510, %v1934
      %v1936 = vpop.f32.mrf.mxu0
      %1937 = vmatprep.mubr.bf16.mxu0 0
      %1938 = vmatmul.mubr.bf16.gmra.mxu0 %v1846
      %v1939 = vpop.f32.mrf.mxu0
      %v1940 = vadd.f32 %v511, %v1939
      %v1941 = vpop.f32.mrf.mxu0
      %v1942 = vpop.f32.mrf.mxu0
      %v1943 = vadd.f32 %v512, %v1942
      %v1944 = vpop.f32.mrf.mxu0
      %1945 = vmatprep.mubr.bf16.mxu0 0
      %1946 = vmatmul.mubr.bf16.gmra.mxu0 %v1847
      %v1947 = vpop.f32.mrf.mxu0
      %v1948 = vadd.f32 %v513, %v1947
      %v1949 = vpop.f32.mrf.mxu0
      %v1950 = vpop.f32.mrf.mxu0
      %v1951 = vadd.f32 %v514, %v1950
      %v1952 = vpop.f32.mrf.mxu0
      %1953 = vmatprep.mubr.bf16.mxu0 0
      %1954 = vmatmul.mubr.bf16.gmra.mxu0 %v1848
      %v1955 = vpop.f32.mrf.mxu0
      %v1956 = vadd.f32 %v515, %v1955
      %v1957 = vpop.f32.mrf.mxu0
      %v1958 = vpop.f32.mrf.mxu0
      %v1959 = vadd.f32 %v516, %v1958
      %v1960 = vpop.f32.mrf.mxu0
      %1961 = vdwg.mxu0
      %1962 = vmax.xlane.f32.xlu0 %v1900
      %v1963 = vpop.xlane.xlu0 %1962
      %1964 = vmax.xlane.f32.xlu0 %v1903
      %v1965 = vpop.xlane.xlu0 %1964
      %1966 = vmax.xlane.f32.xlu0 %v1908
      %v1967 = vpop.xlane.xlu0 %1966
      %1968 = vmax.xlane.f32.xlu0 %v1911
      %v1969 = vpop.xlane.xlu0 %1968
      %1970 = vmax.xlane.f32.xlu0 %v1916
      %v1971 = vpop.xlane.xlu0 %1970
      %1972 = vmax.xlane.f32.xlu0 %v1919
      %v1973 = vpop.xlane.xlu0 %1972
      %1974 = vmax.xlane.f32.xlu0 %v1924
      %v1975 = vpop.xlane.xlu0 %1974
      %1976 = vmax.xlane.f32.xlu0 %v1927
      %v1977 = vpop.xlane.xlu0 %1976
      %1978 = vmax.xlane.f32.xlu0 %v1932
      %v1979 = vpop.xlane.xlu0 %1978
      %1980 = vmax.xlane.f32.xlu0 %v1935
      %v1981 = vpop.xlane.xlu0 %1980
      %1982 = vmax.xlane.f32.xlu0 %v1940
      %v1983 = vpop.xlane.xlu0 %1982
      %1984 = vmax.xlane.f32.xlu0 %v1943
      %v1985 = vpop.xlane.xlu0 %1984
      %1986 = vmax.xlane.f32.xlu0 %v1948
      %v1987 = vpop.xlane.xlu0 %1986
      %1988 = vmax.xlane.f32.xlu0 %v1951
      %v1989 = vpop.xlane.xlu0 %1988
      %1990 = vmax.xlane.f32.xlu0 %v1956
      %v1991 = vpop.xlane.xlu0 %1990
      %1992 = vmax.xlane.f32.xlu0 %v1959
      %v1993 = vpop.xlane.xlu0 %1992
      %v1994 = vsub.f32 %v1900, %v1963
      %v1995 = vsub.f32 %v1903, %v1965
      %v1996 = vsub.f32 %v1908, %v1967
      %v1997 = vsub.f32 %v1911, %v1969
      %v1998 = vsub.f32 %v1916, %v1971
      %v1999 = vsub.f32 %v1919, %v1973
      %v2000 = vsub.f32 %v1924, %v1975
      %v2001 = vsub.f32 %v1927, %v1977
      %v2002 = vsub.f32 %v1932, %v1979
      %v2003 = vsub.f32 %v1935, %v1981
      %v2004 = vsub.f32 %v1940, %v1983
      %v2005 = vsub.f32 %v1943, %v1985
      %v2006 = vsub.f32 %v1948, %v1987
      %v2007 = vsub.f32 %v1951, %v1989
      %v2008 = vsub.f32 %v1956, %v1991
      %v2009 = vsub.f32 %v1959, %v1993
      %v2010 = vmul.f32 %v1994, 1.442695
      %v2011 = vpow.pop %v2010
      %v2012 = vmul.f32 %v1995, 1.442695
      %v2013 = vpow.pop %v2012
      %v2014 = vmul.f32 %v1996, 1.442695
      %v2015 = vpow.pop %v2014
      %v2016 = vmul.f32 %v1997, 1.442695
      %v2017 = vpow.pop %v2016
      %v2018 = vmul.f32 %v1998, 1.442695
      %v2019 = vpow.pop %v2018
      %v2020 = vmul.f32 %v1999, 1.442695
      %v2021 = vpow.pop %v2020
      %v2022 = vmul.f32 %v2000, 1.442695
      %v2023 = vpow.pop %v2022
      %v2024 = vmul.f32 %v2001, 1.442695
      %v2025 = vpow.pop %v2024
      %v2026 = vmul.f32 %v2002, 1.442695
      %v2027 = vpow.pop %v2026
      %v2028 = vmul.f32 %v2003, 1.442695
      %v2029 = vpow.pop %v2028
      %v2030 = vmul.f32 %v2004, 1.442695
      %v2031 = vpow.pop %v2030
      %v2032 = vmul.f32 %v2005, 1.442695
      %v2033 = vpow.pop %v2032
      %v2034 = vmul.f32 %v2006, 1.442695
      %v2035 = vpow.pop %v2034
      %v2036 = vmul.f32 %v2007, 1.442695
      %v2037 = vpow.pop %v2036
      %v2038 = vmul.f32 %v2008, 1.442695
      %v2039 = vpow.pop %v2038
      %v2040 = vmul.f32 %v2009, 1.442695
      %v2041 = vpow.pop %v2040
      %2042 = vadd.xlane.f32.xlu0 %v2011
      %v2043 = vpop.xlane.xlu0 %2042
      %2044 = vadd.xlane.f32.xlu0 %v2013
      %v2045 = vpop.xlane.xlu0 %2044
      %2046 = vadd.xlane.f32.xlu0 %v2015
      %v2047 = vpop.xlane.xlu0 %2046
      %2048 = vadd.xlane.f32.xlu0 %v2017
      %v2049 = vpop.xlane.xlu0 %2048
      %2050 = vadd.xlane.f32.xlu0 %v2019
      %v2051 = vpop.xlane.xlu0 %2050
      %2052 = vadd.xlane.f32.xlu0 %v2021
      %v2053 = vpop.xlane.xlu0 %2052
      %2054 = vadd.xlane.f32.xlu0 %v2023
      %v2055 = vpop.xlane.xlu0 %2054
      %2056 = vadd.xlane.f32.xlu0 %v2025
      %v2057 = vpop.xlane.xlu0 %2056
      %2058 = vadd.xlane.f32.xlu0 %v2027
      %v2059 = vpop.xlane.xlu0 %2058
      %2060 = vadd.xlane.f32.xlu0 %v2029
      %v2061 = vpop.xlane.xlu0 %2060
      %2062 = vadd.xlane.f32.xlu0 %v2031
      %v2063 = vpop.xlane.xlu0 %2062
      %2064 = vadd.xlane.f32.xlu0 %v2033
      %v2065 = vpop.xlane.xlu0 %2064
      %2066 = vadd.xlane.f32.xlu0 %v2035
      %v2067 = vpop.xlane.xlu0 %2066
      %2068 = vadd.xlane.f32.xlu0 %v2037
      %v2069 = vpop.xlane.xlu0 %2068
      %2070 = vadd.xlane.f32.xlu0 %v2039
      %v2071 = vpop.xlane.xlu0 %2070
      %2072 = vadd.xlane.f32.xlu0 %v2041
      %v2073 = vpop.xlane.xlu0 %2072
      %v2074 = vrcp.pop %v2043
      %v2075 = vrcp.pop %v2045
      %v2076 = vrcp.pop %v2047
      %v2077 = vrcp.pop %v2049
      %v2078 = vrcp.pop %v2051
      %v2079 = vrcp.pop %v2053
      %v2080 = vrcp.pop %v2055
      %v2081 = vrcp.pop %v2057
      %v2082 = vrcp.pop %v2059
      %v2083 = vrcp.pop %v2061
      %v2084 = vrcp.pop %v2063
      %v2085 = vrcp.pop %v2065
      %v2086 = vrcp.pop %v2067
      %v2087 = vrcp.pop %v2069
      %v2088 = vrcp.pop %v2071
      %v2089 = vrcp.pop %v2073
      %v2090 = vmul.f32 %v2011, %v2074
      %v2091 = vmul.f32 %v2013, %v2075
      %v2092 = vmul.f32 %v2015, %v2076
      %v2093 = vmul.f32 %v2017, %v2077
      %v2094 = vmul.f32 %v2019, %v2078
      %v2095 = vmul.f32 %v2021, %v2079
      %v2096 = vmul.f32 %v2023, %v2080
      %v2097 = vmul.f32 %v2025, %v2081
      %v2098 = vmul.f32 %v2027, %v2082
      %v2099 = vmul.f32 %v2029, %v2083
      %v2100 = vmul.f32 %v2031, %v2084
      %v2101 = vmul.f32 %v2033, %v2085
      %v2102 = vmul.f32 %v2035, %v2086
      %v2103 = vmul.f32 %v2037, %v2087
      %v2104 = vmul.f32 %v2039, %v2088
      %v2105 = vmul.f32 %v2041, %v2089
      %v2106 = vpack.c.bf16 %v2091, %v2090
      %v2107 = vpack.c.bf16 %v2093, %v2092
      %v2108 = vpack.c.bf16 %v2095, %v2094
      %v2109 = vpack.c.bf16 %v2097, %v2096
      %v2110 = vpack.c.bf16 %v2099, %v2098
      %v2111 = vpack.c.bf16 %v2101, %v2100
      %v2112 = vpack.c.bf16 %v2103, %v2102
      %v2113 = vpack.c.bf16 %v2105, %v2104
      %2114 = vmatprep.subr.bf16.mxu0 0
      %2115 = vmatpush1.bf16.msra.mxu0 %v1864
      %2116 = vmatprep.subr.bf16.mxu0 0
      %2117 = vmatpush1.bf16.msra.mxu0 %v1863
      %2118 = vmatprep.subr.bf16.mxu0 0
      %2119 = vmatpush1.bf16.msra.mxu0 %v1862
      %2120 = vmatprep.subr.bf16.mxu0 0
      %2121 = vmatpush1.bf16.msra.mxu0 %v1861
      %2122 = vmatprep.subr.bf16.mxu0 0
      %2123 = vmatpush1.bf16.msra.mxu0 %v1860
      %2124 = vmatprep.subr.bf16.mxu0 0
      %2125 = vmatpush1.bf16.msra.mxu0 %v1859
      %2126 = vmatprep.subr.bf16.mxu0 0
      %2127 = vmatpush1.bf16.msra.mxu0 %v1858
      %2128 = vmatprep.subr.bf16.mxu0 0
      %2129 = vmatpush1.bf16.msra.mxu0 %v1857
      %2130 = vmatprep.subr.bf16.mxu0 0
      %2131 = vmatpush2.bf16.msra.mxu0 0
      %2132 = vmatprep.subr.bf16.mxu0 0
      %2133 = vmatpush2.bf16.msra.mxu0 0
      %2134 = vmatprep.subr.bf16.mxu0 0
      %2135 = vmatpush2.bf16.msra.mxu0 0
      %2136 = vmatprep.subr.bf16.mxu0 0
      %2137 = vmatpush2.bf16.msra.mxu0 0
      %2138 = vmatprep.subr.bf16.mxu0 0
      %2139 = vmatpush2.bf16.msra.mxu0 0
      %2140 = vmatprep.subr.bf16.mxu0 0
      %2141 = vmatpush2.bf16.msra.mxu0 0
      %2142 = vmatprep.subr.bf16.mxu0 0
      %2143 = vmatpush2.bf16.msra.mxu0 0
      %2144 = vmatprep.subr.bf16.mxu0 0
      %2145 = vmatpush2.bf16.msra.mxu0 0
      %2146 = vmatprep.mubr.bf16.mxu0 0
      %2147 = vmatmul.mubr.bf16.gmra.mxu0 %v2106
      %v2148 = vpop.f32.mrf.mxu0
      %v2149 = vadd.f32 0.0, %v2148
      %v2150 = vpop.f32.mrf.mxu0
      %v2151 = vpop.f32.mrf.mxu0
      %v2152 = vadd.f32 0.0, %v2151
      %v2153 = vpop.f32.mrf.mxu0
      %2154 = vmatprep.mubr.bf16.mxu0 0
      %2155 = vmatmul.mubr.bf16.gmra.mxu0 %v2107
      %v2156 = vpop.f32.mrf.mxu0
      %v2157 = vadd.f32 0.0, %v2156
      %v2158 = vpop.f32.mrf.mxu0
      %v2159 = vpop.f32.mrf.mxu0
      %v2160 = vadd.f32 0.0, %v2159
      %v2161 = vpop.f32.mrf.mxu0
      %2162 = vmatprep.mubr.bf16.mxu0 0
      %2163 = vmatmul.mubr.bf16.gmra.mxu0 %v2108
      %v2164 = vpop.f32.mrf.mxu0
      %v2165 = vadd.f32 0.0, %v2164
      %v2166 = vpop.f32.mrf.mxu0
      %v2167 = vpop.f32.mrf.mxu0
      %v2168 = vadd.f32 0.0, %v2167
      %v2169 = vpop.f32.mrf.mxu0
      %2170 = vmatprep.mubr.bf16.mxu0 0
      %2171 = vmatmul.mubr.bf16.gmra.mxu0 %v2109
      %v2172 = vpop.f32.mrf.mxu0
      %v2173 = vadd.f32 0.0, %v2172
      %v2174 = vpop.f32.mrf.mxu0
      %v2175 = vpop.f32.mrf.mxu0
      %v2176 = vadd.f32 0.0, %v2175
      %v2177 = vpop.f32.mrf.mxu0
      %2178 = vmatprep.mubr.bf16.mxu0 0
      %2179 = vmatmul.mubr.bf16.gmra.mxu0 %v2110
      %v2180 = vpop.f32.mrf.mxu0
      %v2181 = vadd.f32 0.0, %v2180
      %v2182 = vpop.f32.mrf.mxu0
      %v2183 = vpop.f32.mrf.mxu0
      %v2184 = vadd.f32 0.0, %v2183
      %v2185 = vpop.f32.mrf.mxu0
      %2186 = vmatprep.mubr.bf16.mxu0 0
      %2187 = vmatmul.mubr.bf16.gmra.mxu0 %v2111
      %v2188 = vpop.f32.mrf.mxu0
      %v2189 = vadd.f32 0.0, %v2188
      %v2190 = vpop.f32.mrf.mxu0
      %v2191 = vpop.f32.mrf.mxu0
      %v2192 = vadd.f32 0.0, %v2191
      %v2193 = vpop.f32.mrf.mxu0
      %2194 = vmatprep.mubr.bf16.mxu0 0
      %2195 = vmatmul.mubr.bf16.gmra.mxu0 %v2112
      %v2196 = vpop.f32.mrf.mxu0
      %v2197 = vadd.f32 0.0, %v2196
      %v2198 = vpop.f32.mrf.mxu0
      %v2199 = vpop.f32.mrf.mxu0
      %v2200 = vadd.f32 0.0, %v2199
      %v2201 = vpop.f32.mrf.mxu0
      %2202 = vmatprep.mubr.bf16.mxu0 0
      %2203 = vmatmul.mubr.bf16.gmra.mxu0 %v2113
      %v2204 = vpop.f32.mrf.mxu0
      %v2205 = vadd.f32 0.0, %v2204
      %v2206 = vpop.f32.mrf.mxu0
      %v2207 = vpop.f32.mrf.mxu0
      %v2208 = vadd.f32 0.0, %v2207
      %v2209 = vpop.f32.mrf.mxu0
      %2210 = vdwg.mxu0
      %v2211 = vpack.c.bf16 %v2152, %v2149
      %v2212 = vpack.c.bf16 %v2160, %v2157
      %v2213 = vpack.c.bf16 %v2168, %v2165
      %v2214 = vpack.c.bf16 %v2176, %v2173
      %v2215 = vpack.c.bf16 %v2184, %v2181
      %v2216 = vpack.c.bf16 %v2192, %v2189
      %v2217 = vpack.c.bf16 %v2200, %v2197
      %v2218 = vpack.c.bf16 %v2208, %v2205
      %v2227 = vunpack.c.l.b16 %v2211
      %v2228 = vunpack.c.h.b16 %v2211
      %v2229 = vunpack.c.l.b16 %v2212
      %v2230 = vunpack.c.h.b16 %v2212
      %v2231 = vunpack.c.l.b16 %v2213
      %v2232 = vunpack.c.h.b16 %v2213
      %v2233 = vunpack.c.l.b16 %v2214
      %v2234 = vunpack.c.h.b16 %v2214
      %v2235 = vunpack.c.l.b16 %v2215
      %v2236 = vunpack.c.h.b16 %v2215
      %v2237 = vunpack.c.l.b16 %v2216
      %v2238 = vunpack.c.h.b16 %v2216
      %v2239 = vunpack.c.l.b16 %v2217
      %v2240 = vunpack.c.h.b16 %v2217
      %v2241 = vunpack.c.l.b16 %v2218
      %v2242 = vunpack.c.h.b16 %v2218
      %v2243 = vpack.c.b16 %v2227, %v2227
      %v2244 = vpack.c.b16 %v2228, %v2228
      %v2245 = vpack.c.b16 %v2229, %v2229
      %v2246 = vpack.c.b16 %v2230, %v2230
      %v2247 = vpack.c.b16 %v2231, %v2231
      %v2248 = vpack.c.b16 %v2232, %v2232
      %v2249 = vpack.c.b16 %v2233, %v2233
      %v2250 = vpack.c.b16 %v2234, %v2234
      %v2251 = vpack.c.b16 %v2235, %v2235
      %v2252 = vpack.c.b16 %v2236, %v2236
      %v2253 = vpack.c.b16 %v2237, %v2237
      %v2254 = vpack.c.b16 %v2238, %v2238
      %v2255 = vpack.c.b16 %v2239, %v2239
      %v2256 = vpack.c.b16 %v2240, %v2240
      %v2257 = vpack.c.b16 %v2241, %v2241
      %v2258 = vpack.c.b16 %v2242, %v2242
      %2275 = vst [vmem:[#allocation2] sm:$0xf] %v2243
      %2276 = vst [vmem:[#allocation2 + $0x8] sm:$0xf] %v2244
      %2277 = vst [vmem:[#allocation2 + $0x10] sm:$0xf] %v2245
      %2278 = vst [vmem:[#allocation2 + $0x18] sm:$0xf] %v2246
      %2279 = vst [vmem:[#allocation2 + $0x20] sm:$0xf] %v2247
      %2280 = vst [vmem:[#allocation2 + $0x28] sm:$0xf] %v2248
      %2281 = vst [vmem:[#allocation2 + $0x30] sm:$0xf] %v2249
      %2282 = vst [vmem:[#allocation2 + $0x38] sm:$0xf] %v2250
      %2283 = vst [vmem:[#allocation2 + $0x40] sm:$0xf] %v2251
      %2284 = vst [vmem:[#allocation2 + $0x48] sm:$0xf] %v2252
      %2285 = vst [vmem:[#allocation2 + $0x50] sm:$0xf] %v2253
      %2286 = vst [vmem:[#allocation2 + $0x58] sm:$0xf] %v2254
      %2287 = vst [vmem:[#allocation2 + $0x60] sm:$0xf] %v2255
      %2288 = vst [vmem:[#allocation2 + $0x68] sm:$0xf] %v2256
      %2289 = vst [vmem:[#allocation2 + $0x70] sm:$0xf] %v2257
      %2290 = vst [vmem:[#allocation2 + $0x78] sm:$0xf] %v2258
      %v2291 = vmul.f32 %v1523, 0.088388346
      %v2292 = vmul.f32 %v1527, 0.088388346
      %v2293 = vmul.f32 %v1533, 0.088388346
      %v2294 = vmul.f32 %v1537, 0.088388346
      %v2295 = vmul.f32 %v1543, 0.088388346
      %v2296 = vmul.f32 %v1547, 0.088388346
      %v2297 = vmul.f32 %v1553, 0.088388346
      %v2298 = vmul.f32 %v1557, 0.088388346
      %v2299 = vmul.f32 %v1563, 0.088388346
      %v2300 = vmul.f32 %v1567, 0.088388346
      %v2301 = vmul.f32 %v1573, 0.088388346
      %v2302 = vmul.f32 %v1577, 0.088388346
      %v2303 = vmul.f32 %v1583, 0.088388346
      %v2304 = vmul.f32 %v1587, 0.088388346
      %v2305 = vmul.f32 %v1593, 0.088388346
      %v2306 = vmul.f32 %v1597, 0.088388346
      %v2307 = vpack.c.bf16 %v2292, %v2291
      %v2308 = vpack.c.bf16 %v2294, %v2293
      %v2309 = vpack.c.bf16 %v2296, %v2295
      %v2310 = vpack.c.bf16 %v2298, %v2297
      %v2311 = vpack.c.bf16 %v2300, %v2299
      %v2312 = vpack.c.bf16 %v2302, %v2301
      %v2313 = vpack.c.bf16 %v2304, %v2303
      %v2314 = vpack.c.bf16 %v2306, %v2305
      %v2315 = vpack.c.bf16 %v1640, %v1636
      %v2316 = vpack.c.bf16 %v1650, %v1646
      %v2317 = vpack.c.bf16 %v1660, %v1656
      %v2318 = vpack.c.bf16 %v1670, %v1666
      %v2319 = vpack.c.bf16 %v1680, %v1676
      %v2320 = vpack.c.bf16 %v1690, %v1686
      %v2321 = vpack.c.bf16 %v1700, %v1696
      %v2322 = vpack.c.bf16 %v1710, %v1706
      %v2323 = vpack.c.bf16 %v1753, %v1749
      %v2324 = vpack.c.bf16 %v1763, %v1759
      %v2325 = vpack.c.bf16 %v1773, %v1769
      %v2326 = vpack.c.bf16 %v1783, %v1779
      %v2327 = vpack.c.bf16 %v1793, %v1789
      %v2328 = vpack.c.bf16 %v1803, %v1799
      %v2329 = vpack.c.bf16 %v1813, %v1809
      %v2330 = vpack.c.bf16 %v1823, %v1819
      %2331 = vmatprep.subr.bf16.mxu0 0
      %2332 = vmatpush1.bf16.xpose.msra.mxu0 %v2322
      %2333 = vmatprep.subr.bf16.mxu0 0
      %2334 = vmatpush1.bf16.xpose.msra.mxu0 %v2321
      %2335 = vmatprep.subr.bf16.mxu0 0
      %2336 = vmatpush1.bf16.xpose.msra.mxu0 %v2320
      %2337 = vmatprep.subr.bf16.mxu0 0
      %2338 = vmatpush1.bf16.xpose.msra.mxu0 %v2319
      %2339 = vmatprep.subr.bf16.mxu0 0
      %2340 = vmatpush1.bf16.xpose.msra.mxu0 %v2318
      %2341 = vmatprep.subr.bf16.mxu0 0
      %2342 = vmatpush1.bf16.xpose.msra.mxu0 %v2317
      %2343 = vmatprep.subr.bf16.mxu0 0
      %2344 = vmatpush1.bf16.xpose.msra.mxu0 %v2316
      %2345 = vmatprep.subr.bf16.mxu0 0
      %2346 = vmatpush1.bf16.xpose.msra.mxu0 %v2315
      %2347 = vmatprep.subr.bf16.mxu0 0
      %2348 = vmatpush2.bf16.xpose.msra.mxu0 0
      %2349 = vmatprep.subr.bf16.mxu0 0
      %2350 = vmatpush2.bf16.xpose.msra.mxu0 0
      %2351 = vmatprep.subr.bf16.mxu0 0
      %2352 = vmatpush2.bf16.xpose.msra.mxu0 0
      %2353 = vmatprep.subr.bf16.mxu0 0
      %2354 = vmatpush2.bf16.xpose.msra.mxu0 0
      %2355 = vmatprep.subr.bf16.mxu0 0
      %2356 = vmatpush2.bf16.xpose.msra.mxu0 0
      %2357 = vmatprep.subr.bf16.mxu0 0
      %2358 = vmatpush2.bf16.xpose.msra.mxu0 0
      %2359 = vmatprep.subr.bf16.mxu0 0
      %2360 = vmatpush2.bf16.xpose.msra.mxu0 0
      %2361 = vmatprep.subr.bf16.mxu0 0
      %2362 = vmatpush2.bf16.xpose.msra.mxu0 0
      %2363 = vmatprep.mubr.bf16.mxu0 0
      %2364 = vmatmul.mubr.bf16.gmra.mxu0 %v2307
      %v2365 = vpop.f32.mrf.mxu0
      %v2366 = vadd.f32 %v501, %v2365
      %v2367 = vpop.f32.mrf.mxu0
      %v2368 = vpop.f32.mrf.mxu0
      %v2369 = vadd.f32 %v502, %v2368
      %v2370 = vpop.f32.mrf.mxu0
      %2371 = vmatprep.mubr.bf16.mxu0 0
      %2372 = vmatmul.mubr.bf16.gmra.mxu0 %v2308
      %v2373 = vpop.f32.mrf.mxu0
      %v2374 = vadd.f32 %v503, %v2373
      %v2375 = vpop.f32.mrf.mxu0
      %v2376 = vpop.f32.mrf.mxu0
      %v2377 = vadd.f32 %v504, %v2376
      %v2378 = vpop.f32.mrf.mxu0
      %2379 = vmatprep.mubr.bf16.mxu0 0
      %2380 = vmatmul.mubr.bf16.gmra.mxu0 %v2309
      %v2381 = vpop.f32.mrf.mxu0
      %v2382 = vadd.f32 %v505, %v2381
      %v2383 = vpop.f32.mrf.mxu0
      %v2384 = vpop.f32.mrf.mxu0
      %v2385 = vadd.f32 %v506, %v2384
      %v2386 = vpop.f32.mrf.mxu0
      %2387 = vmatprep.mubr.bf16.mxu0 0
      %2388 = vmatmul.mubr.bf16.gmra.mxu0 %v2310
      %v2389 = vpop.f32.mrf.mxu0
      %v2390 = vadd.f32 %v507, %v2389
      %v2391 = vpop.f32.mrf.mxu0
      %v2392 = vpop.f32.mrf.mxu0
      %v2393 = vadd.f32 %v508, %v2392
      %v2394 = vpop.f32.mrf.mxu0
      %2395 = vmatprep.mubr.bf16.mxu0 0
      %2396 = vmatmul.mubr.bf16.gmra.mxu0 %v2311
      %v2397 = vpop.f32.mrf.mxu0
      %v2398 = vadd.f32 %v509, %v2397
      %v2399 = vpop.f32.mrf.mxu0
      %v2400 = vpop.f32.mrf.mxu0
      %v2401 = vadd.f32 %v510, %v2400
      %v2402 = vpop.f32.mrf.mxu0
      %2403 = vmatprep.mubr.bf16.mxu0 0
      %2404 = vmatmul.mubr.bf16.gmra.mxu0 %v2312
      %v2405 = vpop.f32.mrf.mxu0
      %v2406 = vadd.f32 %v511, %v2405
      %v2407 = vpop.f32.mrf.mxu0
      %v2408 = vpop.f32.mrf.mxu0
      %v2409 = vadd.f32 %v512, %v2408
      %v2410 = vpop.f32.mrf.mxu0
      %2411 = vmatprep.mubr.bf16.mxu0 0
      %2412 = vmatmul.mubr.bf16.gmra.mxu0 %v2313
      %v2413 = vpop.f32.mrf.mxu0
      %v2414 = vadd.f32 %v513, %v2413
      %v2415 = vpop.f32.mrf.mxu0
      %v2416 = vpop.f32.mrf.mxu0
      %v2417 = vadd.f32 %v514, %v2416
      %v2418 = vpop.f32.mrf.mxu0
      %2419 = vmatprep.mubr.bf16.mxu0 0
      %2420 = vmatmul.mubr.bf16.gmra.mxu0 %v2314
      %v2421 = vpop.f32.mrf.mxu0
      %v2422 = vadd.f32 %v515, %v2421
      %v2423 = vpop.f32.mrf.mxu0
      %v2424 = vpop.f32.mrf.mxu0
      %v2425 = vadd.f32 %v516, %v2424
      %v2426 = vpop.f32.mrf.mxu0
      %2427 = vdwg.mxu0
      %2428 = vmax.xlane.f32.xlu0 %v2366
      %v2429 = vpop.xlane.xlu0 %2428
      %2430 = vmax.xlane.f32.xlu0 %v2369
      %v2431 = vpop.xlane.xlu0 %2430
      %2432 = vmax.xlane.f32.xlu0 %v2374
      %v2433 = vpop.xlane.xlu0 %2432
      %2434 = vmax.xlane.f32.xlu0 %v2377
      %v2435 = vpop.xlane.xlu0 %2434
      %2436 = vmax.xlane.f32.xlu0 %v2382
      %v2437 = vpop.xlane.xlu0 %2436
      %2438 = vmax.xlane.f32.xlu0 %v2385
      %v2439 = vpop.xlane.xlu0 %2438
      %2440 = vmax.xlane.f32.xlu0 %v2390
      %v2441 = vpop.xlane.xlu0 %2440
      %2442 = vmax.xlane.f32.xlu0 %v2393
      %v2443 = vpop.xlane.xlu0 %2442
      %2444 = vmax.xlane.f32.xlu0 %v2398
      %v2445 = vpop.xlane.xlu0 %2444
      %2446 = vmax.xlane.f32.xlu0 %v2401
      %v2447 = vpop.xlane.xlu0 %2446
      %2448 = vmax.xlane.f32.xlu0 %v2406
      %v2449 = vpop.xlane.xlu0 %2448
      %2450 = vmax.xlane.f32.xlu0 %v2409
      %v2451 = vpop.xlane.xlu0 %2450
      %2452 = vmax.xlane.f32.xlu0 %v2414
      %v2453 = vpop.xlane.xlu0 %2452
      %2454 = vmax.xlane.f32.xlu0 %v2417
      %v2455 = vpop.xlane.xlu0 %2454
      %2456 = vmax.xlane.f32.xlu0 %v2422
      %v2457 = vpop.xlane.xlu0 %2456
      %2458 = vmax.xlane.f32.xlu0 %v2425
      %v2459 = vpop.xlane.xlu0 %2458
      %v2460 = vsub.f32 %v2366, %v2429
      %v2461 = vsub.f32 %v2369, %v2431
      %v2462 = vsub.f32 %v2374, %v2433
      %v2463 = vsub.f32 %v2377, %v2435
      %v2464 = vsub.f32 %v2382, %v2437
      %v2465 = vsub.f32 %v2385, %v2439
      %v2466 = vsub.f32 %v2390, %v2441
      %v2467 = vsub.f32 %v2393, %v2443
      %v2468 = vsub.f32 %v2398, %v2445
      %v2469 = vsub.f32 %v2401, %v2447
      %v2470 = vsub.f32 %v2406, %v2449
      %v2471 = vsub.f32 %v2409, %v2451
      %v2472 = vsub.f32 %v2414, %v2453
      %v2473 = vsub.f32 %v2417, %v2455
      %v2474 = vsub.f32 %v2422, %v2457
      %v2475 = vsub.f32 %v2425, %v2459
      %v2476 = vmul.f32 %v2460, 1.442695
      %v2477 = vpow.pop %v2476
      %v2478 = vmul.f32 %v2461, 1.442695
      %v2479 = vpow.pop %v2478
      %v2480 = vmul.f32 %v2462, 1.442695
      %v2481 = vpow.pop %v2480
      %v2482 = vmul.f32 %v2463, 1.442695
      %v2483 = vpow.pop %v2482
      %v2484 = vmul.f32 %v2464, 1.442695
      %v2485 = vpow.pop %v2484
      %v2486 = vmul.f32 %v2465, 1.442695
      %v2487 = vpow.pop %v2486
      %v2488 = vmul.f32 %v2466, 1.442695
      %v2489 = vpow.pop %v2488
      %v2490 = vmul.f32 %v2467, 1.442695
      %v2491 = vpow.pop %v2490
      %v2492 = vmul.f32 %v2468, 1.442695
      %v2493 = vpow.pop %v2492
      %v2494 = vmul.f32 %v2469, 1.442695
      %v2495 = vpow.pop %v2494
      %v2496 = vmul.f32 %v2470, 1.442695
      %v2497 = vpow.pop %v2496
      %v2498 = vmul.f32 %v2471, 1.442695
      %v2499 = vpow.pop %v2498
      %v2500 = vmul.f32 %v2472, 1.442695
      %v2501 = vpow.pop %v2500
      %v2502 = vmul.f32 %v2473, 1.442695
      %v2503 = vpow.pop %v2502
      %v2504 = vmul.f32 %v2474, 1.442695
      %v2505 = vpow.pop %v2504
      %v2506 = vmul.f32 %v2475, 1.442695
      %v2507 = vpow.pop %v2506
      %2508 = vadd.xlane.f32.xlu0 %v2477
      %v2509 = vpop.xlane.xlu0 %2508
      %2510 = vadd.xlane.f32.xlu0 %v2479
      %v2511 = vpop.xlane.xlu0 %2510
      %2512 = vadd.xlane.f32.xlu0 %v2481
      %v2513 = vpop.xlane.xlu0 %2512
      %2514 = vadd.xlane.f32.xlu0 %v2483
      %v2515 = vpop.xlane.xlu0 %2514
      %2516 = vadd.xlane.f32.xlu0 %v2485
      %v2517 = vpop.xlane.xlu0 %2516
      %2518 = vadd.xlane.f32.xlu0 %v2487
      %v2519 = vpop.xlane.xlu0 %2518
      %2520 = vadd.xlane.f32.xlu0 %v2489
      %v2521 = vpop.xlane.xlu0 %2520
      %2522 = vadd.xlane.f32.xlu0 %v2491
      %v2523 = vpop.xlane.xlu0 %2522
      %2524 = vadd.xlane.f32.xlu0 %v2493
      %v2525 = vpop.xlane.xlu0 %2524
      %2526 = vadd.xlane.f32.xlu0 %v2495
      %v2527 = vpop.xlane.xlu0 %2526
      %2528 = vadd.xlane.f32.xlu0 %v2497
      %v2529 = vpop.xlane.xlu0 %2528
      %2530 = vadd.xlane.f32.xlu0 %v2499
      %v2531 = vpop.xlane.xlu0 %2530
      %2532 = vadd.xlane.f32.xlu0 %v2501
      %v2533 = vpop.xlane.xlu0 %2532
      %2534 = vadd.xlane.f32.xlu0 %v2503
      %v2535 = vpop.xlane.xlu0 %2534
      %2536 = vadd.xlane.f32.xlu0 %v2505
      %v2537 = vpop.xlane.xlu0 %2536
      %2538 = vadd.xlane.f32.xlu0 %v2507
      %v2539 = vpop.xlane.xlu0 %2538
      %v2540 = vrcp.pop %v2509
      %v2541 = vrcp.pop %v2511
      %v2542 = vrcp.pop %v2513
      %v2543 = vrcp.pop %v2515
      %v2544 = vrcp.pop %v2517
      %v2545 = vrcp.pop %v2519
      %v2546 = vrcp.pop %v2521
      %v2547 = vrcp.pop %v2523
      %v2548 = vrcp.pop %v2525
      %v2549 = vrcp.pop %v2527
      %v2550 = vrcp.pop %v2529
      %v2551 = vrcp.pop %v2531
      %v2552 = vrcp.pop %v2533
      %v2553 = vrcp.pop %v2535
      %v2554 = vrcp.pop %v2537
      %v2555 = vrcp.pop %v2539
      %v2556 = vmul.f32 %v2477, %v2540
      %v2557 = vmul.f32 %v2479, %v2541
      %v2558 = vmul.f32 %v2481, %v2542
      %v2559 = vmul.f32 %v2483, %v2543
      %v2560 = vmul.f32 %v2485, %v2544
      %v2561 = vmul.f32 %v2487, %v2545
      %v2562 = vmul.f32 %v2489, %v2546
      %v2563 = vmul.f32 %v2491, %v2547
      %v2564 = vmul.f32 %v2493, %v2548
      %v2565 = vmul.f32 %v2495, %v2549
      %v2566 = vmul.f32 %v2497, %v2550
      %v2567 = vmul.f32 %v2499, %v2551
      %v2568 = vmul.f32 %v2501, %v2552
      %v2569 = vmul.f32 %v2503, %v2553
      %v2570 = vmul.f32 %v2505, %v2554
      %v2571 = vmul.f32 %v2507, %v2555
      %v2572 = vpack.c.bf16 %v2557, %v2556
      %v2573 = vpack.c.bf16 %v2559, %v2558
      %v2574 = vpack.c.bf16 %v2561, %v2560
      %v2575 = vpack.c.bf16 %v2563, %v2562
      %v2576 = vpack.c.bf16 %v2565, %v2564
      %v2577 = vpack.c.bf16 %v2567, %v2566
      %v2578 = vpack.c.bf16 %v2569, %v2568
      %v2579 = vpack.c.bf16 %v2571, %v2570
      %2580 = vmatprep.subr.bf16.mxu0 0
      %2581 = vmatpush1.bf16.msra.mxu0 %v2330
      %2582 = vmatprep.subr.bf16.mxu0 0
      %2583 = vmatpush1.bf16.msra.mxu0 %v2329
      %2584 = vmatprep.subr.bf16.mxu0 0
      %2585 = vmatpush1.bf16.msra.mxu0 %v2328
      %2586 = vmatprep.subr.bf16.mxu0 0
      %2587 = vmatpush1.bf16.msra.mxu0 %v2327
      %2588 = vmatprep.subr.bf16.mxu0 0
      %2589 = vmatpush1.bf16.msra.mxu0 %v2326
      %2590 = vmatprep.subr.bf16.mxu0 0
      %2591 = vmatpush1.bf16.msra.mxu0 %v2325
      %2592 = vmatprep.subr.bf16.mxu0 0
      %2593 = vmatpush1.bf16.msra.mxu0 %v2324
      %2594 = vmatprep.subr.bf16.mxu0 0
      %2595 = vmatpush1.bf16.msra.mxu0 %v2323
      %2596 = vmatprep.subr.bf16.mxu0 0
      %2597 = vmatpush2.bf16.msra.mxu0 0
      %2598 = vmatprep.subr.bf16.mxu0 0
      %2599 = vmatpush2.bf16.msra.mxu0 0
      %2600 = vmatprep.subr.bf16.mxu0 0
      %2601 = vmatpush2.bf16.msra.mxu0 0
      %2602 = vmatprep.subr.bf16.mxu0 0
      %2603 = vmatpush2.bf16.msra.mxu0 0
      %2604 = vmatprep.subr.bf16.mxu0 0
      %2605 = vmatpush2.bf16.msra.mxu0 0
      %2606 = vmatprep.subr.bf16.mxu0 0
      %2607 = vmatpush2.bf16.msra.mxu0 0
      %2608 = vmatprep.subr.bf16.mxu0 0
      %2609 = vmatpush2.bf16.msra.mxu0 0
      %2610 = vmatprep.subr.bf16.mxu0 0
      %2611 = vmatpush2.bf16.msra.mxu0 0
      %2612 = vmatprep.mubr.bf16.mxu0 0
      %2613 = vmatmul.mubr.bf16.gmra.mxu0 %v2572
      %v2614 = vpop.f32.mrf.mxu0
      %v2615 = vadd.f32 0.0, %v2614
      %v2616 = vpop.f32.mrf.mxu0
      %v2617 = vpop.f32.mrf.mxu0
      %v2618 = vadd.f32 0.0, %v2617
      %v2619 = vpop.f32.mrf.mxu0
      %2620 = vmatprep.mubr.bf16.mxu0 0
      %2621 = vmatmul.mubr.bf16.gmra.mxu0 %v2573
      %v2622 = vpop.f32.mrf.mxu0
      %v2623 = vadd.f32 0.0, %v2622
      %v2624 = vpop.f32.mrf.mxu0
      %v2625 = vpop.f32.mrf.mxu0
      %v2626 = vadd.f32 0.0, %v2625
      %v2627 = vpop.f32.mrf.mxu0
      %2628 = vmatprep.mubr.bf16.mxu0 0
      %2629 = vmatmul.mubr.bf16.gmra.mxu0 %v2574
      %v2630 = vpop.f32.mrf.mxu0
      %v2631 = vadd.f32 0.0, %v2630
      %v2632 = vpop.f32.mrf.mxu0
      %v2633 = vpop.f32.mrf.mxu0
      %v2634 = vadd.f32 0.0, %v2633
      %v2635 = vpop.f32.mrf.mxu0
      %2636 = vmatprep.mubr.bf16.mxu0 0
      %2637 = vmatmul.mubr.bf16.gmra.mxu0 %v2575
      %v2638 = vpop.f32.mrf.mxu0
      %v2639 = vadd.f32 0.0, %v2638
      %v2640 = vpop.f32.mrf.mxu0
      %v2641 = vpop.f32.mrf.mxu0
      %v2642 = vadd.f32 0.0, %v2641
      %v2643 = vpop.f32.mrf.mxu0
      %2644 = vmatprep.mubr.bf16.mxu0 0
      %2645 = vmatmul.mubr.bf16.gmra.mxu0 %v2576
      %v2646 = vpop.f32.mrf.mxu0
      %v2647 = vadd.f32 0.0, %v2646
      %v2648 = vpop.f32.mrf.mxu0
      %v2649 = vpop.f32.mrf.mxu0
      %v2650 = vadd.f32 0.0, %v2649
      %v2651 = vpop.f32.mrf.mxu0
      %2652 = vmatprep.mubr.bf16.mxu0 0
      %2653 = vmatmul.mubr.bf16.gmra.mxu0 %v2577
      %v2654 = vpop.f32.mrf.mxu0
      %v2655 = vadd.f32 0.0, %v2654
      %v2656 = vpop.f32.mrf.mxu0
      %v2657 = vpop.f32.mrf.mxu0
      %v2658 = vadd.f32 0.0, %v2657
      %v2659 = vpop.f32.mrf.mxu0
      %2660 = vmatprep.mubr.bf16.mxu0 0
      %2661 = vmatmul.mubr.bf16.gmra.mxu0 %v2578
      %v2662 = vpop.f32.mrf.mxu0
      %v2663 = vadd.f32 0.0, %v2662
      %v2664 = vpop.f32.mrf.mxu0
      %v2665 = vpop.f32.mrf.mxu0
      %v2666 = vadd.f32 0.0, %v2665
      %v2667 = vpop.f32.mrf.mxu0
      %2668 = vmatprep.mubr.bf16.mxu0 0
      %2669 = vmatmul.mubr.bf16.gmra.mxu0 %v2579
      %v2670 = vpop.f32.mrf.mxu0
      %v2671 = vadd.f32 0.0, %v2670
      %v2672 = vpop.f32.mrf.mxu0
      %v2673 = vpop.f32.mrf.mxu0
      %v2674 = vadd.f32 0.0, %v2673
      %v2675 = vpop.f32.mrf.mxu0
      %2676 = vdwg.mxu0
      %v2677 = vpack.c.bf16 %v2618, %v2615
      %v2678 = vpack.c.bf16 %v2626, %v2623
      %v2679 = vpack.c.bf16 %v2634, %v2631
      %v2680 = vpack.c.bf16 %v2642, %v2639
      %v2681 = vpack.c.bf16 %v2650, %v2647
      %v2682 = vpack.c.bf16 %v2658, %v2655
      %v2683 = vpack.c.bf16 %v2666, %v2663
      %v2684 = vpack.c.bf16 %v2674, %v2671
      %v2693 = vunpack.c.l.b16 %v2677
      %v2694 = vunpack.c.h.b16 %v2677
      %v2695 = vunpack.c.l.b16 %v2678
      %v2696 = vunpack.c.h.b16 %v2678
      %v2697 = vunpack.c.l.b16 %v2679
      %v2698 = vunpack.c.h.b16 %v2679
      %v2699 = vunpack.c.l.b16 %v2680
      %v2700 = vunpack.c.h.b16 %v2680
      %v2701 = vunpack.c.l.b16 %v2681
      %v2702 = vunpack.c.h.b16 %v2681
      %v2703 = vunpack.c.l.b16 %v2682
      %v2704 = vunpack.c.h.b16 %v2682
      %v2705 = vunpack.c.l.b16 %v2683
      %v2706 = vunpack.c.h.b16 %v2683
      %v2707 = vunpack.c.l.b16 %v2684
      %v2708 = vunpack.c.h.b16 %v2684
      %v2709 = vpack.c.b16 %v2693, %v2693
      %v2710 = vpack.c.b16 %v2694, %v2694
      %v2711 = vpack.c.b16 %v2695, %v2695
      %v2712 = vpack.c.b16 %v2696, %v2696
      %v2713 = vpack.c.b16 %v2697, %v2697
      %v2714 = vpack.c.b16 %v2698, %v2698
      %v2715 = vpack.c.b16 %v2699, %v2699
      %v2716 = vpack.c.b16 %v2700, %v2700
      %v2717 = vpack.c.b16 %v2701, %v2701
      %v2718 = vpack.c.b16 %v2702, %v2702
      %v2719 = vpack.c.b16 %v2703, %v2703
      %v2720 = vpack.c.b16 %v2704, %v2704
      %v2721 = vpack.c.b16 %v2705, %v2705
      %v2722 = vpack.c.b16 %v2706, %v2706
      %v2723 = vpack.c.b16 %v2707, %v2707
      %v2724 = vpack.c.b16 %v2708, %v2708
      %2741 = vst [vmem:[#allocation2 + $0x4] sm:$0xf] %v2709
      %2742 = vst [vmem:[#allocation2 + $0xc] sm:$0xf] %v2710
      %2743 = vst [vmem:[#allocation2 + $0x14] sm:$0xf] %v2711
      %2744 = vst [vmem:[#allocation2 + $0x1c] sm:$0xf] %v2712
      %2745 = vst [vmem:[#allocation2 + $0x24] sm:$0xf] %v2713
      %2746 = vst [vmem:[#allocation2 + $0x2c] sm:$0xf] %v2714
      %2747 = vst [vmem:[#allocation2 + $0x34] sm:$0xf] %v2715
      %2748 = vst [vmem:[#allocation2 + $0x3c] sm:$0xf] %v2716
      %2749 = vst [vmem:[#allocation2 + $0x44] sm:$0xf] %v2717
      %2750 = vst [vmem:[#allocation2 + $0x4c] sm:$0xf] %v2718
      %2751 = vst [vmem:[#allocation2 + $0x54] sm:$0xf] %v2719
      %2752 = vst [vmem:[#allocation2 + $0x5c] sm:$0xf] %v2720
      %2753 = vst [vmem:[#allocation2 + $0x64] sm:$0xf] %v2721
      %2754 = vst [vmem:[#allocation2 + $0x6c] sm:$0xf] %v2722
      %2755 = vst [vmem:[#allocation2 + $0x74] sm:$0xf] %v2723
      %2756 = vst [vmem:[#allocation2 + $0x7c] sm:$0xf] %v2724
      %v2757 = vld [vmem:[#allocation2] sm:$0xff]
      %v2758 = vld [vmem:[#allocation2 + $0x8] sm:$0xff]
      %v2759 = vld [vmem:[#allocation2 + $0x10] sm:$0xff]
      %v2760 = vld [vmem:[#allocation2 + $0x18] sm:$0xff]
      %v2761 = vld [vmem:[#allocation2 + $0x20] sm:$0xff]
      %v2762 = vld [vmem:[#allocation2 + $0x28] sm:$0xff]
      %v2763 = vld [vmem:[#allocation2 + $0x30] sm:$0xff]
      %v2764 = vld [vmem:[#allocation2 + $0x38] sm:$0xff]
      %v2765 = vld [vmem:[#allocation2 + $0x40] sm:$0xff]
      %v2766 = vld [vmem:[#allocation2 + $0x48] sm:$0xff]
      %v2767 = vld [vmem:[#allocation2 + $0x50] sm:$0xff]
      %v2768 = vld [vmem:[#allocation2 + $0x58] sm:$0xff]
      %v2769 = vld [vmem:[#allocation2 + $0x60] sm:$0xff]
      %v2770 = vld [vmem:[#allocation2 + $0x68] sm:$0xff]
      %v2771 = vld [vmem:[#allocation2 + $0x70] sm:$0xff]
      %v2772 = vld [vmem:[#allocation2 + $0x78] sm:$0xff]
      %v2773 = vld [vmem:[%s6] sm:$0xff]
      %v2774 = vld [vmem:[%s6 + $0x8] sm:$0xff]
      %v2775 = vld [vmem:[%s6 + $0x10] sm:$0xff]
      %v2776 = vld [vmem:[%s6 + $0x18] sm:$0xff]
      %v2777 = vld [vmem:[%s6 + $0x20] sm:$0xff]
      %v2778 = vld [vmem:[%s6 + $0x28] sm:$0xff]
      %v2779 = vld [vmem:[%s6 + $0x30] sm:$0xff]
      %v2780 = vld [vmem:[%s6 + $0x38] sm:$0xff]
      %v2781 = vld [vmem:[%s6 + $0x40] sm:$0xff]
      %v2782 = vld [vmem:[%s6 + $0x48] sm:$0xff]
      %v2783 = vld [vmem:[%s6 + $0x50] sm:$0xff]
      %v2784 = vld [vmem:[%s6 + $0x58] sm:$0xff]
      %v2785 = vld [vmem:[%s6 + $0x60] sm:$0xff]
      %v2786 = vld [vmem:[%s6 + $0x68] sm:$0xff]
      %v2787 = vld [vmem:[%s6 + $0x70] sm:$0xff]
      %v2788 = vld [vmem:[%s6 + $0x78] sm:$0xff]
      %v2789 = vld [vmem:[%s6 + $0x80] sm:$0xff]
      %v2790 = vld [vmem:[%s6 + $0x88] sm:$0xff]
      %v2791 = vld [vmem:[%s6 + $0x90] sm:$0xff]
      %v2792 = vld [vmem:[%s6 + $0x98] sm:$0xff]
      %v2793 = vld [vmem:[%s6 + $0xa0] sm:$0xff]
      %v2794 = vld [vmem:[%s6 + $0xa8] sm:$0xff]
      %v2795 = vld [vmem:[%s6 + $0xb0] sm:$0xff]
      %v2796 = vld [vmem:[%s6 + $0xb8] sm:$0xff]
      %v2797 = vld [vmem:[%s6 + $0xc0] sm:$0xff]
      %v2798 = vld [vmem:[%s6 + $0xc8] sm:$0xff]
      %v2799 = vld [vmem:[%s6 + $0xd0] sm:$0xff]
      %v2800 = vld [vmem:[%s6 + $0xd8] sm:$0xff]
      %v2801 = vld [vmem:[%s6 + $0xe0] sm:$0xff]
      %v2802 = vld [vmem:[%s6 + $0xe8] sm:$0xff]
      %v2803 = vld [vmem:[%s6 + $0xf0] sm:$0xff]
      %v2804 = vld [vmem:[%s6 + $0xf8] sm:$0xff]
      %v2805 = vld [vmem:[%s7] sm:$0x3]
      %v2807 = vlaneseq
      %v2808 = vshrl.u32 %v2807, 7
      %v2809 = vsub.s32 0, %v2808
      %v2810 = vrot.slane %v2805, %v2809
      %v2811 = vlaneseq
      %v2812 = vshrl.u32 %v2811, 7
      %v2813 = vsub.s32 1, %v2812
      %v2814 = vrot.slane %v2805, %v2813
      %v2833 = vunpack.c.l.b16 %v2757
      %v2834 = vunpack.c.h.b16 %v2757
      %v2835 = vunpack.c.l.b16 %v2758
      %v2836 = vunpack.c.h.b16 %v2758
      %v2837 = vunpack.c.l.b16 %v2759
      %v2838 = vunpack.c.h.b16 %v2759
      %v2839 = vunpack.c.l.b16 %v2760
      %v2840 = vunpack.c.h.b16 %v2760
      %v2841 = vunpack.c.l.b16 %v2761
      %v2842 = vunpack.c.h.b16 %v2761
      %v2843 = vunpack.c.l.b16 %v2762
      %v2844 = vunpack.c.h.b16 %v2762
      %v2845 = vunpack.c.l.b16 %v2763
      %v2846 = vunpack.c.h.b16 %v2763
      %v2847 = vunpack.c.l.b16 %v2764
      %v2848 = vunpack.c.h.b16 %v2764
      %v2849 = vunpack.c.l.b16 %v2765
      %v2850 = vunpack.c.h.b16 %v2765
      %v2851 = vunpack.c.l.b16 %v2766
      %v2852 = vunpack.c.h.b16 %v2766
      %v2853 = vunpack.c.l.b16 %v2767
      %v2854 = vunpack.c.h.b16 %v2767
      %v2855 = vunpack.c.l.b16 %v2768
      %v2856 = vunpack.c.h.b16 %v2768
      %v2857 = vunpack.c.l.b16 %v2769
      %v2858 = vunpack.c.h.b16 %v2769
      %v2859 = vunpack.c.l.b16 %v2770
      %v2860 = vunpack.c.h.b16 %v2770
      %v2861 = vunpack.c.l.b16 %v2771
      %v2862 = vunpack.c.h.b16 %v2771
      %v2863 = vunpack.c.l.b16 %v2772
      %v2864 = vunpack.c.h.b16 %v2772
      %v2865 = vpack.c.b16 %v2835, %v2833
      %v2866 = vpack.c.b16 %v2836, %v2834
      %v2867 = vpack.c.b16 %v2839, %v2837
      %v2868 = vpack.c.b16 %v2840, %v2838
      %v2869 = vpack.c.b16 %v2843, %v2841
      %v2870 = vpack.c.b16 %v2844, %v2842
      %v2871 = vpack.c.b16 %v2847, %v2845
      %v2872 = vpack.c.b16 %v2848, %v2846
      %v2873 = vpack.c.b16 %v2851, %v2849
      %v2874 = vpack.c.b16 %v2852, %v2850
      %v2875 = vpack.c.b16 %v2855, %v2853
      %v2876 = vpack.c.b16 %v2856, %v2854
      %v2877 = vpack.c.b16 %v2859, %v2857
      %v2878 = vpack.c.b16 %v2860, %v2858
      %v2879 = vpack.c.b16 %v2863, %v2861
      %v2880 = vpack.c.b16 %v2864, %v2862
      %v2929 = vunpack.c.l.b16 %v2773
      %v2930 = vunpack.c.h.b16 %v2773
      %v2931 = vunpack.c.l.b16 %v2774
      %v2932 = vunpack.c.h.b16 %v2774
      %v2933 = vunpack.c.l.b16 %v2775
      %v2934 = vunpack.c.h.b16 %v2775
      %v2935 = vunpack.c.l.b16 %v2776
      %v2936 = vunpack.c.h.b16 %v2776
      %v2937 = vunpack.c.l.b16 %v2777
      %v2938 = vunpack.c.h.b16 %v2777
      %v2939 = vunpack.c.l.b16 %v2778
      %v2940 = vunpack.c.h.b16 %v2778
      %v2941 = vunpack.c.l.b16 %v2779
      %v2942 = vunpack.c.h.b16 %v2779
      %v2943 = vunpack.c.l.b16 %v2780
      %v2944 = vunpack.c.h.b16 %v2780
      %v2945 = vunpack.c.l.b16 %v2781
      %v2946 = vunpack.c.h.b16 %v2781
      %v2947 = vunpack.c.l.b16 %v2782
      %v2948 = vunpack.c.h.b16 %v2782
      %v2949 = vunpack.c.l.b16 %v2783
      %v2950 = vunpack.c.h.b16 %v2783
      %v2951 = vunpack.c.l.b16 %v2784
      %v2952 = vunpack.c.h.b16 %v2784
      %v2953 = vunpack.c.l.b16 %v2785
      %v2954 = vunpack.c.h.b16 %v2785
      %v2955 = vunpack.c.l.b16 %v2786
      %v2956 = vunpack.c.h.b16 %v2786
      %v2957 = vunpack.c.l.b16 %v2787
      %v2958 = vunpack.c.h.b16 %v2787
      %v2959 = vunpack.c.l.b16 %v2788
      %v2960 = vunpack.c.h.b16 %v2788
      %v2961 = vunpack.c.l.b16 %v2789
      %v2962 = vunpack.c.h.b16 %v2789
      %v2963 = vunpack.c.l.b16 %v2790
      %v2964 = vunpack.c.h.b16 %v2790
      %v2965 = vunpack.c.l.b16 %v2791
      %v2966 = vunpack.c.h.b16 %v2791
      %v2967 = vunpack.c.l.b16 %v2792
      %v2968 = vunpack.c.h.b16 %v2792
      %v2969 = vunpack.c.l.b16 %v2793
      %v2970 = vunpack.c.h.b16 %v2793
      %v2971 = vunpack.c.l.b16 %v2794
      %v2972 = vunpack.c.h.b16 %v2794
      %v2973 = vunpack.c.l.b16 %v2795
      %v2974 = vunpack.c.h.b16 %v2795
      %v2975 = vunpack.c.l.b16 %v2796
      %v2976 = vunpack.c.h.b16 %v2796
      %v2977 = vunpack.c.l.b16 %v2797
      %v2978 = vunpack.c.h.b16 %v2797
      %v2979 = vunpack.c.l.b16 %v2798
      %v2980 = vunpack.c.h.b16 %v2798
      %v2981 = vunpack.c.l.b16 %v2799
      %v2982 = vunpack.c.h.b16 %v2799
      %v2983 = vunpack.c.l.b16 %v2800
      %v2984 = vunpack.c.h.b16 %v2800
      %v2985 = vunpack.c.l.b16 %v2801
      %v2986 = vunpack.c.h.b16 %v2801
      %v2987 = vunpack.c.l.b16 %v2802
      %v2988 = vunpack.c.h.b16 %v2802
      %v2989 = vunpack.c.l.b16 %v2803
      %v2990 = vunpack.c.h.b16 %v2803
      %v2991 = vunpack.c.l.b16 %v2804
      %v2992 = vunpack.c.h.b16 %v2804
      %v2993 = vpack.c.b16 %v2931, %v2929
      %v2994 = vpack.c.b16 %v2932, %v2930
      %v2995 = vpack.c.b16 %v2935, %v2933
      %v2996 = vpack.c.b16 %v2936, %v2934
      %v2997 = vpack.c.b16 %v2939, %v2937
      %v2998 = vpack.c.b16 %v2940, %v2938
      %v2999 = vpack.c.b16 %v2943, %v2941
      %v3000 = vpack.c.b16 %v2944, %v2942
      %v3001 = vpack.c.b16 %v2947, %v2945
      %v3002 = vpack.c.b16 %v2948, %v2946
      %v3003 = vpack.c.b16 %v2951, %v2949
      %v3004 = vpack.c.b16 %v2952, %v2950
      %v3005 = vpack.c.b16 %v2955, %v2953
      %v3006 = vpack.c.b16 %v2956, %v2954
      %v3007 = vpack.c.b16 %v2959, %v2957
      %v3008 = vpack.c.b16 %v2960, %v2958
      %v3009 = vpack.c.b16 %v2963, %v2961
      %v3010 = vpack.c.b16 %v2964, %v2962
      %v3011 = vpack.c.b16 %v2967, %v2965
      %v3012 = vpack.c.b16 %v2968, %v2966
      %v3013 = vpack.c.b16 %v2971, %v2969
      %v3014 = vpack.c.b16 %v2972, %v2970
      %v3015 = vpack.c.b16 %v2975, %v2973
      %v3016 = vpack.c.b16 %v2976, %v2974
      %v3017 = vpack.c.b16 %v2979, %v2977
      %v3018 = vpack.c.b16 %v2980, %v2978
      %v3019 = vpack.c.b16 %v2983, %v2981
      %v3020 = vpack.c.b16 %v2984, %v2982
      %v3021 = vpack.c.b16 %v2987, %v2985
      %v3022 = vpack.c.b16 %v2988, %v2986
      %v3023 = vpack.c.b16 %v2991, %v2989
      %v3024 = vpack.c.b16 %v2992, %v2990
      %3057 = vmatprep.subr.bf16.mxu0 %v3008
      %3058 = vmatpush1.bf16.msra.mxu0 %v3007
      %3059 = vmatprep.subr.bf16.mxu0 %v3006
      %3060 = vmatpush1.bf16.msra.mxu0 %v3005
      %3061 = vmatprep.subr.bf16.mxu0 %v3004
      %3062 = vmatpush1.bf16.msra.mxu0 %v3003
      %3063 = vmatprep.subr.bf16.mxu0 %v3002
      %3064 = vmatpush1.bf16.msra.mxu0 %v3001
      %3065 = vmatprep.subr.bf16.mxu0 %v3000
      %3066 = vmatpush1.bf16.msra.mxu0 %v2999
      %3067 = vmatprep.subr.bf16.mxu0 %v2998
      %3068 = vmatpush1.bf16.msra.mxu0 %v2997
      %3069 = vmatprep.subr.bf16.mxu0 %v2996
      %3070 = vmatpush1.bf16.msra.mxu0 %v2995
      %3071 = vmatprep.subr.bf16.mxu0 %v2994
      %3072 = vmatpush1.bf16.msra.mxu0 %v2993
      %3073 = vmatprep.subr.bf16.mxu0 %v3024
      %3074 = vmatpush2.bf16.msra.mxu0 %v3023
      %3075 = vmatprep.subr.bf16.mxu0 %v3022
      %3076 = vmatpush2.bf16.msra.mxu0 %v3021
      %3077 = vmatprep.subr.bf16.mxu0 %v3020
      %3078 = vmatpush2.bf16.msra.mxu0 %v3019
      %3079 = vmatprep.subr.bf16.mxu0 %v3018
      %3080 = vmatpush2.bf16.msra.mxu0 %v3017
      %3081 = vmatprep.subr.bf16.mxu0 %v3016
      %3082 = vmatpush2.bf16.msra.mxu0 %v3015
      %3083 = vmatprep.subr.bf16.mxu0 %v3014
      %3084 = vmatpush2.bf16.msra.mxu0 %v3013
      %3085 = vmatprep.subr.bf16.mxu0 %v3012
      %3086 = vmatpush2.bf16.msra.mxu0 %v3011
      %3087 = vmatprep.subr.bf16.mxu0 %v3010
      %3088 = vmatpush2.bf16.msra.mxu0 %v3009
      %3089 = vmatprep.mubr.bf16.mxu0 %v2866
      %3090 = vmatmul.mubr.bf16.gmra.mxu0 %v2865
      %v3091 = vpop.f32.mrf.mxu0
      %v3092 = vadd.f32 %v2810, %v3091
      %v3093 = vpop.f32.mrf.mxu0
      %v3094 = vadd.f32 %v2814, %v3093
      %v3095 = vpop.f32.mrf.mxu0
      %v3096 = vadd.f32 %v2810, %v3095
      %v3097 = vpop.f32.mrf.mxu0
      %v3098 = vadd.f32 %v2814, %v3097
      %3099 = vmatprep.mubr.bf16.mxu0 %v2868
      %3100 = vmatmul.mubr.bf16.gmra.mxu0 %v2867
      %v3101 = vpop.f32.mrf.mxu0
      %v3102 = vadd.f32 %v2810, %v3101
      %v3103 = vpop.f32.mrf.mxu0
      %v3104 = vadd.f32 %v2814, %v3103
      %v3105 = vpop.f32.mrf.mxu0
      %v3106 = vadd.f32 %v2810, %v3105
      %v3107 = vpop.f32.mrf.mxu0
      %v3108 = vadd.f32 %v2814, %v3107
      %3109 = vmatprep.mubr.bf16.mxu0 %v2870
      %3110 = vmatmul.mubr.bf16.gmra.mxu0 %v2869
      %v3111 = vpop.f32.mrf.mxu0
      %v3112 = vadd.f32 %v2810, %v3111
      %v3113 = vpop.f32.mrf.mxu0
      %v3114 = vadd.f32 %v2814, %v3113
      %v3115 = vpop.f32.mrf.mxu0
      %v3116 = vadd.f32 %v2810, %v3115
      %v3117 = vpop.f32.mrf.mxu0
      %v3118 = vadd.f32 %v2814, %v3117
      %3119 = vmatprep.mubr.bf16.mxu0 %v2872
      %3120 = vmatmul.mubr.bf16.gmra.mxu0 %v2871
      %v3121 = vpop.f32.mrf.mxu0
      %v3122 = vadd.f32 %v2810, %v3121
      %v3123 = vpop.f32.mrf.mxu0
      %v3124 = vadd.f32 %v2814, %v3123
      %v3125 = vpop.f32.mrf.mxu0
      %v3126 = vadd.f32 %v2810, %v3125
      %v3127 = vpop.f32.mrf.mxu0
      %v3128 = vadd.f32 %v2814, %v3127
      %3129 = vmatprep.mubr.bf16.mxu0 %v2874
      %3130 = vmatmul.mubr.bf16.gmra.mxu0 %v2873
      %v3131 = vpop.f32.mrf.mxu0
      %v3132 = vadd.f32 %v2810, %v3131
      %v3133 = vpop.f32.mrf.mxu0
      %v3134 = vadd.f32 %v2814, %v3133
      %v3135 = vpop.f32.mrf.mxu0
      %v3136 = vadd.f32 %v2810, %v3135
      %v3137 = vpop.f32.mrf.mxu0
      %v3138 = vadd.f32 %v2814, %v3137
      %3139 = vmatprep.mubr.bf16.mxu0 %v2876
      %3140 = vmatmul.mubr.bf16.gmra.mxu0 %v2875
      %v3141 = vpop.f32.mrf.mxu0
      %v3142 = vadd.f32 %v2810, %v3141
      %v3143 = vpop.f32.mrf.mxu0
      %v3144 = vadd.f32 %v2814, %v3143
      %v3145 = vpop.f32.mrf.mxu0
      %v3146 = vadd.f32 %v2810, %v3145
      %v3147 = vpop.f32.mrf.mxu0
      %v3148 = vadd.f32 %v2814, %v3147
      %3149 = vmatprep.mubr.bf16.mxu0 %v2878
      %3150 = vmatmul.mubr.bf16.gmra.mxu0 %v2877
      %v3151 = vpop.f32.mrf.mxu0
      %v3152 = vadd.f32 %v2810, %v3151
      %v3153 = vpop.f32.mrf.mxu0
      %v3154 = vadd.f32 %v2814, %v3153
      %v3155 = vpop.f32.mrf.mxu0
      %v3156 = vadd.f32 %v2810, %v3155
      %v3157 = vpop.f32.mrf.mxu0
      %v3158 = vadd.f32 %v2814, %v3157
      %3159 = vmatprep.mubr.bf16.mxu0 %v2880
      %3160 = vmatmul.mubr.bf16.gmra.mxu0 %v2879
      %v3161 = vpop.f32.mrf.mxu0
      %v3162 = vadd.f32 %v2810, %v3161
      %v3163 = vpop.f32.mrf.mxu0
      %v3164 = vadd.f32 %v2814, %v3163
      %v3165 = vpop.f32.mrf.mxu0
      %v3166 = vadd.f32 %v2810, %v3165
      %v3167 = vpop.f32.mrf.mxu0
      %v3168 = vadd.f32 %v2814, %v3167
      %3169 = vdwg.mxu0
      %v3170 = vadd.f32 %v469, %v3092
      %v3171 = vadd.f32 %v470, %v3094
      %v3172 = vadd.f32 %v471, %v3096
      %v3173 = vadd.f32 %v472, %v3098
      %v3174 = vadd.f32 %v473, %v3102
      %v3175 = vadd.f32 %v474, %v3104
      %v3176 = vadd.f32 %v475, %v3106
      %v3177 = vadd.f32 %v476, %v3108
      %v3178 = vadd.f32 %v477, %v3112
      %v3179 = vadd.f32 %v478, %v3114
      %v3180 = vadd.f32 %v479, %v3116
      %v3181 = vadd.f32 %v480, %v3118
      %v3182 = vadd.f32 %v481, %v3122
      %v3183 = vadd.f32 %v482, %v3124
      %v3184 = vadd.f32 %v483, %v3126
      %v3185 = vadd.f32 %v484, %v3128
      %v3186 = vadd.f32 %v485, %v3132
      %v3187 = vadd.f32 %v486, %v3134
      %v3188 = vadd.f32 %v487, %v3136
      %v3189 = vadd.f32 %v488, %v3138
      %v3190 = vadd.f32 %v489, %v3142
      %v3191 = vadd.f32 %v490, %v3144
      %v3192 = vadd.f32 %v491, %v3146
      %v3193 = vadd.f32 %v492, %v3148
      %v3194 = vadd.f32 %v493, %v3152
      %v3195 = vadd.f32 %v494, %v3154
      %v3196 = vadd.f32 %v495, %v3156
      %v3197 = vadd.f32 %v496, %v3158
      %v3198 = vadd.f32 %v497, %v3162
      %v3199 = vadd.f32 %v498, %v3164
      %v3200 = vadd.f32 %v499, %v3166
      %v3201 = vadd.f32 %v500, %v3168
      %v3202 = vld [vmem:[%s8] sm:$0x3]
      %v3203 = vld [vmem:[%s9] sm:$0x3]
      %v3204 = vadd.f32 %v3170, %v3171
      %3205 = vadd.xlane.f32.xlu0 %v3204
      %v3206 = vpop.xlane.xlu0 %3205
      %v3207 = vadd.f32 %v3172, %v3173
      %3208 = vadd.xlane.f32.xlu0 %v3207
      %v3209 = vpop.xlane.xlu0 %3208
      %v3210 = vadd.f32 %v3174, %v3175
      %3211 = vadd.xlane.f32.xlu0 %v3210
      %v3212 = vpop.xlane.xlu0 %3211
      %v3213 = vadd.f32 %v3176, %v3177
      %3214 = vadd.xlane.f32.xlu0 %v3213
      %v3215 = vpop.xlane.xlu0 %3214
      %v3216 = vadd.f32 %v3178, %v3179
      %3217 = vadd.xlane.f32.xlu0 %v3216
      %v3218 = vpop.xlane.xlu0 %3217
      %v3219 = vadd.f32 %v3180, %v3181
      %3220 = vadd.xlane.f32.xlu0 %v3219
      %v3221 = vpop.xlane.xlu0 %3220
      %v3222 = vadd.f32 %v3182, %v3183
      %3223 = vadd.xlane.f32.xlu0 %v3222
      %v3224 = vpop.xlane.xlu0 %3223
      %v3225 = vadd.f32 %v3184, %v3185
      %3226 = vadd.xlane.f32.xlu0 %v3225
      %v3227 = vpop.xlane.xlu0 %3226
      %v3228 = vadd.f32 %v3186, %v3187
      %3229 = vadd.xlane.f32.xlu0 %v3228
      %v3230 = vpop.xlane.xlu0 %3229
      %v3231 = vadd.f32 %v3188, %v3189
      %3232 = vadd.xlane.f32.xlu0 %v3231
      %v3233 = vpop.xlane.xlu0 %3232
      %v3234 = vadd.f32 %v3190, %v3191
      %3235 = vadd.xlane.f32.xlu0 %v3234
      %v3236 = vpop.xlane.xlu0 %3235
      %v3237 = vadd.f32 %v3192, %v3193
      %3238 = vadd.xlane.f32.xlu0 %v3237
      %v3239 = vpop.xlane.xlu0 %3238
      %v3240 = vadd.f32 %v3194, %v3195
      %3241 = vadd.xlane.f32.xlu0 %v3240
      %v3242 = vpop.xlane.xlu0 %3241
      %v3243 = vadd.f32 %v3196, %v3197
      %3244 = vadd.xlane.f32.xlu0 %v3243
      %v3245 = vpop.xlane.xlu0 %3244
      %v3246 = vadd.f32 %v3198, %v3199
      %3247 = vadd.xlane.f32.xlu0 %v3246
      %v3248 = vpop.xlane.xlu0 %3247
      %v3249 = vadd.f32 %v3200, %v3201
      %3250 = vadd.xlane.f32.xlu0 %v3249
      %v3251 = vpop.xlane.xlu0 %3250
      %v3252 = vmul.f32 %v3206, %v567
      %v3253 = vmul.f32 %v3209, %v567
      %v3254 = vmul.f32 %v3212, %v567
      %v3255 = vmul.f32 %v3215, %v567
      %v3256 = vmul.f32 %v3218, %v567
      %v3257 = vmul.f32 %v3221, %v567
      %v3258 = vmul.f32 %v3224, %v567
      %v3259 = vmul.f32 %v3227, %v567
      %v3260 = vmul.f32 %v3230, %v567
      %v3261 = vmul.f32 %v3233, %v567
      %v3262 = vmul.f32 %v3236, %v567
      %v3263 = vmul.f32 %v3239, %v567
      %v3264 = vmul.f32 %v3242, %v567
      %v3265 = vmul.f32 %v3245, %v567
      %v3266 = vmul.f32 %v3248, %v567
      %v3267 = vmul.f32 %v3251, %v567
      %v3268 = vsub.f32 %v3170, %v3252
      %v3269 = vsub.f32 %v3171, %v3252
      %v3270 = vsub.f32 %v3172, %v3253
      %v3271 = vsub.f32 %v3173, %v3253
      %v3272 = vsub.f32 %v3174, %v3254
      %v3273 = vsub.f32 %v3175, %v3254
      %v3274 = vsub.f32 %v3176, %v3255
      %v3275 = vsub.f32 %v3177, %v3255
      %v3276 = vsub.f32 %v3178, %v3256
      %v3277 = vsub.f32 %v3179, %v3256
      %v3278 = vsub.f32 %v3180, %v3257
      %v3279 = vsub.f32 %v3181, %v3257
      %v3280 = vsub.f32 %v3182, %v3258
      %v3281 = vsub.f32 %v3183, %v3258
      %v3282 = vsub.f32 %v3184, %v3259
      %v3283 = vsub.f32 %v3185, %v3259
      %v3284 = vsub.f32 %v3186, %v3260
      %v3285 = vsub.f32 %v3187, %v3260
      %v3286 = vsub.f32 %v3188, %v3261
      %v3287 = vsub.f32 %v3189, %v3261
      %v3288 = vsub.f32 %v3190, %v3262
      %v3289 = vsub.f32 %v3191, %v3262
      %v3290 = vsub.f32 %v3192, %v3263
      %v3291 = vsub.f32 %v3193, %v3263
      %v3292 = vsub.f32 %v3194, %v3264
      %v3293 = vsub.f32 %v3195, %v3264
      %v3294 = vsub.f32 %v3196, %v3265
      %v3295 = vsub.f32 %v3197, %v3265
      %v3296 = vsub.f32 %v3198, %v3266
      %v3297 = vsub.f32 %v3199, %v3266
      %v3298 = vsub.f32 %v3200, %v3267
      %v3299 = vsub.f32 %v3201, %v3267
      %v3300 = vmul.f32 %v3268, %v3268
      %v3301 = vmul.f32 %v3269, %v3269
      %v3302 = vmul.f32 %v3270, %v3270
      %v3303 = vmul.f32 %v3271, %v3271
      %v3304 = vmul.f32 %v3272, %v3272
      %v3305 = vmul.f32 %v3273, %v3273
      %v3306 = vmul.f32 %v3274, %v3274
      %v3307 = vmul.f32 %v3275, %v3275
      %v3308 = vmul.f32 %v3276, %v3276
      %v3309 = vmul.f32 %v3277, %v3277
      %v3310 = vmul.f32 %v3278, %v3278
      %v3311 = vmul.f32 %v3279, %v3279
      %v3312 = vmul.f32 %v3280, %v3280
      %v3313 = vmul.f32 %v3281, %v3281
      %v3314 = vmul.f32 %v3282, %v3282
      %v3315 = vmul.f32 %v3283, %v3283
      %v3316 = vmul.f32 %v3284, %v3284
      %v3317 = vmul.f32 %v3285, %v3285
      %v3318 = vmul.f32 %v3286, %v3286
      %v3319 = vmul.f32 %v3287, %v3287
      %v3320 = vmul.f32 %v3288, %v3288
      %v3321 = vmul.f32 %v3289, %v3289
      %v3322 = vmul.f32 %v3290, %v3290
      %v3323 = vmul.f32 %v3291, %v3291
      %v3324 = vmul.f32 %v3292, %v3292
      %v3325 = vmul.f32 %v3293, %v3293
      %v3326 = vmul.f32 %v3294, %v3294
      %v3327 = vmul.f32 %v3295, %v3295
      %v3328 = vmul.f32 %v3296, %v3296
      %v3329 = vmul.f32 %v3297, %v3297
      %v3330 = vmul.f32 %v3298, %v3298
      %v3331 = vmul.f32 %v3299, %v3299
      %v3332 = vadd.f32 %v3300, %v3301
      %3333 = vadd.xlane.f32.xlu0 %v3332
      %v3334 = vpop.xlane.xlu0 %3333
      %v3335 = vadd.f32 %v3302, %v3303
      %3336 = vadd.xlane.f32.xlu0 %v3335
      %v3337 = vpop.xlane.xlu0 %3336
      %v3338 = vadd.f32 %v3304, %v3305
      %3339 = vadd.xlane.f32.xlu0 %v3338
      %v3340 = vpop.xlane.xlu0 %3339
      %v3341 = vadd.f32 %v3306, %v3307
      %3342 = vadd.xlane.f32.xlu0 %v3341
      %v3343 = vpop.xlane.xlu0 %3342
      %v3344 = vadd.f32 %v3308, %v3309
      %3345 = vadd.xlane.f32.xlu0 %v3344
      %v3346 = vpop.xlane.xlu0 %3345
      %v3347 = vadd.f32 %v3310, %v3311
      %3348 = vadd.xlane.f32.xlu0 %v3347
      %v3349 = vpop.xlane.xlu0 %3348
      %v3350 = vadd.f32 %v3312, %v3313
      %3351 = vadd.xlane.f32.xlu0 %v3350
      %v3352 = vpop.xlane.xlu0 %3351
      %v3353 = vadd.f32 %v3314, %v3315
      %3354 = vadd.xlane.f32.xlu0 %v3353
      %v3355 = vpop.xlane.xlu0 %3354
      %v3356 = vadd.f32 %v3316, %v3317
      %3357 = vadd.xlane.f32.xlu0 %v3356
      %v3358 = vpop.xlane.xlu0 %3357
      %v3359 = vadd.f32 %v3318, %v3319
      %3360 = vadd.xlane.f32.xlu0 %v3359
      %v3361 = vpop.xlane.xlu0 %3360
      %v3362 = vadd.f32 %v3320, %v3321
      %3363 = vadd.xlane.f32.xlu0 %v3362
      %v3364 = vpop.xlane.xlu0 %3363
      %v3365 = vadd.f32 %v3322, %v3323
      %3366 = vadd.xlane.f32.xlu0 %v3365
      %v3367 = vpop.xlane.xlu0 %3366
      %v3368 = vadd.f32 %v3324, %v3325
      %3369 = vadd.xlane.f32.xlu0 %v3368
      %v3370 = vpop.xlane.xlu0 %3369
      %v3371 = vadd.f32 %v3326, %v3327
      %3372 = vadd.xlane.f32.xlu0 %v3371
      %v3373 = vpop.xlane.xlu0 %3372
      %v3374 = vadd.f32 %v3328, %v3329
      %3375 = vadd.xlane.f32.xlu0 %v3374
      %v3376 = vpop.xlane.xlu0 %3375
      %v3377 = vadd.f32 %v3330, %v3331
      %3378 = vadd.xlane.f32.xlu0 %v3377
      %v3379 = vpop.xlane.xlu0 %3378
      %v3380 = vmul.f32 %v3334, %v567
      %v3381 = vmul.f32 %v3337, %v567
      %v3382 = vmul.f32 %v3340, %v567
      %v3383 = vmul.f32 %v3343, %v567
      %v3384 = vmul.f32 %v3346, %v567
      %v3385 = vmul.f32 %v3349, %v567
      %v3386 = vmul.f32 %v3352, %v567
      %v3387 = vmul.f32 %v3355, %v567
      %v3388 = vmul.f32 %v3358, %v567
      %v3389 = vmul.f32 %v3361, %v567
      %v3390 = vmul.f32 %v3364, %v567
      %v3391 = vmul.f32 %v3367, %v567
      %v3392 = vmul.f32 %v3370, %v567
      %v3393 = vmul.f32 %v3373, %v567
      %v3394 = vmul.f32 %v3376, %v567
      %v3395 = vmul.f32 %v3379, %v567
      %v3396 = vadd.f32 %v3380, 1e-05
      %v3397 = vadd.f32 %v3381, 1e-05
      %v3398 = vadd.f32 %v3382, 1e-05
      %v3399 = vadd.f32 %v3383, 1e-05
      %v3400 = vadd.f32 %v3384, 1e-05
      %v3401 = vadd.f32 %v3385, 1e-05
      %v3402 = vadd.f32 %v3386, 1e-05
      %v3403 = vadd.f32 %v3387, 1e-05
      %v3404 = vadd.f32 %v3388, 1e-05
      %v3405 = vadd.f32 %v3389, 1e-05
      %v3406 = vadd.f32 %v3390, 1e-05
      %v3407 = vadd.f32 %v3391, 1e-05
      %v3408 = vadd.f32 %v3392, 1e-05
      %v3409 = vadd.f32 %v3393, 1e-05
      %v3410 = vadd.f32 %v3394, 1e-05
      %v3411 = vadd.f32 %v3395, 1e-05
      %v3412 = vrsqrt.pop %v3396
      %v3413 = vrsqrt.pop %v3397
      %v3414 = vrsqrt.pop %v3398
      %v3415 = vrsqrt.pop %v3399
      %v3416 = vrsqrt.pop %v3400
      %v3417 = vrsqrt.pop %v3401
      %v3418 = vrsqrt.pop %v3402
      %v3419 = vrsqrt.pop %v3403
      %v3420 = vrsqrt.pop %v3404
      %v3421 = vrsqrt.pop %v3405
      %v3422 = vrsqrt.pop %v3406
      %v3423 = vrsqrt.pop %v3407
      %v3424 = vrsqrt.pop %v3408
      %v3425 = vrsqrt.pop %v3409
      %v3426 = vrsqrt.pop %v3410
      %v3427 = vrsqrt.pop %v3411
      %v3428 = vmul.f32 %v3268, %v3412
      %v3429 = vmul.f32 %v3269, %v3412
      %v3430 = vmul.f32 %v3270, %v3413
      %v3431 = vmul.f32 %v3271, %v3413
      %v3432 = vmul.f32 %v3272, %v3414
      %v3433 = vmul.f32 %v3273, %v3414
      %v3434 = vmul.f32 %v3274, %v3415
      %v3435 = vmul.f32 %v3275, %v3415
      %v3436 = vmul.f32 %v3276, %v3416
      %v3437 = vmul.f32 %v3277, %v3416
      %v3438 = vmul.f32 %v3278, %v3417
      %v3439 = vmul.f32 %v3279, %v3417
      %v3440 = vmul.f32 %v3280, %v3418
      %v3441 = vmul.f32 %v3281, %v3418
      %v3442 = vmul.f32 %v3282, %v3419
      %v3443 = vmul.f32 %v3283, %v3419
      %v3444 = vmul.f32 %v3284, %v3420
      %v3445 = vmul.f32 %v3285, %v3420
      %v3446 = vmul.f32 %v3286, %v3421
      %v3447 = vmul.f32 %v3287, %v3421
      %v3448 = vmul.f32 %v3288, %v3422
      %v3449 = vmul.f32 %v3289, %v3422
      %v3450 = vmul.f32 %v3290, %v3423
      %v3451 = vmul.f32 %v3291, %v3423
      %v3452 = vmul.f32 %v3292, %v3424
      %v3453 = vmul.f32 %v3293, %v3424
      %v3454 = vmul.f32 %v3294, %v3425
      %v3455 = vmul.f32 %v3295, %v3425
      %v3456 = vmul.f32 %v3296, %v3426
      %v3457 = vmul.f32 %v3297, %v3426
      %v3458 = vmul.f32 %v3298, %v3427
      %v3459 = vmul.f32 %v3299, %v3427
      %v3461 = vlaneseq
      %v3462 = vshrl.u32 %v3461, 7
      %v3463 = vsub.s32 0, %v3462
      %v3464 = vrot.slane %v3202, %v3463
      %v3465 = vlaneseq
      %v3466 = vshrl.u32 %v3465, 7
      %v3467 = vsub.s32 1, %v3466
      %v3468 = vrot.slane %v3202, %v3467
      %v3471 = vmul.f32 %v3428, %v3464
      %v3472 = vmul.f32 %v3429, %v3468
      %v3473 = vmul.f32 %v3430, %v3464
      %v3474 = vmul.f32 %v3431, %v3468
      %v3475 = vmul.f32 %v3432, %v3464
      %v3476 = vmul.f32 %v3433, %v3468
      %v3477 = vmul.f32 %v3434, %v3464
      %v3478 = vmul.f32 %v3435, %v3468
      %v3479 = vmul.f32 %v3436, %v3464
      %v3480 = vmul.f32 %v3437, %v3468
      %v3481 = vmul.f32 %v3438, %v3464
      %v3482 = vmul.f32 %v3439, %v3468
      %v3483 = vmul.f32 %v3440, %v3464
      %v3484 = vmul.f32 %v3441, %v3468
      %v3485 = vmul.f32 %v3442, %v3464
      %v3486 = vmul.f32 %v3443, %v3468
      %v3487 = vmul.f32 %v3444, %v3464
      %v3488 = vmul.f32 %v3445, %v3468
      %v3489 = vmul.f32 %v3446, %v3464
      %v3490 = vmul.f32 %v3447, %v3468
      %v3491 = vmul.f32 %v3448, %v3464
      %v3492 = vmul.f32 %v3449, %v3468
      %v3493 = vmul.f32 %v3450, %v3464
      %v3494 = vmul.f32 %v3451, %v3468
      %v3495 = vmul.f32 %v3452, %v3464
      %v3496 = vmul.f32 %v3453, %v3468
      %v3497 = vmul.f32 %v3454, %v3464
      %v3498 = vmul.f32 %v3455, %v3468
      %v3499 = vmul.f32 %v3456, %v3464
      %v3500 = vmul.f32 %v3457, %v3468
      %v3501 = vmul.f32 %v3458, %v3464
      %v3502 = vmul.f32 %v3459, %v3468
      %v3504 = vlaneseq
      %v3505 = vshrl.u32 %v3504, 7
      %v3506 = vsub.s32 0, %v3505
      %v3507 = vrot.slane %v3203, %v3506
      %v3508 = vlaneseq
      %v3509 = vshrl.u32 %v3508, 7
      %v3510 = vsub.s32 1, %v3509
      %v3511 = vrot.slane %v3203, %v3510
      %v3514 = vadd.f32 %v3471, %v3507
      %v3515 = vadd.f32 %v3472, %v3511
      %v3516 = vadd.f32 %v3473, %v3507
      %v3517 = vadd.f32 %v3474, %v3511
      %v3518 = vadd.f32 %v3475, %v3507
      %v3519 = vadd.f32 %v3476, %v3511
      %v3520 = vadd.f32 %v3477, %v3507
      %v3521 = vadd.f32 %v3478, %v3511
      %v3522 = vadd.f32 %v3479, %v3507
      %v3523 = vadd.f32 %v3480, %v3511
      %v3524 = vadd.f32 %v3481, %v3507
      %v3525 = vadd.f32 %v3482, %v3511
      %v3526 = vadd.f32 %v3483, %v3507
      %v3527 = vadd.f32 %v3484, %v3511
      %v3528 = vadd.f32 %v3485, %v3507
      %v3529 = vadd.f32 %v3486, %v3511
      %v3530 = vadd.f32 %v3487, %v3507
      %v3531 = vadd.f32 %v3488, %v3511
      %v3532 = vadd.f32 %v3489, %v3507
      %v3533 = vadd.f32 %v3490, %v3511
      %v3534 = vadd.f32 %v3491, %v3507
      %v3535 = vadd.f32 %v3492, %v3511
      %v3536 = vadd.f32 %v3493, %v3507
      %v3537 = vadd.f32 %v3494, %v3511
      %v3538 = vadd.f32 %v3495, %v3507
      %v3539 = vadd.f32 %v3496, %v3511
      %v3540 = vadd.f32 %v3497, %v3507
      %v3541 = vadd.f32 %v3498, %v3511
      %v3542 = vadd.f32 %v3499, %v3507
      %v3543 = vadd.f32 %v3500, %v3511
      %v3544 = vadd.f32 %v3501, %v3507
      %v3545 = vadd.f32 %v3502, %v3511
      %v3546 = vpack.c.bf16 %v3516, %v3514
      %v3547 = vpack.c.bf16 %v3517, %v3515
      %v3548 = vpack.c.bf16 %v3520, %v3518
      %v3549 = vpack.c.bf16 %v3521, %v3519
      %v3550 = vpack.c.bf16 %v3524, %v3522
      %v3551 = vpack.c.bf16 %v3525, %v3523
      %v3552 = vpack.c.bf16 %v3528, %v3526
      %v3553 = vpack.c.bf16 %v3529, %v3527
      %v3554 = vpack.c.bf16 %v3532, %v3530
      %v3555 = vpack.c.bf16 %v3533, %v3531
      %v3556 = vpack.c.bf16 %v3536, %v3534
      %v3557 = vpack.c.bf16 %v3537, %v3535
      %v3558 = vpack.c.bf16 %v3540, %v3538
      %v3559 = vpack.c.bf16 %v3541, %v3539
      %v3560 = vpack.c.bf16 %v3544, %v3542
      %v3561 = vpack.c.bf16 %v3545, %v3543
      %v3562 = vld [vmem:[%s10] sm:$0xff]
      %v3563 = vld [vmem:[%s10 + $0x8] sm:$0xff]
      %v3564 = vld [vmem:[%s10 + $0x10] sm:$0xff]
      %v3565 = vld [vmem:[%s10 + $0x18] sm:$0xff]
      %v3566 = vld [vmem:[%s10 + $0x20] sm:$0xff]
      %v3567 = vld [vmem:[%s10 + $0x28] sm:$0xff]
      %v3568 = vld [vmem:[%s10 + $0x30] sm:$0xff]
      %v3569 = vld [vmem:[%s10 + $0x38] sm:$0xff]
      %v3570 = vld [vmem:[%s10 + $0x40] sm:$0xff]
      %v3571 = vld [vmem:[%s10 + $0x48] sm:$0xff]
      %v3572 = vld [vmem:[%s10 + $0x50] sm:$0xff]
      %v3573 = vld [vmem:[%s10 + $0x58] sm:$0xff]
      %v3574 = vld [vmem:[%s10 + $0x60] sm:$0xff]
      %v3575 = vld [vmem:[%s10 + $0x68] sm:$0xff]
      %v3576 = vld [vmem:[%s10 + $0x70] sm:$0xff]
      %v3577 = vld [vmem:[%s10 + $0x78] sm:$0xff]
      %v3578 = vld [vmem:[%s10 + $0x80] sm:$0xff]
      %v3579 = vld [vmem:[%s10 + $0x88] sm:$0xff]
      %v3580 = vld [vmem:[%s10 + $0x90] sm:$0xff]
      %v3581 = vld [vmem:[%s10 + $0x98] sm:$0xff]
      %v3582 = vld [vmem:[%s10 + $0xa0] sm:$0xff]
      %v3583 = vld [vmem:[%s10 + $0xa8] sm:$0xff]
      %v3584 = vld [vmem:[%s10 + $0xb0] sm:$0xff]
      %v3585 = vld [vmem:[%s10 + $0xb8] sm:$0xff]
      %v3586 = vld [vmem:[%s10 + $0xc0] sm:$0xff]
      %v3587 = vld [vmem:[%s10 + $0xc8] sm:$0xff]
      %v3588 = vld [vmem:[%s10 + $0xd0] sm:$0xff]
      %v3589 = vld [vmem:[%s10 + $0xd8] sm:$0xff]
      %v3590 = vld [vmem:[%s10 + $0xe0] sm:$0xff]
      %v3591 = vld [vmem:[%s10 + $0xe8] sm:$0xff]
      %v3592 = vld [vmem:[%s10 + $0xf0] sm:$0xff]
      %v3593 = vld [vmem:[%s10 + $0xf8] sm:$0xff]
      %v3594 = vld [vmem:[%s10 + $0x100] sm:$0xff]
      %v3595 = vld [vmem:[%s10 + $0x108] sm:$0xff]
      %v3596 = vld [vmem:[%s10 + $0x110] sm:$0xff]
      %v3597 = vld [vmem:[%s10 + $0x118] sm:$0xff]
      %v3598 = vld [vmem:[%s10 + $0x120] sm:$0xff]
      %v3599 = vld [vmem:[%s10 + $0x128] sm:$0xff]
      %v3600 = vld [vmem:[%s10 + $0x130] sm:$0xff]
      %v3601 = vld [vmem:[%s10 + $0x138] sm:$0xff]
      %v3602 = vld [vmem:[%s10 + $0x140] sm:$0xff]
      %v3603 = vld [vmem:[%s10 + $0x148] sm:$0xff]
      %v3604 = vld [vmem:[%s10 + $0x150] sm:$0xff]
      %v3605 = vld [vmem:[%s10 + $0x158] sm:$0xff]
      %v3606 = vld [vmem:[%s10 + $0x160] sm:$0xff]
      %v3607 = vld [vmem:[%s10 + $0x168] sm:$0xff]
      %v3608 = vld [vmem:[%s10 + $0x170] sm:$0xff]
      %v3609 = vld [vmem:[%s10 + $0x178] sm:$0xff]
      %v3610 = vld [vmem:[%s10 + $0x180] sm:$0xff]
      %v3611 = vld [vmem:[%s10 + $0x188] sm:$0xff]
      %v3612 = vld [vmem:[%s10 + $0x190] sm:$0xff]
      %v3613 = vld [vmem:[%s10 + $0x198] sm:$0xff]
      %v3614 = vld [vmem:[%s10 + $0x1a0] sm:$0xff]
      %v3615 = vld [vmem:[%s10 + $0x1a8] sm:$0xff]
      %v3616 = vld [vmem:[%s10 + $0x1b0] sm:$0xff]
      %v3617 = vld [vmem:[%s10 + $0x1b8] sm:$0xff]
      %v3618 = vld [vmem:[%s10 + $0x1c0] sm:$0xff]
      %v3619 = vld [vmem:[%s10 + $0x1c8] sm:$0xff]
      %v3620 = vld [vmem:[%s10 + $0x1d0] sm:$0xff]
      %v3621 = vld [vmem:[%s10 + $0x1d8] sm:$0xff]
      %v3622 = vld [vmem:[%s10 + $0x1e0] sm:$0xff]
      %v3623 = vld [vmem:[%s10 + $0x1e8] sm:$0xff]
      %v3624 = vld [vmem:[%s10 + $0x1f0] sm:$0xff]
      %v3625 = vld [vmem:[%s10 + $0x1f8] sm:$0xff]
      %v3626 = vld [vmem:[%s10 + $0x200] sm:$0xff]
      %v3627 = vld [vmem:[%s10 + $0x208] sm:$0xff]
      %v3628 = vld [vmem:[%s10 + $0x210] sm:$0xff]
      %v3629 = vld [vmem:[%s10 + $0x218] sm:$0xff]
      %v3630 = vld [vmem:[%s10 + $0x220] sm:$0xff]
      %v3631 = vld [vmem:[%s10 + $0x228] sm:$0xff]
      %v3632 = vld [vmem:[%s10 + $0x230] sm:$0xff]
      %v3633 = vld [vmem:[%s10 + $0x238] sm:$0xff]
      %v3634 = vld [vmem:[%s10 + $0x240] sm:$0xff]
      %v3635 = vld [vmem:[%s10 + $0x248] sm:$0xff]
      %v3636 = vld [vmem:[%s10 + $0x250] sm:$0xff]
      %v3637 = vld [vmem:[%s10 + $0x258] sm:$0xff]
      %v3638 = vld [vmem:[%s10 + $0x260] sm:$0xff]
      %v3639 = vld [vmem:[%s10 + $0x268] sm:$0xff]
      %v3640 = vld [vmem:[%s10 + $0x270] sm:$0xff]
      %v3641 = vld [vmem:[%s10 + $0x278] sm:$0xff]
      %v3642 = vld [vmem:[%s10 + $0x280] sm:$0xff]
      %v3643 = vld [vmem:[%s10 + $0x288] sm:$0xff]
      %v3644 = vld [vmem:[%s10 + $0x290] sm:$0xff]
      %v3645 = vld [vmem:[%s10 + $0x298] sm:$0xff]
      %v3646 = vld [vmem:[%s10 + $0x2a0] sm:$0xff]
      %v3647 = vld [vmem:[%s10 + $0x2a8] sm:$0xff]
      %v3648 = vld [vmem:[%s10 + $0x2b0] sm:$0xff]
      %v3649 = vld [vmem:[%s10 + $0x2b8] sm:$0xff]
      %v3650 = vld [vmem:[%s10 + $0x2c0] sm:$0xff]
      %v3651 = vld [vmem:[%s10 + $0x2c8] sm:$0xff]
      %v3652 = vld [vmem:[%s10 + $0x2d0] sm:$0xff]
      %v3653 = vld [vmem:[%s10 + $0x2d8] sm:$0xff]
      %v3654 = vld [vmem:[%s10 + $0x2e0] sm:$0xff]
      %v3655 = vld [vmem:[%s10 + $0x2e8] sm:$0xff]
      %v3656 = vld [vmem:[%s10 + $0x2f0] sm:$0xff]
      %v3657 = vld [vmem:[%s10 + $0x2f8] sm:$0xff]
      %v3658 = vld [vmem:[%s10 + $0x300] sm:$0xff]
      %v3659 = vld [vmem:[%s10 + $0x308] sm:$0xff]
      %v3660 = vld [vmem:[%s10 + $0x310] sm:$0xff]
      %v3661 = vld [vmem:[%s10 + $0x318] sm:$0xff]
      %v3662 = vld [vmem:[%s10 + $0x320] sm:$0xff]
      %v3663 = vld [vmem:[%s10 + $0x328] sm:$0xff]
      %v3664 = vld [vmem:[%s10 + $0x330] sm:$0xff]
      %v3665 = vld [vmem:[%s10 + $0x338] sm:$0xff]
      %v3666 = vld [vmem:[%s10 + $0x340] sm:$0xff]
      %v3667 = vld [vmem:[%s10 + $0x348] sm:$0xff]
      %v3668 = vld [vmem:[%s10 + $0x350] sm:$0xff]
      %v3669 = vld [vmem:[%s10 + $0x358] sm:$0xff]
      %v3670 = vld [vmem:[%s10 + $0x360] sm:$0xff]
      %v3671 = vld [vmem:[%s10 + $0x368] sm:$0xff]
      %v3672 = vld [vmem:[%s10 + $0x370] sm:$0xff]
      %v3673 = vld [vmem:[%s10 + $0x378] sm:$0xff]
      %v3674 = vld [vmem:[%s10 + $0x380] sm:$0xff]
      %v3675 = vld [vmem:[%s10 + $0x388] sm:$0xff]
      %v3676 = vld [vmem:[%s10 + $0x390] sm:$0xff]
      %v3677 = vld [vmem:[%s10 + $0x398] sm:$0xff]
      %v3678 = vld [vmem:[%s10 + $0x3a0] sm:$0xff]
      %v3679 = vld [vmem:[%s10 + $0x3a8] sm:$0xff]
      %v3680 = vld [vmem:[%s10 + $0x3b0] sm:$0xff]
      %v3681 = vld [vmem:[%s10 + $0x3b8] sm:$0xff]
      %v3682 = vld [vmem:[%s10 + $0x3c0] sm:$0xff]
      %v3683 = vld [vmem:[%s10 + $0x3c8] sm:$0xff]
      %v3684 = vld [vmem:[%s10 + $0x3d0] sm:$0xff]
      %v3685 = vld [vmem:[%s10 + $0x3d8] sm:$0xff]
      %v3686 = vld [vmem:[%s10 + $0x3e0] sm:$0xff]
      %v3687 = vld [vmem:[%s10 + $0x3e8] sm:$0xff]
      %v3688 = vld [vmem:[%s10 + $0x3f0] sm:$0xff]
      %v3689 = vld [vmem:[%s10 + $0x3f8] sm:$0xff]
      %v3690 = vld [vmem:[%s11] sm:$0xff]
      %v3692 = vlaneseq
      %v3693 = vshrl.u32 %v3692, 7
      %v3694 = vsub.s32 0, %v3693
      %v3695 = vrot.slane %v3690, %v3694
      %v3696 = vlaneseq
      %v3697 = vshrl.u32 %v3696, 7
      %v3698 = vsub.s32 1, %v3697
      %v3699 = vrot.slane %v3690, %v3698
      %v3700 = vlaneseq
      %v3701 = vshrl.u32 %v3700, 7
      %v3702 = vsub.s32 2, %v3701
      %v3703 = vrot.slane %v3690, %v3702
      %v3704 = vlaneseq
      %v3705 = vshrl.u32 %v3704, 7
      %v3706 = vsub.s32 3, %v3705
      %v3707 = vrot.slane %v3690, %v3706
      %v3708 = vlaneseq
      %v3709 = vshrl.u32 %v3708, 7
      %v3710 = vsub.s32 4, %v3709
      %v3711 = vrot.slane %v3690, %v3710
      %v3712 = vlaneseq
      %v3713 = vshrl.u32 %v3712, 7
      %v3714 = vsub.s32 5, %v3713
      %v3715 = vrot.slane %v3690, %v3714
      %v3716 = vlaneseq
      %v3717 = vshrl.u32 %v3716, 7
      %v3718 = vsub.s32 6, %v3717
      %v3719 = vrot.slane %v3690, %v3718
      %v3720 = vlaneseq
      %v3721 = vshrl.u32 %v3720, 7
      %v3722 = vsub.s32 7, %v3721
      %v3723 = vrot.slane %v3690, %v3722
      %v3860 = vunpack.c.l.b16 %v3562
      %v3861 = vunpack.c.h.b16 %v3562
      %v3862 = vunpack.c.l.b16 %v3563
      %v3863 = vunpack.c.h.b16 %v3563
      %v3864 = vunpack.c.l.b16 %v3564
      %v3865 = vunpack.c.h.b16 %v3564
      %v3866 = vunpack.c.l.b16 %v3565
      %v3867 = vunpack.c.h.b16 %v3565
      %v3868 = vunpack.c.l.b16 %v3566
      %v3869 = vunpack.c.h.b16 %v3566
      %v3870 = vunpack.c.l.b16 %v3567
      %v3871 = vunpack.c.h.b16 %v3567
      %v3872 = vunpack.c.l.b16 %v3568
      %v3873 = vunpack.c.h.b16 %v3568
      %v3874 = vunpack.c.l.b16 %v3569
      %v3875 = vunpack.c.h.b16 %v3569
      %v3876 = vunpack.c.l.b16 %v3570
      %v3877 = vunpack.c.h.b16 %v3570
      %v3878 = vunpack.c.l.b16 %v3571
      %v3879 = vunpack.c.h.b16 %v3571
      %v3880 = vunpack.c.l.b16 %v3572
      %v3881 = vunpack.c.h.b16 %v3572
      %v3882 = vunpack.c.l.b16 %v3573
      %v3883 = vunpack.c.h.b16 %v3573
      %v3884 = vunpack.c.l.b16 %v3574
      %v3885 = vunpack.c.h.b16 %v3574
      %v3886 = vunpack.c.l.b16 %v3575
      %v3887 = vunpack.c.h.b16 %v3575
      %v3888 = vunpack.c.l.b16 %v3576
      %v3889 = vunpack.c.h.b16 %v3576
      %v3890 = vunpack.c.l.b16 %v3577
      %v3891 = vunpack.c.h.b16 %v3577
      %v3892 = vunpack.c.l.b16 %v3578
      %v3893 = vunpack.c.h.b16 %v3578
      %v3894 = vunpack.c.l.b16 %v3579
      %v3895 = vunpack.c.h.b16 %v3579
      %v3896 = vunpack.c.l.b16 %v3580
      %v3897 = vunpack.c.h.b16 %v3580
      %v3898 = vunpack.c.l.b16 %v3581
      %v3899 = vunpack.c.h.b16 %v3581
      %v3900 = vunpack.c.l.b16 %v3582
      %v3901 = vunpack.c.h.b16 %v3582
      %v3902 = vunpack.c.l.b16 %v3583
      %v3903 = vunpack.c.h.b16 %v3583
      %v3904 = vunpack.c.l.b16 %v3584
      %v3905 = vunpack.c.h.b16 %v3584
      %v3906 = vunpack.c.l.b16 %v3585
      %v3907 = vunpack.c.h.b16 %v3585
      %v3908 = vunpack.c.l.b16 %v3586
      %v3909 = vunpack.c.h.b16 %v3586
      %v3910 = vunpack.c.l.b16 %v3587
      %v3911 = vunpack.c.h.b16 %v3587
      %v3912 = vunpack.c.l.b16 %v3588
      %v3913 = vunpack.c.h.b16 %v3588
      %v3914 = vunpack.c.l.b16 %v3589
      %v3915 = vunpack.c.h.b16 %v3589
      %v3916 = vunpack.c.l.b16 %v3590
      %v3917 = vunpack.c.h.b16 %v3590
      %v3918 = vunpack.c.l.b16 %v3591
      %v3919 = vunpack.c.h.b16 %v3591
      %v3920 = vunpack.c.l.b16 %v3592
      %v3921 = vunpack.c.h.b16 %v3592
      %v3922 = vunpack.c.l.b16 %v3593
      %v3923 = vunpack.c.h.b16 %v3593
      %v3924 = vunpack.c.l.b16 %v3594
      %v3925 = vunpack.c.h.b16 %v3594
      %v3926 = vunpack.c.l.b16 %v3595
      %v3927 = vunpack.c.h.b16 %v3595
      %v3928 = vunpack.c.l.b16 %v3596
      %v3929 = vunpack.c.h.b16 %v3596
      %v3930 = vunpack.c.l.b16 %v3597
      %v3931 = vunpack.c.h.b16 %v3597
      %v3932 = vunpack.c.l.b16 %v3598
      %v3933 = vunpack.c.h.b16 %v3598
      %v3934 = vunpack.c.l.b16 %v3599
      %v3935 = vunpack.c.h.b16 %v3599
      %v3936 = vunpack.c.l.b16 %v3600
      %v3937 = vunpack.c.h.b16 %v3600
      %v3938 = vunpack.c.l.b16 %v3601
      %v3939 = vunpack.c.h.b16 %v3601
      %v3940 = vunpack.c.l.b16 %v3602
      %v3941 = vunpack.c.h.b16 %v3602
      %v3942 = vunpack.c.l.b16 %v3603
      %v3943 = vunpack.c.h.b16 %v3603
      %v3944 = vunpack.c.l.b16 %v3604
      %v3945 = vunpack.c.h.b16 %v3604
      %v3946 = vunpack.c.l.b16 %v3605
      %v3947 = vunpack.c.h.b16 %v3605
      %v3948 = vunpack.c.l.b16 %v3606
      %v3949 = vunpack.c.h.b16 %v3606
      %v3950 = vunpack.c.l.b16 %v3607
      %v3951 = vunpack.c.h.b16 %v3607
      %v3952 = vunpack.c.l.b16 %v3608
      %v3953 = vunpack.c.h.b16 %v3608
      %v3954 = vunpack.c.l.b16 %v3609
      %v3955 = vunpack.c.h.b16 %v3609
      %v3956 = vunpack.c.l.b16 %v3610
      %v3957 = vunpack.c.h.b16 %v3610
      %v3958 = vunpack.c.l.b16 %v3611
      %v3959 = vunpack.c.h.b16 %v3611
      %v3960 = vunpack.c.l.b16 %v3612
      %v3961 = vunpack.c.h.b16 %v3612
      %v3962 = vunpack.c.l.b16 %v3613
      %v3963 = vunpack.c.h.b16 %v3613
      %v3964 = vunpack.c.l.b16 %v3614
      %v3965 = vunpack.c.h.b16 %v3614
      %v3966 = vunpack.c.l.b16 %v3615
      %v3967 = vunpack.c.h.b16 %v3615
      %v3968 = vunpack.c.l.b16 %v3616
      %v3969 = vunpack.c.h.b16 %v3616
      %v3970 = vunpack.c.l.b16 %v3617
      %v3971 = vunpack.c.h.b16 %v3617
      %v3972 = vunpack.c.l.b16 %v3618
      %v3973 = vunpack.c.h.b16 %v3618
      %v3974 = vunpack.c.l.b16 %v3619
      %v3975 = vunpack.c.h.b16 %v3619
      %v3976 = vunpack.c.l.b16 %v3620
      %v3977 = vunpack.c.h.b16 %v3620
      %v3978 = vunpack.c.l.b16 %v3621
      %v3979 = vunpack.c.h.b16 %v3621
      %v3980 = vunpack.c.l.b16 %v3622
      %v3981 = vunpack.c.h.b16 %v3622
      %v3982 = vunpack.c.l.b16 %v3623
      %v3983 = vunpack.c.h.b16 %v3623
      %v3984 = vunpack.c.l.b16 %v3624
      %v3985 = vunpack.c.h.b16 %v3624
      %v3986 = vunpack.c.l.b16 %v3625
      %v3987 = vunpack.c.h.b16 %v3625
      %v3988 = vunpack.c.l.b16 %v3626
      %v3989 = vunpack.c.h.b16 %v3626
      %v3990 = vunpack.c.l.b16 %v3627
      %v3991 = vunpack.c.h.b16 %v3627
      %v3992 = vunpack.c.l.b16 %v3628
      %v3993 = vunpack.c.h.b16 %v3628
      %v3994 = vunpack.c.l.b16 %v3629
      %v3995 = vunpack.c.h.b16 %v3629
      %v3996 = vunpack.c.l.b16 %v3630
      %v3997 = vunpack.c.h.b16 %v3630
      %v3998 = vunpack.c.l.b16 %v3631
      %v3999 = vunpack.c.h.b16 %v3631
      %v4000 = vunpack.c.l.b16 %v3632
      %v4001 = vunpack.c.h.b16 %v3632
      %v4002 = vunpack.c.l.b16 %v3633
      %v4003 = vunpack.c.h.b16 %v3633
      %v4004 = vunpack.c.l.b16 %v3634
      %v4005 = vunpack.c.h.b16 %v3634
      %v4006 = vunpack.c.l.b16 %v3635
      %v4007 = vunpack.c.h.b16 %v3635
      %v4008 = vunpack.c.l.b16 %v3636
      %v4009 = vunpack.c.h.b16 %v3636
      %v4010 = vunpack.c.l.b16 %v3637
      %v4011 = vunpack.c.h.b16 %v3637
      %v4012 = vunpack.c.l.b16 %v3638
      %v4013 = vunpack.c.h.b16 %v3638
      %v4014 = vunpack.c.l.b16 %v3639
      %v4015 = vunpack.c.h.b16 %v3639
      %v4016 = vunpack.c.l.b16 %v3640
      %v4017 = vunpack.c.h.b16 %v3640
      %v4018 = vunpack.c.l.b16 %v3641
      %v4019 = vunpack.c.h.b16 %v3641
      %v4020 = vunpack.c.l.b16 %v3642
      %v4021 = vunpack.c.h.b16 %v3642
      %v4022 = vunpack.c.l.b16 %v3643
      %v4023 = vunpack.c.h.b16 %v3643
      %v4024 = vunpack.c.l.b16 %v3644
      %v4025 = vunpack.c.h.b16 %v3644
      %v4026 = vunpack.c.l.b16 %v3645
      %v4027 = vunpack.c.h.b16 %v3645
      %v4028 = vunpack.c.l.b16 %v3646
      %v4029 = vunpack.c.h.b16 %v3646
      %v4030 = vunpack.c.l.b16 %v3647
      %v4031 = vunpack.c.h.b16 %v3647
      %v4032 = vunpack.c.l.b16 %v3648
      %v4033 = vunpack.c.h.b16 %v3648
      %v4034 = vunpack.c.l.b16 %v3649
      %v4035 = vunpack.c.h.b16 %v3649
      %v4036 = vunpack.c.l.b16 %v3650
      %v4037 = vunpack.c.h.b16 %v3650
      %v4038 = vunpack.c.l.b16 %v3651
      %v4039 = vunpack.c.h.b16 %v3651
      %v4040 = vunpack.c.l.b16 %v3652
      %v4041 = vunpack.c.h.b16 %v3652
      %v4042 = vunpack.c.l.b16 %v3653
      %v4043 = vunpack.c.h.b16 %v3653
      %v4044 = vunpack.c.l.b16 %v3654
      %v4045 = vunpack.c.h.b16 %v3654
      %v4046 = vunpack.c.l.b16 %v3655
      %v4047 = vunpack.c.h.b16 %v3655
      %v4048 = vunpack.c.l.b16 %v3656
      %v4049 = vunpack.c.h.b16 %v3656
      %v4050 = vunpack.c.l.b16 %v3657
      %v4051 = vunpack.c.h.b16 %v3657
      %v4052 = vunpack.c.l.b16 %v3658
      %v4053 = vunpack.c.h.b16 %v3658
      %v4054 = vunpack.c.l.b16 %v3659
      %v4055 = vunpack.c.h.b16 %v3659
      %v4056 = vunpack.c.l.b16 %v3660
      %v4057 = vunpack.c.h.b16 %v3660
      %v4058 = vunpack.c.l.b16 %v3661
      %v4059 = vunpack.c.h.b16 %v3661
      %v4060 = vunpack.c.l.b16 %v3662
      %v4061 = vunpack.c.h.b16 %v3662
      %v4062 = vunpack.c.l.b16 %v3663
      %v4063 = vunpack.c.h.b16 %v3663
      %v4064 = vunpack.c.l.b16 %v3664
      %v4065 = vunpack.c.h.b16 %v3664
      %v4066 = vunpack.c.l.b16 %v3665
      %v4067 = vunpack.c.h.b16 %v3665
      %v4068 = vunpack.c.l.b16 %v3666
      %v4069 = vunpack.c.h.b16 %v3666
      %v4070 = vunpack.c.l.b16 %v3667
      %v4071 = vunpack.c.h.b16 %v3667
      %v4072 = vunpack.c.l.b16 %v3668
      %v4073 = vunpack.c.h.b16 %v3668
      %v4074 = vunpack.c.l.b16 %v3669
      %v4075 = vunpack.c.h.b16 %v3669
      %v4076 = vunpack.c.l.b16 %v3670
      %v4077 = vunpack.c.h.b16 %v3670
      %v4078 = vunpack.c.l.b16 %v3671
      %v4079 = vunpack.c.h.b16 %v3671
      %v4080 = vunpack.c.l.b16 %v3672
      %v4081 = vunpack.c.h.b16 %v3672
      %v4082 = vunpack.c.l.b16 %v3673
      %v4083 = vunpack.c.h.b16 %v3673
      %v4084 = vunpack.c.l.b16 %v3674
      %v4085 = vunpack.c.h.b16 %v3674
      %v4086 = vunpack.c.l.b16 %v3675
      %v4087 = vunpack.c.h.b16 %v3675
      %v4088 = vunpack.c.l.b16 %v3676
      %v4089 = vunpack.c.h.b16 %v3676
      %v4090 = vunpack.c.l.b16 %v3677
      %v4091 = vunpack.c.h.b16 %v3677
      %v4092 = vunpack.c.l.b16 %v3678
      %v4093 = vunpack.c.h.b16 %v3678
      %v4094 = vunpack.c.l.b16 %v3679
      %v4095 = vunpack.c.h.b16 %v3679
      %v4096 = vunpack.c.l.b16 %v3680
      %v4097 = vunpack.c.h.b16 %v3680
      %v4098 = vunpack.c.l.b16 %v3681
      %v4099 = vunpack.c.h.b16 %v3681
      %v4100 = vunpack.c.l.b16 %v3682
      %v4101 = vunpack.c.h.b16 %v3682
      %v4102 = vunpack.c.l.b16 %v3683
      %v4103 = vunpack.c.h.b16 %v3683
      %v4104 = vunpack.c.l.b16 %v3684
      %v4105 = vunpack.c.h.b16 %v3684
      %v4106 = vunpack.c.l.b16 %v3685
      %v4107 = vunpack.c.h.b16 %v3685
      %v4108 = vunpack.c.l.b16 %v3686
      %v4109 = vunpack.c.h.b16 %v3686
      %v4110 = vunpack.c.l.b16 %v3687
      %v4111 = vunpack.c.h.b16 %v3687
      %v4112 = vunpack.c.l.b16 %v3688
      %v4113 = vunpack.c.h.b16 %v3688
      %v4114 = vunpack.c.l.b16 %v3689
      %v4115 = vunpack.c.h.b16 %v3689
      %v4116 = vpack.c.b16 %v3868, %v3860
      %v4117 = vpack.c.b16 %v3869, %v3861
      %v4118 = vpack.c.b16 %v3870, %v3862
      %v4119 = vpack.c.b16 %v3871, %v3863
      %v4120 = vpack.c.b16 %v3872, %v3864
      %v4121 = vpack.c.b16 %v3873, %v3865
      %v4122 = vpack.c.b16 %v3874, %v3866
      %v4123 = vpack.c.b16 %v3875, %v3867
      %v4124 = vpack.c.b16 %v3884, %v3876
      %v4125 = vpack.c.b16 %v3885, %v3877
      %v4126 = vpack.c.b16 %v3886, %v3878
      %v4127 = vpack.c.b16 %v3887, %v3879
      %v4128 = vpack.c.b16 %v3888, %v3880
      %v4129 = vpack.c.b16 %v3889, %v3881
      %v4130 = vpack.c.b16 %v3890, %v3882
      %v4131 = vpack.c.b16 %v3891, %v3883
      %v4132 = vpack.c.b16 %v3900, %v3892
      %v4133 = vpack.c.b16 %v3901, %v3893
      %v4134 = vpack.c.b16 %v3902, %v3894
      %v4135 = vpack.c.b16 %v3903, %v3895
      %v4136 = vpack.c.b16 %v3904, %v3896
      %v4137 = vpack.c.b16 %v3905, %v3897
      %v4138 = vpack.c.b16 %v3906, %v3898
      %v4139 = vpack.c.b16 %v3907, %v3899
      %v4140 = vpack.c.b16 %v3916, %v3908
      %v4141 = vpack.c.b16 %v3917, %v3909
      %v4142 = vpack.c.b16 %v3918, %v3910
      %v4143 = vpack.c.b16 %v3919, %v3911
      %v4144 = vpack.c.b16 %v3920, %v3912
      %v4145 = vpack.c.b16 %v3921, %v3913
      %v4146 = vpack.c.b16 %v3922, %v3914
      %v4147 = vpack.c.b16 %v3923, %v3915
      %v4148 = vpack.c.b16 %v3932, %v3924
      %v4149 = vpack.c.b16 %v3933, %v3925
      %v4150 = vpack.c.b16 %v3934, %v3926
      %v4151 = vpack.c.b16 %v3935, %v3927
      %v4152 = vpack.c.b16 %v3936, %v3928
      %v4153 = vpack.c.b16 %v3937, %v3929
      %v4154 = vpack.c.b16 %v3938, %v3930
      %v4155 = vpack.c.b16 %v3939, %v3931
      %v4156 = vpack.c.b16 %v3948, %v3940
      %v4157 = vpack.c.b16 %v3949, %v3941
      %v4158 = vpack.c.b16 %v3950, %v3942
      %v4159 = vpack.c.b16 %v3951, %v3943
      %v4160 = vpack.c.b16 %v3952, %v3944
      %v4161 = vpack.c.b16 %v3953, %v3945
      %v4162 = vpack.c.b16 %v3954, %v3946
      %v4163 = vpack.c.b16 %v3955, %v3947
      %v4164 = vpack.c.b16 %v3964, %v3956
      %v4165 = vpack.c.b16 %v3965, %v3957
      %v4166 = vpack.c.b16 %v3966, %v3958
      %v4167 = vpack.c.b16 %v3967, %v3959
      %v4168 = vpack.c.b16 %v3968, %v3960
      %v4169 = vpack.c.b16 %v3969, %v3961
      %v4170 = vpack.c.b16 %v3970, %v3962
      %v4171 = vpack.c.b16 %v3971, %v3963
      %v4172 = vpack.c.b16 %v3980, %v3972
      %v4173 = vpack.c.b16 %v3981, %v3973
      %v4174 = vpack.c.b16 %v3982, %v3974
      %v4175 = vpack.c.b16 %v3983, %v3975
      %v4176 = vpack.c.b16 %v3984, %v3976
      %v4177 = vpack.c.b16 %v3985, %v3977
      %v4178 = vpack.c.b16 %v3986, %v3978
      %v4179 = vpack.c.b16 %v3987, %v3979
      %v4180 = vpack.c.b16 %v3996, %v3988
      %v4181 = vpack.c.b16 %v3997, %v3989
      %v4182 = vpack.c.b16 %v3998, %v3990
      %v4183 = vpack.c.b16 %v3999, %v3991
      %v4184 = vpack.c.b16 %v4000, %v3992
      %v4185 = vpack.c.b16 %v4001, %v3993
      %v4186 = vpack.c.b16 %v4002, %v3994
      %v4187 = vpack.c.b16 %v4003, %v3995
      %v4188 = vpack.c.b16 %v4012, %v4004
      %v4189 = vpack.c.b16 %v4013, %v4005
      %v4190 = vpack.c.b16 %v4014, %v4006
      %v4191 = vpack.c.b16 %v4015, %v4007
      %v4192 = vpack.c.b16 %v4016, %v4008
      %v4193 = vpack.c.b16 %v4017, %v4009
      %v4194 = vpack.c.b16 %v4018, %v4010
      %v4195 = vpack.c.b16 %v4019, %v4011
      %v4196 = vpack.c.b16 %v4028, %v4020
      %v4197 = vpack.c.b16 %v4029, %v4021
      %v4198 = vpack.c.b16 %v4030, %v4022
      %v4199 = vpack.c.b16 %v4031, %v4023
      %v4200 = vpack.c.b16 %v4032, %v4024
      %v4201 = vpack.c.b16 %v4033, %v4025
      %v4202 = vpack.c.b16 %v4034, %v4026
      %v4203 = vpack.c.b16 %v4035, %v4027
      %v4204 = vpack.c.b16 %v4044, %v4036
      %v4205 = vpack.c.b16 %v4045, %v4037
      %v4206 = vpack.c.b16 %v4046, %v4038
      %v4207 = vpack.c.b16 %v4047, %v4039
      %v4208 = vpack.c.b16 %v4048, %v4040
      %v4209 = vpack.c.b16 %v4049, %v4041
      %v4210 = vpack.c.b16 %v4050, %v4042
      %v4211 = vpack.c.b16 %v4051, %v4043
      %v4212 = vpack.c.b16 %v4060, %v4052
      %v4213 = vpack.c.b16 %v4061, %v4053
      %v4214 = vpack.c.b16 %v4062, %v4054
      %v4215 = vpack.c.b16 %v4063, %v4055
      %v4216 = vpack.c.b16 %v4064, %v4056
      %v4217 = vpack.c.b16 %v4065, %v4057
      %v4218 = vpack.c.b16 %v4066, %v4058
      %v4219 = vpack.c.b16 %v4067, %v4059
      %v4220 = vpack.c.b16 %v4076, %v4068
      %v4221 = vpack.c.b16 %v4077, %v4069
      %v4222 = vpack.c.b16 %v4078, %v4070
      %v4223 = vpack.c.b16 %v4079, %v4071
      %v4224 = vpack.c.b16 %v4080, %v4072
      %v4225 = vpack.c.b16 %v4081, %v4073
      %v4226 = vpack.c.b16 %v4082, %v4074
      %v4227 = vpack.c.b16 %v4083, %v4075
      %v4228 = vpack.c.b16 %v4092, %v4084
      %v4229 = vpack.c.b16 %v4093, %v4085
      %v4230 = vpack.c.b16 %v4094, %v4086
      %v4231 = vpack.c.b16 %v4095, %v4087
      %v4232 = vpack.c.b16 %v4096, %v4088
      %v4233 = vpack.c.b16 %v4097, %v4089
      %v4234 = vpack.c.b16 %v4098, %v4090
      %v4235 = vpack.c.b16 %v4099, %v4091
      %v4236 = vpack.c.b16 %v4108, %v4100
      %v4237 = vpack.c.b16 %v4109, %v4101
      %v4238 = vpack.c.b16 %v4110, %v4102
      %v4239 = vpack.c.b16 %v4111, %v4103
      %v4240 = vpack.c.b16 %v4112, %v4104
      %v4241 = vpack.c.b16 %v4113, %v4105
      %v4242 = vpack.c.b16 %v4114, %v4106
      %v4243 = vpack.c.b16 %v4115, %v4107
      %4372 = vmatprep.subr.bf16.mxu0 %v4173
      %4373 = vmatpush1.bf16.msra.mxu0 %v4172
      %4374 = vmatprep.subr.bf16.mxu0 %v4165
      %4375 = vmatpush1.bf16.msra.mxu0 %v4164
      %4376 = vmatprep.subr.bf16.mxu0 %v4157
      %4377 = vmatpush1.bf16.msra.mxu0 %v4156
      %4378 = vmatprep.subr.bf16.mxu0 %v4149
      %4379 = vmatpush1.bf16.msra.mxu0 %v4148
      %4380 = vmatprep.subr.bf16.mxu0 %v4141
      %4381 = vmatpush1.bf16.msra.mxu0 %v4140
      %4382 = vmatprep.subr.bf16.mxu0 %v4133
      %4383 = vmatpush1.bf16.msra.mxu0 %v4132
      %4384 = vmatprep.subr.bf16.mxu0 %v4125
      %4385 = vmatpush1.bf16.msra.mxu0 %v4124
      %4386 = vmatprep.subr.bf16.mxu0 %v4117
      %4387 = vmatpush1.bf16.msra.mxu0 %v4116
      %4388 = vmatprep.subr.bf16.mxu0 %v4237
      %4389 = vmatpush2.bf16.msra.mxu0 %v4236
      %4390 = vmatprep.subr.bf16.mxu0 %v4229
      %4391 = vmatpush2.bf16.msra.mxu0 %v4228
      %4392 = vmatprep.subr.bf16.mxu0 %v4221
      %4393 = vmatpush2.bf16.msra.mxu0 %v4220
      %4394 = vmatprep.subr.bf16.mxu0 %v4213
      %4395 = vmatpush2.bf16.msra.mxu0 %v4212
      %4396 = vmatprep.subr.bf16.mxu0 %v4205
      %4397 = vmatpush2.bf16.msra.mxu0 %v4204
      %4398 = vmatprep.subr.bf16.mxu0 %v4197
      %4399 = vmatpush2.bf16.msra.mxu0 %v4196
      %4400 = vmatprep.subr.bf16.mxu0 %v4189
      %4401 = vmatpush2.bf16.msra.mxu0 %v4188
      %4402 = vmatprep.subr.bf16.mxu0 %v4181
      %4403 = vmatpush2.bf16.msra.mxu0 %v4180
      %4404 = vmatprep.mubr.bf16.mxu0 %v3547
      %4405 = vmatmul.mubr.bf16.gmra.mxu0 %v3546
      %v4406 = vpop.f32.mrf.mxu0
      %v4407 = vadd.f32 %v3695, %v4406
      %v4408 = vpop.f32.mrf.mxu0
      %v4409 = vadd.f32 %v3699, %v4408
      %v4410 = vpop.f32.mrf.mxu0
      %v4411 = vadd.f32 %v3695, %v4410
      %v4412 = vpop.f32.mrf.mxu0
      %v4413 = vadd.f32 %v3699, %v4412
      %4414 = vmatprep.mubr.bf16.mxu0 %v3549
      %4415 = vmatmul.mubr.bf16.gmra.mxu0 %v3548
      %v4416 = vpop.f32.mrf.mxu0
      %v4417 = vadd.f32 %v3695, %v4416
      %v4418 = vpop.f32.mrf.mxu0
      %v4419 = vadd.f32 %v3699, %v4418
      %v4420 = vpop.f32.mrf.mxu0
      %v4421 = vadd.f32 %v3695, %v4420
      %v4422 = vpop.f32.mrf.mxu0
      %v4423 = vadd.f32 %v3699, %v4422
      %4424 = vmatprep.mubr.bf16.mxu0 %v3551
      %4425 = vmatmul.mubr.bf16.gmra.mxu0 %v3550
      %v4426 = vpop.f32.mrf.mxu0
      %v4427 = vadd.f32 %v3695, %v4426
      %v4428 = vpop.f32.mrf.mxu0
      %v4429 = vadd.f32 %v3699, %v4428
      %v4430 = vpop.f32.mrf.mxu0
      %v4431 = vadd.f32 %v3695, %v4430
      %v4432 = vpop.f32.mrf.mxu0
      %v4433 = vadd.f32 %v3699, %v4432
      %4434 = vmatprep.mubr.bf16.mxu0 %v3553
      %4435 = vmatmul.mubr.bf16.gmra.mxu0 %v3552
      %v4436 = vpop.f32.mrf.mxu0
      %v4437 = vadd.f32 %v3695, %v4436
      %v4438 = vpop.f32.mrf.mxu0
      %v4439 = vadd.f32 %v3699, %v4438
      %v4440 = vpop.f32.mrf.mxu0
      %v4441 = vadd.f32 %v3695, %v4440
      %v4442 = vpop.f32.mrf.mxu0
      %v4443 = vadd.f32 %v3699, %v4442
      %4444 = vmatprep.mubr.bf16.mxu0 %v3555
      %4445 = vmatmul.mubr.bf16.gmra.mxu0 %v3554
      %v4446 = vpop.f32.mrf.mxu0
      %v4447 = vadd.f32 %v3695, %v4446
      %v4448 = vpop.f32.mrf.mxu0
      %v4449 = vadd.f32 %v3699, %v4448
      %v4450 = vpop.f32.mrf.mxu0
      %v4451 = vadd.f32 %v3695, %v4450
      %v4452 = vpop.f32.mrf.mxu0
      %v4453 = vadd.f32 %v3699, %v4452
      %4454 = vmatprep.mubr.bf16.mxu0 %v3557
      %4455 = vmatmul.mubr.bf16.gmra.mxu0 %v3556
      %v4456 = vpop.f32.mrf.mxu0
      %v4457 = vadd.f32 %v3695, %v4456
      %v4458 = vpop.f32.mrf.mxu0
      %v4459 = vadd.f32 %v3699, %v4458
      %v4460 = vpop.f32.mrf.mxu0
      %v4461 = vadd.f32 %v3695, %v4460
      %v4462 = vpop.f32.mrf.mxu0
      %v4463 = vadd.f32 %v3699, %v4462
      %4464 = vmatprep.mubr.bf16.mxu0 %v3559
      %4465 = vmatmul.mubr.bf16.gmra.mxu0 %v3558
      %v4466 = vpop.f32.mrf.mxu0
      %v4467 = vadd.f32 %v3695, %v4466
      %v4468 = vpop.f32.mrf.mxu0
      %v4469 = vadd.f32 %v3699, %v4468
      %v4470 = vpop.f32.mrf.mxu0
      %v4471 = vadd.f32 %v3695, %v4470
      %v4472 = vpop.f32.mrf.mxu0
      %v4473 = vadd.f32 %v3699, %v4472
      %4474 = vmatprep.mubr.bf16.mxu0 %v3561
      %4475 = vmatmul.mubr.bf16.gmra.mxu0 %v3560
      %v4476 = vpop.f32.mrf.mxu0
      %v4477 = vadd.f32 %v3695, %v4476
      %v4478 = vpop.f32.mrf.mxu0
      %v4479 = vadd.f32 %v3699, %v4478
      %v4480 = vpop.f32.mrf.mxu0
      %v4481 = vadd.f32 %v3695, %v4480
      %v4482 = vpop.f32.mrf.mxu0
      %v4483 = vadd.f32 %v3699, %v4482
      %4484 = vdwg.mxu0
      %4485 = vmatprep.subr.bf16.mxu0 %v4175
      %4486 = vmatpush1.bf16.msra.mxu0 %v4174
      %4487 = vmatprep.subr.bf16.mxu0 %v4167
      %4488 = vmatpush1.bf16.msra.mxu0 %v4166
      %4489 = vmatprep.subr.bf16.mxu0 %v4159
      %4490 = vmatpush1.bf16.msra.mxu0 %v4158
      %4491 = vmatprep.subr.bf16.mxu0 %v4151
      %4492 = vmatpush1.bf16.msra.mxu0 %v4150
      %4493 = vmatprep.subr.bf16.mxu0 %v4143
      %4494 = vmatpush1.bf16.msra.mxu0 %v4142
      %4495 = vmatprep.subr.bf16.mxu0 %v4135
      %4496 = vmatpush1.bf16.msra.mxu0 %v4134
      %4497 = vmatprep.subr.bf16.mxu0 %v4127
      %4498 = vmatpush1.bf16.msra.mxu0 %v4126
      %4499 = vmatprep.subr.bf16.mxu0 %v4119
      %4500 = vmatpush1.bf16.msra.mxu0 %v4118
      %4501 = vmatprep.subr.bf16.mxu0 %v4239
      %4502 = vmatpush2.bf16.msra.mxu0 %v4238
      %4503 = vmatprep.subr.bf16.mxu0 %v4231
      %4504 = vmatpush2.bf16.msra.mxu0 %v4230
      %4505 = vmatprep.subr.bf16.mxu0 %v4223
      %4506 = vmatpush2.bf16.msra.mxu0 %v4222
      %4507 = vmatprep.subr.bf16.mxu0 %v4215
      %4508 = vmatpush2.bf16.msra.mxu0 %v4214
      %4509 = vmatprep.subr.bf16.mxu0 %v4207
      %4510 = vmatpush2.bf16.msra.mxu0 %v4206
      %4511 = vmatprep.subr.bf16.mxu0 %v4199
      %4512 = vmatpush2.bf16.msra.mxu0 %v4198
      %4513 = vmatprep.subr.bf16.mxu0 %v4191
      %4514 = vmatpush2.bf16.msra.mxu0 %v4190
      %4515 = vmatprep.subr.bf16.mxu0 %v4183
      %4516 = vmatpush2.bf16.msra.mxu0 %v4182
      %4517 = vmatprep.mubr.bf16.mxu0 %v3547
      %4518 = vmatmul.mubr.bf16.gmra.mxu0 %v3546
      %v4519 = vpop.f32.mrf.mxu0
      %v4520 = vadd.f32 %v3703, %v4519
      %v4521 = vpop.f32.mrf.mxu0
      %v4522 = vadd.f32 %v3707, %v4521
      %v4523 = vpop.f32.mrf.mxu0
      %v4524 = vadd.f32 %v3703, %v4523
      %v4525 = vpop.f32.mrf.mxu0
      %v4526 = vadd.f32 %v3707, %v4525
      %4527 = vmatprep.mubr.bf16.mxu0 %v3549
      %4528 = vmatmul.mubr.bf16.gmra.mxu0 %v3548
      %v4529 = vpop.f32.mrf.mxu0
      %v4530 = vadd.f32 %v3703, %v4529
      %v4531 = vpop.f32.mrf.mxu0
      %v4532 = vadd.f32 %v3707, %v4531
      %v4533 = vpop.f32.mrf.mxu0
      %v4534 = vadd.f32 %v3703, %v4533
      %v4535 = vpop.f32.mrf.mxu0
      %v4536 = vadd.f32 %v3707, %v4535
      %4537 = vmatprep.mubr.bf16.mxu0 %v3551
      %4538 = vmatmul.mubr.bf16.gmra.mxu0 %v3550
      %v4539 = vpop.f32.mrf.mxu0
      %v4540 = vadd.f32 %v3703, %v4539
      %v4541 = vpop.f32.mrf.mxu0
      %v4542 = vadd.f32 %v3707, %v4541
      %v4543 = vpop.f32.mrf.mxu0
      %v4544 = vadd.f32 %v3703, %v4543
      %v4545 = vpop.f32.mrf.mxu0
      %v4546 = vadd.f32 %v3707, %v4545
      %4547 = vmatprep.mubr.bf16.mxu0 %v3553
      %4548 = vmatmul.mubr.bf16.gmra.mxu0 %v3552
      %v4549 = vpop.f32.mrf.mxu0
      %v4550 = vadd.f32 %v3703, %v4549
      %v4551 = vpop.f32.mrf.mxu0
      %v4552 = vadd.f32 %v3707, %v4551
      %v4553 = vpop.f32.mrf.mxu0
      %v4554 = vadd.f32 %v3703, %v4553
      %v4555 = vpop.f32.mrf.mxu0
      %v4556 = vadd.f32 %v3707, %v4555
      %4557 = vmatprep.mubr.bf16.mxu0 %v3555
      %4558 = vmatmul.mubr.bf16.gmra.mxu0 %v3554
      %v4559 = vpop.f32.mrf.mxu0
      %v4560 = vadd.f32 %v3703, %v4559
      %v4561 = vpop.f32.mrf.mxu0
      %v4562 = vadd.f32 %v3707, %v4561
      %v4563 = vpop.f32.mrf.mxu0
      %v4564 = vadd.f32 %v3703, %v4563
      %v4565 = vpop.f32.mrf.mxu0
      %v4566 = vadd.f32 %v3707, %v4565
      %4567 = vmatprep.mubr.bf16.mxu0 %v3557
      %4568 = vmatmul.mubr.bf16.gmra.mxu0 %v3556
      %v4569 = vpop.f32.mrf.mxu0
      %v4570 = vadd.f32 %v3703, %v4569
      %v4571 = vpop.f32.mrf.mxu0
      %v4572 = vadd.f32 %v3707, %v4571
      %v4573 = vpop.f32.mrf.mxu0
      %v4574 = vadd.f32 %v3703, %v4573
      %v4575 = vpop.f32.mrf.mxu0
      %v4576 = vadd.f32 %v3707, %v4575
      %4577 = vmatprep.mubr.bf16.mxu0 %v3559
      %4578 = vmatmul.mubr.bf16.gmra.mxu0 %v3558
      %v4579 = vpop.f32.mrf.mxu0
      %v4580 = vadd.f32 %v3703, %v4579
      %v4581 = vpop.f32.mrf.mxu0
      %v4582 = vadd.f32 %v3707, %v4581
      %v4583 = vpop.f32.mrf.mxu0
      %v4584 = vadd.f32 %v3703, %v4583
      %v4585 = vpop.f32.mrf.mxu0
      %v4586 = vadd.f32 %v3707, %v4585
      %4587 = vmatprep.mubr.bf16.mxu0 %v3561
      %4588 = vmatmul.mubr.bf16.gmra.mxu0 %v3560
      %v4589 = vpop.f32.mrf.mxu0
      %v4590 = vadd.f32 %v3703, %v4589
      %v4591 = vpop.f32.mrf.mxu0
      %v4592 = vadd.f32 %v3707, %v4591
      %v4593 = vpop.f32.mrf.mxu0
      %v4594 = vadd.f32 %v3703, %v4593
      %v4595 = vpop.f32.mrf.mxu0
      %v4596 = vadd.f32 %v3707, %v4595
      %4597 = vdwg.mxu0
      %4598 = vmatprep.subr.bf16.mxu0 %v4177
      %4599 = vmatpush1.bf16.msra.mxu0 %v4176
      %4600 = vmatprep.subr.bf16.mxu0 %v4169
      %4601 = vmatpush1.bf16.msra.mxu0 %v4168
      %4602 = vmatprep.subr.bf16.mxu0 %v4161
      %4603 = vmatpush1.bf16.msra.mxu0 %v4160
      %4604 = vmatprep.subr.bf16.mxu0 %v4153
      %4605 = vmatpush1.bf16.msra.mxu0 %v4152
      %4606 = vmatprep.subr.bf16.mxu0 %v4145
      %4607 = vmatpush1.bf16.msra.mxu0 %v4144
      %4608 = vmatprep.subr.bf16.mxu0 %v4137
      %4609 = vmatpush1.bf16.msra.mxu0 %v4136
      %4610 = vmatprep.subr.bf16.mxu0 %v4129
      %4611 = vmatpush1.bf16.msra.mxu0 %v4128
      %4612 = vmatprep.subr.bf16.mxu0 %v4121
      %4613 = vmatpush1.bf16.msra.mxu0 %v4120
      %4614 = vmatprep.subr.bf16.mxu0 %v4241
      %4615 = vmatpush2.bf16.msra.mxu0 %v4240
      %4616 = vmatprep.subr.bf16.mxu0 %v4233
      %4617 = vmatpush2.bf16.msra.mxu0 %v4232
      %4618 = vmatprep.subr.bf16.mxu0 %v4225
      %4619 = vmatpush2.bf16.msra.mxu0 %v4224
      %4620 = vmatprep.subr.bf16.mxu0 %v4217
      %4621 = vmatpush2.bf16.msra.mxu0 %v4216
      %4622 = vmatprep.subr.bf16.mxu0 %v4209
      %4623 = vmatpush2.bf16.msra.mxu0 %v4208
      %4624 = vmatprep.subr.bf16.mxu0 %v4201
      %4625 = vmatpush2.bf16.msra.mxu0 %v4200
      %4626 = vmatprep.subr.bf16.mxu0 %v4193
      %4627 = vmatpush2.bf16.msra.mxu0 %v4192
      %4628 = vmatprep.subr.bf16.mxu0 %v4185
      %4629 = vmatpush2.bf16.msra.mxu0 %v4184
      %4630 = vmatprep.mubr.bf16.mxu0 %v3547
      %4631 = vmatmul.mubr.bf16.gmra.mxu0 %v3546
      %v4632 = vpop.f32.mrf.mxu0
      %v4633 = vadd.f32 %v3711, %v4632
      %v4634 = vpop.f32.mrf.mxu0
      %v4635 = vadd.f32 %v3715, %v4634
      %v4636 = vpop.f32.mrf.mxu0
      %v4637 = vadd.f32 %v3711, %v4636
      %v4638 = vpop.f32.mrf.mxu0
      %v4639 = vadd.f32 %v3715, %v4638
      %4640 = vmatprep.mubr.bf16.mxu0 %v3549
      %4641 = vmatmul.mubr.bf16.gmra.mxu0 %v3548
      %v4642 = vpop.f32.mrf.mxu0
      %v4643 = vadd.f32 %v3711, %v4642
      %v4644 = vpop.f32.mrf.mxu0
      %v4645 = vadd.f32 %v3715, %v4644
      %v4646 = vpop.f32.mrf.mxu0
      %v4647 = vadd.f32 %v3711, %v4646
      %v4648 = vpop.f32.mrf.mxu0
      %v4649 = vadd.f32 %v3715, %v4648
      %4650 = vmatprep.mubr.bf16.mxu0 %v3551
      %4651 = vmatmul.mubr.bf16.gmra.mxu0 %v3550
      %v4652 = vpop.f32.mrf.mxu0
      %v4653 = vadd.f32 %v3711, %v4652
      %v4654 = vpop.f32.mrf.mxu0
      %v4655 = vadd.f32 %v3715, %v4654
      %v4656 = vpop.f32.mrf.mxu0
      %v4657 = vadd.f32 %v3711, %v4656
      %v4658 = vpop.f32.mrf.mxu0
      %v4659 = vadd.f32 %v3715, %v4658
      %4660 = vmatprep.mubr.bf16.mxu0 %v3553
      %4661 = vmatmul.mubr.bf16.gmra.mxu0 %v3552
      %v4662 = vpop.f32.mrf.mxu0
      %v4663 = vadd.f32 %v3711, %v4662
      %v4664 = vpop.f32.mrf.mxu0
      %v4665 = vadd.f32 %v3715, %v4664
      %v4666 = vpop.f32.mrf.mxu0
      %v4667 = vadd.f32 %v3711, %v4666
      %v4668 = vpop.f32.mrf.mxu0
      %v4669 = vadd.f32 %v3715, %v4668
      %4670 = vmatprep.mubr.bf16.mxu0 %v3555
      %4671 = vmatmul.mubr.bf16.gmra.mxu0 %v3554
      %v4672 = vpop.f32.mrf.mxu0
      %v4673 = vadd.f32 %v3711, %v4672
      %v4674 = vpop.f32.mrf.mxu0
      %v4675 = vadd.f32 %v3715, %v4674
      %v4676 = vpop.f32.mrf.mxu0
      %v4677 = vadd.f32 %v3711, %v4676
      %v4678 = vpop.f32.mrf.mxu0
      %v4679 = vadd.f32 %v3715, %v4678
      %4680 = vmatprep.mubr.bf16.mxu0 %v3557
      %4681 = vmatmul.mubr.bf16.gmra.mxu0 %v3556
      %v4682 = vpop.f32.mrf.mxu0
      %v4683 = vadd.f32 %v3711, %v4682
      %v4684 = vpop.f32.mrf.mxu0
      %v4685 = vadd.f32 %v3715, %v4684
      %v4686 = vpop.f32.mrf.mxu0
      %v4687 = vadd.f32 %v3711, %v4686
      %v4688 = vpop.f32.mrf.mxu0
      %v4689 = vadd.f32 %v3715, %v4688
      %4690 = vmatprep.mubr.bf16.mxu0 %v3559
      %4691 = vmatmul.mubr.bf16.gmra.mxu0 %v3558
      %v4692 = vpop.f32.mrf.mxu0
      %v4693 = vadd.f32 %v3711, %v4692
      %v4694 = vpop.f32.mrf.mxu0
      %v4695 = vadd.f32 %v3715, %v4694
      %v4696 = vpop.f32.mrf.mxu0
      %v4697 = vadd.f32 %v3711, %v4696
      %v4698 = vpop.f32.mrf.mxu0
      %v4699 = vadd.f32 %v3715, %v4698
      %4700 = vmatprep.mubr.bf16.mxu0 %v3561
      %4701 = vmatmul.mubr.bf16.gmra.mxu0 %v3560
      %v4702 = vpop.f32.mrf.mxu0
      %v4703 = vadd.f32 %v3711, %v4702
      %v4704 = vpop.f32.mrf.mxu0
      %v4705 = vadd.f32 %v3715, %v4704
      %v4706 = vpop.f32.mrf.mxu0
      %v4707 = vadd.f32 %v3711, %v4706
      %v4708 = vpop.f32.mrf.mxu0
      %v4709 = vadd.f32 %v3715, %v4708
      %4710 = vdwg.mxu0
      %4711 = vmatprep.subr.bf16.mxu0 %v4179
      %4712 = vmatpush1.bf16.msra.mxu0 %v4178
      %4713 = vmatprep.subr.bf16.mxu0 %v4171
      %4714 = vmatpush1.bf16.msra.mxu0 %v4170
      %4715 = vmatprep.subr.bf16.mxu0 %v4163
      %4716 = vmatpush1.bf16.msra.mxu0 %v4162
      %4717 = vmatprep.subr.bf16.mxu0 %v4155
      %4718 = vmatpush1.bf16.msra.mxu0 %v4154
      %4719 = vmatprep.subr.bf16.mxu0 %v4147
      %4720 = vmatpush1.bf16.msra.mxu0 %v4146
      %4721 = vmatprep.subr.bf16.mxu0 %v4139
      %4722 = vmatpush1.bf16.msra.mxu0 %v4138
      %4723 = vmatprep.subr.bf16.mxu0 %v4131
      %4724 = vmatpush1.bf16.msra.mxu0 %v4130
      %4725 = vmatprep.subr.bf16.mxu0 %v4123
      %4726 = vmatpush1.bf16.msra.mxu0 %v4122
      %4727 = vmatprep.subr.bf16.mxu0 %v4243
      %4728 = vmatpush2.bf16.msra.mxu0 %v4242
      %4729 = vmatprep.subr.bf16.mxu0 %v4235
      %4730 = vmatpush2.bf16.msra.mxu0 %v4234
      %4731 = vmatprep.subr.bf16.mxu0 %v4227
      %4732 = vmatpush2.bf16.msra.mxu0 %v4226
      %4733 = vmatprep.subr.bf16.mxu0 %v4219
      %4734 = vmatpush2.bf16.msra.mxu0 %v4218
      %4735 = vmatprep.subr.bf16.mxu0 %v4211
      %4736 = vmatpush2.bf16.msra.mxu0 %v4210
      %4737 = vmatprep.subr.bf16.mxu0 %v4203
      %4738 = vmatpush2.bf16.msra.mxu0 %v4202
      %4739 = vmatprep.subr.bf16.mxu0 %v4195
      %4740 = vmatpush2.bf16.msra.mxu0 %v4194
      %4741 = vmatprep.subr.bf16.mxu0 %v4187
      %4742 = vmatpush2.bf16.msra.mxu0 %v4186
      %4743 = vmatprep.mubr.bf16.mxu0 %v3547
      %4744 = vmatmul.mubr.bf16.gmra.mxu0 %v3546
      %v4745 = vpop.f32.mrf.mxu0
      %v4746 = vadd.f32 %v3719, %v4745
      %v4747 = vpop.f32.mrf.mxu0
      %v4748 = vadd.f32 %v3723, %v4747
      %v4749 = vpop.f32.mrf.mxu0
      %v4750 = vadd.f32 %v3719, %v4749
      %v4751 = vpop.f32.mrf.mxu0
      %v4752 = vadd.f32 %v3723, %v4751
      %4753 = vmatprep.mubr.bf16.mxu0 %v3549
      %4754 = vmatmul.mubr.bf16.gmra.mxu0 %v3548
      %v4755 = vpop.f32.mrf.mxu0
      %v4756 = vadd.f32 %v3719, %v4755
      %v4757 = vpop.f32.mrf.mxu0
      %v4758 = vadd.f32 %v3723, %v4757
      %v4759 = vpop.f32.mrf.mxu0
      %v4760 = vadd.f32 %v3719, %v4759
      %v4761 = vpop.f32.mrf.mxu0
      %v4762 = vadd.f32 %v3723, %v4761
      %4763 = vmatprep.mubr.bf16.mxu0 %v3551
      %4764 = vmatmul.mubr.bf16.gmra.mxu0 %v3550
      %v4765 = vpop.f32.mrf.mxu0
      %v4766 = vadd.f32 %v3719, %v4765
      %v4767 = vpop.f32.mrf.mxu0
      %v4768 = vadd.f32 %v3723, %v4767
      %v4769 = vpop.f32.mrf.mxu0
      %v4770 = vadd.f32 %v3719, %v4769
      %v4771 = vpop.f32.mrf.mxu0
      %v4772 = vadd.f32 %v3723, %v4771
      %4773 = vmatprep.mubr.bf16.mxu0 %v3553
      %4774 = vmatmul.mubr.bf16.gmra.mxu0 %v3552
      %v4775 = vpop.f32.mrf.mxu0
      %v4776 = vadd.f32 %v3719, %v4775
      %v4777 = vpop.f32.mrf.mxu0
      %v4778 = vadd.f32 %v3723, %v4777
      %v4779 = vpop.f32.mrf.mxu0
      %v4780 = vadd.f32 %v3719, %v4779
      %v4781 = vpop.f32.mrf.mxu0
      %v4782 = vadd.f32 %v3723, %v4781
      %4783 = vmatprep.mubr.bf16.mxu0 %v3555
      %4784 = vmatmul.mubr.bf16.gmra.mxu0 %v3554
      %v4785 = vpop.f32.mrf.mxu0
      %v4786 = vadd.f32 %v3719, %v4785
      %v4787 = vpop.f32.mrf.mxu0
      %v4788 = vadd.f32 %v3723, %v4787
      %v4789 = vpop.f32.mrf.mxu0
      %v4790 = vadd.f32 %v3719, %v4789
      %v4791 = vpop.f32.mrf.mxu0
      %v4792 = vadd.f32 %v3723, %v4791
      %4793 = vmatprep.mubr.bf16.mxu0 %v3557
      %4794 = vmatmul.mubr.bf16.gmra.mxu0 %v3556
      %v4795 = vpop.f32.mrf.mxu0
      %v4796 = vadd.f32 %v3719, %v4795
      %v4797 = vpop.f32.mrf.mxu0
      %v4798 = vadd.f32 %v3723, %v4797
      %v4799 = vpop.f32.mrf.mxu0
      %v4800 = vadd.f32 %v3719, %v4799
      %v4801 = vpop.f32.mrf.mxu0
      %v4802 = vadd.f32 %v3723, %v4801
      %4803 = vmatprep.mubr.bf16.mxu0 %v3559
      %4804 = vmatmul.mubr.bf16.gmra.mxu0 %v3558
      %v4805 = vpop.f32.mrf.mxu0
      %v4806 = vadd.f32 %v3719, %v4805
      %v4807 = vpop.f32.mrf.mxu0
      %v4808 = vadd.f32 %v3723, %v4807
      %v4809 = vpop.f32.mrf.mxu0
      %v4810 = vadd.f32 %v3719, %v4809
      %v4811 = vpop.f32.mrf.mxu0
      %v4812 = vadd.f32 %v3723, %v4811
      %4813 = vmatprep.mubr.bf16.mxu0 %v3561
      %4814 = vmatmul.mubr.bf16.gmra.mxu0 %v3560
      %v4815 = vpop.f32.mrf.mxu0
      %v4816 = vadd.f32 %v3719, %v4815
      %v4817 = vpop.f32.mrf.mxu0
      %v4818 = vadd.f32 %v3723, %v4817
      %v4819 = vpop.f32.mrf.mxu0
      %v4820 = vadd.f32 %v3719, %v4819
      %v4821 = vpop.f32.mrf.mxu0
      %v4822 = vadd.f32 %v3723, %v4821
      %4823 = vdwg.mxu0
      %v4824 = vmul.f32 %v4407, %v4407
      %v4825 = vmul.f32 %v4409, %v4409
      %v4826 = vmul.f32 %v4520, %v4520
      %v4827 = vmul.f32 %v4522, %v4522
      %v4828 = vmul.f32 %v4633, %v4633
      %v4829 = vmul.f32 %v4635, %v4635
      %v4830 = vmul.f32 %v4746, %v4746
      %v4831 = vmul.f32 %v4748, %v4748
      %v4832 = vmul.f32 %v4411, %v4411
      %v4833 = vmul.f32 %v4413, %v4413
      %v4834 = vmul.f32 %v4524, %v4524
      %v4835 = vmul.f32 %v4526, %v4526
      %v4836 = vmul.f32 %v4637, %v4637
      %v4837 = vmul.f32 %v4639, %v4639
      %v4838 = vmul.f32 %v4750, %v4750
      %v4839 = vmul.f32 %v4752, %v4752
      %v4840 = vmul.f32 %v4417, %v4417
      %v4841 = vmul.f32 %v4419, %v4419
      %v4842 = vmul.f32 %v4530, %v4530
      %v4843 = vmul.f32 %v4532, %v4532
      %v4844 = vmul.f32 %v4643, %v4643
      %v4845 = vmul.f32 %v4645, %v4645
      %v4846 = vmul.f32 %v4756, %v4756
      %v4847 = vmul.f32 %v4758, %v4758
      %v4848 = vmul.f32 %v4421, %v4421
      %v4849 = vmul.f32 %v4423, %v4423
      %v4850 = vmul.f32 %v4534, %v4534
      %v4851 = vmul.f32 %v4536, %v4536
      %v4852 = vmul.f32 %v4647, %v4647
      %v4853 = vmul.f32 %v4649, %v4649
      %v4854 = vmul.f32 %v4760, %v4760
      %v4855 = vmul.f32 %v4762, %v4762
      %v4856 = vmul.f32 %v4427, %v4427
      %v4857 = vmul.f32 %v4429, %v4429
      %v4858 = vmul.f32 %v4540, %v4540
      %v4859 = vmul.f32 %v4542, %v4542
      %v4860 = vmul.f32 %v4653, %v4653
      %v4861 = vmul.f32 %v4655, %v4655
      %v4862 = vmul.f32 %v4766, %v4766
      %v4863 = vmul.f32 %v4768, %v4768
      %v4864 = vmul.f32 %v4431, %v4431
      %v4865 = vmul.f32 %v4433, %v4433
      %v4866 = vmul.f32 %v4544, %v4544
      %v4867 = vmul.f32 %v4546, %v4546
      %v4868 = vmul.f32 %v4657, %v4657
      %v4869 = vmul.f32 %v4659, %v4659
      %v4870 = vmul.f32 %v4770, %v4770
      %v4871 = vmul.f32 %v4772, %v4772
      %v4872 = vmul.f32 %v4437, %v4437
      %v4873 = vmul.f32 %v4439, %v4439
      %v4874 = vmul.f32 %v4550, %v4550
      %v4875 = vmul.f32 %v4552, %v4552
      %v4876 = vmul.f32 %v4663, %v4663
      %v4877 = vmul.f32 %v4665, %v4665
      %v4878 = vmul.f32 %v4776, %v4776
      %v4879 = vmul.f32 %v4778, %v4778
      %v4880 = vmul.f32 %v4441, %v4441
      %v4881 = vmul.f32 %v4443, %v4443
      %v4882 = vmul.f32 %v4554, %v4554
      %v4883 = vmul.f32 %v4556, %v4556
      %v4884 = vmul.f32 %v4667, %v4667
      %v4885 = vmul.f32 %v4669, %v4669
      %v4886 = vmul.f32 %v4780, %v4780
      %v4887 = vmul.f32 %v4782, %v4782
      %v4888 = vmul.f32 %v4447, %v4447
      %v4889 = vmul.f32 %v4449, %v4449
      %v4890 = vmul.f32 %v4560, %v4560
      %v4891 = vmul.f32 %v4562, %v4562
      %v4892 = vmul.f32 %v4673, %v4673
      %v4893 = vmul.f32 %v4675, %v4675
      %v4894 = vmul.f32 %v4786, %v4786
      %v4895 = vmul.f32 %v4788, %v4788
      %v4896 = vmul.f32 %v4451, %v4451
      %v4897 = vmul.f32 %v4453, %v4453
      %v4898 = vmul.f32 %v4564, %v4564
      %v4899 = vmul.f32 %v4566, %v4566
      %v4900 = vmul.f32 %v4677, %v4677
      %v4901 = vmul.f32 %v4679, %v4679
      %v4902 = vmul.f32 %v4790, %v4790
      %v4903 = vmul.f32 %v4792, %v4792
      %v4904 = vmul.f32 %v4457, %v4457
      %v4905 = vmul.f32 %v4459, %v4459
      %v4906 = vmul.f32 %v4570, %v4570
      %v4907 = vmul.f32 %v4572, %v4572
      %v4908 = vmul.f32 %v4683, %v4683
      %v4909 = vmul.f32 %v4685, %v4685
      %v4910 = vmul.f32 %v4796, %v4796
      %v4911 = vmul.f32 %v4798, %v4798
      %v4912 = vmul.f32 %v4461, %v4461
      %v4913 = vmul.f32 %v4463, %v4463
      %v4914 = vmul.f32 %v4574, %v4574
      %v4915 = vmul.f32 %v4576, %v4576
      %v4916 = vmul.f32 %v4687, %v4687
      %v4917 = vmul.f32 %v4689, %v4689
      %v4918 = vmul.f32 %v4800, %v4800
      %v4919 = vmul.f32 %v4802, %v4802
      %v4920 = vmul.f32 %v4467, %v4467
      %v4921 = vmul.f32 %v4469, %v4469
      %v4922 = vmul.f32 %v4580, %v4580
      %v4923 = vmul.f32 %v4582, %v4582
      %v4924 = vmul.f32 %v4693, %v4693
      %v4925 = vmul.f32 %v4695, %v4695
      %v4926 = vmul.f32 %v4806, %v4806
      %v4927 = vmul.f32 %v4808, %v4808
      %v4928 = vmul.f32 %v4471, %v4471
      %v4929 = vmul.f32 %v4473, %v4473
      %v4930 = vmul.f32 %v4584, %v4584
      %v4931 = vmul.f32 %v4586, %v4586
      %v4932 = vmul.f32 %v4697, %v4697
      %v4933 = vmul.f32 %v4699, %v4699
      %v4934 = vmul.f32 %v4810, %v4810
      %v4935 = vmul.f32 %v4812, %v4812
      %v4936 = vmul.f32 %v4477, %v4477
      %v4937 = vmul.f32 %v4479, %v4479
      %v4938 = vmul.f32 %v4590, %v4590
      %v4939 = vmul.f32 %v4592, %v4592
      %v4940 = vmul.f32 %v4703, %v4703
      %v4941 = vmul.f32 %v4705, %v4705
      %v4942 = vmul.f32 %v4816, %v4816
      %v4943 = vmul.f32 %v4818, %v4818
      %v4944 = vmul.f32 %v4481, %v4481
      %v4945 = vmul.f32 %v4483, %v4483
      %v4946 = vmul.f32 %v4594, %v4594
      %v4947 = vmul.f32 %v4596, %v4596
      %v4948 = vmul.f32 %v4707, %v4707
      %v4949 = vmul.f32 %v4709, %v4709
      %v4950 = vmul.f32 %v4820, %v4820
      %v4951 = vmul.f32 %v4822, %v4822
      %v4952 = vmul.f32 %v4407, %v4824
      %v4953 = vmul.f32 %v4409, %v4825
      %v4954 = vmul.f32 %v4520, %v4826
      %v4955 = vmul.f32 %v4522, %v4827
      %v4956 = vmul.f32 %v4633, %v4828
      %v4957 = vmul.f32 %v4635, %v4829
      %v4958 = vmul.f32 %v4746, %v4830
      %v4959 = vmul.f32 %v4748, %v4831
      %v4960 = vmul.f32 %v4411, %v4832
      %v4961 = vmul.f32 %v4413, %v4833
      %v4962 = vmul.f32 %v4524, %v4834
      %v4963 = vmul.f32 %v4526, %v4835
      %v4964 = vmul.f32 %v4637, %v4836
      %v4965 = vmul.f32 %v4639, %v4837
      %v4966 = vmul.f32 %v4750, %v4838
      %v4967 = vmul.f32 %v4752, %v4839
      %v4968 = vmul.f32 %v4417, %v4840
      %v4969 = vmul.f32 %v4419, %v4841
      %v4970 = vmul.f32 %v4530, %v4842
      %v4971 = vmul.f32 %v4532, %v4843
      %v4972 = vmul.f32 %v4643, %v4844
      %v4973 = vmul.f32 %v4645, %v4845
      %v4974 = vmul.f32 %v4756, %v4846
      %v4975 = vmul.f32 %v4758, %v4847
      %v4976 = vmul.f32 %v4421, %v4848
      %v4977 = vmul.f32 %v4423, %v4849
      %v4978 = vmul.f32 %v4534, %v4850
      %v4979 = vmul.f32 %v4536, %v4851
      %v4980 = vmul.f32 %v4647, %v4852
      %v4981 = vmul.f32 %v4649, %v4853
      %v4982 = vmul.f32 %v4760, %v4854
      %v4983 = vmul.f32 %v4762, %v4855
      %v4984 = vmul.f32 %v4427, %v4856
      %v4985 = vmul.f32 %v4429, %v4857
      %v4986 = vmul.f32 %v4540, %v4858
      %v4987 = vmul.f32 %v4542, %v4859
      %v4988 = vmul.f32 %v4653, %v4860
      %v4989 = vmul.f32 %v4655, %v4861
      %v4990 = vmul.f32 %v4766, %v4862
      %v4991 = vmul.f32 %v4768, %v4863
      %v4992 = vmul.f32 %v4431, %v4864
      %v4993 = vmul.f32 %v4433, %v4865
      %v4994 = vmul.f32 %v4544, %v4866
      %v4995 = vmul.f32 %v4546, %v4867
      %v4996 = vmul.f32 %v4657, %v4868
      %v4997 = vmul.f32 %v4659, %v4869
      %v4998 = vmul.f32 %v4770, %v4870
      %v4999 = vmul.f32 %v4772, %v4871
      %v5000 = vmul.f32 %v4437, %v4872
      %v5001 = vmul.f32 %v4439, %v4873
      %v5002 = vmul.f32 %v4550, %v4874
      %v5003 = vmul.f32 %v4552, %v4875
      %v5004 = vmul.f32 %v4663, %v4876
      %v5005 = vmul.f32 %v4665, %v4877
      %v5006 = vmul.f32 %v4776, %v4878
      %v5007 = vmul.f32 %v4778, %v4879
      %v5008 = vmul.f32 %v4441, %v4880
      %v5009 = vmul.f32 %v4443, %v4881
      %v5010 = vmul.f32 %v4554, %v4882
      %v5011 = vmul.f32 %v4556, %v4883
      %v5012 = vmul.f32 %v4667, %v4884
      %v5013 = vmul.f32 %v4669, %v4885
      %v5014 = vmul.f32 %v4780, %v4886
      %v5015 = vmul.f32 %v4782, %v4887
      %v5016 = vmul.f32 %v4447, %v4888
      %v5017 = vmul.f32 %v4449, %v4889
      %v5018 = vmul.f32 %v4560, %v4890
      %v5019 = vmul.f32 %v4562, %v4891
      %v5020 = vmul.f32 %v4673, %v4892
      %v5021 = vmul.f32 %v4675, %v4893
      %v5022 = vmul.f32 %v4786, %v4894
      %v5023 = vmul.f32 %v4788, %v4895
      %v5024 = vmul.f32 %v4451, %v4896
      %v5025 = vmul.f32 %v4453, %v4897
      %v5026 = vmul.f32 %v4564, %v4898
      %v5027 = vmul.f32 %v4566, %v4899
      %v5028 = vmul.f32 %v4677, %v4900
      %v5029 = vmul.f32 %v4679, %v4901
      %v5030 = vmul.f32 %v4790, %v4902
      %v5031 = vmul.f32 %v4792, %v4903
      %v5032 = vmul.f32 %v4457, %v4904
      %v5033 = vmul.f32 %v4459, %v4905
      %v5034 = vmul.f32 %v4570, %v4906
      %v5035 = vmul.f32 %v4572, %v4907
      %v5036 = vmul.f32 %v4683, %v4908
      %v5037 = vmul.f32 %v4685, %v4909
      %v5038 = vmul.f32 %v4796, %v4910
      %v5039 = vmul.f32 %v4798, %v4911
      %v5040 = vmul.f32 %v4461, %v4912
      %v5041 = vmul.f32 %v4463, %v4913
      %v5042 = vmul.f32 %v4574, %v4914
      %v5043 = vmul.f32 %v4576, %v4915
      %v5044 = vmul.f32 %v4687, %v4916
      %v5045 = vmul.f32 %v4689, %v4917
      %v5046 = vmul.f32 %v4800, %v4918
      %v5047 = vmul.f32 %v4802, %v4919
      %v5048 = vmul.f32 %v4467, %v4920
      %v5049 = vmul.f32 %v4469, %v4921
      %v5050 = vmul.f32 %v4580, %v4922
      %v5051 = vmul.f32 %v4582, %v4923
      %v5052 = vmul.f32 %v4693, %v4924
      %v5053 = vmul.f32 %v4695, %v4925
      %v5054 = vmul.f32 %v4806, %v4926
      %v5055 = vmul.f32 %v4808, %v4927
      %v5056 = vmul.f32 %v4471, %v4928
      %v5057 = vmul.f32 %v4473, %v4929
      %v5058 = vmul.f32 %v4584, %v4930
      %v5059 = vmul.f32 %v4586, %v4931
      %v5060 = vmul.f32 %v4697, %v4932
      %v5061 = vmul.f32 %v4699, %v4933
      %v5062 = vmul.f32 %v4810, %v4934
      %v5063 = vmul.f32 %v4812, %v4935
      %v5064 = vmul.f32 %v4477, %v4936
      %v5065 = vmul.f32 %v4479, %v4937
      %v5066 = vmul.f32 %v4590, %v4938
      %v5067 = vmul.f32 %v4592, %v4939
      %v5068 = vmul.f32 %v4703, %v4940
      %v5069 = vmul.f32 %v4705, %v4941
      %v5070 = vmul.f32 %v4816, %v4942
      %v5071 = vmul.f32 %v4818, %v4943
      %v5072 = vmul.f32 %v4481, %v4944
      %v5073 = vmul.f32 %v4483, %v4945
      %v5074 = vmul.f32 %v4594, %v4946
      %v5075 = vmul.f32 %v4596, %v4947
      %v5076 = vmul.f32 %v4707, %v4948
      %v5077 = vmul.f32 %v4709, %v4949
      %v5078 = vmul.f32 %v4820, %v4950
      %v5079 = vmul.f32 %v4822, %v4951
      %v5080 = vmul.f32 %v4952, 0.044715
      %v5081 = vmul.f32 %v4953, 0.044715
      %v5082 = vmul.f32 %v4954, 0.044715
      %v5083 = vmul.f32 %v4955, 0.044715
      %v5084 = vmul.f32 %v4956, 0.044715
      %v5085 = vmul.f32 %v4957, 0.044715
      %v5086 = vmul.f32 %v4958, 0.044715
      %v5087 = vmul.f32 %v4959, 0.044715
      %v5088 = vmul.f32 %v4960, 0.044715
      %v5089 = vmul.f32 %v4961, 0.044715
      %v5090 = vmul.f32 %v4962, 0.044715
      %v5091 = vmul.f32 %v4963, 0.044715
      %v5092 = vmul.f32 %v4964, 0.044715
      %v5093 = vmul.f32 %v4965, 0.044715
      %v5094 = vmul.f32 %v4966, 0.044715
      %v5095 = vmul.f32 %v4967, 0.044715
      %v5096 = vmul.f32 %v4968, 0.044715
      %v5097 = vmul.f32 %v4969, 0.044715
      %v5098 = vmul.f32 %v4970, 0.044715
      %v5099 = vmul.f32 %v4971, 0.044715
      %v5100 = vmul.f32 %v4972, 0.044715
      %v5101 = vmul.f32 %v4973, 0.044715
      %v5102 = vmul.f32 %v4974, 0.044715
      %v5103 = vmul.f32 %v4975, 0.044715
      %v5104 = vmul.f32 %v4976, 0.044715
      %v5105 = vmul.f32 %v4977, 0.044715
      %v5106 = vmul.f32 %v4978, 0.044715
      %v5107 = vmul.f32 %v4979, 0.044715
      %v5108 = vmul.f32 %v4980, 0.044715
      %v5109 = vmul.f32 %v4981, 0.044715
      %v5110 = vmul.f32 %v4982, 0.044715
      %v5111 = vmul.f32 %v4983, 0.044715
      %v5112 = vmul.f32 %v4984, 0.044715
      %v5113 = vmul.f32 %v4985, 0.044715
      %v5114 = vmul.f32 %v4986, 0.044715
      %v5115 = vmul.f32 %v4987, 0.044715
      %v5116 = vmul.f32 %v4988, 0.044715
      %v5117 = vmul.f32 %v4989, 0.044715
      %v5118 = vmul.f32 %v4990, 0.044715
      %v5119 = vmul.f32 %v4991, 0.044715
      %v5120 = vmul.f32 %v4992, 0.044715
      %v5121 = vmul.f32 %v4993, 0.044715
      %v5122 = vmul.f32 %v4994, 0.044715
      %v5123 = vmul.f32 %v4995, 0.044715
      %v5124 = vmul.f32 %v4996, 0.044715
      %v5125 = vmul.f32 %v4997, 0.044715
      %v5126 = vmul.f32 %v4998, 0.044715
      %v5127 = vmul.f32 %v4999, 0.044715
      %v5128 = vmul.f32 %v5000, 0.044715
      %v5129 = vmul.f32 %v5001, 0.044715
      %v5130 = vmul.f32 %v5002, 0.044715
      %v5131 = vmul.f32 %v5003, 0.044715
      %v5132 = vmul.f32 %v5004, 0.044715
      %v5133 = vmul.f32 %v5005, 0.044715
      %v5134 = vmul.f32 %v5006, 0.044715
      %v5135 = vmul.f32 %v5007, 0.044715
      %v5136 = vmul.f32 %v5008, 0.044715
      %v5137 = vmul.f32 %v5009, 0.044715
      %v5138 = vmul.f32 %v5010, 0.044715
      %v5139 = vmul.f32 %v5011, 0.044715
      %v5140 = vmul.f32 %v5012, 0.044715
      %v5141 = vmul.f32 %v5013, 0.044715
      %v5142 = vmul.f32 %v5014, 0.044715
      %v5143 = vmul.f32 %v5015, 0.044715
      %v5144 = vmul.f32 %v5016, 0.044715
      %v5145 = vmul.f32 %v5017, 0.044715
      %v5146 = vmul.f32 %v5018, 0.044715
      %v5147 = vmul.f32 %v5019, 0.044715
      %v5148 = vmul.f32 %v5020, 0.044715
      %v5149 = vmul.f32 %v5021, 0.044715
      %v5150 = vmul.f32 %v5022, 0.044715
      %v5151 = vmul.f32 %v5023, 0.044715
      %v5152 = vmul.f32 %v5024, 0.044715
      %v5153 = vmul.f32 %v5025, 0.044715
      %v5154 = vmul.f32 %v5026, 0.044715
      %v5155 = vmul.f32 %v5027, 0.044715
      %v5156 = vmul.f32 %v5028, 0.044715
      %v5157 = vmul.f32 %v5029, 0.044715
      %v5158 = vmul.f32 %v5030, 0.044715
      %v5159 = vmul.f32 %v5031, 0.044715
      %v5160 = vmul.f32 %v5032, 0.044715
      %v5161 = vmul.f32 %v5033, 0.044715
      %v5162 = vmul.f32 %v5034, 0.044715
      %v5163 = vmul.f32 %v5035, 0.044715
      %v5164 = vmul.f32 %v5036, 0.044715
      %v5165 = vmul.f32 %v5037, 0.044715
      %v5166 = vmul.f32 %v5038, 0.044715
      %v5167 = vmul.f32 %v5039, 0.044715
      %v5168 = vmul.f32 %v5040, 0.044715
      %v5169 = vmul.f32 %v5041, 0.044715
      %v5170 = vmul.f32 %v5042, 0.044715
      %v5171 = vmul.f32 %v5043, 0.044715
      %v5172 = vmul.f32 %v5044, 0.044715
      %v5173 = vmul.f32 %v5045, 0.044715
      %v5174 = vmul.f32 %v5046, 0.044715
      %v5175 = vmul.f32 %v5047, 0.044715
      %v5176 = vmul.f32 %v5048, 0.044715
      %v5177 = vmul.f32 %v5049, 0.044715
      %v5178 = vmul.f32 %v5050, 0.044715
      %v5179 = vmul.f32 %v5051, 0.044715
      %v5180 = vmul.f32 %v5052, 0.044715
      %v5181 = vmul.f32 %v5053, 0.044715
      %v5182 = vmul.f32 %v5054, 0.044715
      %v5183 = vmul.f32 %v5055, 0.044715
      %v5184 = vmul.f32 %v5056, 0.044715
      %v5185 = vmul.f32 %v5057, 0.044715
      %v5186 = vmul.f32 %v5058, 0.044715
      %v5187 = vmul.f32 %v5059, 0.044715
      %v5188 = vmul.f32 %v5060, 0.044715
      %v5189 = vmul.f32 %v5061, 0.044715
      %v5190 = vmul.f32 %v5062, 0.044715
      %v5191 = vmul.f32 %v5063, 0.044715
      %v5192 = vmul.f32 %v5064, 0.044715
      %v5193 = vmul.f32 %v5065, 0.044715
      %v5194 = vmul.f32 %v5066, 0.044715
      %v5195 = vmul.f32 %v5067, 0.044715
      %v5196 = vmul.f32 %v5068, 0.044715
      %v5197 = vmul.f32 %v5069, 0.044715
      %v5198 = vmul.f32 %v5070, 0.044715
      %v5199 = vmul.f32 %v5071, 0.044715
      %v5200 = vmul.f32 %v5072, 0.044715
      %v5201 = vmul.f32 %v5073, 0.044715
      %v5202 = vmul.f32 %v5074, 0.044715
      %v5203 = vmul.f32 %v5075, 0.044715
      %v5204 = vmul.f32 %v5076, 0.044715
      %v5205 = vmul.f32 %v5077, 0.044715
      %v5206 = vmul.f32 %v5078, 0.044715
      %v5207 = vmul.f32 %v5079, 0.044715
      %v5208 = vadd.f32 %v4407, %v5080
      %v5209 = vadd.f32 %v4409, %v5081
      %v5210 = vadd.f32 %v4520, %v5082
      %v5211 = vadd.f32 %v4522, %v5083
      %v5212 = vadd.f32 %v4633, %v5084
      %v5213 = vadd.f32 %v4635, %v5085
      %v5214 = vadd.f32 %v4746, %v5086
      %v5215 = vadd.f32 %v4748, %v5087
      %v5216 = vadd.f32 %v4411, %v5088
      %v5217 = vadd.f32 %v4413, %v5089
      %v5218 = vadd.f32 %v4524, %v5090
      %v5219 = vadd.f32 %v4526, %v5091
      %v5220 = vadd.f32 %v4637, %v5092
      %v5221 = vadd.f32 %v4639, %v5093
      %v5222 = vadd.f32 %v4750, %v5094
      %v5223 = vadd.f32 %v4752, %v5095
      %v5224 = vadd.f32 %v4417, %v5096
      %v5225 = vadd.f32 %v4419, %v5097
      %v5226 = vadd.f32 %v4530, %v5098
      %v5227 = vadd.f32 %v4532, %v5099
      %v5228 = vadd.f32 %v4643, %v5100
      %v5229 = vadd.f32 %v4645, %v5101
      %v5230 = vadd.f32 %v4756, %v5102
      %v5231 = vadd.f32 %v4758, %v5103
      %v5232 = vadd.f32 %v4421, %v5104
      %v5233 = vadd.f32 %v4423, %v5105
      %v5234 = vadd.f32 %v4534, %v5106
      %v5235 = vadd.f32 %v4536, %v5107
      %v5236 = vadd.f32 %v4647, %v5108
      %v5237 = vadd.f32 %v4649, %v5109
      %v5238 = vadd.f32 %v4760, %v5110
      %v5239 = vadd.f32 %v4762, %v5111
      %v5240 = vadd.f32 %v4427, %v5112
      %v5241 = vadd.f32 %v4429, %v5113
      %v5242 = vadd.f32 %v4540, %v5114
      %v5243 = vadd.f32 %v4542, %v5115
      %v5244 = vadd.f32 %v4653, %v5116
      %v5245 = vadd.f32 %v4655, %v5117
      %v5246 = vadd.f32 %v4766, %v5118
      %v5247 = vadd.f32 %v4768, %v5119
      %v5248 = vadd.f32 %v4431, %v5120
      %v5249 = vadd.f32 %v4433, %v5121
      %v5250 = vadd.f32 %v4544, %v5122
      %v5251 = vadd.f32 %v4546, %v5123
      %v5252 = vadd.f32 %v4657, %v5124
      %v5253 = vadd.f32 %v4659, %v5125
      %v5254 = vadd.f32 %v4770, %v5126
      %v5255 = vadd.f32 %v4772, %v5127
      %v5256 = vadd.f32 %v4437, %v5128
      %v5257 = vadd.f32 %v4439, %v5129
      %v5258 = vadd.f32 %v4550, %v5130
      %v5259 = vadd.f32 %v4552, %v5131
      %v5260 = vadd.f32 %v4663, %v5132
      %v5261 = vadd.f32 %v4665, %v5133
      %v5262 = vadd.f32 %v4776, %v5134
      %v5263 = vadd.f32 %v4778, %v5135
      %v5264 = vadd.f32 %v4441, %v5136
      %v5265 = vadd.f32 %v4443, %v5137
      %v5266 = vadd.f32 %v4554, %v5138
      %v5267 = vadd.f32 %v4556, %v5139
      %v5268 = vadd.f32 %v4667, %v5140
      %v5269 = vadd.f32 %v4669, %v5141
      %v5270 = vadd.f32 %v4780, %v5142
      %v5271 = vadd.f32 %v4782, %v5143
      %v5272 = vadd.f32 %v4447, %v5144
      %v5273 = vadd.f32 %v4449, %v5145
      %v5274 = vadd.f32 %v4560, %v5146
      %v5275 = vadd.f32 %v4562, %v5147
      %v5276 = vadd.f32 %v4673, %v5148
      %v5277 = vadd.f32 %v4675, %v5149
      %v5278 = vadd.f32 %v4786, %v5150
      %v5279 = vadd.f32 %v4788, %v5151
      %v5280 = vadd.f32 %v4451, %v5152
      %v5281 = vadd.f32 %v4453, %v5153
      %v5282 = vadd.f32 %v4564, %v5154
      %v5283 = vadd.f32 %v4566, %v5155
      %v5284 = vadd.f32 %v4677, %v5156
      %v5285 = vadd.f32 %v4679, %v5157
      %v5286 = vadd.f32 %v4790, %v5158
      %v5287 = vadd.f32 %v4792, %v5159
      %v5288 = vadd.f32 %v4457, %v5160
      %v5289 = vadd.f32 %v4459, %v5161
      %v5290 = vadd.f32 %v4570, %v5162
      %v5291 = vadd.f32 %v4572, %v5163
      %v5292 = vadd.f32 %v4683, %v5164
      %v5293 = vadd.f32 %v4685, %v5165
      %v5294 = vadd.f32 %v4796, %v5166
      %v5295 = vadd.f32 %v4798, %v5167
      %v5296 = vadd.f32 %v4461, %v5168
      %v5297 = vadd.f32 %v4463, %v5169
      %v5298 = vadd.f32 %v4574, %v5170
      %v5299 = vadd.f32 %v4576, %v5171
      %v5300 = vadd.f32 %v4687, %v5172
      %v5301 = vadd.f32 %v4689, %v5173
      %v5302 = vadd.f32 %v4800, %v5174
      %v5303 = vadd.f32 %v4802, %v5175
      %v5304 = vadd.f32 %v4467, %v5176
      %v5305 = vadd.f32 %v4469, %v5177
      %v5306 = vadd.f32 %v4580, %v5178
      %v5307 = vadd.f32 %v4582, %v5179
      %v5308 = vadd.f32 %v4693, %v5180
      %v5309 = vadd.f32 %v4695, %v5181
      %v5310 = vadd.f32 %v4806, %v5182
      %v5311 = vadd.f32 %v4808, %v5183
      %v5312 = vadd.f32 %v4471, %v5184
      %v5313 = vadd.f32 %v4473, %v5185
      %v5314 = vadd.f32 %v4584, %v5186
      %v5315 = vadd.f32 %v4586, %v5187
      %v5316 = vadd.f32 %v4697, %v5188
      %v5317 = vadd.f32 %v4699, %v5189
      %v5318 = vadd.f32 %v4810, %v5190
      %v5319 = vadd.f32 %v4812, %v5191
      %v5320 = vadd.f32 %v4477, %v5192
      %v5321 = vadd.f32 %v4479, %v5193
      %v5322 = vadd.f32 %v4590, %v5194
      %v5323 = vadd.f32 %v4592, %v5195
      %v5324 = vadd.f32 %v4703, %v5196
      %v5325 = vadd.f32 %v4705, %v5197
      %v5326 = vadd.f32 %v4816, %v5198
      %v5327 = vadd.f32 %v4818, %v5199
      %v5328 = vadd.f32 %v4481, %v5200
      %v5329 = vadd.f32 %v4483, %v5201
      %v5330 = vadd.f32 %v4594, %v5202
      %v5331 = vadd.f32 %v4596, %v5203
      %v5332 = vadd.f32 %v4707, %v5204
      %v5333 = vadd.f32 %v4709, %v5205
      %v5334 = vadd.f32 %v4820, %v5206
      %v5335 = vadd.f32 %v4822, %v5207
      %v5336 = vmul.f32 %v5208, 0.7978846
      %v5337 = vmul.f32 %v5209, 0.7978846
      %v5338 = vmul.f32 %v5210, 0.7978846
      %v5339 = vmul.f32 %v5211, 0.7978846
      %v5340 = vmul.f32 %v5212, 0.7978846
      %v5341 = vmul.f32 %v5213, 0.7978846
      %v5342 = vmul.f32 %v5214, 0.7978846
      %v5343 = vmul.f32 %v5215, 0.7978846
      %v5344 = vmul.f32 %v5216, 0.7978846
      %v5345 = vmul.f32 %v5217, 0.7978846
      %v5346 = vmul.f32 %v5218, 0.7978846
      %v5347 = vmul.f32 %v5219, 0.7978846
      %v5348 = vmul.f32 %v5220, 0.7978846
      %v5349 = vmul.f32 %v5221, 0.7978846
      %v5350 = vmul.f32 %v5222, 0.7978846
      %v5351 = vmul.f32 %v5223, 0.7978846
      %v5352 = vmul.f32 %v5224, 0.7978846
      %v5353 = vmul.f32 %v5225, 0.7978846
      %v5354 = vmul.f32 %v5226, 0.7978846
      %v5355 = vmul.f32 %v5227, 0.7978846
      %v5356 = vmul.f32 %v5228, 0.7978846
      %v5357 = vmul.f32 %v5229, 0.7978846
      %v5358 = vmul.f32 %v5230, 0.7978846
      %v5359 = vmul.f32 %v5231, 0.7978846
      %v5360 = vmul.f32 %v5232, 0.7978846
      %v5361 = vmul.f32 %v5233, 0.7978846
      %v5362 = vmul.f32 %v5234, 0.7978846
      %v5363 = vmul.f32 %v5235, 0.7978846
      %v5364 = vmul.f32 %v5236, 0.7978846
      %v5365 = vmul.f32 %v5237, 0.7978846
      %v5366 = vmul.f32 %v5238, 0.7978846
      %v5367 = vmul.f32 %v5239, 0.7978846
      %v5368 = vmul.f32 %v5240, 0.7978846
      %v5369 = vmul.f32 %v5241, 0.7978846
      %v5370 = vmul.f32 %v5242, 0.7978846
      %v5371 = vmul.f32 %v5243, 0.7978846
      %v5372 = vmul.f32 %v5244, 0.7978846
      %v5373 = vmul.f32 %v5245, 0.7978846
      %v5374 = vmul.f32 %v5246, 0.7978846
      %v5375 = vmul.f32 %v5247, 0.7978846
      %v5376 = vmul.f32 %v5248, 0.7978846
      %v5377 = vmul.f32 %v5249, 0.7978846
      %v5378 = vmul.f32 %v5250, 0.7978846
      %v5379 = vmul.f32 %v5251, 0.7978846
      %v5380 = vmul.f32 %v5252, 0.7978846
      %v5381 = vmul.f32 %v5253, 0.7978846
      %v5382 = vmul.f32 %v5254, 0.7978846
      %v5383 = vmul.f32 %v5255, 0.7978846
      %v5384 = vmul.f32 %v5256, 0.7978846
      %v5385 = vmul.f32 %v5257, 0.7978846
      %v5386 = vmul.f32 %v5258, 0.7978846
      %v5387 = vmul.f32 %v5259, 0.7978846
      %v5388 = vmul.f32 %v5260, 0.7978846
      %v5389 = vmul.f32 %v5261, 0.7978846
      %v5390 = vmul.f32 %v5262, 0.7978846
      %v5391 = vmul.f32 %v5263, 0.7978846
      %v5392 = vmul.f32 %v5264, 0.7978846
      %v5393 = vmul.f32 %v5265, 0.7978846
      %v5394 = vmul.f32 %v5266, 0.7978846
      %v5395 = vmul.f32 %v5267, 0.7978846
      %v5396 = vmul.f32 %v5268, 0.7978846
      %v5397 = vmul.f32 %v5269, 0.7978846
      %v5398 = vmul.f32 %v5270, 0.7978846
      %v5399 = vmul.f32 %v5271, 0.7978846
      %v5400 = vmul.f32 %v5272, 0.7978846
      %v5401 = vmul.f32 %v5273, 0.7978846
      %v5402 = vmul.f32 %v5274, 0.7978846
      %v5403 = vmul.f32 %v5275, 0.7978846
      %v5404 = vmul.f32 %v5276, 0.7978846
      %v5405 = vmul.f32 %v5277, 0.7978846
      %v5406 = vmul.f32 %v5278, 0.7978846
      %v5407 = vmul.f32 %v5279, 0.7978846
      %v5408 = vmul.f32 %v5280, 0.7978846
      %v5409 = vmul.f32 %v5281, 0.7978846
      %v5410 = vmul.f32 %v5282, 0.7978846
      %v5411 = vmul.f32 %v5283, 0.7978846
      %v5412 = vmul.f32 %v5284, 0.7978846
      %v5413 = vmul.f32 %v5285, 0.7978846
      %v5414 = vmul.f32 %v5286, 0.7978846
      %v5415 = vmul.f32 %v5287, 0.7978846
      %v5416 = vmul.f32 %v5288, 0.7978846
      %v5417 = vmul.f32 %v5289, 0.7978846
      %v5418 = vmul.f32 %v5290, 0.7978846
      %v5419 = vmul.f32 %v5291, 0.7978846
      %v5420 = vmul.f32 %v5292, 0.7978846
      %v5421 = vmul.f32 %v5293, 0.7978846
      %v5422 = vmul.f32 %v5294, 0.7978846
      %v5423 = vmul.f32 %v5295, 0.7978846
      %v5424 = vmul.f32 %v5296, 0.7978846
      %v5425 = vmul.f32 %v5297, 0.7978846
      %v5426 = vmul.f32 %v5298, 0.7978846
      %v5427 = vmul.f32 %v5299, 0.7978846
      %v5428 = vmul.f32 %v5300, 0.7978846
      %v5429 = vmul.f32 %v5301, 0.7978846
      %v5430 = vmul.f32 %v5302, 0.7978846
      %v5431 = vmul.f32 %v5303, 0.7978846
      %v5432 = vmul.f32 %v5304, 0.7978846
      %v5433 = vmul.f32 %v5305, 0.7978846
      %v5434 = vmul.f32 %v5306, 0.7978846
      %v5435 = vmul.f32 %v5307, 0.7978846
      %v5436 = vmul.f32 %v5308, 0.7978846
      %v5437 = vmul.f32 %v5309, 0.7978846
      %v5438 = vmul.f32 %v5310, 0.7978846
      %v5439 = vmul.f32 %v5311, 0.7978846
      %v5440 = vmul.f32 %v5312, 0.7978846
      %v5441 = vmul.f32 %v5313, 0.7978846
      %v5442 = vmul.f32 %v5314, 0.7978846
      %v5443 = vmul.f32 %v5315, 0.7978846
      %v5444 = vmul.f32 %v5316, 0.7978846
      %v5445 = vmul.f32 %v5317, 0.7978846
      %v5446 = vmul.f32 %v5318, 0.7978846
      %v5447 = vmul.f32 %v5319, 0.7978846
      %v5448 = vmul.f32 %v5320, 0.7978846
      %v5449 = vmul.f32 %v5321, 0.7978846
      %v5450 = vmul.f32 %v5322, 0.7978846
      %v5451 = vmul.f32 %v5323, 0.7978846
      %v5452 = vmul.f32 %v5324, 0.7978846
      %v5453 = vmul.f32 %v5325, 0.7978846
      %v5454 = vmul.f32 %v5326, 0.7978846
      %v5455 = vmul.f32 %v5327, 0.7978846
      %v5456 = vmul.f32 %v5328, 0.7978846
      %v5457 = vmul.f32 %v5329, 0.7978846
      %v5458 = vmul.f32 %v5330, 0.7978846
      %v5459 = vmul.f32 %v5331, 0.7978846
      %v5460 = vmul.f32 %v5332, 0.7978846
      %v5461 = vmul.f32 %v5333, 0.7978846
      %v5462 = vmul.f32 %v5334, 0.7978846
      %v5463 = vmul.f32 %v5335, 0.7978846
      %v5464 = vtanh.pop %v5336
      %v5465 = vtanh.pop %v5337
      %v5466 = vtanh.pop %v5338
      %v5467 = vtanh.pop %v5339
      %v5468 = vtanh.pop %v5340
      %v5469 = vtanh.pop %v5341
      %v5470 = vtanh.pop %v5342
      %v5471 = vtanh.pop %v5343
      %v5472 = vtanh.pop %v5344
      %v5473 = vtanh.pop %v5345
      %v5474 = vtanh.pop %v5346
      %v5475 = vtanh.pop %v5347
      %v5476 = vtanh.pop %v5348
      %v5477 = vtanh.pop %v5349
      %v5478 = vtanh.pop %v5350
      %v5479 = vtanh.pop %v5351
      %v5480 = vtanh.pop %v5352
      %v5481 = vtanh.pop %v5353
      %v5482 = vtanh.pop %v5354
      %v5483 = vtanh.pop %v5355
      %v5484 = vtanh.pop %v5356
      %v5485 = vtanh.pop %v5357
      %v5486 = vtanh.pop %v5358
      %v5487 = vtanh.pop %v5359
      %v5488 = vtanh.pop %v5360
      %v5489 = vtanh.pop %v5361
      %v5490 = vtanh.pop %v5362
      %v5491 = vtanh.pop %v5363
      %v5492 = vtanh.pop %v5364
      %v5493 = vtanh.pop %v5365
      %v5494 = vtanh.pop %v5366
      %v5495 = vtanh.pop %v5367
      %v5496 = vtanh.pop %v5368
      %v5497 = vtanh.pop %v5369
      %v5498 = vtanh.pop %v5370
      %v5499 = vtanh.pop %v5371
      %v5500 = vtanh.pop %v5372
      %v5501 = vtanh.pop %v5373
      %v5502 = vtanh.pop %v5374
      %v5503 = vtanh.pop %v5375
      %v5504 = vtanh.pop %v5376
      %v5505 = vtanh.pop %v5377
      %v5506 = vtanh.pop %v5378
      %v5507 = vtanh.pop %v5379
      %v5508 = vtanh.pop %v5380
      %v5509 = vtanh.pop %v5381
      %v5510 = vtanh.pop %v5382
      %v5511 = vtanh.pop %v5383
      %v5512 = vtanh.pop %v5384
      %v5513 = vtanh.pop %v5385
      %v5514 = vtanh.pop %v5386
      %v5515 = vtanh.pop %v5387
      %v5516 = vtanh.pop %v5388
      %v5517 = vtanh.pop %v5389
      %v5518 = vtanh.pop %v5390
      %v5519 = vtanh.pop %v5391
      %v5520 = vtanh.pop %v5392
      %v5521 = vtanh.pop %v5393
      %v5522 = vtanh.pop %v5394
      %v5523 = vtanh.pop %v5395
      %v5524 = vtanh.pop %v5396
      %v5525 = vtanh.pop %v5397
      %v5526 = vtanh.pop %v5398
      %v5527 = vtanh.pop %v5399
      %v5528 = vtanh.pop %v5400
      %v5529 = vtanh.pop %v5401
      %v5530 = vtanh.pop %v5402
      %v5531 = vtanh.pop %v5403
      %v5532 = vtanh.pop %v5404
      %v5533 = vtanh.pop %v5405
      %v5534 = vtanh.pop %v5406
      %v5535 = vtanh.pop %v5407
      %v5536 = vtanh.pop %v5408
      %v5537 = vtanh.pop %v5409
      %v5538 = vtanh.pop %v5410
      %v5539 = vtanh.pop %v5411
      %v5540 = vtanh.pop %v5412
      %v5541 = vtanh.pop %v5413
      %v5542 = vtanh.pop %v5414
      %v5543 = vtanh.pop %v5415
      %v5544 = vtanh.pop %v5416
      %v5545 = vtanh.pop %v5417
      %v5546 = vtanh.pop %v5418
      %v5547 = vtanh.pop %v5419
      %v5548 = vtanh.pop %v5420
      %v5549 = vtanh.pop %v5421
      %v5550 = vtanh.pop %v5422
      %v5551 = vtanh.pop %v5423
      %v5552 = vtanh.pop %v5424
      %v5553 = vtanh.pop %v5425
      %v5554 = vtanh.pop %v5426
      %v5555 = vtanh.pop %v5427
      %v5556 = vtanh.pop %v5428
      %v5557 = vtanh.pop %v5429
      %v5558 = vtanh.pop %v5430
      %v5559 = vtanh.pop %v5431
      %v5560 = vtanh.pop %v5432
      %v5561 = vtanh.pop %v5433
      %v5562 = vtanh.pop %v5434
      %v5563 = vtanh.pop %v5435
      %v5564 = vtanh.pop %v5436
      %v5565 = vtanh.pop %v5437
      %v5566 = vtanh.pop %v5438
      %v5567 = vtanh.pop %v5439
      %v5568 = vtanh.pop %v5440
      %v5569 = vtanh.pop %v5441
      %v5570 = vtanh.pop %v5442
      %v5571 = vtanh.pop %v5443
      %v5572 = vtanh.pop %v5444
      %v5573 = vtanh.pop %v5445
      %v5574 = vtanh.pop %v5446
      %v5575 = vtanh.pop %v5447
      %v5576 = vtanh.pop %v5448
      %v5577 = vtanh.pop %v5449
      %v5578 = vtanh.pop %v5450
      %v5579 = vtanh.pop %v5451
      %v5580 = vtanh.pop %v5452
      %v5581 = vtanh.pop %v5453
      %v5582 = vtanh.pop %v5454
      %v5583 = vtanh.pop %v5455
      %v5584 = vtanh.pop %v5456
      %v5585 = vtanh.pop %v5457
      %v5586 = vtanh.pop %v5458
      %v5587 = vtanh.pop %v5459
      %v5588 = vtanh.pop %v5460
      %v5589 = vtanh.pop %v5461
      %v5590 = vtanh.pop %v5462
      %v5591 = vtanh.pop %v5463
      %v5592 = vadd.f32 %v5464, 1.0
      %v5593 = vadd.f32 %v5465, 1.0
      %v5594 = vadd.f32 %v5466, 1.0
      %v5595 = vadd.f32 %v5467, 1.0
      %v5596 = vadd.f32 %v5468, 1.0
      %v5597 = vadd.f32 %v5469, 1.0
      %v5598 = vadd.f32 %v5470, 1.0
      %v5599 = vadd.f32 %v5471, 1.0
      %v5600 = vadd.f32 %v5472, 1.0
      %v5601 = vadd.f32 %v5473, 1.0
      %v5602 = vadd.f32 %v5474, 1.0
      %v5603 = vadd.f32 %v5475, 1.0
      %v5604 = vadd.f32 %v5476, 1.0
      %v5605 = vadd.f32 %v5477, 1.0
      %v5606 = vadd.f32 %v5478, 1.0
      %v5607 = vadd.f32 %v5479, 1.0
      %v5608 = vadd.f32 %v5480, 1.0
      %v5609 = vadd.f32 %v5481, 1.0
      %v5610 = vadd.f32 %v5482, 1.0
      %v5611 = vadd.f32 %v5483, 1.0
      %v5612 = vadd.f32 %v5484, 1.0
      %v5613 = vadd.f32 %v5485, 1.0
      %v5614 = vadd.f32 %v5486, 1.0
      %v5615 = vadd.f32 %v5487, 1.0
      %v5616 = vadd.f32 %v5488, 1.0
      %v5617 = vadd.f32 %v5489, 1.0
      %v5618 = vadd.f32 %v5490, 1.0
      %v5619 = vadd.f32 %v5491, 1.0
      %v5620 = vadd.f32 %v5492, 1.0
      %v5621 = vadd.f32 %v5493, 1.0
      %v5622 = vadd.f32 %v5494, 1.0
      %v5623 = vadd.f32 %v5495, 1.0
      %v5624 = vadd.f32 %v5496, 1.0
      %v5625 = vadd.f32 %v5497, 1.0
      %v5626 = vadd.f32 %v5498, 1.0
      %v5627 = vadd.f32 %v5499, 1.0
      %v5628 = vadd.f32 %v5500, 1.0
      %v5629 = vadd.f32 %v5501, 1.0
      %v5630 = vadd.f32 %v5502, 1.0
      %v5631 = vadd.f32 %v5503, 1.0
      %v5632 = vadd.f32 %v5504, 1.0
      %v5633 = vadd.f32 %v5505, 1.0
      %v5634 = vadd.f32 %v5506, 1.0
      %v5635 = vadd.f32 %v5507, 1.0
      %v5636 = vadd.f32 %v5508, 1.0
      %v5637 = vadd.f32 %v5509, 1.0
      %v5638 = vadd.f32 %v5510, 1.0
      %v5639 = vadd.f32 %v5511, 1.0
      %v5640 = vadd.f32 %v5512, 1.0
      %v5641 = vadd.f32 %v5513, 1.0
      %v5642 = vadd.f32 %v5514, 1.0
      %v5643 = vadd.f32 %v5515, 1.0
      %v5644 = vadd.f32 %v5516, 1.0
      %v5645 = vadd.f32 %v5517, 1.0
      %v5646 = vadd.f32 %v5518, 1.0
      %v5647 = vadd.f32 %v5519, 1.0
      %v5648 = vadd.f32 %v5520, 1.0
      %v5649 = vadd.f32 %v5521, 1.0
      %v5650 = vadd.f32 %v5522, 1.0
      %v5651 = vadd.f32 %v5523, 1.0
      %v5652 = vadd.f32 %v5524, 1.0
      %v5653 = vadd.f32 %v5525, 1.0
      %v5654 = vadd.f32 %v5526, 1.0
      %v5655 = vadd.f32 %v5527, 1.0
      %v5656 = vadd.f32 %v5528, 1.0
      %v5657 = vadd.f32 %v5529, 1.0
      %v5658 = vadd.f32 %v5530, 1.0
      %v5659 = vadd.f32 %v5531, 1.0
      %v5660 = vadd.f32 %v5532, 1.0
      %v5661 = vadd.f32 %v5533, 1.0
      %v5662 = vadd.f32 %v5534, 1.0
      %v5663 = vadd.f32 %v5535, 1.0
      %v5664 = vadd.f32 %v5536, 1.0
      %v5665 = vadd.f32 %v5537, 1.0
      %v5666 = vadd.f32 %v5538, 1.0
      %v5667 = vadd.f32 %v5539, 1.0
      %v5668 = vadd.f32 %v5540, 1.0
      %v5669 = vadd.f32 %v5541, 1.0
      %v5670 = vadd.f32 %v5542, 1.0
      %v5671 = vadd.f32 %v5543, 1.0
      %v5672 = vadd.f32 %v5544, 1.0
      %v5673 = vadd.f32 %v5545, 1.0
      %v5674 = vadd.f32 %v5546, 1.0
      %v5675 = vadd.f32 %v5547, 1.0
      %v5676 = vadd.f32 %v5548, 1.0
      %v5677 = vadd.f32 %v5549, 1.0
      %v5678 = vadd.f32 %v5550, 1.0
      %v5679 = vadd.f32 %v5551, 1.0
      %v5680 = vadd.f32 %v5552, 1.0
      %v5681 = vadd.f32 %v5553, 1.0
      %v5682 = vadd.f32 %v5554, 1.0
      %v5683 = vadd.f32 %v5555, 1.0
      %v5684 = vadd.f32 %v5556, 1.0
      %v5685 = vadd.f32 %v5557, 1.0
      %v5686 = vadd.f32 %v5558, 1.0
      %v5687 = vadd.f32 %v5559, 1.0
      %v5688 = vadd.f32 %v5560, 1.0
      %v5689 = vadd.f32 %v5561, 1.0
      %v5690 = vadd.f32 %v5562, 1.0
      %v5691 = vadd.f32 %v5563, 1.0
      %v5692 = vadd.f32 %v5564, 1.0
      %v5693 = vadd.f32 %v5565, 1.0
      %v5694 = vadd.f32 %v5566, 1.0
      %v5695 = vadd.f32 %v5567, 1.0
      %v5696 = vadd.f32 %v5568, 1.0
      %v5697 = vadd.f32 %v5569, 1.0
      %v5698 = vadd.f32 %v5570, 1.0
      %v5699 = vadd.f32 %v5571, 1.0
      %v5700 = vadd.f32 %v5572, 1.0
      %v5701 = vadd.f32 %v5573, 1.0
      %v5702 = vadd.f32 %v5574, 1.0
      %v5703 = vadd.f32 %v5575, 1.0
      %v5704 = vadd.f32 %v5576, 1.0
      %v5705 = vadd.f32 %v5577, 1.0
      %v5706 = vadd.f32 %v5578, 1.0
      %v5707 = vadd.f32 %v5579, 1.0
      %v5708 = vadd.f32 %v5580, 1.0
      %v5709 = vadd.f32 %v5581, 1.0
      %v5710 = vadd.f32 %v5582, 1.0
      %v5711 = vadd.f32 %v5583, 1.0
      %v5712 = vadd.f32 %v5584, 1.0
      %v5713 = vadd.f32 %v5585, 1.0
      %v5714 = vadd.f32 %v5586, 1.0
      %v5715 = vadd.f32 %v5587, 1.0
      %v5716 = vadd.f32 %v5588, 1.0
      %v5717 = vadd.f32 %v5589, 1.0
      %v5718 = vadd.f32 %v5590, 1.0
      %v5719 = vadd.f32 %v5591, 1.0
      %v5720 = vmul.f32 %v5592, 0.5
      %v5721 = vmul.f32 %v5593, 0.5
      %v5722 = vmul.f32 %v5594, 0.5
      %v5723 = vmul.f32 %v5595, 0.5
      %v5724 = vmul.f32 %v5596, 0.5
      %v5725 = vmul.f32 %v5597, 0.5
      %v5726 = vmul.f32 %v5598, 0.5
      %v5727 = vmul.f32 %v5599, 0.5
      %v5728 = vmul.f32 %v5600, 0.5
      %v5729 = vmul.f32 %v5601, 0.5
      %v5730 = vmul.f32 %v5602, 0.5
      %v5731 = vmul.f32 %v5603, 0.5
      %v5732 = vmul.f32 %v5604, 0.5
      %v5733 = vmul.f32 %v5605, 0.5
      %v5734 = vmul.f32 %v5606, 0.5
      %v5735 = vmul.f32 %v5607, 0.5
      %v5736 = vmul.f32 %v5608, 0.5
      %v5737 = vmul.f32 %v5609, 0.5
      %v5738 = vmul.f32 %v5610, 0.5
      %v5739 = vmul.f32 %v5611, 0.5
      %v5740 = vmul.f32 %v5612, 0.5
      %v5741 = vmul.f32 %v5613, 0.5
      %v5742 = vmul.f32 %v5614, 0.5
      %v5743 = vmul.f32 %v5615, 0.5
      %v5744 = vmul.f32 %v5616, 0.5
      %v5745 = vmul.f32 %v5617, 0.5
      %v5746 = vmul.f32 %v5618, 0.5
      %v5747 = vmul.f32 %v5619, 0.5
      %v5748 = vmul.f32 %v5620, 0.5
      %v5749 = vmul.f32 %v5621, 0.5
      %v5750 = vmul.f32 %v5622, 0.5
      %v5751 = vmul.f32 %v5623, 0.5
      %v5752 = vmul.f32 %v5624, 0.5
      %v5753 = vmul.f32 %v5625, 0.5
      %v5754 = vmul.f32 %v5626, 0.5
      %v5755 = vmul.f32 %v5627, 0.5
      %v5756 = vmul.f32 %v5628, 0.5
      %v5757 = vmul.f32 %v5629, 0.5
      %v5758 = vmul.f32 %v5630, 0.5
      %v5759 = vmul.f32 %v5631, 0.5
      %v5760 = vmul.f32 %v5632, 0.5
      %v5761 = vmul.f32 %v5633, 0.5
      %v5762 = vmul.f32 %v5634, 0.5
      %v5763 = vmul.f32 %v5635, 0.5
      %v5764 = vmul.f32 %v5636, 0.5
      %v5765 = vmul.f32 %v5637, 0.5
      %v5766 = vmul.f32 %v5638, 0.5
      %v5767 = vmul.f32 %v5639, 0.5
      %v5768 = vmul.f32 %v5640, 0.5
      %v5769 = vmul.f32 %v5641, 0.5
      %v5770 = vmul.f32 %v5642, 0.5
      %v5771 = vmul.f32 %v5643, 0.5
      %v5772 = vmul.f32 %v5644, 0.5
      %v5773 = vmul.f32 %v5645, 0.5
      %v5774 = vmul.f32 %v5646, 0.5
      %v5775 = vmul.f32 %v5647, 0.5
      %v5776 = vmul.f32 %v5648, 0.5
      %v5777 = vmul.f32 %v5649, 0.5
      %v5778 = vmul.f32 %v5650, 0.5
      %v5779 = vmul.f32 %v5651, 0.5
      %v5780 = vmul.f32 %v5652, 0.5
      %v5781 = vmul.f32 %v5653, 0.5
      %v5782 = vmul.f32 %v5654, 0.5
      %v5783 = vmul.f32 %v5655, 0.5
      %v5784 = vmul.f32 %v5656, 0.5
      %v5785 = vmul.f32 %v5657, 0.5
      %v5786 = vmul.f32 %v5658, 0.5
      %v5787 = vmul.f32 %v5659, 0.5
      %v5788 = vmul.f32 %v5660, 0.5
      %v5789 = vmul.f32 %v5661, 0.5
      %v5790 = vmul.f32 %v5662, 0.5
      %v5791 = vmul.f32 %v5663, 0.5
      %v5792 = vmul.f32 %v5664, 0.5
      %v5793 = vmul.f32 %v5665, 0.5
      %v5794 = vmul.f32 %v5666, 0.5
      %v5795 = vmul.f32 %v5667, 0.5
      %v5796 = vmul.f32 %v5668, 0.5
      %v5797 = vmul.f32 %v5669, 0.5
      %v5798 = vmul.f32 %v5670, 0.5
      %v5799 = vmul.f32 %v5671, 0.5
      %v5800 = vmul.f32 %v5672, 0.5
      %v5801 = vmul.f32 %v5673, 0.5
      %v5802 = vmul.f32 %v5674, 0.5
      %v5803 = vmul.f32 %v5675, 0.5
      %v5804 = vmul.f32 %v5676, 0.5
      %v5805 = vmul.f32 %v5677, 0.5
      %v5806 = vmul.f32 %v5678, 0.5
      %v5807 = vmul.f32 %v5679, 0.5
      %v5808 = vmul.f32 %v5680, 0.5
      %v5809 = vmul.f32 %v5681, 0.5
      %v5810 = vmul.f32 %v5682, 0.5
      %v5811 = vmul.f32 %v5683, 0.5
      %v5812 = vmul.f32 %v5684, 0.5
      %v5813 = vmul.f32 %v5685, 0.5
      %v5814 = vmul.f32 %v5686, 0.5
      %v5815 = vmul.f32 %v5687, 0.5
      %v5816 = vmul.f32 %v5688, 0.5
      %v5817 = vmul.f32 %v5689, 0.5
      %v5818 = vmul.f32 %v5690, 0.5
      %v5819 = vmul.f32 %v5691, 0.5
      %v5820 = vmul.f32 %v5692, 0.5
      %v5821 = vmul.f32 %v5693, 0.5
      %v5822 = vmul.f32 %v5694, 0.5
      %v5823 = vmul.f32 %v5695, 0.5
      %v5824 = vmul.f32 %v5696, 0.5
      %v5825 = vmul.f32 %v5697, 0.5
      %v5826 = vmul.f32 %v5698, 0.5
      %v5827 = vmul.f32 %v5699, 0.5
      %v5828 = vmul.f32 %v5700, 0.5
      %v5829 = vmul.f32 %v5701, 0.5
      %v5830 = vmul.f32 %v5702, 0.5
      %v5831 = vmul.f32 %v5703, 0.5
      %v5832 = vmul.f32 %v5704, 0.5
      %v5833 = vmul.f32 %v5705, 0.5
      %v5834 = vmul.f32 %v5706, 0.5
      %v5835 = vmul.f32 %v5707, 0.5
      %v5836 = vmul.f32 %v5708, 0.5
      %v5837 = vmul.f32 %v5709, 0.5
      %v5838 = vmul.f32 %v5710, 0.5
      %v5839 = vmul.f32 %v5711, 0.5
      %v5840 = vmul.f32 %v5712, 0.5
      %v5841 = vmul.f32 %v5713, 0.5
      %v5842 = vmul.f32 %v5714, 0.5
      %v5843 = vmul.f32 %v5715, 0.5
      %v5844 = vmul.f32 %v5716, 0.5
      %v5845 = vmul.f32 %v5717, 0.5
      %v5846 = vmul.f32 %v5718, 0.5
      %v5847 = vmul.f32 %v5719, 0.5
      %v5848 = vmul.f32 %v4407, %v5720
      %v5849 = vmul.f32 %v4409, %v5721
      %v5850 = vmul.f32 %v4520, %v5722
      %v5851 = vmul.f32 %v4522, %v5723
      %v5852 = vmul.f32 %v4633, %v5724
      %v5853 = vmul.f32 %v4635, %v5725
      %v5854 = vmul.f32 %v4746, %v5726
      %v5855 = vmul.f32 %v4748, %v5727
      %v5856 = vmul.f32 %v4411, %v5728
      %v5857 = vmul.f32 %v4413, %v5729
      %v5858 = vmul.f32 %v4524, %v5730
      %v5859 = vmul.f32 %v4526, %v5731
      %v5860 = vmul.f32 %v4637, %v5732
      %v5861 = vmul.f32 %v4639, %v5733
      %v5862 = vmul.f32 %v4750, %v5734
      %v5863 = vmul.f32 %v4752, %v5735
      %v5864 = vmul.f32 %v4417, %v5736
      %v5865 = vmul.f32 %v4419, %v5737
      %v5866 = vmul.f32 %v4530, %v5738
      %v5867 = vmul.f32 %v4532, %v5739
      %v5868 = vmul.f32 %v4643, %v5740
      %v5869 = vmul.f32 %v4645, %v5741
      %v5870 = vmul.f32 %v4756, %v5742
      %v5871 = vmul.f32 %v4758, %v5743
      %v5872 = vmul.f32 %v4421, %v5744
      %v5873 = vmul.f32 %v4423, %v5745
      %v5874 = vmul.f32 %v4534, %v5746
      %v5875 = vmul.f32 %v4536, %v5747
      %v5876 = vmul.f32 %v4647, %v5748
      %v5877 = vmul.f32 %v4649, %v5749
      %v5878 = vmul.f32 %v4760, %v5750
      %v5879 = vmul.f32 %v4762, %v5751
      %v5880 = vmul.f32 %v4427, %v5752
      %v5881 = vmul.f32 %v4429, %v5753
      %v5882 = vmul.f32 %v4540, %v5754
      %v5883 = vmul.f32 %v4542, %v5755
      %v5884 = vmul.f32 %v4653, %v5756
      %v5885 = vmul.f32 %v4655, %v5757
      %v5886 = vmul.f32 %v4766, %v5758
      %v5887 = vmul.f32 %v4768, %v5759
      %v5888 = vmul.f32 %v4431, %v5760
      %v5889 = vmul.f32 %v4433, %v5761
      %v5890 = vmul.f32 %v4544, %v5762
      %v5891 = vmul.f32 %v4546, %v5763
      %v5892 = vmul.f32 %v4657, %v5764
      %v5893 = vmul.f32 %v4659, %v5765
      %v5894 = vmul.f32 %v4770, %v5766
      %v5895 = vmul.f32 %v4772, %v5767
      %v5896 = vmul.f32 %v4437, %v5768
      %v5897 = vmul.f32 %v4439, %v5769
      %v5898 = vmul.f32 %v4550, %v5770
      %v5899 = vmul.f32 %v4552, %v5771
      %v5900 = vmul.f32 %v4663, %v5772
      %v5901 = vmul.f32 %v4665, %v5773
      %v5902 = vmul.f32 %v4776, %v5774
      %v5903 = vmul.f32 %v4778, %v5775
      %v5904 = vmul.f32 %v4441, %v5776
      %v5905 = vmul.f32 %v4443, %v5777
      %v5906 = vmul.f32 %v4554, %v5778
      %v5907 = vmul.f32 %v4556, %v5779
      %v5908 = vmul.f32 %v4667, %v5780
      %v5909 = vmul.f32 %v4669, %v5781
      %v5910 = vmul.f32 %v4780, %v5782
      %v5911 = vmul.f32 %v4782, %v5783
      %v5912 = vmul.f32 %v4447, %v5784
      %v5913 = vmul.f32 %v4449, %v5785
      %v5914 = vmul.f32 %v4560, %v5786
      %v5915 = vmul.f32 %v4562, %v5787
      %v5916 = vmul.f32 %v4673, %v5788
      %v5917 = vmul.f32 %v4675, %v5789
      %v5918 = vmul.f32 %v4786, %v5790
      %v5919 = vmul.f32 %v4788, %v5791
      %v5920 = vmul.f32 %v4451, %v5792
      %v5921 = vmul.f32 %v4453, %v5793
      %v5922 = vmul.f32 %v4564, %v5794
      %v5923 = vmul.f32 %v4566, %v5795
      %v5924 = vmul.f32 %v4677, %v5796
      %v5925 = vmul.f32 %v4679, %v5797
      %v5926 = vmul.f32 %v4790, %v5798
      %v5927 = vmul.f32 %v4792, %v5799
      %v5928 = vmul.f32 %v4457, %v5800
      %v5929 = vmul.f32 %v4459, %v5801
      %v5930 = vmul.f32 %v4570, %v5802
      %v5931 = vmul.f32 %v4572, %v5803
      %v5932 = vmul.f32 %v4683, %v5804
      %v5933 = vmul.f32 %v4685, %v5805
      %v5934 = vmul.f32 %v4796, %v5806
      %v5935 = vmul.f32 %v4798, %v5807
      %v5936 = vmul.f32 %v4461, %v5808
      %v5937 = vmul.f32 %v4463, %v5809
      %v5938 = vmul.f32 %v4574, %v5810
      %v5939 = vmul.f32 %v4576, %v5811
      %v5940 = vmul.f32 %v4687, %v5812
      %v5941 = vmul.f32 %v4689, %v5813
      %v5942 = vmul.f32 %v4800, %v5814
      %v5943 = vmul.f32 %v4802, %v5815
      %v5944 = vmul.f32 %v4467, %v5816
      %v5945 = vmul.f32 %v4469, %v5817
      %v5946 = vmul.f32 %v4580, %v5818
      %v5947 = vmul.f32 %v4582, %v5819
      %v5948 = vmul.f32 %v4693, %v5820
      %v5949 = vmul.f32 %v4695, %v5821
      %v5950 = vmul.f32 %v4806, %v5822
      %v5951 = vmul.f32 %v4808, %v5823
      %v5952 = vmul.f32 %v4471, %v5824
      %v5953 = vmul.f32 %v4473, %v5825
      %v5954 = vmul.f32 %v4584, %v5826
      %v5955 = vmul.f32 %v4586, %v5827
      %v5956 = vmul.f32 %v4697, %v5828
      %v5957 = vmul.f32 %v4699, %v5829
      %v5958 = vmul.f32 %v4810, %v5830
      %v5959 = vmul.f32 %v4812, %v5831
      %v5960 = vmul.f32 %v4477, %v5832
      %v5961 = vmul.f32 %v4479, %v5833
      %v5962 = vmul.f32 %v4590, %v5834
      %v5963 = vmul.f32 %v4592, %v5835
      %v5964 = vmul.f32 %v4703, %v5836
      %v5965 = vmul.f32 %v4705, %v5837
      %v5966 = vmul.f32 %v4816, %v5838
      %v5967 = vmul.f32 %v4818, %v5839
      %v5968 = vmul.f32 %v4481, %v5840
      %v5969 = vmul.f32 %v4483, %v5841
      %v5970 = vmul.f32 %v4594, %v5842
      %v5971 = vmul.f32 %v4596, %v5843
      %v5972 = vmul.f32 %v4707, %v5844
      %v5973 = vmul.f32 %v4709, %v5845
      %v5974 = vmul.f32 %v4820, %v5846
      %v5975 = vmul.f32 %v4822, %v5847
      %v5976 = vpack.c.bf16 %v5856, %v5848
      %v5977 = vpack.c.bf16 %v5857, %v5849
      %v5978 = vpack.c.bf16 %v5858, %v5850
      %v5979 = vpack.c.bf16 %v5859, %v5851
      %v5980 = vpack.c.bf16 %v5860, %v5852
      %v5981 = vpack.c.bf16 %v5861, %v5853
      %v5982 = vpack.c.bf16 %v5862, %v5854
      %v5983 = vpack.c.bf16 %v5863, %v5855
      %v5984 = vpack.c.bf16 %v5872, %v5864
      %v5985 = vpack.c.bf16 %v5873, %v5865
      %v5986 = vpack.c.bf16 %v5874, %v5866
      %v5987 = vpack.c.bf16 %v5875, %v5867
      %v5988 = vpack.c.bf16 %v5876, %v5868
      %v5989 = vpack.c.bf16 %v5877, %v5869
      %v5990 = vpack.c.bf16 %v5878, %v5870
      %v5991 = vpack.c.bf16 %v5879, %v5871
      %v5992 = vpack.c.bf16 %v5888, %v5880
      %v5993 = vpack.c.bf16 %v5889, %v5881
      %v5994 = vpack.c.bf16 %v5890, %v5882
      %v5995 = vpack.c.bf16 %v5891, %v5883
      %v5996 = vpack.c.bf16 %v5892, %v5884
      %v5997 = vpack.c.bf16 %v5893, %v5885
      %v5998 = vpack.c.bf16 %v5894, %v5886
      %v5999 = vpack.c.bf16 %v5895, %v5887
      %v6000 = vpack.c.bf16 %v5904, %v5896
      %v6001 = vpack.c.bf16 %v5905, %v5897
      %v6002 = vpack.c.bf16 %v5906, %v5898
      %v6003 = vpack.c.bf16 %v5907, %v5899
      %v6004 = vpack.c.bf16 %v5908, %v5900
      %v6005 = vpack.c.bf16 %v5909, %v5901
      %v6006 = vpack.c.bf16 %v5910, %v5902
      %v6007 = vpack.c.bf16 %v5911, %v5903
      %v6008 = vpack.c.bf16 %v5920, %v5912
      %v6009 = vpack.c.bf16 %v5921, %v5913
      %v6010 = vpack.c.bf16 %v5922, %v5914
      %v6011 = vpack.c.bf16 %v5923, %v5915
      %v6012 = vpack.c.bf16 %v5924, %v5916
      %v6013 = vpack.c.bf16 %v5925, %v5917
      %v6014 = vpack.c.bf16 %v5926, %v5918
      %v6015 = vpack.c.bf16 %v5927, %v5919
      %v6016 = vpack.c.bf16 %v5936, %v5928
      %v6017 = vpack.c.bf16 %v5937, %v5929
      %v6018 = vpack.c.bf16 %v5938, %v5930
      %v6019 = vpack.c.bf16 %v5939, %v5931
      %v6020 = vpack.c.bf16 %v5940, %v5932
      %v6021 = vpack.c.bf16 %v5941, %v5933
      %v6022 = vpack.c.bf16 %v5942, %v5934
      %v6023 = vpack.c.bf16 %v5943, %v5935
      %v6024 = vpack.c.bf16 %v5952, %v5944
      %v6025 = vpack.c.bf16 %v5953, %v5945
      %v6026 = vpack.c.bf16 %v5954, %v5946
      %v6027 = vpack.c.bf16 %v5955, %v5947
      %v6028 = vpack.c.bf16 %v5956, %v5948
      %v6029 = vpack.c.bf16 %v5957, %v5949
      %v6030 = vpack.c.bf16 %v5958, %v5950
      %v6031 = vpack.c.bf16 %v5959, %v5951
      %v6032 = vpack.c.bf16 %v5968, %v5960
      %v6033 = vpack.c.bf16 %v5969, %v5961
      %v6034 = vpack.c.bf16 %v5970, %v5962
      %v6035 = vpack.c.bf16 %v5971, %v5963
      %v6036 = vpack.c.bf16 %v5972, %v5964
      %v6037 = vpack.c.bf16 %v5973, %v5965
      %v6038 = vpack.c.bf16 %v5974, %v5966
      %v6039 = vpack.c.bf16 %v5975, %v5967
      %v6040 = vld [vmem:[%s12] sm:$0xff]
      %v6041 = vld [vmem:[%s12 + $0x8] sm:$0xff]
      %v6042 = vld [vmem:[%s12 + $0x10] sm:$0xff]
      %v6043 = vld [vmem:[%s12 + $0x18] sm:$0xff]
      %v6044 = vld [vmem:[%s12 + $0x20] sm:$0xff]
      %v6045 = vld [vmem:[%s12 + $0x28] sm:$0xff]
      %v6046 = vld [vmem:[%s12 + $0x30] sm:$0xff]
      %v6047 = vld [vmem:[%s12 + $0x38] sm:$0xff]
      %v6048 = vld [vmem:[%s12 + $0x40] sm:$0xff]
      %v6049 = vld [vmem:[%s12 + $0x48] sm:$0xff]
      %v6050 = vld [vmem:[%s12 + $0x50] sm:$0xff]
      %v6051 = vld [vmem:[%s12 + $0x58] sm:$0xff]
      %v6052 = vld [vmem:[%s12 + $0x60] sm:$0xff]
      %v6053 = vld [vmem:[%s12 + $0x68] sm:$0xff]
      %v6054 = vld [vmem:[%s12 + $0x70] sm:$0xff]
      %v6055 = vld [vmem:[%s12 + $0x78] sm:$0xff]
      %v6056 = vld [vmem:[%s12 + $0x80] sm:$0xff]
      %v6057 = vld [vmem:[%s12 + $0x88] sm:$0xff]
      %v6058 = vld [vmem:[%s12 + $0x90] sm:$0xff]
      %v6059 = vld [vmem:[%s12 + $0x98] sm:$0xff]
      %v6060 = vld [vmem:[%s12 + $0xa0] sm:$0xff]
      %v6061 = vld [vmem:[%s12 + $0xa8] sm:$0xff]
      %v6062 = vld [vmem:[%s12 + $0xb0] sm:$0xff]
      %v6063 = vld [vmem:[%s12 + $0xb8] sm:$0xff]
      %v6064 = vld [vmem:[%s12 + $0xc0] sm:$0xff]
      %v6065 = vld [vmem:[%s12 + $0xc8] sm:$0xff]
      %v6066 = vld [vmem:[%s12 + $0xd0] sm:$0xff]
      %v6067 = vld [vmem:[%s12 + $0xd8] sm:$0xff]
      %v6068 = vld [vmem:[%s12 + $0xe0] sm:$0xff]
      %v6069 = vld [vmem:[%s12 + $0xe8] sm:$0xff]
      %v6070 = vld [vmem:[%s12 + $0xf0] sm:$0xff]
      %v6071 = vld [vmem:[%s12 + $0xf8] sm:$0xff]
      %v6072 = vld [vmem:[%s12 + $0x100] sm:$0xff]
      %v6073 = vld [vmem:[%s12 + $0x108] sm:$0xff]
      %v6074 = vld [vmem:[%s12 + $0x110] sm:$0xff]
      %v6075 = vld [vmem:[%s12 + $0x118] sm:$0xff]
      %v6076 = vld [vmem:[%s12 + $0x120] sm:$0xff]
      %v6077 = vld [vmem:[%s12 + $0x128] sm:$0xff]
      %v6078 = vld [vmem:[%s12 + $0x130] sm:$0xff]
      %v6079 = vld [vmem:[%s12 + $0x138] sm:$0xff]
      %v6080 = vld [vmem:[%s12 + $0x140] sm:$0xff]
      %v6081 = vld [vmem:[%s12 + $0x148] sm:$0xff]
      %v6082 = vld [vmem:[%s12 + $0x150] sm:$0xff]
      %v6083 = vld [vmem:[%s12 + $0x158] sm:$0xff]
      %v6084 = vld [vmem:[%s12 + $0x160] sm:$0xff]
      %v6085 = vld [vmem:[%s12 + $0x168] sm:$0xff]
      %v6086 = vld [vmem:[%s12 + $0x170] sm:$0xff]
      %v6087 = vld [vmem:[%s12 + $0x178] sm:$0xff]
      %v6088 = vld [vmem:[%s12 + $0x180] sm:$0xff]
      %v6089 = vld [vmem:[%s12 + $0x188] sm:$0xff]
      %v6090 = vld [vmem:[%s12 + $0x190] sm:$0xff]
      %v6091 = vld [vmem:[%s12 + $0x198] sm:$0xff]
      %v6092 = vld [vmem:[%s12 + $0x1a0] sm:$0xff]
      %v6093 = vld [vmem:[%s12 + $0x1a8] sm:$0xff]
      %v6094 = vld [vmem:[%s12 + $0x1b0] sm:$0xff]
      %v6095 = vld [vmem:[%s12 + $0x1b8] sm:$0xff]
      %v6096 = vld [vmem:[%s12 + $0x1c0] sm:$0xff]
      %v6097 = vld [vmem:[%s12 + $0x1c8] sm:$0xff]
      %v6098 = vld [vmem:[%s12 + $0x1d0] sm:$0xff]
      %v6099 = vld [vmem:[%s12 + $0x1d8] sm:$0xff]
      %v6100 = vld [vmem:[%s12 + $0x1e0] sm:$0xff]
      %v6101 = vld [vmem:[%s12 + $0x1e8] sm:$0xff]
      %v6102 = vld [vmem:[%s12 + $0x1f0] sm:$0xff]
      %v6103 = vld [vmem:[%s12 + $0x1f8] sm:$0xff]
      %v6104 = vld [vmem:[%s12 + $0x200] sm:$0xff]
      %v6105 = vld [vmem:[%s12 + $0x208] sm:$0xff]
      %v6106 = vld [vmem:[%s12 + $0x210] sm:$0xff]
      %v6107 = vld [vmem:[%s12 + $0x218] sm:$0xff]
      %v6108 = vld [vmem:[%s12 + $0x220] sm:$0xff]
      %v6109 = vld [vmem:[%s12 + $0x228] sm:$0xff]
      %v6110 = vld [vmem:[%s12 + $0x230] sm:$0xff]
      %v6111 = vld [vmem:[%s12 + $0x238] sm:$0xff]
      %v6112 = vld [vmem:[%s12 + $0x240] sm:$0xff]
      %v6113 = vld [vmem:[%s12 + $0x248] sm:$0xff]
      %v6114 = vld [vmem:[%s12 + $0x250] sm:$0xff]
      %v6115 = vld [vmem:[%s12 + $0x258] sm:$0xff]
      %v6116 = vld [vmem:[%s12 + $0x260] sm:$0xff]
      %v6117 = vld [vmem:[%s12 + $0x268] sm:$0xff]
      %v6118 = vld [vmem:[%s12 + $0x270] sm:$0xff]
      %v6119 = vld [vmem:[%s12 + $0x278] sm:$0xff]
      %v6120 = vld [vmem:[%s12 + $0x280] sm:$0xff]
      %v6121 = vld [vmem:[%s12 + $0x288] sm:$0xff]
      %v6122 = vld [vmem:[%s12 + $0x290] sm:$0xff]
      %v6123 = vld [vmem:[%s12 + $0x298] sm:$0xff]
      %v6124 = vld [vmem:[%s12 + $0x2a0] sm:$0xff]
      %v6125 = vld [vmem:[%s12 + $0x2a8] sm:$0xff]
      %v6126 = vld [vmem:[%s12 + $0x2b0] sm:$0xff]
      %v6127 = vld [vmem:[%s12 + $0x2b8] sm:$0xff]
      %v6128 = vld [vmem:[%s12 + $0x2c0] sm:$0xff]
      %v6129 = vld [vmem:[%s12 + $0x2c8] sm:$0xff]
      %v6130 = vld [vmem:[%s12 + $0x2d0] sm:$0xff]
      %v6131 = vld [vmem:[%s12 + $0x2d8] sm:$0xff]
      %v6132 = vld [vmem:[%s12 + $0x2e0] sm:$0xff]
      %v6133 = vld [vmem:[%s12 + $0x2e8] sm:$0xff]
      %v6134 = vld [vmem:[%s12 + $0x2f0] sm:$0xff]
      %v6135 = vld [vmem:[%s12 + $0x2f8] sm:$0xff]
      %v6136 = vld [vmem:[%s12 + $0x300] sm:$0xff]
      %v6137 = vld [vmem:[%s12 + $0x308] sm:$0xff]
      %v6138 = vld [vmem:[%s12 + $0x310] sm:$0xff]
      %v6139 = vld [vmem:[%s12 + $0x318] sm:$0xff]
      %v6140 = vld [vmem:[%s12 + $0x320] sm:$0xff]
      %v6141 = vld [vmem:[%s12 + $0x328] sm:$0xff]
      %v6142 = vld [vmem:[%s12 + $0x330] sm:$0xff]
      %v6143 = vld [vmem:[%s12 + $0x338] sm:$0xff]
      %v6144 = vld [vmem:[%s12 + $0x340] sm:$0xff]
      %v6145 = vld [vmem:[%s12 + $0x348] sm:$0xff]
      %v6146 = vld [vmem:[%s12 + $0x350] sm:$0xff]
      %v6147 = vld [vmem:[%s12 + $0x358] sm:$0xff]
      %v6148 = vld [vmem:[%s12 + $0x360] sm:$0xff]
      %v6149 = vld [vmem:[%s12 + $0x368] sm:$0xff]
      %v6150 = vld [vmem:[%s12 + $0x370] sm:$0xff]
      %v6151 = vld [vmem:[%s12 + $0x378] sm:$0xff]
      %v6152 = vld [vmem:[%s12 + $0x380] sm:$0xff]
      %v6153 = vld [vmem:[%s12 + $0x388] sm:$0xff]
      %v6154 = vld [vmem:[%s12 + $0x390] sm:$0xff]
      %v6155 = vld [vmem:[%s12 + $0x398] sm:$0xff]
      %v6156 = vld [vmem:[%s12 + $0x3a0] sm:$0xff]
      %v6157 = vld [vmem:[%s12 + $0x3a8] sm:$0xff]
      %v6158 = vld [vmem:[%s12 + $0x3b0] sm:$0xff]
      %v6159 = vld [vmem:[%s12 + $0x3b8] sm:$0xff]
      %v6160 = vld [vmem:[%s12 + $0x3c0] sm:$0xff]
      %v6161 = vld [vmem:[%s12 + $0x3c8] sm:$0xff]
      %v6162 = vld [vmem:[%s12 + $0x3d0] sm:$0xff]
      %v6163 = vld [vmem:[%s12 + $0x3d8] sm:$0xff]
      %v6164 = vld [vmem:[%s12 + $0x3e0] sm:$0xff]
      %v6165 = vld [vmem:[%s12 + $0x3e8] sm:$0xff]
      %v6166 = vld [vmem:[%s12 + $0x3f0] sm:$0xff]
      %v6167 = vld [vmem:[%s12 + $0x3f8] sm:$0xff]
      %v6168 = vld [vmem:[%s13] sm:$0x3]
      %v6170 = vlaneseq
      %v6171 = vshrl.u32 %v6170, 7
      %v6172 = vsub.s32 0, %v6171
      %v6173 = vrot.slane %v6168, %v6172
      %v6174 = vlaneseq
      %v6175 = vshrl.u32 %v6174, 7
      %v6176 = vsub.s32 1, %v6175
      %v6177 = vrot.slane %v6168, %v6176
      %v6308 = vunpack.c.l.b16 %v6040
      %v6309 = vunpack.c.h.b16 %v6040
      %v6310 = vunpack.c.l.b16 %v6041
      %v6311 = vunpack.c.h.b16 %v6041
      %v6312 = vunpack.c.l.b16 %v6042
      %v6313 = vunpack.c.h.b16 %v6042
      %v6314 = vunpack.c.l.b16 %v6043
      %v6315 = vunpack.c.h.b16 %v6043
      %v6316 = vunpack.c.l.b16 %v6044
      %v6317 = vunpack.c.h.b16 %v6044
      %v6318 = vunpack.c.l.b16 %v6045
      %v6319 = vunpack.c.h.b16 %v6045
      %v6320 = vunpack.c.l.b16 %v6046
      %v6321 = vunpack.c.h.b16 %v6046
      %v6322 = vunpack.c.l.b16 %v6047
      %v6323 = vunpack.c.h.b16 %v6047
      %v6324 = vunpack.c.l.b16 %v6048
      %v6325 = vunpack.c.h.b16 %v6048
      %v6326 = vunpack.c.l.b16 %v6049
      %v6327 = vunpack.c.h.b16 %v6049
      %v6328 = vunpack.c.l.b16 %v6050
      %v6329 = vunpack.c.h.b16 %v6050
      %v6330 = vunpack.c.l.b16 %v6051
      %v6331 = vunpack.c.h.b16 %v6051
      %v6332 = vunpack.c.l.b16 %v6052
      %v6333 = vunpack.c.h.b16 %v6052
      %v6334 = vunpack.c.l.b16 %v6053
      %v6335 = vunpack.c.h.b16 %v6053
      %v6336 = vunpack.c.l.b16 %v6054
      %v6337 = vunpack.c.h.b16 %v6054
      %v6338 = vunpack.c.l.b16 %v6055
      %v6339 = vunpack.c.h.b16 %v6055
      %v6340 = vunpack.c.l.b16 %v6056
      %v6341 = vunpack.c.h.b16 %v6056
      %v6342 = vunpack.c.l.b16 %v6057
      %v6343 = vunpack.c.h.b16 %v6057
      %v6344 = vunpack.c.l.b16 %v6058
      %v6345 = vunpack.c.h.b16 %v6058
      %v6346 = vunpack.c.l.b16 %v6059
      %v6347 = vunpack.c.h.b16 %v6059
      %v6348 = vunpack.c.l.b16 %v6060
      %v6349 = vunpack.c.h.b16 %v6060
      %v6350 = vunpack.c.l.b16 %v6061
      %v6351 = vunpack.c.h.b16 %v6061
      %v6352 = vunpack.c.l.b16 %v6062
      %v6353 = vunpack.c.h.b16 %v6062
      %v6354 = vunpack.c.l.b16 %v6063
      %v6355 = vunpack.c.h.b16 %v6063
      %v6356 = vunpack.c.l.b16 %v6064
      %v6357 = vunpack.c.h.b16 %v6064
      %v6358 = vunpack.c.l.b16 %v6065
      %v6359 = vunpack.c.h.b16 %v6065
      %v6360 = vunpack.c.l.b16 %v6066
      %v6361 = vunpack.c.h.b16 %v6066
      %v6362 = vunpack.c.l.b16 %v6067
      %v6363 = vunpack.c.h.b16 %v6067
      %v6364 = vunpack.c.l.b16 %v6068
      %v6365 = vunpack.c.h.b16 %v6068
      %v6366 = vunpack.c.l.b16 %v6069
      %v6367 = vunpack.c.h.b16 %v6069
      %v6368 = vunpack.c.l.b16 %v6070
      %v6369 = vunpack.c.h.b16 %v6070
      %v6370 = vunpack.c.l.b16 %v6071
      %v6371 = vunpack.c.h.b16 %v6071
      %v6372 = vunpack.c.l.b16 %v6072
      %v6373 = vunpack.c.h.b16 %v6072
      %v6374 = vunpack.c.l.b16 %v6073
      %v6375 = vunpack.c.h.b16 %v6073
      %v6376 = vunpack.c.l.b16 %v6074
      %v6377 = vunpack.c.h.b16 %v6074
      %v6378 = vunpack.c.l.b16 %v6075
      %v6379 = vunpack.c.h.b16 %v6075
      %v6380 = vunpack.c.l.b16 %v6076
      %v6381 = vunpack.c.h.b16 %v6076
      %v6382 = vunpack.c.l.b16 %v6077
      %v6383 = vunpack.c.h.b16 %v6077
      %v6384 = vunpack.c.l.b16 %v6078
      %v6385 = vunpack.c.h.b16 %v6078
      %v6386 = vunpack.c.l.b16 %v6079
      %v6387 = vunpack.c.h.b16 %v6079
      %v6388 = vunpack.c.l.b16 %v6080
      %v6389 = vunpack.c.h.b16 %v6080
      %v6390 = vunpack.c.l.b16 %v6081
      %v6391 = vunpack.c.h.b16 %v6081
      %v6392 = vunpack.c.l.b16 %v6082
      %v6393 = vunpack.c.h.b16 %v6082
      %v6394 = vunpack.c.l.b16 %v6083
      %v6395 = vunpack.c.h.b16 %v6083
      %v6396 = vunpack.c.l.b16 %v6084
      %v6397 = vunpack.c.h.b16 %v6084
      %v6398 = vunpack.c.l.b16 %v6085
      %v6399 = vunpack.c.h.b16 %v6085
      %v6400 = vunpack.c.l.b16 %v6086
      %v6401 = vunpack.c.h.b16 %v6086
      %v6402 = vunpack.c.l.b16 %v6087
      %v6403 = vunpack.c.h.b16 %v6087
      %v6404 = vunpack.c.l.b16 %v6088
      %v6405 = vunpack.c.h.b16 %v6088
      %v6406 = vunpack.c.l.b16 %v6089
      %v6407 = vunpack.c.h.b16 %v6089
      %v6408 = vunpack.c.l.b16 %v6090
      %v6409 = vunpack.c.h.b16 %v6090
      %v6410 = vunpack.c.l.b16 %v6091
      %v6411 = vunpack.c.h.b16 %v6091
      %v6412 = vunpack.c.l.b16 %v6092
      %v6413 = vunpack.c.h.b16 %v6092
      %v6414 = vunpack.c.l.b16 %v6093
      %v6415 = vunpack.c.h.b16 %v6093
      %v6416 = vunpack.c.l.b16 %v6094
      %v6417 = vunpack.c.h.b16 %v6094
      %v6418 = vunpack.c.l.b16 %v6095
      %v6419 = vunpack.c.h.b16 %v6095
      %v6420 = vunpack.c.l.b16 %v6096
      %v6421 = vunpack.c.h.b16 %v6096
      %v6422 = vunpack.c.l.b16 %v6097
      %v6423 = vunpack.c.h.b16 %v6097
      %v6424 = vunpack.c.l.b16 %v6098
      %v6425 = vunpack.c.h.b16 %v6098
      %v6426 = vunpack.c.l.b16 %v6099
      %v6427 = vunpack.c.h.b16 %v6099
      %v6428 = vunpack.c.l.b16 %v6100
      %v6429 = vunpack.c.h.b16 %v6100
      %v6430 = vunpack.c.l.b16 %v6101
      %v6431 = vunpack.c.h.b16 %v6101
      %v6432 = vunpack.c.l.b16 %v6102
      %v6433 = vunpack.c.h.b16 %v6102
      %v6434 = vunpack.c.l.b16 %v6103
      %v6435 = vunpack.c.h.b16 %v6103
      %v6436 = vunpack.c.l.b16 %v6104
      %v6437 = vunpack.c.h.b16 %v6104
      %v6438 = vunpack.c.l.b16 %v6105
      %v6439 = vunpack.c.h.b16 %v6105
      %v6440 = vunpack.c.l.b16 %v6106
      %v6441 = vunpack.c.h.b16 %v6106
      %v6442 = vunpack.c.l.b16 %v6107
      %v6443 = vunpack.c.h.b16 %v6107
      %v6444 = vunpack.c.l.b16 %v6108
      %v6445 = vunpack.c.h.b16 %v6108
      %v6446 = vunpack.c.l.b16 %v6109
      %v6447 = vunpack.c.h.b16 %v6109
      %v6448 = vunpack.c.l.b16 %v6110
      %v6449 = vunpack.c.h.b16 %v6110
      %v6450 = vunpack.c.l.b16 %v6111
      %v6451 = vunpack.c.h.b16 %v6111
      %v6452 = vunpack.c.l.b16 %v6112
      %v6453 = vunpack.c.h.b16 %v6112
      %v6454 = vunpack.c.l.b16 %v6113
      %v6455 = vunpack.c.h.b16 %v6113
      %v6456 = vunpack.c.l.b16 %v6114
      %v6457 = vunpack.c.h.b16 %v6114
      %v6458 = vunpack.c.l.b16 %v6115
      %v6459 = vunpack.c.h.b16 %v6115
      %v6460 = vunpack.c.l.b16 %v6116
      %v6461 = vunpack.c.h.b16 %v6116
      %v6462 = vunpack.c.l.b16 %v6117
      %v6463 = vunpack.c.h.b16 %v6117
      %v6464 = vunpack.c.l.b16 %v6118
      %v6465 = vunpack.c.h.b16 %v6118
      %v6466 = vunpack.c.l.b16 %v6119
      %v6467 = vunpack.c.h.b16 %v6119
      %v6468 = vunpack.c.l.b16 %v6120
      %v6469 = vunpack.c.h.b16 %v6120
      %v6470 = vunpack.c.l.b16 %v6121
      %v6471 = vunpack.c.h.b16 %v6121
      %v6472 = vunpack.c.l.b16 %v6122
      %v6473 = vunpack.c.h.b16 %v6122
      %v6474 = vunpack.c.l.b16 %v6123
      %v6475 = vunpack.c.h.b16 %v6123
      %v6476 = vunpack.c.l.b16 %v6124
      %v6477 = vunpack.c.h.b16 %v6124
      %v6478 = vunpack.c.l.b16 %v6125
      %v6479 = vunpack.c.h.b16 %v6125
      %v6480 = vunpack.c.l.b16 %v6126
      %v6481 = vunpack.c.h.b16 %v6126
      %v6482 = vunpack.c.l.b16 %v6127
      %v6483 = vunpack.c.h.b16 %v6127
      %v6484 = vunpack.c.l.b16 %v6128
      %v6485 = vunpack.c.h.b16 %v6128
      %v6486 = vunpack.c.l.b16 %v6129
      %v6487 = vunpack.c.h.b16 %v6129
      %v6488 = vunpack.c.l.b16 %v6130
      %v6489 = vunpack.c.h.b16 %v6130
      %v6490 = vunpack.c.l.b16 %v6131
      %v6491 = vunpack.c.h.b16 %v6131
      %v6492 = vunpack.c.l.b16 %v6132
      %v6493 = vunpack.c.h.b16 %v6132
      %v6494 = vunpack.c.l.b16 %v6133
      %v6495 = vunpack.c.h.b16 %v6133
      %v6496 = vunpack.c.l.b16 %v6134
      %v6497 = vunpack.c.h.b16 %v6134
      %v6498 = vunpack.c.l.b16 %v6135
      %v6499 = vunpack.c.h.b16 %v6135
      %v6500 = vunpack.c.l.b16 %v6136
      %v6501 = vunpack.c.h.b16 %v6136
      %v6502 = vunpack.c.l.b16 %v6137
      %v6503 = vunpack.c.h.b16 %v6137
      %v6504 = vunpack.c.l.b16 %v6138
      %v6505 = vunpack.c.h.b16 %v6138
      %v6506 = vunpack.c.l.b16 %v6139
      %v6507 = vunpack.c.h.b16 %v6139
      %v6508 = vunpack.c.l.b16 %v6140
      %v6509 = vunpack.c.h.b16 %v6140
      %v6510 = vunpack.c.l.b16 %v6141
      %v6511 = vunpack.c.h.b16 %v6141
      %v6512 = vunpack.c.l.b16 %v6142
      %v6513 = vunpack.c.h.b16 %v6142
      %v6514 = vunpack.c.l.b16 %v6143
      %v6515 = vunpack.c.h.b16 %v6143
      %v6516 = vunpack.c.l.b16 %v6144
      %v6517 = vunpack.c.h.b16 %v6144
      %v6518 = vunpack.c.l.b16 %v6145
      %v6519 = vunpack.c.h.b16 %v6145
      %v6520 = vunpack.c.l.b16 %v6146
      %v6521 = vunpack.c.h.b16 %v6146
      %v6522 = vunpack.c.l.b16 %v6147
      %v6523 = vunpack.c.h.b16 %v6147
      %v6524 = vunpack.c.l.b16 %v6148
      %v6525 = vunpack.c.h.b16 %v6148
      %v6526 = vunpack.c.l.b16 %v6149
      %v6527 = vunpack.c.h.b16 %v6149
      %v6528 = vunpack.c.l.b16 %v6150
      %v6529 = vunpack.c.h.b16 %v6150
      %v6530 = vunpack.c.l.b16 %v6151
      %v6531 = vunpack.c.h.b16 %v6151
      %v6532 = vunpack.c.l.b16 %v6152
      %v6533 = vunpack.c.h.b16 %v6152
      %v6534 = vunpack.c.l.b16 %v6153
      %v6535 = vunpack.c.h.b16 %v6153
      %v6536 = vunpack.c.l.b16 %v6154
      %v6537 = vunpack.c.h.b16 %v6154
      %v6538 = vunpack.c.l.b16 %v6155
      %v6539 = vunpack.c.h.b16 %v6155
      %v6540 = vunpack.c.l.b16 %v6156
      %v6541 = vunpack.c.h.b16 %v6156
      %v6542 = vunpack.c.l.b16 %v6157
      %v6543 = vunpack.c.h.b16 %v6157
      %v6544 = vunpack.c.l.b16 %v6158
      %v6545 = vunpack.c.h.b16 %v6158
      %v6546 = vunpack.c.l.b16 %v6159
      %v6547 = vunpack.c.h.b16 %v6159
      %v6548 = vunpack.c.l.b16 %v6160
      %v6549 = vunpack.c.h.b16 %v6160
      %v6550 = vunpack.c.l.b16 %v6161
      %v6551 = vunpack.c.h.b16 %v6161
      %v6552 = vunpack.c.l.b16 %v6162
      %v6553 = vunpack.c.h.b16 %v6162
      %v6554 = vunpack.c.l.b16 %v6163
      %v6555 = vunpack.c.h.b16 %v6163
      %v6556 = vunpack.c.l.b16 %v6164
      %v6557 = vunpack.c.h.b16 %v6164
      %v6558 = vunpack.c.l.b16 %v6165
      %v6559 = vunpack.c.h.b16 %v6165
      %v6560 = vunpack.c.l.b16 %v6166
      %v6561 = vunpack.c.h.b16 %v6166
      %v6562 = vunpack.c.l.b16 %v6167
      %v6563 = vunpack.c.h.b16 %v6167
      %v6564 = vpack.c.b16 %v6310, %v6308
      %v6565 = vpack.c.b16 %v6311, %v6309
      %v6566 = vpack.c.b16 %v6314, %v6312
      %v6567 = vpack.c.b16 %v6315, %v6313
      %v6568 = vpack.c.b16 %v6318, %v6316
      %v6569 = vpack.c.b16 %v6319, %v6317
      %v6570 = vpack.c.b16 %v6322, %v6320
      %v6571 = vpack.c.b16 %v6323, %v6321
      %v6572 = vpack.c.b16 %v6326, %v6324
      %v6573 = vpack.c.b16 %v6327, %v6325
      %v6574 = vpack.c.b16 %v6330, %v6328
      %v6575 = vpack.c.b16 %v6331, %v6329
      %v6576 = vpack.c.b16 %v6334, %v6332
      %v6577 = vpack.c.b16 %v6335, %v6333
      %v6578 = vpack.c.b16 %v6338, %v6336
      %v6579 = vpack.c.b16 %v6339, %v6337
      %v6580 = vpack.c.b16 %v6342, %v6340
      %v6581 = vpack.c.b16 %v6343, %v6341
      %v6582 = vpack.c.b16 %v6346, %v6344
      %v6583 = vpack.c.b16 %v6347, %v6345
      %v6584 = vpack.c.b16 %v6350, %v6348
      %v6585 = vpack.c.b16 %v6351, %v6349
      %v6586 = vpack.c.b16 %v6354, %v6352
      %v6587 = vpack.c.b16 %v6355, %v6353
      %v6588 = vpack.c.b16 %v6358, %v6356
      %v6589 = vpack.c.b16 %v6359, %v6357
      %v6590 = vpack.c.b16 %v6362, %v6360
      %v6591 = vpack.c.b16 %v6363, %v6361
      %v6592 = vpack.c.b16 %v6366, %v6364
      %v6593 = vpack.c.b16 %v6367, %v6365
      %v6594 = vpack.c.b16 %v6370, %v6368
      %v6595 = vpack.c.b16 %v6371, %v6369
      %v6596 = vpack.c.b16 %v6374, %v6372
      %v6597 = vpack.c.b16 %v6375, %v6373
      %v6598 = vpack.c.b16 %v6378, %v6376
      %v6599 = vpack.c.b16 %v6379, %v6377
      %v6600 = vpack.c.b16 %v6382, %v6380
      %v6601 = vpack.c.b16 %v6383, %v6381
      %v6602 = vpack.c.b16 %v6386, %v6384
      %v6603 = vpack.c.b16 %v6387, %v6385
      %v6604 = vpack.c.b16 %v6390, %v6388
      %v6605 = vpack.c.b16 %v6391, %v6389
      %v6606 = vpack.c.b16 %v6394, %v6392
      %v6607 = vpack.c.b16 %v6395, %v6393
      %v6608 = vpack.c.b16 %v6398, %v6396
      %v6609 = vpack.c.b16 %v6399, %v6397
      %v6610 = vpack.c.b16 %v6402, %v6400
      %v6611 = vpack.c.b16 %v6403, %v6401
      %v6612 = vpack.c.b16 %v6406, %v6404
      %v6613 = vpack.c.b16 %v6407, %v6405
      %v6614 = vpack.c.b16 %v6410, %v6408
      %v6615 = vpack.c.b16 %v6411, %v6409
      %v6616 = vpack.c.b16 %v6414, %v6412
      %v6617 = vpack.c.b16 %v6415, %v6413
      %v6618 = vpack.c.b16 %v6418, %v6416
      %v6619 = vpack.c.b16 %v6419, %v6417
      %v6620 = vpack.c.b16 %v6422, %v6420
      %v6621 = vpack.c.b16 %v6423, %v6421
      %v6622 = vpack.c.b16 %v6426, %v6424
      %v6623 = vpack.c.b16 %v6427, %v6425
      %v6624 = vpack.c.b16 %v6430, %v6428
      %v6625 = vpack.c.b16 %v6431, %v6429
      %v6626 = vpack.c.b16 %v6434, %v6432
      %v6627 = vpack.c.b16 %v6435, %v6433
      %v6628 = vpack.c.b16 %v6438, %v6436
      %v6629 = vpack.c.b16 %v6439, %v6437
      %v6630 = vpack.c.b16 %v6442, %v6440
      %v6631 = vpack.c.b16 %v6443, %v6441
      %v6632 = vpack.c.b16 %v6446, %v6444
      %v6633 = vpack.c.b16 %v6447, %v6445
      %v6634 = vpack.c.b16 %v6450, %v6448
      %v6635 = vpack.c.b16 %v6451, %v6449
      %v6636 = vpack.c.b16 %v6454, %v6452
      %v6637 = vpack.c.b16 %v6455, %v6453
      %v6638 = vpack.c.b16 %v6458, %v6456
      %v6639 = vpack.c.b16 %v6459, %v6457
      %v6640 = vpack.c.b16 %v6462, %v6460
      %v6641 = vpack.c.b16 %v6463, %v6461
      %v6642 = vpack.c.b16 %v6466, %v6464
      %v6643 = vpack.c.b16 %v6467, %v6465
      %v6644 = vpack.c.b16 %v6470, %v6468
      %v6645 = vpack.c.b16 %v6471, %v6469
      %v6646 = vpack.c.b16 %v6474, %v6472
      %v6647 = vpack.c.b16 %v6475, %v6473
      %v6648 = vpack.c.b16 %v6478, %v6476
      %v6649 = vpack.c.b16 %v6479, %v6477
      %v6650 = vpack.c.b16 %v6482, %v6480
      %v6651 = vpack.c.b16 %v6483, %v6481
      %v6652 = vpack.c.b16 %v6486, %v6484
      %v6653 = vpack.c.b16 %v6487, %v6485
      %v6654 = vpack.c.b16 %v6490, %v6488
      %v6655 = vpack.c.b16 %v6491, %v6489
      %v6656 = vpack.c.b16 %v6494, %v6492
      %v6657 = vpack.c.b16 %v6495, %v6493
      %v6658 = vpack.c.b16 %v6498, %v6496
      %v6659 = vpack.c.b16 %v6499, %v6497
      %v6660 = vpack.c.b16 %v6502, %v6500
      %v6661 = vpack.c.b16 %v6503, %v6501
      %v6662 = vpack.c.b16 %v6506, %v6504
      %v6663 = vpack.c.b16 %v6507, %v6505
      %v6664 = vpack.c.b16 %v6510, %v6508
      %v6665 = vpack.c.b16 %v6511, %v6509
      %v6666 = vpack.c.b16 %v6514, %v6512
      %v6667 = vpack.c.b16 %v6515, %v6513
      %v6668 = vpack.c.b16 %v6518, %v6516
      %v6669 = vpack.c.b16 %v6519, %v6517
      %v6670 = vpack.c.b16 %v6522, %v6520
      %v6671 = vpack.c.b16 %v6523, %v6521
      %v6672 = vpack.c.b16 %v6526, %v6524
      %v6673 = vpack.c.b16 %v6527, %v6525
      %v6674 = vpack.c.b16 %v6530, %v6528
      %v6675 = vpack.c.b16 %v6531, %v6529
      %v6676 = vpack.c.b16 %v6534, %v6532
      %v6677 = vpack.c.b16 %v6535, %v6533
      %v6678 = vpack.c.b16 %v6538, %v6536
      %v6679 = vpack.c.b16 %v6539, %v6537
      %v6680 = vpack.c.b16 %v6542, %v6540
      %v6681 = vpack.c.b16 %v6543, %v6541
      %v6682 = vpack.c.b16 %v6546, %v6544
      %v6683 = vpack.c.b16 %v6547, %v6545
      %v6684 = vpack.c.b16 %v6550, %v6548
      %v6685 = vpack.c.b16 %v6551, %v6549
      %v6686 = vpack.c.b16 %v6554, %v6552
      %v6687 = vpack.c.b16 %v6555, %v6553
      %v6688 = vpack.c.b16 %v6558, %v6556
      %v6689 = vpack.c.b16 %v6559, %v6557
      %v6690 = vpack.c.b16 %v6562, %v6560
      %v6691 = vpack.c.b16 %v6563, %v6561
      %6820 = vmatprep.subr.bf16.mxu0 %v6579
      %6821 = vmatpush1.bf16.msra.mxu0 %v6578
      %6822 = vmatprep.subr.bf16.mxu0 %v6577
      %6823 = vmatpush1.bf16.msra.mxu0 %v6576
      %6824 = vmatprep.subr.bf16.mxu0 %v6575
      %6825 = vmatpush1.bf16.msra.mxu0 %v6574
      %6826 = vmatprep.subr.bf16.mxu0 %v6573
      %6827 = vmatpush1.bf16.msra.mxu0 %v6572
      %6828 = vmatprep.subr.bf16.mxu0 %v6571
      %6829 = vmatpush1.bf16.msra.mxu0 %v6570
      %6830 = vmatprep.subr.bf16.mxu0 %v6569
      %6831 = vmatpush1.bf16.msra.mxu0 %v6568
      %6832 = vmatprep.subr.bf16.mxu0 %v6567
      %6833 = vmatpush1.bf16.msra.mxu0 %v6566
      %6834 = vmatprep.subr.bf16.mxu0 %v6565
      %6835 = vmatpush1.bf16.msra.mxu0 %v6564
      %6836 = vmatprep.subr.bf16.mxu0 %v6595
      %6837 = vmatpush2.bf16.msra.mxu0 %v6594
      %6838 = vmatprep.subr.bf16.mxu0 %v6593
      %6839 = vmatpush2.bf16.msra.mxu0 %v6592
      %6840 = vmatprep.subr.bf16.mxu0 %v6591
      %6841 = vmatpush2.bf16.msra.mxu0 %v6590
      %6842 = vmatprep.subr.bf16.mxu0 %v6589
      %6843 = vmatpush2.bf16.msra.mxu0 %v6588
      %6844 = vmatprep.subr.bf16.mxu0 %v6587
      %6845 = vmatpush2.bf16.msra.mxu0 %v6586
      %6846 = vmatprep.subr.bf16.mxu0 %v6585
      %6847 = vmatpush2.bf16.msra.mxu0 %v6584
      %6848 = vmatprep.subr.bf16.mxu0 %v6583
      %6849 = vmatpush2.bf16.msra.mxu0 %v6582
      %6850 = vmatprep.subr.bf16.mxu0 %v6581
      %6851 = vmatpush2.bf16.msra.mxu0 %v6580
      %6852 = vmatprep.mubr.bf16.mxu0 %v5977
      %6853 = vmatmul.mubr.bf16.gmra.mxu0 %v5976
      %v6854 = vpop.f32.mrf.mxu0
      %v6855 = vadd.f32 %v6173, %v6854
      %v6856 = vpop.f32.mrf.mxu0
      %v6857 = vadd.f32 %v6177, %v6856
      %v6858 = vpop.f32.mrf.mxu0
      %v6859 = vadd.f32 %v6173, %v6858
      %v6860 = vpop.f32.mrf.mxu0
      %v6861 = vadd.f32 %v6177, %v6860
      %6862 = vmatprep.mubr.bf16.mxu0 %v5985
      %6863 = vmatmul.mubr.bf16.gmra.mxu0 %v5984
      %v6864 = vpop.f32.mrf.mxu0
      %v6865 = vadd.f32 %v6173, %v6864
      %v6866 = vpop.f32.mrf.mxu0
      %v6867 = vadd.f32 %v6177, %v6866
      %v6868 = vpop.f32.mrf.mxu0
      %v6869 = vadd.f32 %v6173, %v6868
      %v6870 = vpop.f32.mrf.mxu0
      %v6871 = vadd.f32 %v6177, %v6870
      %6872 = vmatprep.mubr.bf16.mxu0 %v5993
      %6873 = vmatmul.mubr.bf16.gmra.mxu0 %v5992
      %v6874 = vpop.f32.mrf.mxu0
      %v6875 = vadd.f32 %v6173, %v6874
      %v6876 = vpop.f32.mrf.mxu0
      %v6877 = vadd.f32 %v6177, %v6876
      %v6878 = vpop.f32.mrf.mxu0
      %v6879 = vadd.f32 %v6173, %v6878
      %v6880 = vpop.f32.mrf.mxu0
      %v6881 = vadd.f32 %v6177, %v6880
      %6882 = vmatprep.mubr.bf16.mxu0 %v6001
      %6883 = vmatmul.mubr.bf16.gmra.mxu0 %v6000
      %v6884 = vpop.f32.mrf.mxu0
      %v6885 = vadd.f32 %v6173, %v6884
      %v6886 = vpop.f32.mrf.mxu0
      %v6887 = vadd.f32 %v6177, %v6886
      %v6888 = vpop.f32.mrf.mxu0
      %v6889 = vadd.f32 %v6173, %v6888
      %v6890 = vpop.f32.mrf.mxu0
      %v6891 = vadd.f32 %v6177, %v6890
      %6892 = vmatprep.mubr.bf16.mxu0 %v6009
      %6893 = vmatmul.mubr.bf16.gmra.mxu0 %v6008
      %v6894 = vpop.f32.mrf.mxu0
      %v6895 = vadd.f32 %v6173, %v6894
      %v6896 = vpop.f32.mrf.mxu0
      %v6897 = vadd.f32 %v6177, %v6896
      %v6898 = vpop.f32.mrf.mxu0
      %v6899 = vadd.f32 %v6173, %v6898
      %v6900 = vpop.f32.mrf.mxu0
      %v6901 = vadd.f32 %v6177, %v6900
      %6902 = vmatprep.mubr.bf16.mxu0 %v6017
      %6903 = vmatmul.mubr.bf16.gmra.mxu0 %v6016
      %v6904 = vpop.f32.mrf.mxu0
      %v6905 = vadd.f32 %v6173, %v6904
      %v6906 = vpop.f32.mrf.mxu0
      %v6907 = vadd.f32 %v6177, %v6906
      %v6908 = vpop.f32.mrf.mxu0
      %v6909 = vadd.f32 %v6173, %v6908
      %v6910 = vpop.f32.mrf.mxu0
      %v6911 = vadd.f32 %v6177, %v6910
      %6912 = vmatprep.mubr.bf16.mxu0 %v6025
      %6913 = vmatmul.mubr.bf16.gmra.mxu0 %v6024
      %v6914 = vpop.f32.mrf.mxu0
      %v6915 = vadd.f32 %v6173, %v6914
      %v6916 = vpop.f32.mrf.mxu0
      %v6917 = vadd.f32 %v6177, %v6916
      %v6918 = vpop.f32.mrf.mxu0
      %v6919 = vadd.f32 %v6173, %v6918
      %v6920 = vpop.f32.mrf.mxu0
      %v6921 = vadd.f32 %v6177, %v6920
      %6922 = vmatprep.mubr.bf16.mxu0 %v6033
      %6923 = vmatmul.mubr.bf16.gmra.mxu0 %v6032
      %v6924 = vpop.f32.mrf.mxu0
      %v6925 = vadd.f32 %v6173, %v6924
      %v6926 = vpop.f32.mrf.mxu0
      %v6927 = vadd.f32 %v6177, %v6926
      %v6928 = vpop.f32.mrf.mxu0
      %v6929 = vadd.f32 %v6173, %v6928
      %v6930 = vpop.f32.mrf.mxu0
      %v6931 = vadd.f32 %v6177, %v6930
      %6932 = vdwg.mxu0
      %6933 = vmatprep.subr.bf16.mxu0 %v6611
      %6934 = vmatpush1.bf16.msra.mxu0 %v6610
      %6935 = vmatprep.subr.bf16.mxu0 %v6609
      %6936 = vmatpush1.bf16.msra.mxu0 %v6608
      %6937 = vmatprep.subr.bf16.mxu0 %v6607
      %6938 = vmatpush1.bf16.msra.mxu0 %v6606
      %6939 = vmatprep.subr.bf16.mxu0 %v6605
      %6940 = vmatpush1.bf16.msra.mxu0 %v6604
      %6941 = vmatprep.subr.bf16.mxu0 %v6603
      %6942 = vmatpush1.bf16.msra.mxu0 %v6602
      %6943 = vmatprep.subr.bf16.mxu0 %v6601
      %6944 = vmatpush1.bf16.msra.mxu0 %v6600
      %6945 = vmatprep.subr.bf16.mxu0 %v6599
      %6946 = vmatpush1.bf16.msra.mxu0 %v6598
      %6947 = vmatprep.subr.bf16.mxu0 %v6597
      %6948 = vmatpush1.bf16.msra.mxu0 %v6596
      %6949 = vmatprep.subr.bf16.mxu0 %v6627
      %6950 = vmatpush2.bf16.msra.mxu0 %v6626
      %6951 = vmatprep.subr.bf16.mxu0 %v6625
      %6952 = vmatpush2.bf16.msra.mxu0 %v6624
      %6953 = vmatprep.subr.bf16.mxu0 %v6623
      %6954 = vmatpush2.bf16.msra.mxu0 %v6622
      %6955 = vmatprep.subr.bf16.mxu0 %v6621
      %6956 = vmatpush2.bf16.msra.mxu0 %v6620
      %6957 = vmatprep.subr.bf16.mxu0 %v6619
      %6958 = vmatpush2.bf16.msra.mxu0 %v6618
      %6959 = vmatprep.subr.bf16.mxu0 %v6617
      %6960 = vmatpush2.bf16.msra.mxu0 %v6616
      %6961 = vmatprep.subr.bf16.mxu0 %v6615
      %6962 = vmatpush2.bf16.msra.mxu0 %v6614
      %6963 = vmatprep.subr.bf16.mxu0 %v6613
      %6964 = vmatpush2.bf16.msra.mxu0 %v6612
      %6965 = vmatprep.mubr.bf16.mxu0 %v5979
      %6966 = vmatmul.mubr.bf16.gmra.mxu0 %v5978
      %v6967 = vpop.f32.mrf.mxu0
      %v6968 = vadd.f32 %v6855, %v6967
      %v6969 = vpop.f32.mrf.mxu0
      %v6970 = vadd.f32 %v6857, %v6969
      %v6971 = vpop.f32.mrf.mxu0
      %v6972 = vadd.f32 %v6859, %v6971
      %v6973 = vpop.f32.mrf.mxu0
      %v6974 = vadd.f32 %v6861, %v6973
      %6975 = vmatprep.mubr.bf16.mxu0 %v5987
      %6976 = vmatmul.mubr.bf16.gmra.mxu0 %v5986
      %v6977 = vpop.f32.mrf.mxu0
      %v6978 = vadd.f32 %v6865, %v6977
      %v6979 = vpop.f32.mrf.mxu0
      %v6980 = vadd.f32 %v6867, %v6979
      %v6981 = vpop.f32.mrf.mxu0
      %v6982 = vadd.f32 %v6869, %v6981
      %v6983 = vpop.f32.mrf.mxu0
      %v6984 = vadd.f32 %v6871, %v6983
      %6985 = vmatprep.mubr.bf16.mxu0 %v5995
      %6986 = vmatmul.mubr.bf16.gmra.mxu0 %v5994
      %v6987 = vpop.f32.mrf.mxu0
      %v6988 = vadd.f32 %v6875, %v6987
      %v6989 = vpop.f32.mrf.mxu0
      %v6990 = vadd.f32 %v6877, %v6989
      %v6991 = vpop.f32.mrf.mxu0
      %v6992 = vadd.f32 %v6879, %v6991
      %v6993 = vpop.f32.mrf.mxu0
      %v6994 = vadd.f32 %v6881, %v6993
      %6995 = vmatprep.mubr.bf16.mxu0 %v6003
      %6996 = vmatmul.mubr.bf16.gmra.mxu0 %v6002
      %v6997 = vpop.f32.mrf.mxu0
      %v6998 = vadd.f32 %v6885, %v6997
      %v6999 = vpop.f32.mrf.mxu0
      %v7000 = vadd.f32 %v6887, %v6999
      %v7001 = vpop.f32.mrf.mxu0
      %v7002 = vadd.f32 %v6889, %v7001
      %v7003 = vpop.f32.mrf.mxu0
      %v7004 = vadd.f32 %v6891, %v7003
      %7005 = vmatprep.mubr.bf16.mxu0 %v6011
      %7006 = vmatmul.mubr.bf16.gmra.mxu0 %v6010
      %v7007 = vpop.f32.mrf.mxu0
      %v7008 = vadd.f32 %v6895, %v7007
      %v7009 = vpop.f32.mrf.mxu0
      %v7010 = vadd.f32 %v6897, %v7009
      %v7011 = vpop.f32.mrf.mxu0
      %v7012 = vadd.f32 %v6899, %v7011
      %v7013 = vpop.f32.mrf.mxu0
      %v7014 = vadd.f32 %v6901, %v7013
      %7015 = vmatprep.mubr.bf16.mxu0 %v6019
      %7016 = vmatmul.mubr.bf16.gmra.mxu0 %v6018
      %v7017 = vpop.f32.mrf.mxu0
      %v7018 = vadd.f32 %v6905, %v7017
      %v7019 = vpop.f32.mrf.mxu0
      %v7020 = vadd.f32 %v6907, %v7019
      %v7021 = vpop.f32.mrf.mxu0
      %v7022 = vadd.f32 %v6909, %v7021
      %v7023 = vpop.f32.mrf.mxu0
      %v7024 = vadd.f32 %v6911, %v7023
      %7025 = vmatprep.mubr.bf16.mxu0 %v6027
      %7026 = vmatmul.mubr.bf16.gmra.mxu0 %v6026
      %v7027 = vpop.f32.mrf.mxu0
      %v7028 = vadd.f32 %v6915, %v7027
      %v7029 = vpop.f32.mrf.mxu0
      %v7030 = vadd.f32 %v6917, %v7029
      %v7031 = vpop.f32.mrf.mxu0
      %v7032 = vadd.f32 %v6919, %v7031
      %v7033 = vpop.f32.mrf.mxu0
      %v7034 = vadd.f32 %v6921, %v7033
      %7035 = vmatprep.mubr.bf16.mxu0 %v6035
      %7036 = vmatmul.mubr.bf16.gmra.mxu0 %v6034
      %v7037 = vpop.f32.mrf.mxu0
      %v7038 = vadd.f32 %v6925, %v7037
      %v7039 = vpop.f32.mrf.mxu0
      %v7040 = vadd.f32 %v6927, %v7039
      %v7041 = vpop.f32.mrf.mxu0
      %v7042 = vadd.f32 %v6929, %v7041
      %v7043 = vpop.f32.mrf.mxu0
      %v7044 = vadd.f32 %v6931, %v7043
      %7045 = vdwg.mxu0
      %7046 = vmatprep.subr.bf16.mxu0 %v6643
      %7047 = vmatpush1.bf16.msra.mxu0 %v6642
      %7048 = vmatprep.subr.bf16.mxu0 %v6641
      %7049 = vmatpush1.bf16.msra.mxu0 %v6640
      %7050 = vmatprep.subr.bf16.mxu0 %v6639
      %7051 = vmatpush1.bf16.msra.mxu0 %v6638
      %7052 = vmatprep.subr.bf16.mxu0 %v6637
      %7053 = vmatpush1.bf16.msra.mxu0 %v6636
      %7054 = vmatprep.subr.bf16.mxu0 %v6635
      %7055 = vmatpush1.bf16.msra.mxu0 %v6634
      %7056 = vmatprep.subr.bf16.mxu0 %v6633
      %7057 = vmatpush1.bf16.msra.mxu0 %v6632
      %7058 = vmatprep.subr.bf16.mxu0 %v6631
      %7059 = vmatpush1.bf16.msra.mxu0 %v6630
      %7060 = vmatprep.subr.bf16.mxu0 %v6629
      %7061 = vmatpush1.bf16.msra.mxu0 %v6628
      %7062 = vmatprep.subr.bf16.mxu0 %v6659
      %7063 = vmatpush2.bf16.msra.mxu0 %v6658
      %7064 = vmatprep.subr.bf16.mxu0 %v6657
      %7065 = vmatpush2.bf16.msra.mxu0 %v6656
      %7066 = vmatprep.subr.bf16.mxu0 %v6655
      %7067 = vmatpush2.bf16.msra.mxu0 %v6654
      %7068 = vmatprep.subr.bf16.mxu0 %v6653
      %7069 = vmatpush2.bf16.msra.mxu0 %v6652
      %7070 = vmatprep.subr.bf16.mxu0 %v6651
      %7071 = vmatpush2.bf16.msra.mxu0 %v6650
      %7072 = vmatprep.subr.bf16.mxu0 %v6649
      %7073 = vmatpush2.bf16.msra.mxu0 %v6648
      %7074 = vmatprep.subr.bf16.mxu0 %v6647
      %7075 = vmatpush2.bf16.msra.mxu0 %v6646
      %7076 = vmatprep.subr.bf16.mxu0 %v6645
      %7077 = vmatpush2.bf16.msra.mxu0 %v6644
      %7078 = vmatprep.mubr.bf16.mxu0 %v5981
      %7079 = vmatmul.mubr.bf16.gmra.mxu0 %v5980
      %v7080 = vpop.f32.mrf.mxu0
      %v7081 = vadd.f32 %v6968, %v7080
      %v7082 = vpop.f32.mrf.mxu0
      %v7083 = vadd.f32 %v6970, %v7082
      %v7084 = vpop.f32.mrf.mxu0
      %v7085 = vadd.f32 %v6972, %v7084
      %v7086 = vpop.f32.mrf.mxu0
      %v7087 = vadd.f32 %v6974, %v7086
      %7088 = vmatprep.mubr.bf16.mxu0 %v5989
      %7089 = vmatmul.mubr.bf16.gmra.mxu0 %v5988
      %v7090 = vpop.f32.mrf.mxu0
      %v7091 = vadd.f32 %v6978, %v7090
      %v7092 = vpop.f32.mrf.mxu0
      %v7093 = vadd.f32 %v6980, %v7092
      %v7094 = vpop.f32.mrf.mxu0
      %v7095 = vadd.f32 %v6982, %v7094
      %v7096 = vpop.f32.mrf.mxu0
      %v7097 = vadd.f32 %v6984, %v7096
      %7098 = vmatprep.mubr.bf16.mxu0 %v5997
      %7099 = vmatmul.mubr.bf16.gmra.mxu0 %v5996
      %v7100 = vpop.f32.mrf.mxu0
      %v7101 = vadd.f32 %v6988, %v7100
      %v7102 = vpop.f32.mrf.mxu0
      %v7103 = vadd.f32 %v6990, %v7102
      %v7104 = vpop.f32.mrf.mxu0
      %v7105 = vadd.f32 %v6992, %v7104
      %v7106 = vpop.f32.mrf.mxu0
      %v7107 = vadd.f32 %v6994, %v7106
      %7108 = vmatprep.mubr.bf16.mxu0 %v6005
      %7109 = vmatmul.mubr.bf16.gmra.mxu0 %v6004
      %v7110 = vpop.f32.mrf.mxu0
      %v7111 = vadd.f32 %v6998, %v7110
      %v7112 = vpop.f32.mrf.mxu0
      %v7113 = vadd.f32 %v7000, %v7112
      %v7114 = vpop.f32.mrf.mxu0
      %v7115 = vadd.f32 %v7002, %v7114
      %v7116 = vpop.f32.mrf.mxu0
      %v7117 = vadd.f32 %v7004, %v7116
      %7118 = vmatprep.mubr.bf16.mxu0 %v6013
      %7119 = vmatmul.mubr.bf16.gmra.mxu0 %v6012
      %v7120 = vpop.f32.mrf.mxu0
      %v7121 = vadd.f32 %v7008, %v7120
      %v7122 = vpop.f32.mrf.mxu0
      %v7123 = vadd.f32 %v7010, %v7122
      %v7124 = vpop.f32.mrf.mxu0
      %v7125 = vadd.f32 %v7012, %v7124
      %v7126 = vpop.f32.mrf.mxu0
      %v7127 = vadd.f32 %v7014, %v7126
      %7128 = vmatprep.mubr.bf16.mxu0 %v6021
      %7129 = vmatmul.mubr.bf16.gmra.mxu0 %v6020
      %v7130 = vpop.f32.mrf.mxu0
      %v7131 = vadd.f32 %v7018, %v7130
      %v7132 = vpop.f32.mrf.mxu0
      %v7133 = vadd.f32 %v7020, %v7132
      %v7134 = vpop.f32.mrf.mxu0
      %v7135 = vadd.f32 %v7022, %v7134
      %v7136 = vpop.f32.mrf.mxu0
      %v7137 = vadd.f32 %v7024, %v7136
      %7138 = vmatprep.mubr.bf16.mxu0 %v6029
      %7139 = vmatmul.mubr.bf16.gmra.mxu0 %v6028
      %v7140 = vpop.f32.mrf.mxu0
      %v7141 = vadd.f32 %v7028, %v7140
      %v7142 = vpop.f32.mrf.mxu0
      %v7143 = vadd.f32 %v7030, %v7142
      %v7144 = vpop.f32.mrf.mxu0
      %v7145 = vadd.f32 %v7032, %v7144
      %v7146 = vpop.f32.mrf.mxu0
      %v7147 = vadd.f32 %v7034, %v7146
      %7148 = vmatprep.mubr.bf16.mxu0 %v6037
      %7149 = vmatmul.mubr.bf16.gmra.mxu0 %v6036
      %v7150 = vpop.f32.mrf.mxu0
      %v7151 = vadd.f32 %v7038, %v7150
      %v7152 = vpop.f32.mrf.mxu0
      %v7153 = vadd.f32 %v7040, %v7152
      %v7154 = vpop.f32.mrf.mxu0
      %v7155 = vadd.f32 %v7042, %v7154
      %v7156 = vpop.f32.mrf.mxu0
      %v7157 = vadd.f32 %v7044, %v7156
      %7158 = vdwg.mxu0
      %7159 = vmatprep.subr.bf16.mxu0 %v6675
      %7160 = vmatpush1.bf16.msra.mxu0 %v6674
      %7161 = vmatprep.subr.bf16.mxu0 %v6673
      %7162 = vmatpush1.bf16.msra.mxu0 %v6672
      %7163 = vmatprep.subr.bf16.mxu0 %v6671
      %7164 = vmatpush1.bf16.msra.mxu0 %v6670
      %7165 = vmatprep.subr.bf16.mxu0 %v6669
      %7166 = vmatpush1.bf16.msra.mxu0 %v6668
      %7167 = vmatprep.subr.bf16.mxu0 %v6667
      %7168 = vmatpush1.bf16.msra.mxu0 %v6666
      %7169 = vmatprep.subr.bf16.mxu0 %v6665
      %7170 = vmatpush1.bf16.msra.mxu0 %v6664
      %7171 = vmatprep.subr.bf16.mxu0 %v6663
      %7172 = vmatpush1.bf16.msra.mxu0 %v6662
      %7173 = vmatprep.subr.bf16.mxu0 %v6661
      %7174 = vmatpush1.bf16.msra.mxu0 %v6660
      %7175 = vmatprep.subr.bf16.mxu0 %v6691
      %7176 = vmatpush2.bf16.msra.mxu0 %v6690
      %7177 = vmatprep.subr.bf16.mxu0 %v6689
      %7178 = vmatpush2.bf16.msra.mxu0 %v6688
      %7179 = vmatprep.subr.bf16.mxu0 %v6687
      %7180 = vmatpush2.bf16.msra.mxu0 %v6686
      %7181 = vmatprep.subr.bf16.mxu0 %v6685
      %7182 = vmatpush2.bf16.msra.mxu0 %v6684
      %7183 = vmatprep.subr.bf16.mxu0 %v6683
      %7184 = vmatpush2.bf16.msra.mxu0 %v6682
      %7185 = vmatprep.subr.bf16.mxu0 %v6681
      %7186 = vmatpush2.bf16.msra.mxu0 %v6680
      %7187 = vmatprep.subr.bf16.mxu0 %v6679
      %7188 = vmatpush2.bf16.msra.mxu0 %v6678
      %7189 = vmatprep.subr.bf16.mxu0 %v6677
      %7190 = vmatpush2.bf16.msra.mxu0 %v6676
      %7191 = vmatprep.mubr.bf16.mxu0 %v5983
      %7192 = vmatmul.mubr.bf16.gmra.mxu0 %v5982
      %v7193 = vpop.f32.mrf.mxu0
      %v7194 = vadd.f32 %v7081, %v7193
      %v7195 = vpop.f32.mrf.mxu0
      %v7196 = vadd.f32 %v7083, %v7195
      %v7197 = vpop.f32.mrf.mxu0
      %v7198 = vadd.f32 %v7085, %v7197
      %v7199 = vpop.f32.mrf.mxu0
      %v7200 = vadd.f32 %v7087, %v7199
      %7201 = vmatprep.mubr.bf16.mxu0 %v5991
      %7202 = vmatmul.mubr.bf16.gmra.mxu0 %v5990
      %v7203 = vpop.f32.mrf.mxu0
      %v7204 = vadd.f32 %v7091, %v7203
      %v7205 = vpop.f32.mrf.mxu0
      %v7206 = vadd.f32 %v7093, %v7205
      %v7207 = vpop.f32.mrf.mxu0
      %v7208 = vadd.f32 %v7095, %v7207
      %v7209 = vpop.f32.mrf.mxu0
      %v7210 = vadd.f32 %v7097, %v7209
      %7211 = vmatprep.mubr.bf16.mxu0 %v5999
      %7212 = vmatmul.mubr.bf16.gmra.mxu0 %v5998
      %v7213 = vpop.f32.mrf.mxu0
      %v7214 = vadd.f32 %v7101, %v7213
      %v7215 = vpop.f32.mrf.mxu0
      %v7216 = vadd.f32 %v7103, %v7215
      %v7217 = vpop.f32.mrf.mxu0
      %v7218 = vadd.f32 %v7105, %v7217
      %v7219 = vpop.f32.mrf.mxu0
      %v7220 = vadd.f32 %v7107, %v7219
      %7221 = vmatprep.mubr.bf16.mxu0 %v6007
      %7222 = vmatmul.mubr.bf16.gmra.mxu0 %v6006
      %v7223 = vpop.f32.mrf.mxu0
      %v7224 = vadd.f32 %v7111, %v7223
      %v7225 = vpop.f32.mrf.mxu0
      %v7226 = vadd.f32 %v7113, %v7225
      %v7227 = vpop.f32.mrf.mxu0
      %v7228 = vadd.f32 %v7115, %v7227
      %v7229 = vpop.f32.mrf.mxu0
      %v7230 = vadd.f32 %v7117, %v7229
      %7231 = vmatprep.mubr.bf16.mxu0 %v6015
      %7232 = vmatmul.mubr.bf16.gmra.mxu0 %v6014
      %v7233 = vpop.f32.mrf.mxu0
      %v7234 = vadd.f32 %v7121, %v7233
      %v7235 = vpop.f32.mrf.mxu0
      %v7236 = vadd.f32 %v7123, %v7235
      %v7237 = vpop.f32.mrf.mxu0
      %v7238 = vadd.f32 %v7125, %v7237
      %v7239 = vpop.f32.mrf.mxu0
      %v7240 = vadd.f32 %v7127, %v7239
      %7241 = vmatprep.mubr.bf16.mxu0 %v6023
      %7242 = vmatmul.mubr.bf16.gmra.mxu0 %v6022
      %v7243 = vpop.f32.mrf.mxu0
      %v7244 = vadd.f32 %v7131, %v7243
      %v7245 = vpop.f32.mrf.mxu0
      %v7246 = vadd.f32 %v7133, %v7245
      %v7247 = vpop.f32.mrf.mxu0
      %v7248 = vadd.f32 %v7135, %v7247
      %v7249 = vpop.f32.mrf.mxu0
      %v7250 = vadd.f32 %v7137, %v7249
      %7251 = vmatprep.mubr.bf16.mxu0 %v6031
      %7252 = vmatmul.mubr.bf16.gmra.mxu0 %v6030
      %v7253 = vpop.f32.mrf.mxu0
      %v7254 = vadd.f32 %v7141, %v7253
      %v7255 = vpop.f32.mrf.mxu0
      %v7256 = vadd.f32 %v7143, %v7255
      %v7257 = vpop.f32.mrf.mxu0
      %v7258 = vadd.f32 %v7145, %v7257
      %v7259 = vpop.f32.mrf.mxu0
      %v7260 = vadd.f32 %v7147, %v7259
      %7261 = vmatprep.mubr.bf16.mxu0 %v6039
      %7262 = vmatmul.mubr.bf16.gmra.mxu0 %v6038
      %v7263 = vpop.f32.mrf.mxu0
      %v7264 = vadd.f32 %v7151, %v7263
      %v7265 = vpop.f32.mrf.mxu0
      %v7266 = vadd.f32 %v7153, %v7265
      %v7267 = vpop.f32.mrf.mxu0
      %v7268 = vadd.f32 %v7155, %v7267
      %v7269 = vpop.f32.mrf.mxu0
      %v7270 = vadd.f32 %v7157, %v7269
      %7271 = vdwg.mxu0
      %v7272 = vadd.f32 %v3170, %v7194
      %v7273 = vadd.f32 %v3171, %v7196
      %v7274 = vadd.f32 %v3172, %v7198
      %v7275 = vadd.f32 %v3173, %v7200
      %v7276 = vadd.f32 %v3174, %v7204
      %v7277 = vadd.f32 %v3175, %v7206
      %v7278 = vadd.f32 %v3176, %v7208
      %v7279 = vadd.f32 %v3177, %v7210
      %v7280 = vadd.f32 %v3178, %v7214
      %v7281 = vadd.f32 %v3179, %v7216
      %v7282 = vadd.f32 %v3180, %v7218
      %v7283 = vadd.f32 %v3181, %v7220
      %v7284 = vadd.f32 %v3182, %v7224
      %v7285 = vadd.f32 %v3183, %v7226
      %v7286 = vadd.f32 %v3184, %v7228
      %v7287 = vadd.f32 %v3185, %v7230
      %v7288 = vadd.f32 %v3186, %v7234
      %v7289 = vadd.f32 %v3187, %v7236
      %v7290 = vadd.f32 %v3188, %v7238
      %v7291 = vadd.f32 %v3189, %v7240
      %v7292 = vadd.f32 %v3190, %v7244
      %v7293 = vadd.f32 %v3191, %v7246
      %v7294 = vadd.f32 %v3192, %v7248
      %v7295 = vadd.f32 %v3193, %v7250
      %v7296 = vadd.f32 %v3194, %v7254
      %v7297 = vadd.f32 %v3195, %v7256
      %v7298 = vadd.f32 %v3196, %v7258
      %v7299 = vadd.f32 %v3197, %v7260
      %v7300 = vadd.f32 %v3198, %v7264
      %v7301 = vadd.f32 %v3199, %v7266
      %v7302 = vadd.f32 %v3200, %v7268
      %v7303 = vadd.f32 %v3201, %v7270
      %7304 = vst [vmem:[%s467] sm:$0xff] %v7272
      %7305 = vst [vmem:[%s467 + $0x8] sm:$0xff] %v7273
      %7306 = vst [vmem:[%s467 + $0x10] sm:$0xff] %v7274
      %7307 = vst [vmem:[%s467 + $0x18] sm:$0xff] %v7275
      %7308 = vst [vmem:[%s467 + $0x20] sm:$0xff] %v7276
      %7309 = vst [vmem:[%s467 + $0x28] sm:$0xff] %v7277
      %7310 = vst [vmem:[%s467 + $0x30] sm:$0xff] %v7278
      %7311 = vst [vmem:[%s467 + $0x38] sm:$0xff] %v7279
      %7312 = vst [vmem:[%s467 + $0x40] sm:$0xff] %v7280
      %7313 = vst [vmem:[%s467 + $0x48] sm:$0xff] %v7281
      %7314 = vst [vmem:[%s467 + $0x50] sm:$0xff] %v7282
      %7315 = vst [vmem:[%s467 + $0x58] sm:$0xff] %v7283
      %7316 = vst [vmem:[%s467 + $0x60] sm:$0xff] %v7284
      %7317 = vst [vmem:[%s467 + $0x68] sm:$0xff] %v7285
      %7318 = vst [vmem:[%s467 + $0x70] sm:$0xff] %v7286
      %7319 = vst [vmem:[%s467 + $0x78] sm:$0xff] %v7287
      %7320 = vst [vmem:[%s467 + $0x80] sm:$0xff] %v7288
      %7321 = vst [vmem:[%s467 + $0x88] sm:$0xff] %v7289
      %7322 = vst [vmem:[%s467 + $0x90] sm:$0xff] %v7290
      %7323 = vst [vmem:[%s467 + $0x98] sm:$0xff] %v7291
      %7324 = vst [vmem:[%s467 + $0xa0] sm:$0xff] %v7292
      %7325 = vst [vmem:[%s467 + $0xa8] sm:$0xff] %v7293
      %7326 = vst [vmem:[%s467 + $0xb0] sm:$0xff] %v7294
      %7327 = vst [vmem:[%s467 + $0xb8] sm:$0xff] %v7295
      %7328 = vst [vmem:[%s467 + $0xc0] sm:$0xff] %v7296
      %7329 = vst [vmem:[%s467 + $0xc8] sm:$0xff] %v7297
      %7330 = vst [vmem:[%s467 + $0xd0] sm:$0xff] %v7298
      %7331 = vst [vmem:[%s467 + $0xd8] sm:$0xff] %v7299
      %7332 = vst [vmem:[%s467 + $0xe0] sm:$0xff] %v7300
      %7333 = vst [vmem:[%s467 + $0xe8] sm:$0xff] %v7301
      %7334 = vst [vmem:[%s467 + $0xf0] sm:$0xff] %v7302
      %7335 = vst [vmem:[%s467 + $0xf8] sm:$0xff] %v7303
      %p7336 = scmp.lt.s32.totalorder %s25, 1
      %s7337 = scalar_select %p7336, %s25, 1
      %s7338 = smul.addr %s7337, 32
      %s7339 = smul.addr %s7338, 8
      %s7340 = scalar_lea.vmem %s14, %s7339
      // Predicated region
      $region77: #{gpt_forward.3} parent=75 // pred_check
        %p7341 = pneg %p342
      $region78: #{gpt_forward.3} parent=75 // pred_check_branch
        %7343 = sbr.rel (%p7341) target = $region80
      $region79: #{gpt_forward.3} parent=75 // pred_region
        _
      $region80: #{gpt_forward.3} parent=75 // pred_fallthru
        _
    $region76: #{gpt_forward.3} parent=5 // pred_fallthru
      _
    %p7344 = scmp.le.s32.totalorder 2, %s20
    // Predicated region
    $region81: #{gpt_forward.3} parent=5 // pred_check
      %p7345 = pneg %p7344
    $region82: #{gpt_forward.3} parent=5 // pred_check_branch
      %7347 = sbr.rel (%p7345) target = $region84
    $region83: #{gpt_forward.3} parent=5 // pred_region
      %s7348 = ssub.s32 %s20, 2
      // Predicated region
      $region85: #{gpt_forward.3} parent=83 // pred_check
        %p7349 = pneg %p348
      $region86: #{gpt_forward.3} parent=83 // pred_check_branch
        %7351 = sbr.rel (%p7349) target = $region88
      $region87: #{gpt_forward.3} parent=83 // pred_region
        %p7352 = scmp.lt.s32.totalorder %s26, 1
        %s7353 = scalar_select %p7352, %s26, 1
        %s7354 = smul.addr %s7353, 32
        %s7355 = smul.addr %s7354, 8
        %s7356 = scalar_lea.vmem %s14, %s7355
      $region88: #{gpt_forward.3} parent=83 // pred_fallthru
        _
    $region84: #{gpt_forward.3} parent=5 // pred_fallthru
      _
  $region6: #{gpt_forward.3} parent=0 // loop_footer
    %s24 = sadd.s32 1, %s20
  $region7: #{gpt_forward.3} parent=0 // loop_footer_branch
    %19 = sbr.rel target = $region3
  $region8: #{gpt_forward.3} parent=0 // loop_exit
    _

</llo_original>
